<compile_context>
chip_gen: v5e
topology: v5e:2x2
jax: 0.10.0
libtpu: 0.0.40
codegen_flags: <defaults>
</compile_context>

<pallas_src>
import functools
import math

import jax
import jax.numpy as jnp
from jax.experimental import pallas as pl
from jax.experimental.pallas import tpu as pltpu


def _round_up(x, m):
    return ((x + m - 1) // m) * m


def _vmem_capacity_bytes():
    try:
        return int(pltpu.get_tpu_info().vmem_capacity_bytes)
    except Exception:
        return 64 * 1024 * 1024  # conservative fallback (v7x per-TensorCore VMEM)


def _sine_layer_kernel(x_ref, w_ref, b_ref, o_ref, *, compute_dtype):
    # x_ref: (tm, K)  stored dtype          w_ref: (K, Np) compute dtype (omega folded)
    # b_ref: (1, Np)  f32 (omega folded)    o_ref: (tm, Np) out dtype
    x = x_ref[...].astype(compute_dtype)        # in-kernel cast: free VPU filler
    z = jnp.dot(x, w_ref[...], preferred_element_type=jnp.float32)
    z = z + b_ref[...]                          # f32 bias add (phase-sensitive)
    o_ref[...] = jnp.sin(z).astype(o_ref.dtype)


def prepare_sine_layer_params(w_t, b, omega_0=30.0, compute_dtype=jnp.bfloat16):
    """One-time parameter prep (hoisted out of the forward pass).

    Folds omega_0 into W and b, pads out_features to a lane multiple of 128 and
    casts W to the MXU compute dtype.  Returns (w_p, b_p, n_out).
    w_t: (K, N) weight stored transposed w.r.t. torch.nn.Linear.weight; b: (N,).
    """
    K, N = w_t.shape
    assert b.shape == (N,)
    Np = _round_up(N, 128)
    w_p = w_t.astype(jnp.float32) * jnp.float32(omega_0)
    w_p = jnp.pad(w_p, ((0, 0), (0, Np - N))).astype(compute_dtype)
    b_p = jnp.pad(b.astype(jnp.float32) * jnp.float32(omega_0), (0, Np - N))
    b_p = b_p.reshape(1, Np)
    return w_p, b_p, N


def sine_layer_apply(x, w_p, b_p, n_out, *, out_dtype=None, block_m=None,
                     vmem_budget_bytes=None):
    """Apply a prepared SIREN sine layer: sin(x @ w_p + b_p), omega already folded."""
    M, K = x.shape
    K2, Np = w_p.shape
    assert K == K2, "in_features mismatch between x and prepared weight"
    assert b_p.shape == (1, Np)
    out_dtype = out_dtype or x.dtype
    compute_dtype = w_p.dtype

    cap = _vmem_capacity_bytes()
    big_vmem = cap >= 100 * 1024 * 1024            # v5e/v6e (128 MiB) vs v7x (64 MiB)
    if block_m is None:
        block_m = 1024 if big_vmem else 512
    if vmem_budget_bytes is None:
        vmem_budget_bytes = (48 if big_vmem else 24) * 1024 * 1024

    xsz = jnp.dtype(x.dtype).itemsize
    wsz = jnp.dtype(compute_dtype).itemsize
    osz = jnp.dtype(out_dtype).itemsize

    def live_bytes(tm_):
        return (2 * tm_ * K * xsz          # double-buffered activation tiles
                + 2 * K * Np * wsz         # weight (VMEM-resident; 2 bufs allocated)
                + 2 * Np * 4               # bias (f32)
                + 2 * tm_ * Np * osz)      # double-buffered output tiles

    tm = _round_up(min(block_m, M), 16)
    while live_bytes(tm) > vmem_budget_bytes and tm > 64:
        tm = max(64, tm // 2)
    # Give v7x's two TensorCores at least one batch tile each.
    if M >= 256 and pl.cdiv(M, tm) < 2:
        tm = _round_up(pl.cdiv(M, 2), 16)

    grid_m = pl.cdiv(M, tm)
    vmem_limit = int(min(cap * 3 // 4,
                         max(32 * 1024 * 1024, 2 * live_bytes(tm))))

    out = pl.pallas_call(
        functools.partial(_sine_layer_kernel, compute_dtype=compute_dtype),
        # True M: the boundary tile's store is masked, so no trailing row slice.
        out_shape=jax.ShapeDtypeStruct((M, Np), out_dtype),
        grid_spec=pltpu.PrefetchScalarGridSpec(
            num_scalar_prefetch=0,
            grid=(grid_m,),
            in_specs=[
                pl.BlockSpec((tm, K), lambda i: (i, 0)),   # batch-tiled x, no K pad
                pl.BlockSpec((K, Np), lambda i: (0, 0)),   # weight resident across tiles
                pl.BlockSpec((1, Np), lambda i: (0, 0)),   # bias resident (f32)
            ],
            out_specs=pl.BlockSpec((tm, Np), lambda i: (i, 0)),
        ),
        compiler_params=pltpu.CompilerParams(
            dimension_semantics=("parallel",),
            vmem_limit_bytes=vmem_limit,
        ),
    )(x, w_p, b_p)

    return out if Np == n_out else out[:, :n_out]


def sine_layer_forward(x, w_t, b, omega_0=30.0, *, compute_dtype=jnp.bfloat16,
                       out_dtype=None, block_m=None, vmem_budget_bytes=None):
    """One-shot convenience forward: sin(omega_0 * (x @ w_t + b)).

    For stacked layers prefer prepare_sine_layer_params(...) once per layer and
    sine_layer_apply(...) per call (keeps the omega fold / pad / cast out of the
    per-step graph)."""
    w_p, b_p, n_out = prepare_sine_layer_params(w_t, b, omega_0, compute_dtype)
    return sine_layer_apply(x, w_p, b_p, n_out, out_dtype=out_dtype,
                            block_m=block_m, vmem_budget_bytes=vmem_budget_bytes)


def init_sine_layer_params(key, in_features, out_features, is_first, omega_0):
    """SIREN init matching SineLayer.init_weights (weight) and the nn.Linear
    default bias ~ U(-1/sqrt(in), 1/sqrt(in))."""
    kw, kb = jax.random.split(key)
    if is_first:
        bound = 1.0 / in_features
    else:
        bound = math.sqrt(6.0 / in_features) / omega_0
    # torch Linear weight is (out, in); store transposed (in, out) for the kernel.
    w_t = jax.random.uniform(
        kw, (in_features, out_features), jnp.float32, minval=-bound, maxval=bound
    )
    b_bound = 1.0 / math.sqrt(in_features)
    b = jax.random.uniform(
        kb, (out_features,), jnp.float32, minval=-b_bound, maxval=b_bound
    )
    return w_t, b


if __name__ == "__main__":
    key = jax.random.PRNGKey(0)
    k_x, k_p1, k_p2 = jax.random.split(key, 3)

    omega_0 = 30.0
    batch, in_features, hidden, hidden2 = 512, 3, 256, 128

    x = jax.random.normal(k_x, (batch, in_features), jnp.float32)
    w1, b1 = init_sine_layer_params(k_p1, in_features, hidden, True, omega_0)
    w2, b2 = init_sine_layer_params(k_p2, hidden, hidden2, False, omega_0)

    # ---- first layer: 3-D coordinates -> hidden.  K is tiny (3), so bf16 buys
    # no bandwidth and the omega-folded phase is sensitive; keep f32 compute.
    h = jax.block_until_ready(
        sine_layer_forward(x, w1, b1, omega_0, compute_dtype=jnp.float32)
    )
    ref1 = jnp.sin(
        omega_0 * (jnp.dot(x, w1, precision=jax.lax.Precision.HIGHEST) + b1)
    )
    assert h.shape == (batch, hidden) and h.dtype == x.dtype
    assert jnp.allclose(h, ref1, atol=1e-3, rtol=1e-3)

    # ---- hidden layer: bf16 compute + bf16 output (stacked-SIREN default; the
    # (M, N) activation stream dominates HBM traffic so bf16 out halves it).
    w2_p, b2_p, n2 = prepare_sine_layer_params(w2, b2, omega_0, jnp.bfloat16)
    h2 = jax.block_until_ready(
        sine_layer_apply(h, w2_p, b2_p, n2, out_dtype=jnp.bfloat16)
    )
    # Quantization-matched smoke-test reference (bf16 x/W, f32 accumulate + sin).
    xs = h.astype(jnp.bfloat16).astype(jnp.float32)
    ws = (w2 * omega_0).astype(jnp.bfloat16).astype(jnp.float32)
    ref2 = jnp.sin(
        jnp.dot(xs, ws, precision=jax.lax.Precision.HIGHEST) + b2 * omega_0
    )
    assert h2.shape == (batch, hidden2) and h2.dtype == jnp.bfloat16
    assert jnp.allclose(h2.astype(jnp.float32), ref2, atol=2e-2, rtol=2e-2)

    print("KERNEL_OK")
</pallas_src>

<mosaic_0001>
module attributes {stable_mosaic.version = 11 : i64} {
  func.func @_sine_layer_kernel(%arg0: i32, %arg1: memref<256x3xf32, #tpu.memory_space<vmem>>, %arg2: memref<3x256xf32, #tpu.memory_space<vmem>>, %arg3: memref<1x256xf32, #tpu.memory_space<vmem>>, %arg4: memref<256x256xf32, #tpu.memory_space<vmem>>) attributes {dimension_semantics = [#tpu.dimension_semantics<parallel>], iteration_bounds = array<i64: 2>, scalar_prefetch = 0 : i64, scratch_operands = 0 : i64, tpu.core_type = #tpu.core_type<tc>, window_params = [{transform_indices = @transform_0, window_bounds = array<i64: 256, 3>}, {pipeline_mode = #tpu.pipeline_mode<synchronous>, transform_indices = @transform_1, window_bounds = array<i64: 3, 256>}, {pipeline_mode = #tpu.pipeline_mode<synchronous>, transform_indices = @transform_2, window_bounds = array<i64: 1, 256>}, {transform_indices = @transform_3, window_bounds = array<i64: 256, 256>}]} {
    %c0 = arith.constant 0 : index
    %c0_0 = arith.constant 0 : index
    %0 = vector.load %arg1[%c0, %c0_0] : memref<256x3xf32, #tpu.memory_space<vmem>>, vector<256x3xf32>
    %c0_1 = arith.constant 0 : index
    %c0_2 = arith.constant 0 : index
    %1 = vector.load %arg2[%c0_1, %c0_2] : memref<3x256xf32, #tpu.memory_space<vmem>>, vector<3x256xf32>
    %cst = arith.constant dense<0.000000e+00> : vector<256x256xf32>
    %2 = tpu.matmul %0, %1, %cst {dimension_numbers = #tpu.dot_dimension_numbers<[1], [0], [0], [1], [0, 0, 1, 1], [], []>} : vector<256x3xf32>, vector<3x256xf32>, vector<256x256xf32> -> vector<256x256xf32>
    %c0_3 = arith.constant 0 : index
    %c0_4 = arith.constant 0 : index
    %3 = vector.load %arg3[%c0_3, %c0_4] : memref<1x256xf32, #tpu.memory_space<vmem>>, vector<1x256xf32>
    %4 = vector.broadcast %3 : vector<1x256xf32> to vector<256x256xf32>
    %5 = arith.addf %2, %4 : vector<256x256xf32>
    %6 = math.sin %5 : vector<256x256xf32>
    %c0_5 = arith.constant 0 : index
    %c0_6 = arith.constant 0 : index
    %7 = vector.load %arg4[%c0_5, %c0_6] : memref<256x256xf32, #tpu.memory_space<vmem>>, vector<256x256xf32>
    tpu.vector_store %arg4[%c0_5, %c0_6], %6 {strides = array<i32>} : memref<256x256xf32, #tpu.memory_space<vmem>>, vector<256x256xf32>,
    return
  }
  func.func @transform_0(%arg0: i32) -> (i32, i32) {
    %c0_i32 = arith.constant 0 : i32
    %c0_i32_0 = arith.constant 0 : i32
    return %arg0, %c0_i32 : i32, i32
  }
  func.func @transform_1(%arg0: i32) -> (i32, i32) {
    %c0_i32 = arith.constant 0 : i32
    %c0_i32_0 = arith.constant 0 : i32
    %c0_i32_1 = arith.constant 0 : i32
    return %c0_i32, %c0_i32_0 : i32, i32
  }
  func.func @transform_2(%arg0: i32) -> (i32, i32) {
    %c0_i32 = arith.constant 0 : i32
    %c0_i32_0 = arith.constant 0 : i32
    %c0_i32_1 = arith.constant 0 : i32
    return %c0_i32, %c0_i32_0 : i32, i32
  }
  func.func @transform_3(%arg0: i32) -> (i32, i32) {
    %c0_i32 = arith.constant 0 : i32
    %c0_i32_0 = arith.constant 0 : i32
    return %arg0, %c0_i32 : i32, i32
  }
}

</mosaic_0001>

<llo_original>
// kernel: tpu_custom_call.1
$region0: #{tpu_custom_call.1}
  #allocation0 [shape = 'u32[]', space=smem, size = 0x4, offset = 0x4, fixed_abs, tag = 'smem constant byte address 0x4 - core index']
  #allocation1 [shape = 'u32[72,128]{1,0:T(1,128)}', space=vmem, size = 0x9000, scoped, tag = 'internal scratch']
  %s0 = inlined_call_operand.vmem [shape: f32[512,3], index: 0, kind: input, shape index: {}]
  %s1 = inlined_call_operand.vmem [shape: f32[3,256], index: 1, kind: input, shape index: {}]
  %s2 = inlined_call_operand.vmem [shape: f32[1,256], index: 2, kind: input, shape index: {}]
  %s3 = inlined_call_operand.hbm [shape: f32[512,256], index: 3, kind: output, shape index: {}]
  %s4 = sld [smem:[#allocation0]]
  $region45: #{tpu_custom_call.1} parent=0
    _
  %s6 = ssub.s32 1, %s4
  %s7 = scalar_select 0, %s6, %s4
  $region1: #{tpu_custom_call.1} parent=0
    #allocation2 [shape = 'u8[524288]{0}', space=vmem, size = 0x80000, scoped, tag = 'output window, operand 0']
    #allocation3 [shape = 's32[2]{0}', space=sflag, size = 0x8, scoped, tag = 'scoped memory for tpu_custom_call.1']
    %8 = vsyncpa [#allocation3], 0
    %s9 = scalar_lea.sflag [#allocation3], 1
    %10 = vsyncpa %s9, 0
    loop: start=0, step=1, limit=4
    $region2: #{tpu_custom_call.1} parent=1 // loop_pre_header
      _
    $region3: #{tpu_custom_call.1} parent=1 // loop_header
      %s12 = sphi 0, %s16
      %p13 = scmp.ge.s32.totalorder %s12, 4
      %s22 = sphi 0, %s24
      %s25 = sphi 0, %s22
      %s26 = sphi 0, %s25
      %s42 = sphi 0, %s26
      %s46 = sphi 0, %s46
      %s48 = sphi 0, %s46
      %s49 = sphi 0, %s48
      %s63 = sphi 0, %s49
      %s67 = sphi 0, %s67
      %s69 = sphi 0, %s67
      %s70 = sphi 0, %s69
      %s84 = sphi 0, %s70
      %s90 = sphi 0, %s92
      %s93 = sphi 0, %s90
      %s94 = sphi 0, %s93
      %s110 = sphi 0, %s94
    $region4: #{tpu_custom_call.1} parent=1 // loop_header_branch
      %15 = sbr.rel (%p13) target = $region8
    $region5: #{tpu_custom_call.1} parent=1 // loop_body
      %s17 = ssub.s32 %s12, 1
      %s18 = ssub.s32 %s12, 2
      %s19 = sadd.s32 %s12, 1
      %s20 = ssub.s32 %s12, %s19
      %p21 = scmp.eq.s32.totalorder %s20, 0
      %s23 = sadd.s32 %s22, 1
      %s24 = scalar_select %p21, %s22, %s23
      %p27 = pneg %p21
      %p28 = scmp.eq.s32.totalorder %s12, 1
      %p29 = por %p27, %p28
      %p30 = scmp.ne.s32.totalorder %s22, %s25
      %p31 = scmp.eq.s32.totalorder %s12, 0
      %p32 = por %p30, %p31
      %p33 = scmp.ne.s32.totalorder %s22, %s25
      %p34 = scmp.eq.s32.totalorder %s17, 1
      %p35 = por %p33, %p34
      %p36 = scmp.ne.s32.totalorder %s25, %s26
      %p37 = scmp.eq.s32.totalorder %s17, 0
      %p38 = por %p36, %p37
      %p39 = scmp.ne.s32.totalorder %s25, %s26
      %p40 = scmp.eq.s32.totalorder %s18, 1
      %p41 = por %p39, %p40
      %p43 = scmp.ne.s32.totalorder %s26, %s42
      %p44 = scmp.eq.s32.totalorder %s18, 0
      %p45 = por %p43, %p44
      %s47 = sadd.s32 %s46, 1
      %p50 = scmp.eq.s32.totalorder %s12, 1
      %p51 = scmp.ne.s32.totalorder %s46, %s48
      %p52 = scmp.eq.s32.totalorder %s12, 0
      %p53 = por %p51, %p52
      %p54 = scmp.ne.s32.totalorder %s46, %s48
      %p55 = scmp.eq.s32.totalorder %s17, 1
      %p56 = por %p54, %p55
      %p57 = scmp.ne.s32.totalorder %s48, %s49
      %p58 = scmp.eq.s32.totalorder %s17, 0
      %p59 = por %p57, %p58
      %p60 = scmp.ne.s32.totalorder %s48, %s49
      %p61 = scmp.eq.s32.totalorder %s18, 1
      %p62 = por %p60, %p61
      %p64 = scmp.ne.s32.totalorder %s49, %s63
      %p65 = scmp.eq.s32.totalorder %s18, 0
      %p66 = por %p64, %p65
      %s68 = sadd.s32 %s67, 1
      %p71 = scmp.eq.s32.totalorder %s12, 1
      %p72 = scmp.ne.s32.totalorder %s67, %s69
      %p73 = scmp.eq.s32.totalorder %s12, 0
      %p74 = por %p72, %p73
      %p75 = scmp.ne.s32.totalorder %s67, %s69
      %p76 = scmp.eq.s32.totalorder %s17, 1
      %p77 = por %p75, %p76
      %p78 = scmp.ne.s32.totalorder %s69, %s70
      %p79 = scmp.eq.s32.totalorder %s17, 0
      %p80 = por %p78, %p79
      %p81 = scmp.ne.s32.totalorder %s69, %s70
      %p82 = scmp.eq.s32.totalorder %s18, 1
      %p83 = por %p81, %p82
      %p85 = scmp.ne.s32.totalorder %s70, %s84
      %p86 = scmp.eq.s32.totalorder %s18, 0
      %p87 = por %p85, %p86
      %s88 = ssub.s32 %s12, %s19
      %p89 = scmp.eq.s32.totalorder %s88, 0
      %s91 = sadd.s32 %s90, 1
      %s92 = scalar_select %p89, %s90, %s91
      %p95 = pneg %p89
      %p96 = scmp.eq.s32.totalorder %s12, 1
      %p97 = por %p95, %p96
      %p98 = scmp.ne.s32.totalorder %s90, %s93
      %p99 = scmp.eq.s32.totalorder %s12, 0
      %p100 = por %p98, %p99
      %p101 = scmp.ne.s32.totalorder %s90, %s93
      %p102 = scmp.eq.s32.totalorder %s17, 1
      %p103 = por %p101, %p102
      %p104 = scmp.ne.s32.totalorder %s93, %s94
      %p105 = scmp.eq.s32.totalorder %s17, 0
      %p106 = por %p104, %p105
      %p107 = scmp.ne.s32.totalorder %s93, %s94
      %p108 = scmp.eq.s32.totalorder %s18, 1
      %p109 = por %p107, %p108
      %p111 = scmp.ne.s32.totalorder %s94, %s110
      %p112 = scmp.eq.s32.totalorder %s18, 0
      %p113 = por %p111, %p112
      %p114 = scmp.le.s32.totalorder 1, %s12
      %p115 = scmp.lt.s32.totalorder %s12, 3
      %p116 = pnand %p114, %p115
      %p117 = pneg %p116
      // Predicated region
      $region9: #{tpu_custom_call.1} parent=5 // pred_check
        _
      $region10: #{tpu_custom_call.1} parent=5 // pred_check_branch
        %119 = sbr.rel (%p116) target = $region12
      $region11: #{tpu_custom_call.1} parent=5 // pred_region
        %s120 = ssub.s32 %s12, 1
        // Predicated region
        $region13: #{tpu_custom_call.1} parent=11 // pred_check
          %p121 = pneg %p59
        $region14: #{tpu_custom_call.1} parent=11 // pred_check_branch
          %123 = sbr.rel (%p121) target = $region16
        $region15: #{tpu_custom_call.1} parent=11 // pred_region
          _
        $region16: #{tpu_custom_call.1} parent=11 // pred_fallthru
          _
        // Predicated region
        $region17: #{tpu_custom_call.1} parent=11 // pred_check
          %p124 = pneg %p80
        $region18: #{tpu_custom_call.1} parent=11 // pred_check_branch
          %126 = sbr.rel (%p124) target = $region20
        $region19: #{tpu_custom_call.1} parent=11 // pred_region
          _
        $region20: #{tpu_custom_call.1} parent=11 // pred_fallthru
          _
      $region12: #{tpu_custom_call.1} parent=5 // pred_fallthru
        _
      %p127 = scmp.lt.s32.totalorder %s12, 2
      // Predicated region
      $region21: #{tpu_custom_call.1} parent=5 // pred_check
        %p128 = pneg %p127
      $region22: #{tpu_custom_call.1} parent=5 // pred_check_branch
        %130 = sbr.rel (%p128) target = $region24
      $region23: #{tpu_custom_call.1} parent=5 // pred_region
        // Predicated region
        $region25: #{tpu_custom_call.1} parent=23 // pred_check
          %p131 = pneg %p32
        $region26: #{tpu_custom_call.1} parent=23 // pred_check_branch
          %133 = sbr.rel (%p131) target = $region28
        $region27: #{tpu_custom_call.1} parent=23 // pred_region
          %s134 = smul.u32 32, %s12
          %p135 = scmp.lt.s32.totalorder %s134, 63
          %s136 = scalar_select %p135, %s134, 63
          %s137 = smul.addr %s136, 8
          %s138 = scalar_lea.vmem %s0, %s137
          %s139 = smul.u32 32, %s12
        $region28: #{tpu_custom_call.1} parent=23 // pred_fallthru
          _
      $region24: #{tpu_custom_call.1} parent=5 // pred_fallthru
        _
      %p140 = scmp.le.s32.totalorder 1, %s12
      %p141 = scmp.lt.s32.totalorder %s12, 3
      %p142 = pnand %p140, %p141
      %p143 = pneg %p142
      // Predicated region
      $region29: #{tpu_custom_call.1} parent=5 // pred_check
        _
      $region30: #{tpu_custom_call.1} parent=5 // pred_check_branch
        %145 = sbr.rel (%p142) target = $region32
      $region31: #{tpu_custom_call.1} parent=5 // pred_region
        %s146 = ssub.s32 %s12, 1
        %s147 = smul.u32 32, %s17
        %p148 = scmp.lt.s32.totalorder %s147, 63
        %s149 = scalar_select %p148, %s147, 63
        %s150 = smul.addr %s149, 8
        %s151 = scalar_lea.vmem %s0, %s150
        %p152 = pneg %p38
        %p153 = pneg %p35
        %p154 = pneg %p59
        %p155 = pneg %p56
        %p156 = pneg %p80
        %p157 = pneg %p77
        %p158 = pneg %p106
        %p159 = pneg %p103
        %s160 = sand.u32 %s93, 1
        %s161 = scalar_lea.sflag [#allocation3], %s160
        %s162 = sand.u32 %s93, 1
        %s163 = smul.addr %s162, 512
        %s164 = scalar_lea.vmem [#allocation2], %s163
        %s165 = smul.u32 32, %s17
        %p166 = scmp.lt.s32.totalorder %s165, 63
        %s167 = scalar_select %p166, %s165, 63
        %s168 = smul.addr %s167, 8
        %s169 = scalar_lea.vmem %s0, %s168
        %s170 = smul.u32 32, %s17
        %s171 = smul.u32 32, %s17
        %v172 = vld [vmem:[%s169] sm:$0xff]
        %v173 = vld [vmem:[%s169 + $0x8] sm:$0xff]
        %v174 = vld [vmem:[%s169 + $0x10] sm:$0xff]
        %v175 = vld [vmem:[%s169 + $0x18] sm:$0xff]
        %v176 = vld [vmem:[%s169 + $0x20] sm:$0xff]
        %v177 = vld [vmem:[%s169 + $0x28] sm:$0xff]
        %v178 = vld [vmem:[%s169 + $0x30] sm:$0xff]
        %v179 = vld [vmem:[%s169 + $0x38] sm:$0xff]
        %v180 = vld [vmem:[%s169 + $0x40] sm:$0xff]
        %v181 = vld [vmem:[%s169 + $0x48] sm:$0xff]
        %v182 = vld [vmem:[%s169 + $0x50] sm:$0xff]
        %v183 = vld [vmem:[%s169 + $0x58] sm:$0xff]
        %v184 = vld [vmem:[%s169 + $0x60] sm:$0xff]
        %v185 = vld [vmem:[%s169 + $0x68] sm:$0xff]
        %v186 = vld [vmem:[%s169 + $0x70] sm:$0xff]
        %v187 = vld [vmem:[%s169 + $0x78] sm:$0xff]
        %v188 = vld [vmem:[%s169 + $0x80] sm:$0xff]
        %v189 = vld [vmem:[%s169 + $0x88] sm:$0xff]
        %v190 = vld [vmem:[%s169 + $0x90] sm:$0xff]
        %v191 = vld [vmem:[%s169 + $0x98] sm:$0xff]
        %v192 = vld [vmem:[%s169 + $0xa0] sm:$0xff]
        %v193 = vld [vmem:[%s169 + $0xa8] sm:$0xff]
        %v194 = vld [vmem:[%s169 + $0xb0] sm:$0xff]
        %v195 = vld [vmem:[%s169 + $0xb8] sm:$0xff]
        %v196 = vld [vmem:[%s169 + $0xc0] sm:$0xff]
        %v197 = vld [vmem:[%s169 + $0xc8] sm:$0xff]
        %v198 = vld [vmem:[%s169 + $0xd0] sm:$0xff]
        %v199 = vld [vmem:[%s169 + $0xd8] sm:$0xff]
        %v200 = vld [vmem:[%s169 + $0xe0] sm:$0xff]
        %v201 = vld [vmem:[%s169 + $0xe8] sm:$0xff]
        %v202 = vld [vmem:[%s169 + $0xf0] sm:$0xff]
        %v203 = vld [vmem:[%s169 + $0xf8] sm:$0xff]
        %v204 = vld [vmem:[%s1] sm:$0x77]
        %v205 = vld [vmem:[%s2] sm:$0x3]
        %v207 = vperm.slane %v205, 0
        %v208 = vperm.slane %v205, 1
        %212 = vst [vmem:[#allocation1] ss:$2 sm:$0xff] %v204
        %v213 = vld.sshfl [vmem:[#allocation1] sm:$0xff pattern:$0x75316420]
        %v214 = vld.sshfl [vmem:[#allocation1 + $0x8] sm:$0xff pattern:$0x75316420]
        %vm215 = vcmask 23552
        %v217 = vsel %vm215, %v172, 0
        %v220 = vsel %vm215, %v173, 0
        %v223 = vsel %vm215, %v174, 0
        %v226 = vsel %vm215, %v175, 0
        %v229 = vsel %vm215, %v176, 0
        %v232 = vsel %vm215, %v177, 0
        %v235 = vsel %vm215, %v178, 0
        %v238 = vsel %vm215, %v179, 0
        %v241 = vsel %vm215, %v180, 0
        %v244 = vsel %vm215, %v181, 0
        %v247 = vsel %vm215, %v182, 0
        %v250 = vsel %vm215, %v183, 0
        %v253 = vsel %vm215, %v184, 0
        %v256 = vsel %vm215, %v185, 0
        %v259 = vsel %vm215, %v186, 0
        %v262 = vsel %vm215, %v187, 0
        %v265 = vsel %vm215, %v188, 0
        %v268 = vsel %vm215, %v189, 0
        %v271 = vsel %vm215, %v190, 0
        %v274 = vsel %vm215, %v191, 0
        %v277 = vsel %vm215, %v192, 0
        %v280 = vsel %vm215, %v193, 0
        %v283 = vsel %vm215, %v194, 0
        %v286 = vsel %vm215, %v195, 0
        %v289 = vsel %vm215, %v196, 0
        %v292 = vsel %vm215, %v197, 0
        %v295 = vsel %vm215, %v198, 0
        %v298 = vsel %vm215, %v199, 0
        %v301 = vsel %vm215, %v200, 0
        %v304 = vsel %vm215, %v201, 0
        %v307 = vsel %vm215, %v202, 0
        %v310 = vsel %vm215, %v203, 0
        %vm312 = vcmask 1042432
        %v313 = vsel %vm312, %v213, 0
        %v315 = vsel %vm312, %v214, 0
        %317 = vmatpush.msra.mxu0 0.0
        %318 = vmatpush.msra.mxu0 0.0
        %319 = vmatpush.msra.mxu0 0.0
        %320 = vmatpush.msra.mxu0 0.0
        %321 = vmatpush.msra.mxu0 0.0
        %322 = vmatpush.msra.mxu0 0.0
        %323 = vmatpush.msra.mxu0 0.0
        %324 = vmatpush.msra.mxu0 0.0
        %325 = vmatpush.msra.mxu0 0.0
        %326 = vmatpush.msra.mxu0 0.0
        %327 = vmatpush.msra.mxu0 0.0
        %328 = vmatpush.msra.mxu0 0.0
        %329 = vmatpush.msra.mxu0 0.0
        %330 = vmatpush.msra.mxu0 0.0
        %331 = vmatpush.msra.mxu0 0.0
        %332 = vmatpush.msra.mxu0 %v313
        %333 = vmatmul.f32.gmra.mxu0 %v217
        %v334 = vpop.f32.mrf.mxu0
        %v335 = vadd.f32 %v207, %v334
        %336 = vmatmul.f32.gmra.mxu0 %v220
        %v337 = vpop.f32.mrf.mxu0
        %v338 = vadd.f32 %v207, %v337
        %339 = vmatmul.f32.gmra.mxu0 %v223
        %v340 = vpop.f32.mrf.mxu0
        %v341 = vadd.f32 %v207, %v340
        %342 = vmatmul.f32.gmra.mxu0 %v226
        %v343 = vpop.f32.mrf.mxu0
        %v344 = vadd.f32 %v207, %v343
        %345 = vmatmul.f32.gmra.mxu0 %v229
        %v346 = vpop.f32.mrf.mxu0
        %v347 = vadd.f32 %v207, %v346
        %348 = vmatmul.f32.gmra.mxu0 %v232
        %v349 = vpop.f32.mrf.mxu0
        %v350 = vadd.f32 %v207, %v349
        %351 = vmatmul.f32.gmra.mxu0 %v235
        %v352 = vpop.f32.mrf.mxu0
        %v353 = vadd.f32 %v207, %v352
        %354 = vmatmul.f32.gmra.mxu0 %v238
        %v355 = vpop.f32.mrf.mxu0
        %v356 = vadd.f32 %v207, %v355
        %357 = vmatmul.f32.gmra.mxu0 %v241
        %v358 = vpop.f32.mrf.mxu0
        %v359 = vadd.f32 %v207, %v358
        %360 = vmatmul.f32.gmra.mxu0 %v244
        %v361 = vpop.f32.mrf.mxu0
        %v362 = vadd.f32 %v207, %v361
        %363 = vmatmul.f32.gmra.mxu0 %v247
        %v364 = vpop.f32.mrf.mxu0
        %v365 = vadd.f32 %v207, %v364
        %366 = vmatmul.f32.gmra.mxu0 %v250
        %v367 = vpop.f32.mrf.mxu0
        %v368 = vadd.f32 %v207, %v367
        %369 = vmatmul.f32.gmra.mxu0 %v253
        %v370 = vpop.f32.mrf.mxu0
        %v371 = vadd.f32 %v207, %v370
        %372 = vmatmul.f32.gmra.mxu0 %v256
        %v373 = vpop.f32.mrf.mxu0
        %v374 = vadd.f32 %v207, %v373
        %375 = vmatmul.f32.gmra.mxu0 %v259
        %v376 = vpop.f32.mrf.mxu0
        %v377 = vadd.f32 %v207, %v376
        %378 = vmatmul.f32.gmra.mxu0 %v262
        %v379 = vpop.f32.mrf.mxu0
        %v380 = vadd.f32 %v207, %v379
        %381 = vmatmul.f32.gmra.mxu0 %v265
        %v382 = vpop.f32.mrf.mxu0
        %v383 = vadd.f32 %v207, %v382
        %384 = vmatmul.f32.gmra.mxu0 %v268
        %v385 = vpop.f32.mrf.mxu0
        %v386 = vadd.f32 %v207, %v385
        %387 = vmatmul.f32.gmra.mxu0 %v271
        %v388 = vpop.f32.mrf.mxu0
        %v389 = vadd.f32 %v207, %v388
        %390 = vmatmul.f32.gmra.mxu0 %v274
        %v391 = vpop.f32.mrf.mxu0
        %v392 = vadd.f32 %v207, %v391
        %393 = vmatmul.f32.gmra.mxu0 %v277
        %v394 = vpop.f32.mrf.mxu0
        %v395 = vadd.f32 %v207, %v394
        %396 = vmatmul.f32.gmra.mxu0 %v280
        %v397 = vpop.f32.mrf.mxu0
        %v398 = vadd.f32 %v207, %v397
        %399 = vmatmul.f32.gmra.mxu0 %v283
        %v400 = vpop.f32.mrf.mxu0
        %v401 = vadd.f32 %v207, %v400
        %402 = vmatmul.f32.gmra.mxu0 %v286
        %v403 = vpop.f32.mrf.mxu0
        %v404 = vadd.f32 %v207, %v403
        %405 = vmatmul.f32.gmra.mxu0 %v289
        %v406 = vpop.f32.mrf.mxu0
        %v407 = vadd.f32 %v207, %v406
        %408 = vmatmul.f32.gmra.mxu0 %v292
        %v409 = vpop.f32.mrf.mxu0
        %v410 = vadd.f32 %v207, %v409
        %411 = vmatmul.f32.gmra.mxu0 %v295
        %v412 = vpop.f32.mrf.mxu0
        %v413 = vadd.f32 %v207, %v412
        %414 = vmatmul.f32.gmra.mxu0 %v298
        %v415 = vpop.f32.mrf.mxu0
        %v416 = vadd.f32 %v207, %v415
        %417 = vmatmul.f32.gmra.mxu0 %v301
        %v418 = vpop.f32.mrf.mxu0
        %v419 = vadd.f32 %v207, %v418
        %420 = vmatmul.f32.gmra.mxu0 %v304
        %v421 = vpop.f32.mrf.mxu0
        %v422 = vadd.f32 %v207, %v421
        %423 = vmatmul.f32.gmra.mxu0 %v307
        %v424 = vpop.f32.mrf.mxu0
        %v425 = vadd.f32 %v207, %v424
        %426 = vmatmul.f32.gmra.mxu0 %v310
        %v427 = vpop.f32.mrf.mxu0
        %v428 = vadd.f32 %v207, %v427
        %429 = vdwg.mxu0
        %430 = vmatpush.msra.mxu0 0.0
        %431 = vmatpush.msra.mxu0 0.0
        %432 = vmatpush.msra.mxu0 0.0
        %433 = vmatpush.msra.mxu0 0.0
        %434 = vmatpush.msra.mxu0 0.0
        %435 = vmatpush.msra.mxu0 0.0
        %436 = vmatpush.msra.mxu0 0.0
        %437 = vmatpush.msra.mxu0 0.0
        %438 = vmatpush.msra.mxu0 0.0
        %439 = vmatpush.msra.mxu0 0.0
        %440 = vmatpush.msra.mxu0 0.0
        %441 = vmatpush.msra.mxu0 0.0
        %442 = vmatpush.msra.mxu0 0.0
        %443 = vmatpush.msra.mxu0 0.0
        %444 = vmatpush.msra.mxu0 0.0
        %445 = vmatpush.msra.mxu0 %v315
        %446 = vmatmul.f32.gmra.mxu0 %v217
        %v447 = vpop.f32.mrf.mxu0
        %v448 = vadd.f32 %v208, %v447
        %449 = vmatmul.f32.gmra.mxu0 %v220
        %v450 = vpop.f32.mrf.mxu0
        %v451 = vadd.f32 %v208, %v450
        %452 = vmatmul.f32.gmra.mxu0 %v223
        %v453 = vpop.f32.mrf.mxu0
        %v454 = vadd.f32 %v208, %v453
        %455 = vmatmul.f32.gmra.mxu0 %v226
        %v456 = vpop.f32.mrf.mxu0
        %v457 = vadd.f32 %v208, %v456
        %458 = vmatmul.f32.gmra.mxu0 %v229
        %v459 = vpop.f32.mrf.mxu0
        %v460 = vadd.f32 %v208, %v459
        %461 = vmatmul.f32.gmra.mxu0 %v232
        %v462 = vpop.f32.mrf.mxu0
        %v463 = vadd.f32 %v208, %v462
        %464 = vmatmul.f32.gmra.mxu0 %v235
        %v465 = vpop.f32.mrf.mxu0
        %v466 = vadd.f32 %v208, %v465
        %467 = vmatmul.f32.gmra.mxu0 %v238
        %v468 = vpop.f32.mrf.mxu0
        %v469 = vadd.f32 %v208, %v468
        %470 = vmatmul.f32.gmra.mxu0 %v241
        %v471 = vpop.f32.mrf.mxu0
        %v472 = vadd.f32 %v208, %v471
        %473 = vmatmul.f32.gmra.mxu0 %v244
        %v474 = vpop.f32.mrf.mxu0
        %v475 = vadd.f32 %v208, %v474
        %476 = vmatmul.f32.gmra.mxu0 %v247
        %v477 = vpop.f32.mrf.mxu0
        %v478 = vadd.f32 %v208, %v477
        %479 = vmatmul.f32.gmra.mxu0 %v250
        %v480 = vpop.f32.mrf.mxu0
        %v481 = vadd.f32 %v208, %v480
        %482 = vmatmul.f32.gmra.mxu0 %v253
        %v483 = vpop.f32.mrf.mxu0
        %v484 = vadd.f32 %v208, %v483
        %485 = vmatmul.f32.gmra.mxu0 %v256
        %v486 = vpop.f32.mrf.mxu0
        %v487 = vadd.f32 %v208, %v486
        %488 = vmatmul.f32.gmra.mxu0 %v259
        %v489 = vpop.f32.mrf.mxu0
        %v490 = vadd.f32 %v208, %v489
        %491 = vmatmul.f32.gmra.mxu0 %v262
        %v492 = vpop.f32.mrf.mxu0
        %v493 = vadd.f32 %v208, %v492
        %494 = vmatmul.f32.gmra.mxu0 %v265
        %v495 = vpop.f32.mrf.mxu0
        %v496 = vadd.f32 %v208, %v495
        %497 = vmatmul.f32.gmra.mxu0 %v268
        %v498 = vpop.f32.mrf.mxu0
        %v499 = vadd.f32 %v208, %v498
        %500 = vmatmul.f32.gmra.mxu0 %v271
        %v501 = vpop.f32.mrf.mxu0
        %v502 = vadd.f32 %v208, %v501
        %503 = vmatmul.f32.gmra.mxu0 %v274
        %v504 = vpop.f32.mrf.mxu0
        %v505 = vadd.f32 %v208, %v504
        %506 = vmatmul.f32.gmra.mxu0 %v277
        %v507 = vpop.f32.mrf.mxu0
        %v508 = vadd.f32 %v208, %v507
        %509 = vmatmul.f32.gmra.mxu0 %v280
        %v510 = vpop.f32.mrf.mxu0
        %v511 = vadd.f32 %v208, %v510
        %512 = vmatmul.f32.gmra.mxu0 %v283
        %v513 = vpop.f32.mrf.mxu0
        %v514 = vadd.f32 %v208, %v513
        %515 = vmatmul.f32.gmra.mxu0 %v286
        %v516 = vpop.f32.mrf.mxu0
        %v517 = vadd.f32 %v208, %v516
        %518 = vmatmul.f32.gmra.mxu0 %v289
        %v519 = vpop.f32.mrf.mxu0
        %v520 = vadd.f32 %v208, %v519
        %521 = vmatmul.f32.gmra.mxu0 %v292
        %v522 = vpop.f32.mrf.mxu0
        %v523 = vadd.f32 %v208, %v522
        %524 = vmatmul.f32.gmra.mxu0 %v295
        %v525 = vpop.f32.mrf.mxu0
        %v526 = vadd.f32 %v208, %v525
        %527 = vmatmul.f32.gmra.mxu0 %v298
        %v528 = vpop.f32.mrf.mxu0
        %v529 = vadd.f32 %v208, %v528
        %530 = vmatmul.f32.gmra.mxu0 %v301
        %v531 = vpop.f32.mrf.mxu0
        %v532 = vadd.f32 %v208, %v531
        %533 = vmatmul.f32.gmra.mxu0 %v304
        %v534 = vpop.f32.mrf.mxu0
        %v535 = vadd.f32 %v208, %v534
        %536 = vmatmul.f32.gmra.mxu0 %v307
        %v537 = vpop.f32.mrf.mxu0
        %v538 = vadd.f32 %v208, %v537
        %539 = vmatmul.f32.gmra.mxu0 %v310
        %v540 = vpop.f32.mrf.mxu0
        %v541 = vadd.f32 %v208, %v540
        %542 = vdwg.mxu0
        %v543 = vand.u32 2147483647, %v335
        %vm544 = vcmp.le.f32.partialorder %v543, 0.7853982
        %vm545 = vcmp.lt.s32.totalorder %v335, 0
        %v546 = vand.u32 %v335, 2139095040
        %v547 = vshrl.u32 %v546, 23
        %v548 = vsub.s32 %v547, 127
        %v549 = vand.u32 2147483647, %v335
        %v550 = vand.u32 %v549, 8388607
        %v551 = vor.u32 %v550, 8388608
        %v552 = vsub.s32 0, %v551
        %v553 = vadd.s32 %v548, 1
        %vm554 = vcmp.gt.s32.totalorder %v553, 0
        %v555 = vsel %vm554, %v553, 0
        %v556 = vshrl.u32 %v555, 5
        %v557 = vand.u32 %v555, 31
        %v558 = vsub.s32 32, %v557
        %v559 = vshrl.u32 683565275, %v558
        %v560 = vshll.u32 683565275, %v557
        %v561 = vshrl.u32 2475754826, %v558
        %v562 = vor.u32 %v560, %v561
        %v563 = vshll.u32 2475754826, %v557
        %v564 = vshrl.u32 2131351028, %v558
        %v565 = vor.u32 %v563, %v564
        %v566 = vshll.u32 2131351028, %v557
        %v567 = vshrl.u32 2102212464, %v558
        %v568 = vor.u32 %v566, %v567
        %v569 = vshll.u32 2102212464, %v557
        %v570 = vshrl.u32 920167782, %v558
        %v571 = vor.u32 %v569, %v570
        %v572 = vshll.u32 920167782, %v557
        %v573 = vshrl.u32 1326507024, %v558
        %v574 = vor.u32 %v572, %v573
        %vm575 = vcmp.lt.s32.totalorder %v556, 1
        %vm576 = vcmp.lt.s32.totalorder %v556, 2
        %vm577 = vcmp.lt.s32.totalorder %v556, 3
        %vm578 = vcmp.lt.s32.totalorder %v556, 4
        %v579 = vsel %vm575, %v559, %v562
        %v580 = vsel %vm578, %v568, 2102212464
        %v581 = vsel %vm577, %v565, %v580
        %v582 = vsel %vm576, %v579, %v581
        %v583 = vsel %vm575, %v562, %v565
        %v584 = vsel %vm578, %v571, 920167782
        %v585 = vsel %vm577, %v568, %v584
        %v586 = vsel %vm576, %v583, %v585
        %v587 = vsel %vm575, %v565, %v568
        %v588 = vsel %vm578, %v574, 1326507024
        %v589 = vsel %vm577, %v571, %v588
        %v590 = vsel %vm576, %v587, %v589
        %v591 = vshll.u32 %v551, 8
        %v592 = vand.u32 %v591, 65535
        %v593 = vshrl.u32 %v591, 16
        %v594 = vand.u32 %v590, 65535
        %v595 = vshrl.u32 %v590, 16
        %v596 = vmul.u32 %v592, %v594
        %v597 = vmul.u32 %v592, %v595
        %v598 = vmul.u32 %v593, %v594
        %v599 = vmul.u32 %v593, %v595
        %v600 = vshll.u32 %v597, 16
        %v601 = vshrl.u32 %v597, 16
        %v602 = vshll.u32 %v598, 16
        %v603 = vshrl.u32 %v598, 16
        %vm604 = vc.u32 %v596, %v600
        %v605 = vsel %vm604, 1, 0
        %v606 = vadd.s32 %v596, %v600
        %v607 = vadd.s32 %v599, %v605
        %vm608 = vc.u32 %v606, %v602
        %v609 = vsel %vm608, 1, 0
        %v610 = vadd.s32 %v606, %v602
        %v611 = vadd.s32 %v607, %v609
        %v612 = vadd.s32 %v611, %v601
        %v613 = vadd.s32 %v612, %v603
        %v614 = vand.u32 %v591, 65535
        %v615 = vshrl.u32 %v591, 16
        %v616 = vand.u32 %v586, 65535
        %v617 = vshrl.u32 %v586, 16
        %v618 = vmul.u32 %v614, %v616
        %v619 = vmul.u32 %v614, %v617
        %v620 = vmul.u32 %v615, %v616
        %v621 = vmul.u32 %v615, %v617
        %v622 = vshll.u32 %v619, 16
        %v623 = vshrl.u32 %v619, 16
        %v624 = vshll.u32 %v620, 16
        %v625 = vshrl.u32 %v620, 16
        %vm626 = vc.u32 %v618, %v622
        %v627 = vsel %vm626, 1, 0
        %v628 = vadd.s32 %v618, %v622
        %v629 = vadd.s32 %v621, %v627
        %vm630 = vc.u32 %v628, %v624
        %v631 = vsel %vm630, 1, 0
        %v632 = vadd.s32 %v628, %v624
        %v633 = vadd.s32 %v629, %v631
        %v634 = vadd.s32 %v633, %v623
        %v635 = vadd.s32 %v634, %v625
        %v636 = vmul.u32 %v591, %v582
        %v637 = vadd.s32 %v613, %v632
        %vm638 = vc.u32 %v613, %v632
        %v639 = vadd.s32 %v635, 1
        %v640 = vsel %vm638, %v639, %v635
        %v641 = vadd.s32 %v636, %v640
        %v642 = vadd.s32 %v641, 536870912
        %v643 = vshrl.u32 %v642, 30
        %v644 = vshll.u32 %v643, 30
        %v645 = vsub.s32 %v641, %v644
        %vm646 = vcmp.lt.s32.totalorder %v645, 0
        %v647 = vsub.s32 0, %v645
        %v648 = vsel %vm646, %v647, %v645
        %v649 = vclz %v648
        %v650 = vsub.s32 %v649, 2
        %vm651 = vcmp.gt.s32.totalorder 0, %v650
        %v652 = vsel %vm651, 0, %v650
        %v653 = vsub.s32 32, %v652
        %v654 = vshll.u32 %v645, %v652
        %v655 = vshrl.u32 %v637, %v653
        %v656 = vor.u32 %v654, %v655
        %v657 = vsub.s32 4294967266, %v652
        %v658 = vadd.s32 %v657, 127
        %v659 = vshll.u32 %v658, 23
        %v660 = vor.u32 4788187, %v659
        %v661 = vand.u32 2147483647, %v660
        %v663 = vcvt.s32.f32 %v656
        %v664 = vmul.f32 %v663, %v661
        %v665 = vxor.u32 %v664, 2147483648
        %v666 = vsel %vm545, %v665, %v664
        %v667 = vsub.s32 4, %v643
        %v668 = vsel %vm545, %v667, %v643
        %v669 = vsel %vm544, %v335, %v666
        %v670 = vsel %vm544, 0, %v668
        %v671 = vmul.f32 %v669, %v669
        %v672 = vmul.f32 %v671, -0.001358992
        %v673 = vadd.f32 %v672, 0.041655596
        %v674 = vmul.f32 %v671, %v673
        %v675 = vadd.f32 %v674, -0.4999988
        %v676 = vmul.f32 %v671, %v675
        %v677 = vadd.f32 1.0, %v676
        %v678 = vmul.f32 %v669, %v669
        %v679 = vmul.f32 %v678, -0.00019511016
        %v680 = vadd.f32 %v679, 0.008332121
        %v681 = vmul.f32 %v678, %v680
        %v682 = vadd.f32 %v681, -0.16666654
        %v683 = vmul.f32 %v678, %v682
        %v684 = vadd.f32 %v683, 1.0
        %v685 = vmul.f32 %v684, %v669
        %vm686 = vweird.f32 %v335
        %v687 = vadd.s32 %v670, 3
        %v688 = vand.u32 %v687, 3
        %vm689 = vcmp.lt.s32.totalorder %v688, 2
        %vm690 = vcmp.eq.s32.totalorder %v688, 0
        %v691 = vxor.u32 %v685, 2147483648
        %v692 = vsel %vm690, %v677, %v691
        %vm693 = vcmp.eq.s32.totalorder %v688, 2
        %v694 = vxor.u32 %v677, 2147483648
        %v695 = vsel %vm693, %v694, %v685
        %v696 = vsel %vm689, %v692, %v695
        %v697 = vsel %vm686, nan, %v696
        %v698 = vand.u32 2147483647, %v448
        %vm699 = vcmp.le.f32.partialorder %v698, 0.7853982
        %vm700 = vcmp.lt.s32.totalorder %v448, 0
        %v701 = vand.u32 %v448, 2139095040
        %v702 = vshrl.u32 %v701, 23
        %v703 = vsub.s32 %v702, 127
        %v704 = vand.u32 2147483647, %v448
        %v705 = vand.u32 %v704, 8388607
        %v706 = vor.u32 %v705, 8388608
        %v707 = vsub.s32 0, %v706
        %v708 = vadd.s32 %v703, 1
        %vm709 = vcmp.gt.s32.totalorder %v708, 0
        %v710 = vsel %vm709, %v708, 0
        %v711 = vshrl.u32 %v710, 5
        %v712 = vand.u32 %v710, 31
        %v713 = vsub.s32 32, %v712
        %v714 = vshrl.u32 683565275, %v713
        %v715 = vshll.u32 683565275, %v712
        %v716 = vshrl.u32 2475754826, %v713
        %v717 = vor.u32 %v715, %v716
        %v718 = vshll.u32 2475754826, %v712
        %v719 = vshrl.u32 2131351028, %v713
        %v720 = vor.u32 %v718, %v719
        %v721 = vshll.u32 2131351028, %v712
        %v722 = vshrl.u32 2102212464, %v713
        %v723 = vor.u32 %v721, %v722
        %v724 = vshll.u32 2102212464, %v712
        %v725 = vshrl.u32 920167782, %v713
        %v726 = vor.u32 %v724, %v725
        %v727 = vshll.u32 920167782, %v712
        %v728 = vshrl.u32 1326507024, %v713
        %v729 = vor.u32 %v727, %v728
        %vm730 = vcmp.lt.s32.totalorder %v711, 1
        %vm731 = vcmp.lt.s32.totalorder %v711, 2
        %vm732 = vcmp.lt.s32.totalorder %v711, 3
        %vm733 = vcmp.lt.s32.totalorder %v711, 4
        %v734 = vsel %vm730, %v714, %v717
        %v735 = vsel %vm733, %v723, 2102212464
        %v736 = vsel %vm732, %v720, %v735
        %v737 = vsel %vm731, %v734, %v736
        %v738 = vsel %vm730, %v717, %v720
        %v739 = vsel %vm733, %v726, 920167782
        %v740 = vsel %vm732, %v723, %v739
        %v741 = vsel %vm731, %v738, %v740
        %v742 = vsel %vm730, %v720, %v723
        %v743 = vsel %vm733, %v729, 1326507024
        %v744 = vsel %vm732, %v726, %v743
        %v745 = vsel %vm731, %v742, %v744
        %v746 = vshll.u32 %v706, 8
        %v747 = vand.u32 %v746, 65535
        %v748 = vshrl.u32 %v746, 16
        %v749 = vand.u32 %v745, 65535
        %v750 = vshrl.u32 %v745, 16
        %v751 = vmul.u32 %v747, %v749
        %v752 = vmul.u32 %v747, %v750
        %v753 = vmul.u32 %v748, %v749
        %v754 = vmul.u32 %v748, %v750
        %v755 = vshll.u32 %v752, 16
        %v756 = vshrl.u32 %v752, 16
        %v757 = vshll.u32 %v753, 16
        %v758 = vshrl.u32 %v753, 16
        %vm759 = vc.u32 %v751, %v755
        %v760 = vsel %vm759, 1, 0
        %v761 = vadd.s32 %v751, %v755
        %v762 = vadd.s32 %v754, %v760
        %vm763 = vc.u32 %v761, %v757
        %v764 = vsel %vm763, 1, 0
        %v765 = vadd.s32 %v761, %v757
        %v766 = vadd.s32 %v762, %v764
        %v767 = vadd.s32 %v766, %v756
        %v768 = vadd.s32 %v767, %v758
        %v769 = vand.u32 %v746, 65535
        %v770 = vshrl.u32 %v746, 16
        %v771 = vand.u32 %v741, 65535
        %v772 = vshrl.u32 %v741, 16
        %v773 = vmul.u32 %v769, %v771
        %v774 = vmul.u32 %v769, %v772
        %v775 = vmul.u32 %v770, %v771
        %v776 = vmul.u32 %v770, %v772
        %v777 = vshll.u32 %v774, 16
        %v778 = vshrl.u32 %v774, 16
        %v779 = vshll.u32 %v775, 16
        %v780 = vshrl.u32 %v775, 16
        %vm781 = vc.u32 %v773, %v777
        %v782 = vsel %vm781, 1, 0
        %v783 = vadd.s32 %v773, %v777
        %v784 = vadd.s32 %v776, %v782
        %vm785 = vc.u32 %v783, %v779
        %v786 = vsel %vm785, 1, 0
        %v787 = vadd.s32 %v783, %v779
        %v788 = vadd.s32 %v784, %v786
        %v789 = vadd.s32 %v788, %v778
        %v790 = vadd.s32 %v789, %v780
        %v791 = vmul.u32 %v746, %v737
        %v792 = vadd.s32 %v768, %v787
        %vm793 = vc.u32 %v768, %v787
        %v794 = vadd.s32 %v790, 1
        %v795 = vsel %vm793, %v794, %v790
        %v796 = vadd.s32 %v791, %v795
        %v797 = vadd.s32 %v796, 536870912
        %v798 = vshrl.u32 %v797, 30
        %v799 = vshll.u32 %v798, 30
        %v800 = vsub.s32 %v796, %v799
        %vm801 = vcmp.lt.s32.totalorder %v800, 0
        %v802 = vsub.s32 0, %v800
        %v803 = vsel %vm801, %v802, %v800
        %v804 = vclz %v803
        %v805 = vsub.s32 %v804, 2
        %vm806 = vcmp.gt.s32.totalorder 0, %v805
        %v807 = vsel %vm806, 0, %v805
        %v808 = vsub.s32 32, %v807
        %v809 = vshll.u32 %v800, %v807
        %v810 = vshrl.u32 %v792, %v808
        %v811 = vor.u32 %v809, %v810
        %v812 = vsub.s32 4294967266, %v807
        %v813 = vadd.s32 %v812, 127
        %v814 = vshll.u32 %v813, 23
        %v815 = vor.u32 4788187, %v814
        %v816 = vand.u32 2147483647, %v815
        %v818 = vcvt.s32.f32 %v811
        %v819 = vmul.f32 %v818, %v816
        %v820 = vxor.u32 %v819, 2147483648
        %v821 = vsel %vm700, %v820, %v819
        %v822 = vsub.s32 4, %v798
        %v823 = vsel %vm700, %v822, %v798
        %v824 = vsel %vm699, %v448, %v821
        %v825 = vsel %vm699, 0, %v823
        %v826 = vmul.f32 %v824, %v824
        %v827 = vmul.f32 %v826, -0.001358992
        %v828 = vadd.f32 %v827, 0.041655596
        %v829 = vmul.f32 %v826, %v828
        %v830 = vadd.f32 %v829, -0.4999988
        %v831 = vmul.f32 %v826, %v830
        %v832 = vadd.f32 1.0, %v831
        %v833 = vmul.f32 %v824, %v824
        %v834 = vmul.f32 %v833, -0.00019511016
        %v835 = vadd.f32 %v834, 0.008332121
        %v836 = vmul.f32 %v833, %v835
        %v837 = vadd.f32 %v836, -0.16666654
        %v838 = vmul.f32 %v833, %v837
        %v839 = vadd.f32 %v838, 1.0
        %v840 = vmul.f32 %v839, %v824
        %vm841 = vweird.f32 %v448
        %v842 = vadd.s32 %v825, 3
        %v843 = vand.u32 %v842, 3
        %vm844 = vcmp.lt.s32.totalorder %v843, 2
        %vm845 = vcmp.eq.s32.totalorder %v843, 0
        %v846 = vxor.u32 %v840, 2147483648
        %v847 = vsel %vm845, %v832, %v846
        %vm848 = vcmp.eq.s32.totalorder %v843, 2
        %v849 = vxor.u32 %v832, 2147483648
        %v850 = vsel %vm848, %v849, %v840
        %v851 = vsel %vm844, %v847, %v850
        %v852 = vsel %vm841, nan, %v851
        %v853 = vand.u32 2147483647, %v338
        %vm854 = vcmp.le.f32.partialorder %v853, 0.7853982
        %vm855 = vcmp.lt.s32.totalorder %v338, 0
        %v856 = vand.u32 %v338, 2139095040
        %v857 = vshrl.u32 %v856, 23
        %v858 = vsub.s32 %v857, 127
        %v859 = vand.u32 2147483647, %v338
        %v860 = vand.u32 %v859, 8388607
        %v861 = vor.u32 %v860, 8388608
        %v862 = vsub.s32 0, %v861
        %v863 = vadd.s32 %v858, 1
        %vm864 = vcmp.gt.s32.totalorder %v863, 0
        %v865 = vsel %vm864, %v863, 0
        %v866 = vshrl.u32 %v865, 5
        %v867 = vand.u32 %v865, 31
        %v868 = vsub.s32 32, %v867
        %v869 = vshrl.u32 683565275, %v868
        %v870 = vshll.u32 683565275, %v867
        %v871 = vshrl.u32 2475754826, %v868
        %v872 = vor.u32 %v870, %v871
        %v873 = vshll.u32 2475754826, %v867
        %v874 = vshrl.u32 2131351028, %v868
        %v875 = vor.u32 %v873, %v874
        %v876 = vshll.u32 2131351028, %v867
        %v877 = vshrl.u32 2102212464, %v868
        %v878 = vor.u32 %v876, %v877
        %v879 = vshll.u32 2102212464, %v867
        %v880 = vshrl.u32 920167782, %v868
        %v881 = vor.u32 %v879, %v880
        %v882 = vshll.u32 920167782, %v867
        %v883 = vshrl.u32 1326507024, %v868
        %v884 = vor.u32 %v882, %v883
        %vm885 = vcmp.lt.s32.totalorder %v866, 1
        %vm886 = vcmp.lt.s32.totalorder %v866, 2
        %vm887 = vcmp.lt.s32.totalorder %v866, 3
        %vm888 = vcmp.lt.s32.totalorder %v866, 4
        %v889 = vsel %vm885, %v869, %v872
        %v890 = vsel %vm888, %v878, 2102212464
        %v891 = vsel %vm887, %v875, %v890
        %v892 = vsel %vm886, %v889, %v891
        %v893 = vsel %vm885, %v872, %v875
        %v894 = vsel %vm888, %v881, 920167782
        %v895 = vsel %vm887, %v878, %v894
        %v896 = vsel %vm886, %v893, %v895
        %v897 = vsel %vm885, %v875, %v878
        %v898 = vsel %vm888, %v884, 1326507024
        %v899 = vsel %vm887, %v881, %v898
        %v900 = vsel %vm886, %v897, %v899
        %v901 = vshll.u32 %v861, 8
        %v902 = vand.u32 %v901, 65535
        %v903 = vshrl.u32 %v901, 16
        %v904 = vand.u32 %v900, 65535
        %v905 = vshrl.u32 %v900, 16
        %v906 = vmul.u32 %v902, %v904
        %v907 = vmul.u32 %v902, %v905
        %v908 = vmul.u32 %v903, %v904
        %v909 = vmul.u32 %v903, %v905
        %v910 = vshll.u32 %v907, 16
        %v911 = vshrl.u32 %v907, 16
        %v912 = vshll.u32 %v908, 16
        %v913 = vshrl.u32 %v908, 16
        %vm914 = vc.u32 %v906, %v910
        %v915 = vsel %vm914, 1, 0
        %v916 = vadd.s32 %v906, %v910
        %v917 = vadd.s32 %v909, %v915
        %vm918 = vc.u32 %v916, %v912
        %v919 = vsel %vm918, 1, 0
        %v920 = vadd.s32 %v916, %v912
        %v921 = vadd.s32 %v917, %v919
        %v922 = vadd.s32 %v921, %v911
        %v923 = vadd.s32 %v922, %v913
        %v924 = vand.u32 %v901, 65535
        %v925 = vshrl.u32 %v901, 16
        %v926 = vand.u32 %v896, 65535
        %v927 = vshrl.u32 %v896, 16
        %v928 = vmul.u32 %v924, %v926
        %v929 = vmul.u32 %v924, %v927
        %v930 = vmul.u32 %v925, %v926
        %v931 = vmul.u32 %v925, %v927
        %v932 = vshll.u32 %v929, 16
        %v933 = vshrl.u32 %v929, 16
        %v934 = vshll.u32 %v930, 16
        %v935 = vshrl.u32 %v930, 16
        %vm936 = vc.u32 %v928, %v932
        %v937 = vsel %vm936, 1, 0
        %v938 = vadd.s32 %v928, %v932
        %v939 = vadd.s32 %v931, %v937
        %vm940 = vc.u32 %v938, %v934
        %v941 = vsel %vm940, 1, 0
        %v942 = vadd.s32 %v938, %v934
        %v943 = vadd.s32 %v939, %v941
        %v944 = vadd.s32 %v943, %v933
        %v945 = vadd.s32 %v944, %v935
        %v946 = vmul.u32 %v901, %v892
        %v947 = vadd.s32 %v923, %v942
        %vm948 = vc.u32 %v923, %v942
        %v949 = vadd.s32 %v945, 1
        %v950 = vsel %vm948, %v949, %v945
        %v951 = vadd.s32 %v946, %v950
        %v952 = vadd.s32 %v951, 536870912
        %v953 = vshrl.u32 %v952, 30
        %v954 = vshll.u32 %v953, 30
        %v955 = vsub.s32 %v951, %v954
        %vm956 = vcmp.lt.s32.totalorder %v955, 0
        %v957 = vsub.s32 0, %v955
        %v958 = vsel %vm956, %v957, %v955
        %v959 = vclz %v958
        %v960 = vsub.s32 %v959, 2
        %vm961 = vcmp.gt.s32.totalorder 0, %v960
        %v962 = vsel %vm961, 0, %v960
        %v963 = vsub.s32 32, %v962
        %v964 = vshll.u32 %v955, %v962
        %v965 = vshrl.u32 %v947, %v963
        %v966 = vor.u32 %v964, %v965
        %v967 = vsub.s32 4294967266, %v962
        %v968 = vadd.s32 %v967, 127
        %v969 = vshll.u32 %v968, 23
        %v970 = vor.u32 4788187, %v969
        %v971 = vand.u32 2147483647, %v970
        %v973 = vcvt.s32.f32 %v966
        %v974 = vmul.f32 %v973, %v971
        %v975 = vxor.u32 %v974, 2147483648
        %v976 = vsel %vm855, %v975, %v974
        %v977 = vsub.s32 4, %v953
        %v978 = vsel %vm855, %v977, %v953
        %v979 = vsel %vm854, %v338, %v976
        %v980 = vsel %vm854, 0, %v978
        %v981 = vmul.f32 %v979, %v979
        %v982 = vmul.f32 %v981, -0.001358992
        %v983 = vadd.f32 %v982, 0.041655596
        %v984 = vmul.f32 %v981, %v983
        %v985 = vadd.f32 %v984, -0.4999988
        %v986 = vmul.f32 %v981, %v985
        %v987 = vadd.f32 1.0, %v986
        %v988 = vmul.f32 %v979, %v979
        %v989 = vmul.f32 %v988, -0.00019511016
        %v990 = vadd.f32 %v989, 0.008332121
        %v991 = vmul.f32 %v988, %v990
        %v992 = vadd.f32 %v991, -0.16666654
        %v993 = vmul.f32 %v988, %v992
        %v994 = vadd.f32 %v993, 1.0
        %v995 = vmul.f32 %v994, %v979
        %vm996 = vweird.f32 %v338
        %v997 = vadd.s32 %v980, 3
        %v998 = vand.u32 %v997, 3
        %vm999 = vcmp.lt.s32.totalorder %v998, 2
        %vm1000 = vcmp.eq.s32.totalorder %v998, 0
        %v1001 = vxor.u32 %v995, 2147483648
        %v1002 = vsel %vm1000, %v987, %v1001
        %vm1003 = vcmp.eq.s32.totalorder %v998, 2
        %v1004 = vxor.u32 %v987, 2147483648
        %v1005 = vsel %vm1003, %v1004, %v995
        %v1006 = vsel %vm999, %v1002, %v1005
        %v1007 = vsel %vm996, nan, %v1006
        %v1008 = vand.u32 2147483647, %v451
        %vm1009 = vcmp.le.f32.partialorder %v1008, 0.7853982
        %vm1010 = vcmp.lt.s32.totalorder %v451, 0
        %v1011 = vand.u32 %v451, 2139095040
        %v1012 = vshrl.u32 %v1011, 23
        %v1013 = vsub.s32 %v1012, 127
        %v1014 = vand.u32 2147483647, %v451
        %v1015 = vand.u32 %v1014, 8388607
        %v1016 = vor.u32 %v1015, 8388608
        %v1017 = vsub.s32 0, %v1016
        %v1018 = vadd.s32 %v1013, 1
        %vm1019 = vcmp.gt.s32.totalorder %v1018, 0
        %v1020 = vsel %vm1019, %v1018, 0
        %v1021 = vshrl.u32 %v1020, 5
        %v1022 = vand.u32 %v1020, 31
        %v1023 = vsub.s32 32, %v1022
        %v1024 = vshrl.u32 683565275, %v1023
        %v1025 = vshll.u32 683565275, %v1022
        %v1026 = vshrl.u32 2475754826, %v1023
        %v1027 = vor.u32 %v1025, %v1026
        %v1028 = vshll.u32 2475754826, %v1022
        %v1029 = vshrl.u32 2131351028, %v1023
        %v1030 = vor.u32 %v1028, %v1029
        %v1031 = vshll.u32 2131351028, %v1022
        %v1032 = vshrl.u32 2102212464, %v1023
        %v1033 = vor.u32 %v1031, %v1032
        %v1034 = vshll.u32 2102212464, %v1022
        %v1035 = vshrl.u32 920167782, %v1023
        %v1036 = vor.u32 %v1034, %v1035
        %v1037 = vshll.u32 920167782, %v1022
        %v1038 = vshrl.u32 1326507024, %v1023
        %v1039 = vor.u32 %v1037, %v1038
        %vm1040 = vcmp.lt.s32.totalorder %v1021, 1
        %vm1041 = vcmp.lt.s32.totalorder %v1021, 2
        %vm1042 = vcmp.lt.s32.totalorder %v1021, 3
        %vm1043 = vcmp.lt.s32.totalorder %v1021, 4
        %v1044 = vsel %vm1040, %v1024, %v1027
        %v1045 = vsel %vm1043, %v1033, 2102212464
        %v1046 = vsel %vm1042, %v1030, %v1045
        %v1047 = vsel %vm1041, %v1044, %v1046
        %v1048 = vsel %vm1040, %v1027, %v1030
        %v1049 = vsel %vm1043, %v1036, 920167782
        %v1050 = vsel %vm1042, %v1033, %v1049
        %v1051 = vsel %vm1041, %v1048, %v1050
        %v1052 = vsel %vm1040, %v1030, %v1033
        %v1053 = vsel %vm1043, %v1039, 1326507024
        %v1054 = vsel %vm1042, %v1036, %v1053
        %v1055 = vsel %vm1041, %v1052, %v1054
        %v1056 = vshll.u32 %v1016, 8
        %v1057 = vand.u32 %v1056, 65535
        %v1058 = vshrl.u32 %v1056, 16
        %v1059 = vand.u32 %v1055, 65535
        %v1060 = vshrl.u32 %v1055, 16
        %v1061 = vmul.u32 %v1057, %v1059
        %v1062 = vmul.u32 %v1057, %v1060
        %v1063 = vmul.u32 %v1058, %v1059
        %v1064 = vmul.u32 %v1058, %v1060
        %v1065 = vshll.u32 %v1062, 16
        %v1066 = vshrl.u32 %v1062, 16
        %v1067 = vshll.u32 %v1063, 16
        %v1068 = vshrl.u32 %v1063, 16
        %vm1069 = vc.u32 %v1061, %v1065
        %v1070 = vsel %vm1069, 1, 0
        %v1071 = vadd.s32 %v1061, %v1065
        %v1072 = vadd.s32 %v1064, %v1070
        %vm1073 = vc.u32 %v1071, %v1067
        %v1074 = vsel %vm1073, 1, 0
        %v1075 = vadd.s32 %v1071, %v1067
        %v1076 = vadd.s32 %v1072, %v1074
        %v1077 = vadd.s32 %v1076, %v1066
        %v1078 = vadd.s32 %v1077, %v1068
        %v1079 = vand.u32 %v1056, 65535
        %v1080 = vshrl.u32 %v1056, 16
        %v1081 = vand.u32 %v1051, 65535
        %v1082 = vshrl.u32 %v1051, 16
        %v1083 = vmul.u32 %v1079, %v1081
        %v1084 = vmul.u32 %v1079, %v1082
        %v1085 = vmul.u32 %v1080, %v1081
        %v1086 = vmul.u32 %v1080, %v1082
        %v1087 = vshll.u32 %v1084, 16
        %v1088 = vshrl.u32 %v1084, 16
        %v1089 = vshll.u32 %v1085, 16
        %v1090 = vshrl.u32 %v1085, 16
        %vm1091 = vc.u32 %v1083, %v1087
        %v1092 = vsel %vm1091, 1, 0
        %v1093 = vadd.s32 %v1083, %v1087
        %v1094 = vadd.s32 %v1086, %v1092
        %vm1095 = vc.u32 %v1093, %v1089
        %v1096 = vsel %vm1095, 1, 0
        %v1097 = vadd.s32 %v1093, %v1089
        %v1098 = vadd.s32 %v1094, %v1096
        %v1099 = vadd.s32 %v1098, %v1088
        %v1100 = vadd.s32 %v1099, %v1090
        %v1101 = vmul.u32 %v1056, %v1047
        %v1102 = vadd.s32 %v1078, %v1097
        %vm1103 = vc.u32 %v1078, %v1097
        %v1104 = vadd.s32 %v1100, 1
        %v1105 = vsel %vm1103, %v1104, %v1100
        %v1106 = vadd.s32 %v1101, %v1105
        %v1107 = vadd.s32 %v1106, 536870912
        %v1108 = vshrl.u32 %v1107, 30
        %v1109 = vshll.u32 %v1108, 30
        %v1110 = vsub.s32 %v1106, %v1109
        %vm1111 = vcmp.lt.s32.totalorder %v1110, 0
        %v1112 = vsub.s32 0, %v1110
        %v1113 = vsel %vm1111, %v1112, %v1110
        %v1114 = vclz %v1113
        %v1115 = vsub.s32 %v1114, 2
        %vm1116 = vcmp.gt.s32.totalorder 0, %v1115
        %v1117 = vsel %vm1116, 0, %v1115
        %v1118 = vsub.s32 32, %v1117
        %v1119 = vshll.u32 %v1110, %v1117
        %v1120 = vshrl.u32 %v1102, %v1118
        %v1121 = vor.u32 %v1119, %v1120
        %v1122 = vsub.s32 4294967266, %v1117
        %v1123 = vadd.s32 %v1122, 127
        %v1124 = vshll.u32 %v1123, 23
        %v1125 = vor.u32 4788187, %v1124
        %v1126 = vand.u32 2147483647, %v1125
        %v1128 = vcvt.s32.f32 %v1121
        %v1129 = vmul.f32 %v1128, %v1126
        %v1130 = vxor.u32 %v1129, 2147483648
        %v1131 = vsel %vm1010, %v1130, %v1129
        %v1132 = vsub.s32 4, %v1108
        %v1133 = vsel %vm1010, %v1132, %v1108
        %v1134 = vsel %vm1009, %v451, %v1131
        %v1135 = vsel %vm1009, 0, %v1133
        %v1136 = vmul.f32 %v1134, %v1134
        %v1137 = vmul.f32 %v1136, -0.001358992
        %v1138 = vadd.f32 %v1137, 0.041655596
        %v1139 = vmul.f32 %v1136, %v1138
        %v1140 = vadd.f32 %v1139, -0.4999988
        %v1141 = vmul.f32 %v1136, %v1140
        %v1142 = vadd.f32 1.0, %v1141
        %v1143 = vmul.f32 %v1134, %v1134
        %v1144 = vmul.f32 %v1143, -0.00019511016
        %v1145 = vadd.f32 %v1144, 0.008332121
        %v1146 = vmul.f32 %v1143, %v1145
        %v1147 = vadd.f32 %v1146, -0.16666654
        %v1148 = vmul.f32 %v1143, %v1147
        %v1149 = vadd.f32 %v1148, 1.0
        %v1150 = vmul.f32 %v1149, %v1134
        %vm1151 = vweird.f32 %v451
        %v1152 = vadd.s32 %v1135, 3
        %v1153 = vand.u32 %v1152, 3
        %vm1154 = vcmp.lt.s32.totalorder %v1153, 2
        %vm1155 = vcmp.eq.s32.totalorder %v1153, 0
        %v1156 = vxor.u32 %v1150, 2147483648
        %v1157 = vsel %vm1155, %v1142, %v1156
        %vm1158 = vcmp.eq.s32.totalorder %v1153, 2
        %v1159 = vxor.u32 %v1142, 2147483648
        %v1160 = vsel %vm1158, %v1159, %v1150
        %v1161 = vsel %vm1154, %v1157, %v1160
        %v1162 = vsel %vm1151, nan, %v1161
        %v1163 = vand.u32 2147483647, %v341
        %vm1164 = vcmp.le.f32.partialorder %v1163, 0.7853982
        %vm1165 = vcmp.lt.s32.totalorder %v341, 0
        %v1166 = vand.u32 %v341, 2139095040
        %v1167 = vshrl.u32 %v1166, 23
        %v1168 = vsub.s32 %v1167, 127
        %v1169 = vand.u32 2147483647, %v341
        %v1170 = vand.u32 %v1169, 8388607
        %v1171 = vor.u32 %v1170, 8388608
        %v1172 = vsub.s32 0, %v1171
        %v1173 = vadd.s32 %v1168, 1
        %vm1174 = vcmp.gt.s32.totalorder %v1173, 0
        %v1175 = vsel %vm1174, %v1173, 0
        %v1176 = vshrl.u32 %v1175, 5
        %v1177 = vand.u32 %v1175, 31
        %v1178 = vsub.s32 32, %v1177
        %v1179 = vshrl.u32 683565275, %v1178
        %v1180 = vshll.u32 683565275, %v1177
        %v1181 = vshrl.u32 2475754826, %v1178
        %v1182 = vor.u32 %v1180, %v1181
        %v1183 = vshll.u32 2475754826, %v1177
        %v1184 = vshrl.u32 2131351028, %v1178
        %v1185 = vor.u32 %v1183, %v1184
        %v1186 = vshll.u32 2131351028, %v1177
        %v1187 = vshrl.u32 2102212464, %v1178
        %v1188 = vor.u32 %v1186, %v1187
        %v1189 = vshll.u32 2102212464, %v1177
        %v1190 = vshrl.u32 920167782, %v1178
        %v1191 = vor.u32 %v1189, %v1190
        %v1192 = vshll.u32 920167782, %v1177
        %v1193 = vshrl.u32 1326507024, %v1178
        %v1194 = vor.u32 %v1192, %v1193
        %vm1195 = vcmp.lt.s32.totalorder %v1176, 1
        %vm1196 = vcmp.lt.s32.totalorder %v1176, 2
        %vm1197 = vcmp.lt.s32.totalorder %v1176, 3
        %vm1198 = vcmp.lt.s32.totalorder %v1176, 4
        %v1199 = vsel %vm1195, %v1179, %v1182
        %v1200 = vsel %vm1198, %v1188, 2102212464
        %v1201 = vsel %vm1197, %v1185, %v1200
        %v1202 = vsel %vm1196, %v1199, %v1201
        %v1203 = vsel %vm1195, %v1182, %v1185
        %v1204 = vsel %vm1198, %v1191, 920167782
        %v1205 = vsel %vm1197, %v1188, %v1204
        %v1206 = vsel %vm1196, %v1203, %v1205
        %v1207 = vsel %vm1195, %v1185, %v1188
        %v1208 = vsel %vm1198, %v1194, 1326507024
        %v1209 = vsel %vm1197, %v1191, %v1208
        %v1210 = vsel %vm1196, %v1207, %v1209
        %v1211 = vshll.u32 %v1171, 8
        %v1212 = vand.u32 %v1211, 65535
        %v1213 = vshrl.u32 %v1211, 16
        %v1214 = vand.u32 %v1210, 65535
        %v1215 = vshrl.u32 %v1210, 16
        %v1216 = vmul.u32 %v1212, %v1214
        %v1217 = vmul.u32 %v1212, %v1215
        %v1218 = vmul.u32 %v1213, %v1214
        %v1219 = vmul.u32 %v1213, %v1215
        %v1220 = vshll.u32 %v1217, 16
        %v1221 = vshrl.u32 %v1217, 16
        %v1222 = vshll.u32 %v1218, 16
        %v1223 = vshrl.u32 %v1218, 16
        %vm1224 = vc.u32 %v1216, %v1220
        %v1225 = vsel %vm1224, 1, 0
        %v1226 = vadd.s32 %v1216, %v1220
        %v1227 = vadd.s32 %v1219, %v1225
        %vm1228 = vc.u32 %v1226, %v1222
        %v1229 = vsel %vm1228, 1, 0
        %v1230 = vadd.s32 %v1226, %v1222
        %v1231 = vadd.s32 %v1227, %v1229
        %v1232 = vadd.s32 %v1231, %v1221
        %v1233 = vadd.s32 %v1232, %v1223
        %v1234 = vand.u32 %v1211, 65535
        %v1235 = vshrl.u32 %v1211, 16
        %v1236 = vand.u32 %v1206, 65535
        %v1237 = vshrl.u32 %v1206, 16
        %v1238 = vmul.u32 %v1234, %v1236
        %v1239 = vmul.u32 %v1234, %v1237
        %v1240 = vmul.u32 %v1235, %v1236
        %v1241 = vmul.u32 %v1235, %v1237
        %v1242 = vshll.u32 %v1239, 16
        %v1243 = vshrl.u32 %v1239, 16
        %v1244 = vshll.u32 %v1240, 16
        %v1245 = vshrl.u32 %v1240, 16
        %vm1246 = vc.u32 %v1238, %v1242
        %v1247 = vsel %vm1246, 1, 0
        %v1248 = vadd.s32 %v1238, %v1242
        %v1249 = vadd.s32 %v1241, %v1247
        %vm1250 = vc.u32 %v1248, %v1244
        %v1251 = vsel %vm1250, 1, 0
        %v1252 = vadd.s32 %v1248, %v1244
        %v1253 = vadd.s32 %v1249, %v1251
        %v1254 = vadd.s32 %v1253, %v1243
        %v1255 = vadd.s32 %v1254, %v1245
        %v1256 = vmul.u32 %v1211, %v1202
        %v1257 = vadd.s32 %v1233, %v1252
        %vm1258 = vc.u32 %v1233, %v1252
        %v1259 = vadd.s32 %v1255, 1
        %v1260 = vsel %vm1258, %v1259, %v1255
        %v1261 = vadd.s32 %v1256, %v1260
        %v1262 = vadd.s32 %v1261, 536870912
        %v1263 = vshrl.u32 %v1262, 30
        %v1264 = vshll.u32 %v1263, 30
        %v1265 = vsub.s32 %v1261, %v1264
        %vm1266 = vcmp.lt.s32.totalorder %v1265, 0
        %v1267 = vsub.s32 0, %v1265
        %v1268 = vsel %vm1266, %v1267, %v1265
        %v1269 = vclz %v1268
        %v1270 = vsub.s32 %v1269, 2
        %vm1271 = vcmp.gt.s32.totalorder 0, %v1270
        %v1272 = vsel %vm1271, 0, %v1270
        %v1273 = vsub.s32 32, %v1272
        %v1274 = vshll.u32 %v1265, %v1272
        %v1275 = vshrl.u32 %v1257, %v1273
        %v1276 = vor.u32 %v1274, %v1275
        %v1277 = vsub.s32 4294967266, %v1272
        %v1278 = vadd.s32 %v1277, 127
        %v1279 = vshll.u32 %v1278, 23
        %v1280 = vor.u32 4788187, %v1279
        %v1281 = vand.u32 2147483647, %v1280
        %v1283 = vcvt.s32.f32 %v1276
        %v1284 = vmul.f32 %v1283, %v1281
        %v1285 = vxor.u32 %v1284, 2147483648
        %v1286 = vsel %vm1165, %v1285, %v1284
        %v1287 = vsub.s32 4, %v1263
        %v1288 = vsel %vm1165, %v1287, %v1263
        %v1289 = vsel %vm1164, %v341, %v1286
        %v1290 = vsel %vm1164, 0, %v1288
        %v1291 = vmul.f32 %v1289, %v1289
        %v1292 = vmul.f32 %v1291, -0.001358992
        %v1293 = vadd.f32 %v1292, 0.041655596
        %v1294 = vmul.f32 %v1291, %v1293
        %v1295 = vadd.f32 %v1294, -0.4999988
        %v1296 = vmul.f32 %v1291, %v1295
        %v1297 = vadd.f32 1.0, %v1296
        %v1298 = vmul.f32 %v1289, %v1289
        %v1299 = vmul.f32 %v1298, -0.00019511016
        %v1300 = vadd.f32 %v1299, 0.008332121
        %v1301 = vmul.f32 %v1298, %v1300
        %v1302 = vadd.f32 %v1301, -0.16666654
        %v1303 = vmul.f32 %v1298, %v1302
        %v1304 = vadd.f32 %v1303, 1.0
        %v1305 = vmul.f32 %v1304, %v1289
        %vm1306 = vweird.f32 %v341
        %v1307 = vadd.s32 %v1290, 3
        %v1308 = vand.u32 %v1307, 3
        %vm1309 = vcmp.lt.s32.totalorder %v1308, 2
        %vm1310 = vcmp.eq.s32.totalorder %v1308, 0
        %v1311 = vxor.u32 %v1305, 2147483648
        %v1312 = vsel %vm1310, %v1297, %v1311
        %vm1313 = vcmp.eq.s32.totalorder %v1308, 2
        %v1314 = vxor.u32 %v1297, 2147483648
        %v1315 = vsel %vm1313, %v1314, %v1305
        %v1316 = vsel %vm1309, %v1312, %v1315
        %v1317 = vsel %vm1306, nan, %v1316
        %v1318 = vand.u32 2147483647, %v454
        %vm1319 = vcmp.le.f32.partialorder %v1318, 0.7853982
        %vm1320 = vcmp.lt.s32.totalorder %v454, 0
        %v1321 = vand.u32 %v454, 2139095040
        %v1322 = vshrl.u32 %v1321, 23
        %v1323 = vsub.s32 %v1322, 127
        %v1324 = vand.u32 2147483647, %v454
        %v1325 = vand.u32 %v1324, 8388607
        %v1326 = vor.u32 %v1325, 8388608
        %v1327 = vsub.s32 0, %v1326
        %v1328 = vadd.s32 %v1323, 1
        %vm1329 = vcmp.gt.s32.totalorder %v1328, 0
        %v1330 = vsel %vm1329, %v1328, 0
        %v1331 = vshrl.u32 %v1330, 5
        %v1332 = vand.u32 %v1330, 31
        %v1333 = vsub.s32 32, %v1332
        %v1334 = vshrl.u32 683565275, %v1333
        %v1335 = vshll.u32 683565275, %v1332
        %v1336 = vshrl.u32 2475754826, %v1333
        %v1337 = vor.u32 %v1335, %v1336
        %v1338 = vshll.u32 2475754826, %v1332
        %v1339 = vshrl.u32 2131351028, %v1333
        %v1340 = vor.u32 %v1338, %v1339
        %v1341 = vshll.u32 2131351028, %v1332
        %v1342 = vshrl.u32 2102212464, %v1333
        %v1343 = vor.u32 %v1341, %v1342
        %v1344 = vshll.u32 2102212464, %v1332
        %v1345 = vshrl.u32 920167782, %v1333
        %v1346 = vor.u32 %v1344, %v1345
        %v1347 = vshll.u32 920167782, %v1332
        %v1348 = vshrl.u32 1326507024, %v1333
        %v1349 = vor.u32 %v1347, %v1348
        %vm1350 = vcmp.lt.s32.totalorder %v1331, 1
        %vm1351 = vcmp.lt.s32.totalorder %v1331, 2
        %vm1352 = vcmp.lt.s32.totalorder %v1331, 3
        %vm1353 = vcmp.lt.s32.totalorder %v1331, 4
        %v1354 = vsel %vm1350, %v1334, %v1337
        %v1355 = vsel %vm1353, %v1343, 2102212464
        %v1356 = vsel %vm1352, %v1340, %v1355
        %v1357 = vsel %vm1351, %v1354, %v1356
        %v1358 = vsel %vm1350, %v1337, %v1340
        %v1359 = vsel %vm1353, %v1346, 920167782
        %v1360 = vsel %vm1352, %v1343, %v1359
        %v1361 = vsel %vm1351, %v1358, %v1360
        %v1362 = vsel %vm1350, %v1340, %v1343
        %v1363 = vsel %vm1353, %v1349, 1326507024
        %v1364 = vsel %vm1352, %v1346, %v1363
        %v1365 = vsel %vm1351, %v1362, %v1364
        %v1366 = vshll.u32 %v1326, 8
        %v1367 = vand.u32 %v1366, 65535
        %v1368 = vshrl.u32 %v1366, 16
        %v1369 = vand.u32 %v1365, 65535
        %v1370 = vshrl.u32 %v1365, 16
        %v1371 = vmul.u32 %v1367, %v1369
        %v1372 = vmul.u32 %v1367, %v1370
        %v1373 = vmul.u32 %v1368, %v1369
        %v1374 = vmul.u32 %v1368, %v1370
        %v1375 = vshll.u32 %v1372, 16
        %v1376 = vshrl.u32 %v1372, 16
        %v1377 = vshll.u32 %v1373, 16
        %v1378 = vshrl.u32 %v1373, 16
        %vm1379 = vc.u32 %v1371, %v1375
        %v1380 = vsel %vm1379, 1, 0
        %v1381 = vadd.s32 %v1371, %v1375
        %v1382 = vadd.s32 %v1374, %v1380
        %vm1383 = vc.u32 %v1381, %v1377
        %v1384 = vsel %vm1383, 1, 0
        %v1385 = vadd.s32 %v1381, %v1377
        %v1386 = vadd.s32 %v1382, %v1384
        %v1387 = vadd.s32 %v1386, %v1376
        %v1388 = vadd.s32 %v1387, %v1378
        %v1389 = vand.u32 %v1366, 65535
        %v1390 = vshrl.u32 %v1366, 16
        %v1391 = vand.u32 %v1361, 65535
        %v1392 = vshrl.u32 %v1361, 16
        %v1393 = vmul.u32 %v1389, %v1391
        %v1394 = vmul.u32 %v1389, %v1392
        %v1395 = vmul.u32 %v1390, %v1391
        %v1396 = vmul.u32 %v1390, %v1392
        %v1397 = vshll.u32 %v1394, 16
        %v1398 = vshrl.u32 %v1394, 16
        %v1399 = vshll.u32 %v1395, 16
        %v1400 = vshrl.u32 %v1395, 16
        %vm1401 = vc.u32 %v1393, %v1397
        %v1402 = vsel %vm1401, 1, 0
        %v1403 = vadd.s32 %v1393, %v1397
        %v1404 = vadd.s32 %v1396, %v1402
        %vm1405 = vc.u32 %v1403, %v1399
        %v1406 = vsel %vm1405, 1, 0
        %v1407 = vadd.s32 %v1403, %v1399
        %v1408 = vadd.s32 %v1404, %v1406
        %v1409 = vadd.s32 %v1408, %v1398
        %v1410 = vadd.s32 %v1409, %v1400
        %v1411 = vmul.u32 %v1366, %v1357
        %v1412 = vadd.s32 %v1388, %v1407
        %vm1413 = vc.u32 %v1388, %v1407
        %v1414 = vadd.s32 %v1410, 1
        %v1415 = vsel %vm1413, %v1414, %v1410
        %v1416 = vadd.s32 %v1411, %v1415
        %v1417 = vadd.s32 %v1416, 536870912
        %v1418 = vshrl.u32 %v1417, 30
        %v1419 = vshll.u32 %v1418, 30
        %v1420 = vsub.s32 %v1416, %v1419
        %vm1421 = vcmp.lt.s32.totalorder %v1420, 0
        %v1422 = vsub.s32 0, %v1420
        %v1423 = vsel %vm1421, %v1422, %v1420
        %v1424 = vclz %v1423
        %v1425 = vsub.s32 %v1424, 2
        %vm1426 = vcmp.gt.s32.totalorder 0, %v1425
        %v1427 = vsel %vm1426, 0, %v1425
        %v1428 = vsub.s32 32, %v1427
        %v1429 = vshll.u32 %v1420, %v1427
        %v1430 = vshrl.u32 %v1412, %v1428
        %v1431 = vor.u32 %v1429, %v1430
        %v1432 = vsub.s32 4294967266, %v1427
        %v1433 = vadd.s32 %v1432, 127
        %v1434 = vshll.u32 %v1433, 23
        %v1435 = vor.u32 4788187, %v1434
        %v1436 = vand.u32 2147483647, %v1435
        %v1438 = vcvt.s32.f32 %v1431
        %v1439 = vmul.f32 %v1438, %v1436
        %v1440 = vxor.u32 %v1439, 2147483648
        %v1441 = vsel %vm1320, %v1440, %v1439
        %v1442 = vsub.s32 4, %v1418
        %v1443 = vsel %vm1320, %v1442, %v1418
        %v1444 = vsel %vm1319, %v454, %v1441
        %v1445 = vsel %vm1319, 0, %v1443
        %v1446 = vmul.f32 %v1444, %v1444
        %v1447 = vmul.f32 %v1446, -0.001358992
        %v1448 = vadd.f32 %v1447, 0.041655596
        %v1449 = vmul.f32 %v1446, %v1448
        %v1450 = vadd.f32 %v1449, -0.4999988
        %v1451 = vmul.f32 %v1446, %v1450
        %v1452 = vadd.f32 1.0, %v1451
        %v1453 = vmul.f32 %v1444, %v1444
        %v1454 = vmul.f32 %v1453, -0.00019511016
        %v1455 = vadd.f32 %v1454, 0.008332121
        %v1456 = vmul.f32 %v1453, %v1455
        %v1457 = vadd.f32 %v1456, -0.16666654
        %v1458 = vmul.f32 %v1453, %v1457
        %v1459 = vadd.f32 %v1458, 1.0
        %v1460 = vmul.f32 %v1459, %v1444
        %vm1461 = vweird.f32 %v454
        %v1462 = vadd.s32 %v1445, 3
        %v1463 = vand.u32 %v1462, 3
        %vm1464 = vcmp.lt.s32.totalorder %v1463, 2
        %vm1465 = vcmp.eq.s32.totalorder %v1463, 0
        %v1466 = vxor.u32 %v1460, 2147483648
        %v1467 = vsel %vm1465, %v1452, %v1466
        %vm1468 = vcmp.eq.s32.totalorder %v1463, 2
        %v1469 = vxor.u32 %v1452, 2147483648
        %v1470 = vsel %vm1468, %v1469, %v1460
        %v1471 = vsel %vm1464, %v1467, %v1470
        %v1472 = vsel %vm1461, nan, %v1471
        %v1473 = vand.u32 2147483647, %v344
        %vm1474 = vcmp.le.f32.partialorder %v1473, 0.7853982
        %vm1475 = vcmp.lt.s32.totalorder %v344, 0
        %v1476 = vand.u32 %v344, 2139095040
        %v1477 = vshrl.u32 %v1476, 23
        %v1478 = vsub.s32 %v1477, 127
        %v1479 = vand.u32 2147483647, %v344
        %v1480 = vand.u32 %v1479, 8388607
        %v1481 = vor.u32 %v1480, 8388608
        %v1482 = vsub.s32 0, %v1481
        %v1483 = vadd.s32 %v1478, 1
        %vm1484 = vcmp.gt.s32.totalorder %v1483, 0
        %v1485 = vsel %vm1484, %v1483, 0
        %v1486 = vshrl.u32 %v1485, 5
        %v1487 = vand.u32 %v1485, 31
        %v1488 = vsub.s32 32, %v1487
        %v1489 = vshrl.u32 683565275, %v1488
        %v1490 = vshll.u32 683565275, %v1487
        %v1491 = vshrl.u32 2475754826, %v1488
        %v1492 = vor.u32 %v1490, %v1491
        %v1493 = vshll.u32 2475754826, %v1487
        %v1494 = vshrl.u32 2131351028, %v1488
        %v1495 = vor.u32 %v1493, %v1494
        %v1496 = vshll.u32 2131351028, %v1487
        %v1497 = vshrl.u32 2102212464, %v1488
        %v1498 = vor.u32 %v1496, %v1497
        %v1499 = vshll.u32 2102212464, %v1487
        %v1500 = vshrl.u32 920167782, %v1488
        %v1501 = vor.u32 %v1499, %v1500
        %v1502 = vshll.u32 920167782, %v1487
        %v1503 = vshrl.u32 1326507024, %v1488
        %v1504 = vor.u32 %v1502, %v1503
        %vm1505 = vcmp.lt.s32.totalorder %v1486, 1
        %vm1506 = vcmp.lt.s32.totalorder %v1486, 2
        %vm1507 = vcmp.lt.s32.totalorder %v1486, 3
        %vm1508 = vcmp.lt.s32.totalorder %v1486, 4
        %v1509 = vsel %vm1505, %v1489, %v1492
        %v1510 = vsel %vm1508, %v1498, 2102212464
        %v1511 = vsel %vm1507, %v1495, %v1510
        %v1512 = vsel %vm1506, %v1509, %v1511
        %v1513 = vsel %vm1505, %v1492, %v1495
        %v1514 = vsel %vm1508, %v1501, 920167782
        %v1515 = vsel %vm1507, %v1498, %v1514
        %v1516 = vsel %vm1506, %v1513, %v1515
        %v1517 = vsel %vm1505, %v1495, %v1498
        %v1518 = vsel %vm1508, %v1504, 1326507024
        %v1519 = vsel %vm1507, %v1501, %v1518
        %v1520 = vsel %vm1506, %v1517, %v1519
        %v1521 = vshll.u32 %v1481, 8
        %v1522 = vand.u32 %v1521, 65535
        %v1523 = vshrl.u32 %v1521, 16
        %v1524 = vand.u32 %v1520, 65535
        %v1525 = vshrl.u32 %v1520, 16
        %v1526 = vmul.u32 %v1522, %v1524
        %v1527 = vmul.u32 %v1522, %v1525
        %v1528 = vmul.u32 %v1523, %v1524
        %v1529 = vmul.u32 %v1523, %v1525
        %v1530 = vshll.u32 %v1527, 16
        %v1531 = vshrl.u32 %v1527, 16
        %v1532 = vshll.u32 %v1528, 16
        %v1533 = vshrl.u32 %v1528, 16
        %vm1534 = vc.u32 %v1526, %v1530
        %v1535 = vsel %vm1534, 1, 0
        %v1536 = vadd.s32 %v1526, %v1530
        %v1537 = vadd.s32 %v1529, %v1535
        %vm1538 = vc.u32 %v1536, %v1532
        %v1539 = vsel %vm1538, 1, 0
        %v1540 = vadd.s32 %v1536, %v1532
        %v1541 = vadd.s32 %v1537, %v1539
        %v1542 = vadd.s32 %v1541, %v1531
        %v1543 = vadd.s32 %v1542, %v1533
        %v1544 = vand.u32 %v1521, 65535
        %v1545 = vshrl.u32 %v1521, 16
        %v1546 = vand.u32 %v1516, 65535
        %v1547 = vshrl.u32 %v1516, 16
        %v1548 = vmul.u32 %v1544, %v1546
        %v1549 = vmul.u32 %v1544, %v1547
        %v1550 = vmul.u32 %v1545, %v1546
        %v1551 = vmul.u32 %v1545, %v1547
        %v1552 = vshll.u32 %v1549, 16
        %v1553 = vshrl.u32 %v1549, 16
        %v1554 = vshll.u32 %v1550, 16
        %v1555 = vshrl.u32 %v1550, 16
        %vm1556 = vc.u32 %v1548, %v1552
        %v1557 = vsel %vm1556, 1, 0
        %v1558 = vadd.s32 %v1548, %v1552
        %v1559 = vadd.s32 %v1551, %v1557
        %vm1560 = vc.u32 %v1558, %v1554
        %v1561 = vsel %vm1560, 1, 0
        %v1562 = vadd.s32 %v1558, %v1554
        %v1563 = vadd.s32 %v1559, %v1561
        %v1564 = vadd.s32 %v1563, %v1553
        %v1565 = vadd.s32 %v1564, %v1555
        %v1566 = vmul.u32 %v1521, %v1512
        %v1567 = vadd.s32 %v1543, %v1562
        %vm1568 = vc.u32 %v1543, %v1562
        %v1569 = vadd.s32 %v1565, 1
        %v1570 = vsel %vm1568, %v1569, %v1565
        %v1571 = vadd.s32 %v1566, %v1570
        %v1572 = vadd.s32 %v1571, 536870912
        %v1573 = vshrl.u32 %v1572, 30
        %v1574 = vshll.u32 %v1573, 30
        %v1575 = vsub.s32 %v1571, %v1574
        %vm1576 = vcmp.lt.s32.totalorder %v1575, 0
        %v1577 = vsub.s32 0, %v1575
        %v1578 = vsel %vm1576, %v1577, %v1575
        %v1579 = vclz %v1578
        %v1580 = vsub.s32 %v1579, 2
        %vm1581 = vcmp.gt.s32.totalorder 0, %v1580
        %v1582 = vsel %vm1581, 0, %v1580
        %v1583 = vsub.s32 32, %v1582
        %v1584 = vshll.u32 %v1575, %v1582
        %v1585 = vshrl.u32 %v1567, %v1583
        %v1586 = vor.u32 %v1584, %v1585
        %v1587 = vsub.s32 4294967266, %v1582
        %v1588 = vadd.s32 %v1587, 127
        %v1589 = vshll.u32 %v1588, 23
        %v1590 = vor.u32 4788187, %v1589
        %v1591 = vand.u32 2147483647, %v1590
        %v1593 = vcvt.s32.f32 %v1586
        %v1594 = vmul.f32 %v1593, %v1591
        %v1595 = vxor.u32 %v1594, 2147483648
        %v1596 = vsel %vm1475, %v1595, %v1594
        %v1597 = vsub.s32 4, %v1573
        %v1598 = vsel %vm1475, %v1597, %v1573
        %v1599 = vsel %vm1474, %v344, %v1596
        %v1600 = vsel %vm1474, 0, %v1598
        %v1601 = vmul.f32 %v1599, %v1599
        %v1602 = vmul.f32 %v1601, -0.001358992
        %v1603 = vadd.f32 %v1602, 0.041655596
        %v1604 = vmul.f32 %v1601, %v1603
        %v1605 = vadd.f32 %v1604, -0.4999988
        %v1606 = vmul.f32 %v1601, %v1605
        %v1607 = vadd.f32 1.0, %v1606
        %v1608 = vmul.f32 %v1599, %v1599
        %v1609 = vmul.f32 %v1608, -0.00019511016
        %v1610 = vadd.f32 %v1609, 0.008332121
        %v1611 = vmul.f32 %v1608, %v1610
        %v1612 = vadd.f32 %v1611, -0.16666654
        %v1613 = vmul.f32 %v1608, %v1612
        %v1614 = vadd.f32 %v1613, 1.0
        %v1615 = vmul.f32 %v1614, %v1599
        %vm1616 = vweird.f32 %v344
        %v1617 = vadd.s32 %v1600, 3
        %v1618 = vand.u32 %v1617, 3
        %vm1619 = vcmp.lt.s32.totalorder %v1618, 2
        %vm1620 = vcmp.eq.s32.totalorder %v1618, 0
        %v1621 = vxor.u32 %v1615, 2147483648
        %v1622 = vsel %vm1620, %v1607, %v1621
        %vm1623 = vcmp.eq.s32.totalorder %v1618, 2
        %v1624 = vxor.u32 %v1607, 2147483648
        %v1625 = vsel %vm1623, %v1624, %v1615
        %v1626 = vsel %vm1619, %v1622, %v1625
        %v1627 = vsel %vm1616, nan, %v1626
        %v1628 = vand.u32 2147483647, %v457
        %vm1629 = vcmp.le.f32.partialorder %v1628, 0.7853982
        %vm1630 = vcmp.lt.s32.totalorder %v457, 0
        %v1631 = vand.u32 %v457, 2139095040
        %v1632 = vshrl.u32 %v1631, 23
        %v1633 = vsub.s32 %v1632, 127
        %v1634 = vand.u32 2147483647, %v457
        %v1635 = vand.u32 %v1634, 8388607
        %v1636 = vor.u32 %v1635, 8388608
        %v1637 = vsub.s32 0, %v1636
        %v1638 = vadd.s32 %v1633, 1
        %vm1639 = vcmp.gt.s32.totalorder %v1638, 0
        %v1640 = vsel %vm1639, %v1638, 0
        %v1641 = vshrl.u32 %v1640, 5
        %v1642 = vand.u32 %v1640, 31
        %v1643 = vsub.s32 32, %v1642
        %v1644 = vshrl.u32 683565275, %v1643
        %v1645 = vshll.u32 683565275, %v1642
        %v1646 = vshrl.u32 2475754826, %v1643
        %v1647 = vor.u32 %v1645, %v1646
        %v1648 = vshll.u32 2475754826, %v1642
        %v1649 = vshrl.u32 2131351028, %v1643
        %v1650 = vor.u32 %v1648, %v1649
        %v1651 = vshll.u32 2131351028, %v1642
        %v1652 = vshrl.u32 2102212464, %v1643
        %v1653 = vor.u32 %v1651, %v1652
        %v1654 = vshll.u32 2102212464, %v1642
        %v1655 = vshrl.u32 920167782, %v1643
        %v1656 = vor.u32 %v1654, %v1655
        %v1657 = vshll.u32 920167782, %v1642
        %v1658 = vshrl.u32 1326507024, %v1643
        %v1659 = vor.u32 %v1657, %v1658
        %vm1660 = vcmp.lt.s32.totalorder %v1641, 1
        %vm1661 = vcmp.lt.s32.totalorder %v1641, 2
        %vm1662 = vcmp.lt.s32.totalorder %v1641, 3
        %vm1663 = vcmp.lt.s32.totalorder %v1641, 4
        %v1664 = vsel %vm1660, %v1644, %v1647
        %v1665 = vsel %vm1663, %v1653, 2102212464
        %v1666 = vsel %vm1662, %v1650, %v1665
        %v1667 = vsel %vm1661, %v1664, %v1666
        %v1668 = vsel %vm1660, %v1647, %v1650
        %v1669 = vsel %vm1663, %v1656, 920167782
        %v1670 = vsel %vm1662, %v1653, %v1669
        %v1671 = vsel %vm1661, %v1668, %v1670
        %v1672 = vsel %vm1660, %v1650, %v1653
        %v1673 = vsel %vm1663, %v1659, 1326507024
        %v1674 = vsel %vm1662, %v1656, %v1673
        %v1675 = vsel %vm1661, %v1672, %v1674
        %v1676 = vshll.u32 %v1636, 8
        %v1677 = vand.u32 %v1676, 65535
        %v1678 = vshrl.u32 %v1676, 16
        %v1679 = vand.u32 %v1675, 65535
        %v1680 = vshrl.u32 %v1675, 16
        %v1681 = vmul.u32 %v1677, %v1679
        %v1682 = vmul.u32 %v1677, %v1680
        %v1683 = vmul.u32 %v1678, %v1679
        %v1684 = vmul.u32 %v1678, %v1680
        %v1685 = vshll.u32 %v1682, 16
        %v1686 = vshrl.u32 %v1682, 16
        %v1687 = vshll.u32 %v1683, 16
        %v1688 = vshrl.u32 %v1683, 16
        %vm1689 = vc.u32 %v1681, %v1685
        %v1690 = vsel %vm1689, 1, 0
        %v1691 = vadd.s32 %v1681, %v1685
        %v1692 = vadd.s32 %v1684, %v1690
        %vm1693 = vc.u32 %v1691, %v1687
        %v1694 = vsel %vm1693, 1, 0
        %v1695 = vadd.s32 %v1691, %v1687
        %v1696 = vadd.s32 %v1692, %v1694
        %v1697 = vadd.s32 %v1696, %v1686
        %v1698 = vadd.s32 %v1697, %v1688
        %v1699 = vand.u32 %v1676, 65535
        %v1700 = vshrl.u32 %v1676, 16
        %v1701 = vand.u32 %v1671, 65535
        %v1702 = vshrl.u32 %v1671, 16
        %v1703 = vmul.u32 %v1699, %v1701
        %v1704 = vmul.u32 %v1699, %v1702
        %v1705 = vmul.u32 %v1700, %v1701
        %v1706 = vmul.u32 %v1700, %v1702
        %v1707 = vshll.u32 %v1704, 16
        %v1708 = vshrl.u32 %v1704, 16
        %v1709 = vshll.u32 %v1705, 16
        %v1710 = vshrl.u32 %v1705, 16
        %vm1711 = vc.u32 %v1703, %v1707
        %v1712 = vsel %vm1711, 1, 0
        %v1713 = vadd.s32 %v1703, %v1707
        %v1714 = vadd.s32 %v1706, %v1712
        %vm1715 = vc.u32 %v1713, %v1709
        %v1716 = vsel %vm1715, 1, 0
        %v1717 = vadd.s32 %v1713, %v1709
        %v1718 = vadd.s32 %v1714, %v1716
        %v1719 = vadd.s32 %v1718, %v1708
        %v1720 = vadd.s32 %v1719, %v1710
        %v1721 = vmul.u32 %v1676, %v1667
        %v1722 = vadd.s32 %v1698, %v1717
        %vm1723 = vc.u32 %v1698, %v1717
        %v1724 = vadd.s32 %v1720, 1
        %v1725 = vsel %vm1723, %v1724, %v1720
        %v1726 = vadd.s32 %v1721, %v1725
        %v1727 = vadd.s32 %v1726, 536870912
        %v1728 = vshrl.u32 %v1727, 30
        %v1729 = vshll.u32 %v1728, 30
        %v1730 = vsub.s32 %v1726, %v1729
        %vm1731 = vcmp.lt.s32.totalorder %v1730, 0
        %v1732 = vsub.s32 0, %v1730
        %v1733 = vsel %vm1731, %v1732, %v1730
        %v1734 = vclz %v1733
        %v1735 = vsub.s32 %v1734, 2
        %vm1736 = vcmp.gt.s32.totalorder 0, %v1735
        %v1737 = vsel %vm1736, 0, %v1735
        %v1738 = vsub.s32 32, %v1737
        %v1739 = vshll.u32 %v1730, %v1737
        %v1740 = vshrl.u32 %v1722, %v1738
        %v1741 = vor.u32 %v1739, %v1740
        %v1742 = vsub.s32 4294967266, %v1737
        %v1743 = vadd.s32 %v1742, 127
        %v1744 = vshll.u32 %v1743, 23
        %v1745 = vor.u32 4788187, %v1744
        %v1746 = vand.u32 2147483647, %v1745
        %v1748 = vcvt.s32.f32 %v1741
        %v1749 = vmul.f32 %v1748, %v1746
        %v1750 = vxor.u32 %v1749, 2147483648
        %v1751 = vsel %vm1630, %v1750, %v1749
        %v1752 = vsub.s32 4, %v1728
        %v1753 = vsel %vm1630, %v1752, %v1728
        %v1754 = vsel %vm1629, %v457, %v1751
        %v1755 = vsel %vm1629, 0, %v1753
        %v1756 = vmul.f32 %v1754, %v1754
        %v1757 = vmul.f32 %v1756, -0.001358992
        %v1758 = vadd.f32 %v1757, 0.041655596
        %v1759 = vmul.f32 %v1756, %v1758
        %v1760 = vadd.f32 %v1759, -0.4999988
        %v1761 = vmul.f32 %v1756, %v1760
        %v1762 = vadd.f32 1.0, %v1761
        %v1763 = vmul.f32 %v1754, %v1754
        %v1764 = vmul.f32 %v1763, -0.00019511016
        %v1765 = vadd.f32 %v1764, 0.008332121
        %v1766 = vmul.f32 %v1763, %v1765
        %v1767 = vadd.f32 %v1766, -0.16666654
        %v1768 = vmul.f32 %v1763, %v1767
        %v1769 = vadd.f32 %v1768, 1.0
        %v1770 = vmul.f32 %v1769, %v1754
        %vm1771 = vweird.f32 %v457
        %v1772 = vadd.s32 %v1755, 3
        %v1773 = vand.u32 %v1772, 3
        %vm1774 = vcmp.lt.s32.totalorder %v1773, 2
        %vm1775 = vcmp.eq.s32.totalorder %v1773, 0
        %v1776 = vxor.u32 %v1770, 2147483648
        %v1777 = vsel %vm1775, %v1762, %v1776
        %vm1778 = vcmp.eq.s32.totalorder %v1773, 2
        %v1779 = vxor.u32 %v1762, 2147483648
        %v1780 = vsel %vm1778, %v1779, %v1770
        %v1781 = vsel %vm1774, %v1777, %v1780
        %v1782 = vsel %vm1771, nan, %v1781
        %v1783 = vand.u32 2147483647, %v347
        %vm1784 = vcmp.le.f32.partialorder %v1783, 0.7853982
        %vm1785 = vcmp.lt.s32.totalorder %v347, 0
        %v1786 = vand.u32 %v347, 2139095040
        %v1787 = vshrl.u32 %v1786, 23
        %v1788 = vsub.s32 %v1787, 127
        %v1789 = vand.u32 2147483647, %v347
        %v1790 = vand.u32 %v1789, 8388607
        %v1791 = vor.u32 %v1790, 8388608
        %v1792 = vsub.s32 0, %v1791
        %v1793 = vadd.s32 %v1788, 1
        %vm1794 = vcmp.gt.s32.totalorder %v1793, 0
        %v1795 = vsel %vm1794, %v1793, 0
        %v1796 = vshrl.u32 %v1795, 5
        %v1797 = vand.u32 %v1795, 31
        %v1798 = vsub.s32 32, %v1797
        %v1799 = vshrl.u32 683565275, %v1798
        %v1800 = vshll.u32 683565275, %v1797
        %v1801 = vshrl.u32 2475754826, %v1798
        %v1802 = vor.u32 %v1800, %v1801
        %v1803 = vshll.u32 2475754826, %v1797
        %v1804 = vshrl.u32 2131351028, %v1798
        %v1805 = vor.u32 %v1803, %v1804
        %v1806 = vshll.u32 2131351028, %v1797
        %v1807 = vshrl.u32 2102212464, %v1798
        %v1808 = vor.u32 %v1806, %v1807
        %v1809 = vshll.u32 2102212464, %v1797
        %v1810 = vshrl.u32 920167782, %v1798
        %v1811 = vor.u32 %v1809, %v1810
        %v1812 = vshll.u32 920167782, %v1797
        %v1813 = vshrl.u32 1326507024, %v1798
        %v1814 = vor.u32 %v1812, %v1813
        %vm1815 = vcmp.lt.s32.totalorder %v1796, 1
        %vm1816 = vcmp.lt.s32.totalorder %v1796, 2
        %vm1817 = vcmp.lt.s32.totalorder %v1796, 3
        %vm1818 = vcmp.lt.s32.totalorder %v1796, 4
        %v1819 = vsel %vm1815, %v1799, %v1802
        %v1820 = vsel %vm1818, %v1808, 2102212464
        %v1821 = vsel %vm1817, %v1805, %v1820
        %v1822 = vsel %vm1816, %v1819, %v1821
        %v1823 = vsel %vm1815, %v1802, %v1805
        %v1824 = vsel %vm1818, %v1811, 920167782
        %v1825 = vsel %vm1817, %v1808, %v1824
        %v1826 = vsel %vm1816, %v1823, %v1825
        %v1827 = vsel %vm1815, %v1805, %v1808
        %v1828 = vsel %vm1818, %v1814, 1326507024
        %v1829 = vsel %vm1817, %v1811, %v1828
        %v1830 = vsel %vm1816, %v1827, %v1829
        %v1831 = vshll.u32 %v1791, 8
        %v1832 = vand.u32 %v1831, 65535
        %v1833 = vshrl.u32 %v1831, 16
        %v1834 = vand.u32 %v1830, 65535
        %v1835 = vshrl.u32 %v1830, 16
        %v1836 = vmul.u32 %v1832, %v1834
        %v1837 = vmul.u32 %v1832, %v1835
        %v1838 = vmul.u32 %v1833, %v1834
        %v1839 = vmul.u32 %v1833, %v1835
        %v1840 = vshll.u32 %v1837, 16
        %v1841 = vshrl.u32 %v1837, 16
        %v1842 = vshll.u32 %v1838, 16
        %v1843 = vshrl.u32 %v1838, 16
        %vm1844 = vc.u32 %v1836, %v1840
        %v1845 = vsel %vm1844, 1, 0
        %v1846 = vadd.s32 %v1836, %v1840
        %v1847 = vadd.s32 %v1839, %v1845
        %vm1848 = vc.u32 %v1846, %v1842
        %v1849 = vsel %vm1848, 1, 0
        %v1850 = vadd.s32 %v1846, %v1842
        %v1851 = vadd.s32 %v1847, %v1849
        %v1852 = vadd.s32 %v1851, %v1841
        %v1853 = vadd.s32 %v1852, %v1843
        %v1854 = vand.u32 %v1831, 65535
        %v1855 = vshrl.u32 %v1831, 16
        %v1856 = vand.u32 %v1826, 65535
        %v1857 = vshrl.u32 %v1826, 16
        %v1858 = vmul.u32 %v1854, %v1856
        %v1859 = vmul.u32 %v1854, %v1857
        %v1860 = vmul.u32 %v1855, %v1856
        %v1861 = vmul.u32 %v1855, %v1857
        %v1862 = vshll.u32 %v1859, 16
        %v1863 = vshrl.u32 %v1859, 16
        %v1864 = vshll.u32 %v1860, 16
        %v1865 = vshrl.u32 %v1860, 16
        %vm1866 = vc.u32 %v1858, %v1862
        %v1867 = vsel %vm1866, 1, 0
        %v1868 = vadd.s32 %v1858, %v1862
        %v1869 = vadd.s32 %v1861, %v1867
        %vm1870 = vc.u32 %v1868, %v1864
        %v1871 = vsel %vm1870, 1, 0
        %v1872 = vadd.s32 %v1868, %v1864
        %v1873 = vadd.s32 %v1869, %v1871
        %v1874 = vadd.s32 %v1873, %v1863
        %v1875 = vadd.s32 %v1874, %v1865
        %v1876 = vmul.u32 %v1831, %v1822
        %v1877 = vadd.s32 %v1853, %v1872
        %vm1878 = vc.u32 %v1853, %v1872
        %v1879 = vadd.s32 %v1875, 1
        %v1880 = vsel %vm1878, %v1879, %v1875
        %v1881 = vadd.s32 %v1876, %v1880
        %v1882 = vadd.s32 %v1881, 536870912
        %v1883 = vshrl.u32 %v1882, 30
        %v1884 = vshll.u32 %v1883, 30
        %v1885 = vsub.s32 %v1881, %v1884
        %vm1886 = vcmp.lt.s32.totalorder %v1885, 0
        %v1887 = vsub.s32 0, %v1885
        %v1888 = vsel %vm1886, %v1887, %v1885
        %v1889 = vclz %v1888
        %v1890 = vsub.s32 %v1889, 2
        %vm1891 = vcmp.gt.s32.totalorder 0, %v1890
        %v1892 = vsel %vm1891, 0, %v1890
        %v1893 = vsub.s32 32, %v1892
        %v1894 = vshll.u32 %v1885, %v1892
        %v1895 = vshrl.u32 %v1877, %v1893
        %v1896 = vor.u32 %v1894, %v1895
        %v1897 = vsub.s32 4294967266, %v1892
        %v1898 = vadd.s32 %v1897, 127
        %v1899 = vshll.u32 %v1898, 23
        %v1900 = vor.u32 4788187, %v1899
        %v1901 = vand.u32 2147483647, %v1900
        %v1903 = vcvt.s32.f32 %v1896
        %v1904 = vmul.f32 %v1903, %v1901
        %v1905 = vxor.u32 %v1904, 2147483648
        %v1906 = vsel %vm1785, %v1905, %v1904
        %v1907 = vsub.s32 4, %v1883
        %v1908 = vsel %vm1785, %v1907, %v1883
        %v1909 = vsel %vm1784, %v347, %v1906
        %v1910 = vsel %vm1784, 0, %v1908
        %v1911 = vmul.f32 %v1909, %v1909
        %v1912 = vmul.f32 %v1911, -0.001358992
        %v1913 = vadd.f32 %v1912, 0.041655596
        %v1914 = vmul.f32 %v1911, %v1913
        %v1915 = vadd.f32 %v1914, -0.4999988
        %v1916 = vmul.f32 %v1911, %v1915
        %v1917 = vadd.f32 1.0, %v1916
        %v1918 = vmul.f32 %v1909, %v1909
        %v1919 = vmul.f32 %v1918, -0.00019511016
        %v1920 = vadd.f32 %v1919, 0.008332121
        %v1921 = vmul.f32 %v1918, %v1920
        %v1922 = vadd.f32 %v1921, -0.16666654
        %v1923 = vmul.f32 %v1918, %v1922
        %v1924 = vadd.f32 %v1923, 1.0
        %v1925 = vmul.f32 %v1924, %v1909
        %vm1926 = vweird.f32 %v347
        %v1927 = vadd.s32 %v1910, 3
        %v1928 = vand.u32 %v1927, 3
        %vm1929 = vcmp.lt.s32.totalorder %v1928, 2
        %vm1930 = vcmp.eq.s32.totalorder %v1928, 0
        %v1931 = vxor.u32 %v1925, 2147483648
        %v1932 = vsel %vm1930, %v1917, %v1931
        %vm1933 = vcmp.eq.s32.totalorder %v1928, 2
        %v1934 = vxor.u32 %v1917, 2147483648
        %v1935 = vsel %vm1933, %v1934, %v1925
        %v1936 = vsel %vm1929, %v1932, %v1935
        %v1937 = vsel %vm1926, nan, %v1936
        %v1938 = vand.u32 2147483647, %v460
        %vm1939 = vcmp.le.f32.partialorder %v1938, 0.7853982
        %vm1940 = vcmp.lt.s32.totalorder %v460, 0
        %v1941 = vand.u32 %v460, 2139095040
        %v1942 = vshrl.u32 %v1941, 23
        %v1943 = vsub.s32 %v1942, 127
        %v1944 = vand.u32 2147483647, %v460
        %v1945 = vand.u32 %v1944, 8388607
        %v1946 = vor.u32 %v1945, 8388608
        %v1947 = vsub.s32 0, %v1946
        %v1948 = vadd.s32 %v1943, 1
        %vm1949 = vcmp.gt.s32.totalorder %v1948, 0
        %v1950 = vsel %vm1949, %v1948, 0
        %v1951 = vshrl.u32 %v1950, 5
        %v1952 = vand.u32 %v1950, 31
        %v1953 = vsub.s32 32, %v1952
        %v1954 = vshrl.u32 683565275, %v1953
        %v1955 = vshll.u32 683565275, %v1952
        %v1956 = vshrl.u32 2475754826, %v1953
        %v1957 = vor.u32 %v1955, %v1956
        %v1958 = vshll.u32 2475754826, %v1952
        %v1959 = vshrl.u32 2131351028, %v1953
        %v1960 = vor.u32 %v1958, %v1959
        %v1961 = vshll.u32 2131351028, %v1952
        %v1962 = vshrl.u32 2102212464, %v1953
        %v1963 = vor.u32 %v1961, %v1962
        %v1964 = vshll.u32 2102212464, %v1952
        %v1965 = vshrl.u32 920167782, %v1953
        %v1966 = vor.u32 %v1964, %v1965
        %v1967 = vshll.u32 920167782, %v1952
        %v1968 = vshrl.u32 1326507024, %v1953
        %v1969 = vor.u32 %v1967, %v1968
        %vm1970 = vcmp.lt.s32.totalorder %v1951, 1
        %vm1971 = vcmp.lt.s32.totalorder %v1951, 2
        %vm1972 = vcmp.lt.s32.totalorder %v1951, 3
        %vm1973 = vcmp.lt.s32.totalorder %v1951, 4
        %v1974 = vsel %vm1970, %v1954, %v1957
        %v1975 = vsel %vm1973, %v1963, 2102212464
        %v1976 = vsel %vm1972, %v1960, %v1975
        %v1977 = vsel %vm1971, %v1974, %v1976
        %v1978 = vsel %vm1970, %v1957, %v1960
        %v1979 = vsel %vm1973, %v1966, 920167782
        %v1980 = vsel %vm1972, %v1963, %v1979
        %v1981 = vsel %vm1971, %v1978, %v1980
        %v1982 = vsel %vm1970, %v1960, %v1963
        %v1983 = vsel %vm1973, %v1969, 1326507024
        %v1984 = vsel %vm1972, %v1966, %v1983
        %v1985 = vsel %vm1971, %v1982, %v1984
        %v1986 = vshll.u32 %v1946, 8
        %v1987 = vand.u32 %v1986, 65535
        %v1988 = vshrl.u32 %v1986, 16
        %v1989 = vand.u32 %v1985, 65535
        %v1990 = vshrl.u32 %v1985, 16
        %v1991 = vmul.u32 %v1987, %v1989
        %v1992 = vmul.u32 %v1987, %v1990
        %v1993 = vmul.u32 %v1988, %v1989
        %v1994 = vmul.u32 %v1988, %v1990
        %v1995 = vshll.u32 %v1992, 16
        %v1996 = vshrl.u32 %v1992, 16
        %v1997 = vshll.u32 %v1993, 16
        %v1998 = vshrl.u32 %v1993, 16
        %vm1999 = vc.u32 %v1991, %v1995
        %v2000 = vsel %vm1999, 1, 0
        %v2001 = vadd.s32 %v1991, %v1995
        %v2002 = vadd.s32 %v1994, %v2000
        %vm2003 = vc.u32 %v2001, %v1997
        %v2004 = vsel %vm2003, 1, 0
        %v2005 = vadd.s32 %v2001, %v1997
        %v2006 = vadd.s32 %v2002, %v2004
        %v2007 = vadd.s32 %v2006, %v1996
        %v2008 = vadd.s32 %v2007, %v1998
        %v2009 = vand.u32 %v1986, 65535
        %v2010 = vshrl.u32 %v1986, 16
        %v2011 = vand.u32 %v1981, 65535
        %v2012 = vshrl.u32 %v1981, 16
        %v2013 = vmul.u32 %v2009, %v2011
        %v2014 = vmul.u32 %v2009, %v2012
        %v2015 = vmul.u32 %v2010, %v2011
        %v2016 = vmul.u32 %v2010, %v2012
        %v2017 = vshll.u32 %v2014, 16
        %v2018 = vshrl.u32 %v2014, 16
        %v2019 = vshll.u32 %v2015, 16
        %v2020 = vshrl.u32 %v2015, 16
        %vm2021 = vc.u32 %v2013, %v2017
        %v2022 = vsel %vm2021, 1, 0
        %v2023 = vadd.s32 %v2013, %v2017
        %v2024 = vadd.s32 %v2016, %v2022
        %vm2025 = vc.u32 %v2023, %v2019
        %v2026 = vsel %vm2025, 1, 0
        %v2027 = vadd.s32 %v2023, %v2019
        %v2028 = vadd.s32 %v2024, %v2026
        %v2029 = vadd.s32 %v2028, %v2018
        %v2030 = vadd.s32 %v2029, %v2020
        %v2031 = vmul.u32 %v1986, %v1977
        %v2032 = vadd.s32 %v2008, %v2027
        %vm2033 = vc.u32 %v2008, %v2027
        %v2034 = vadd.s32 %v2030, 1
        %v2035 = vsel %vm2033, %v2034, %v2030
        %v2036 = vadd.s32 %v2031, %v2035
        %v2037 = vadd.s32 %v2036, 536870912
        %v2038 = vshrl.u32 %v2037, 30
        %v2039 = vshll.u32 %v2038, 30
        %v2040 = vsub.s32 %v2036, %v2039
        %vm2041 = vcmp.lt.s32.totalorder %v2040, 0
        %v2042 = vsub.s32 0, %v2040
        %v2043 = vsel %vm2041, %v2042, %v2040
        %v2044 = vclz %v2043
        %v2045 = vsub.s32 %v2044, 2
        %vm2046 = vcmp.gt.s32.totalorder 0, %v2045
        %v2047 = vsel %vm2046, 0, %v2045
        %v2048 = vsub.s32 32, %v2047
        %v2049 = vshll.u32 %v2040, %v2047
        %v2050 = vshrl.u32 %v2032, %v2048
        %v2051 = vor.u32 %v2049, %v2050
        %v2052 = vsub.s32 4294967266, %v2047
        %v2053 = vadd.s32 %v2052, 127
        %v2054 = vshll.u32 %v2053, 23
        %v2055 = vor.u32 4788187, %v2054
        %v2056 = vand.u32 2147483647, %v2055
        %v2058 = vcvt.s32.f32 %v2051
        %v2059 = vmul.f32 %v2058, %v2056
        %v2060 = vxor.u32 %v2059, 2147483648
        %v2061 = vsel %vm1940, %v2060, %v2059
        %v2062 = vsub.s32 4, %v2038
        %v2063 = vsel %vm1940, %v2062, %v2038
        %v2064 = vsel %vm1939, %v460, %v2061
        %v2065 = vsel %vm1939, 0, %v2063
        %v2066 = vmul.f32 %v2064, %v2064
        %v2067 = vmul.f32 %v2066, -0.001358992
        %v2068 = vadd.f32 %v2067, 0.041655596
        %v2069 = vmul.f32 %v2066, %v2068
        %v2070 = vadd.f32 %v2069, -0.4999988
        %v2071 = vmul.f32 %v2066, %v2070
        %v2072 = vadd.f32 1.0, %v2071
        %v2073 = vmul.f32 %v2064, %v2064
        %v2074 = vmul.f32 %v2073, -0.00019511016
        %v2075 = vadd.f32 %v2074, 0.008332121
        %v2076 = vmul.f32 %v2073, %v2075
        %v2077 = vadd.f32 %v2076, -0.16666654
        %v2078 = vmul.f32 %v2073, %v2077
        %v2079 = vadd.f32 %v2078, 1.0
        %v2080 = vmul.f32 %v2079, %v2064
        %vm2081 = vweird.f32 %v460
        %v2082 = vadd.s32 %v2065, 3
        %v2083 = vand.u32 %v2082, 3
        %vm2084 = vcmp.lt.s32.totalorder %v2083, 2
        %vm2085 = vcmp.eq.s32.totalorder %v2083, 0
        %v2086 = vxor.u32 %v2080, 2147483648
        %v2087 = vsel %vm2085, %v2072, %v2086
        %vm2088 = vcmp.eq.s32.totalorder %v2083, 2
        %v2089 = vxor.u32 %v2072, 2147483648
        %v2090 = vsel %vm2088, %v2089, %v2080
        %v2091 = vsel %vm2084, %v2087, %v2090
        %v2092 = vsel %vm2081, nan, %v2091
        %v2093 = vand.u32 2147483647, %v350
        %vm2094 = vcmp.le.f32.partialorder %v2093, 0.7853982
        %vm2095 = vcmp.lt.s32.totalorder %v350, 0
        %v2096 = vand.u32 %v350, 2139095040
        %v2097 = vshrl.u32 %v2096, 23
        %v2098 = vsub.s32 %v2097, 127
        %v2099 = vand.u32 2147483647, %v350
        %v2100 = vand.u32 %v2099, 8388607
        %v2101 = vor.u32 %v2100, 8388608
        %v2102 = vsub.s32 0, %v2101
        %v2103 = vadd.s32 %v2098, 1
        %vm2104 = vcmp.gt.s32.totalorder %v2103, 0
        %v2105 = vsel %vm2104, %v2103, 0
        %v2106 = vshrl.u32 %v2105, 5
        %v2107 = vand.u32 %v2105, 31
        %v2108 = vsub.s32 32, %v2107
        %v2109 = vshrl.u32 683565275, %v2108
        %v2110 = vshll.u32 683565275, %v2107
        %v2111 = vshrl.u32 2475754826, %v2108
        %v2112 = vor.u32 %v2110, %v2111
        %v2113 = vshll.u32 2475754826, %v2107
        %v2114 = vshrl.u32 2131351028, %v2108
        %v2115 = vor.u32 %v2113, %v2114
        %v2116 = vshll.u32 2131351028, %v2107
        %v2117 = vshrl.u32 2102212464, %v2108
        %v2118 = vor.u32 %v2116, %v2117
        %v2119 = vshll.u32 2102212464, %v2107
        %v2120 = vshrl.u32 920167782, %v2108
        %v2121 = vor.u32 %v2119, %v2120
        %v2122 = vshll.u32 920167782, %v2107
        %v2123 = vshrl.u32 1326507024, %v2108
        %v2124 = vor.u32 %v2122, %v2123
        %vm2125 = vcmp.lt.s32.totalorder %v2106, 1
        %vm2126 = vcmp.lt.s32.totalorder %v2106, 2
        %vm2127 = vcmp.lt.s32.totalorder %v2106, 3
        %vm2128 = vcmp.lt.s32.totalorder %v2106, 4
        %v2129 = vsel %vm2125, %v2109, %v2112
        %v2130 = vsel %vm2128, %v2118, 2102212464
        %v2131 = vsel %vm2127, %v2115, %v2130
        %v2132 = vsel %vm2126, %v2129, %v2131
        %v2133 = vsel %vm2125, %v2112, %v2115
        %v2134 = vsel %vm2128, %v2121, 920167782
        %v2135 = vsel %vm2127, %v2118, %v2134
        %v2136 = vsel %vm2126, %v2133, %v2135
        %v2137 = vsel %vm2125, %v2115, %v2118
        %v2138 = vsel %vm2128, %v2124, 1326507024
        %v2139 = vsel %vm2127, %v2121, %v2138
        %v2140 = vsel %vm2126, %v2137, %v2139
        %v2141 = vshll.u32 %v2101, 8
        %v2142 = vand.u32 %v2141, 65535
        %v2143 = vshrl.u32 %v2141, 16
        %v2144 = vand.u32 %v2140, 65535
        %v2145 = vshrl.u32 %v2140, 16
        %v2146 = vmul.u32 %v2142, %v2144
        %v2147 = vmul.u32 %v2142, %v2145
        %v2148 = vmul.u32 %v2143, %v2144
        %v2149 = vmul.u32 %v2143, %v2145
        %v2150 = vshll.u32 %v2147, 16
        %v2151 = vshrl.u32 %v2147, 16
        %v2152 = vshll.u32 %v2148, 16
        %v2153 = vshrl.u32 %v2148, 16
        %vm2154 = vc.u32 %v2146, %v2150
        %v2155 = vsel %vm2154, 1, 0
        %v2156 = vadd.s32 %v2146, %v2150
        %v2157 = vadd.s32 %v2149, %v2155
        %vm2158 = vc.u32 %v2156, %v2152
        %v2159 = vsel %vm2158, 1, 0
        %v2160 = vadd.s32 %v2156, %v2152
        %v2161 = vadd.s32 %v2157, %v2159
        %v2162 = vadd.s32 %v2161, %v2151
        %v2163 = vadd.s32 %v2162, %v2153
        %v2164 = vand.u32 %v2141, 65535
        %v2165 = vshrl.u32 %v2141, 16
        %v2166 = vand.u32 %v2136, 65535
        %v2167 = vshrl.u32 %v2136, 16
        %v2168 = vmul.u32 %v2164, %v2166
        %v2169 = vmul.u32 %v2164, %v2167
        %v2170 = vmul.u32 %v2165, %v2166
        %v2171 = vmul.u32 %v2165, %v2167
        %v2172 = vshll.u32 %v2169, 16
        %v2173 = vshrl.u32 %v2169, 16
        %v2174 = vshll.u32 %v2170, 16
        %v2175 = vshrl.u32 %v2170, 16
        %vm2176 = vc.u32 %v2168, %v2172
        %v2177 = vsel %vm2176, 1, 0
        %v2178 = vadd.s32 %v2168, %v2172
        %v2179 = vadd.s32 %v2171, %v2177
        %vm2180 = vc.u32 %v2178, %v2174
        %v2181 = vsel %vm2180, 1, 0
        %v2182 = vadd.s32 %v2178, %v2174
        %v2183 = vadd.s32 %v2179, %v2181
        %v2184 = vadd.s32 %v2183, %v2173
        %v2185 = vadd.s32 %v2184, %v2175
        %v2186 = vmul.u32 %v2141, %v2132
        %v2187 = vadd.s32 %v2163, %v2182
        %vm2188 = vc.u32 %v2163, %v2182
        %v2189 = vadd.s32 %v2185, 1
        %v2190 = vsel %vm2188, %v2189, %v2185
        %v2191 = vadd.s32 %v2186, %v2190
        %v2192 = vadd.s32 %v2191, 536870912
        %v2193 = vshrl.u32 %v2192, 30
        %v2194 = vshll.u32 %v2193, 30
        %v2195 = vsub.s32 %v2191, %v2194
        %vm2196 = vcmp.lt.s32.totalorder %v2195, 0
        %v2197 = vsub.s32 0, %v2195
        %v2198 = vsel %vm2196, %v2197, %v2195
        %v2199 = vclz %v2198
        %v2200 = vsub.s32 %v2199, 2
        %vm2201 = vcmp.gt.s32.totalorder 0, %v2200
        %v2202 = vsel %vm2201, 0, %v2200
        %v2203 = vsub.s32 32, %v2202
        %v2204 = vshll.u32 %v2195, %v2202
        %v2205 = vshrl.u32 %v2187, %v2203
        %v2206 = vor.u32 %v2204, %v2205
        %v2207 = vsub.s32 4294967266, %v2202
        %v2208 = vadd.s32 %v2207, 127
        %v2209 = vshll.u32 %v2208, 23
        %v2210 = vor.u32 4788187, %v2209
        %v2211 = vand.u32 2147483647, %v2210
        %v2213 = vcvt.s32.f32 %v2206
        %v2214 = vmul.f32 %v2213, %v2211
        %v2215 = vxor.u32 %v2214, 2147483648
        %v2216 = vsel %vm2095, %v2215, %v2214
        %v2217 = vsub.s32 4, %v2193
        %v2218 = vsel %vm2095, %v2217, %v2193
        %v2219 = vsel %vm2094, %v350, %v2216
        %v2220 = vsel %vm2094, 0, %v2218
        %v2221 = vmul.f32 %v2219, %v2219
        %v2222 = vmul.f32 %v2221, -0.001358992
        %v2223 = vadd.f32 %v2222, 0.041655596
        %v2224 = vmul.f32 %v2221, %v2223
        %v2225 = vadd.f32 %v2224, -0.4999988
        %v2226 = vmul.f32 %v2221, %v2225
        %v2227 = vadd.f32 1.0, %v2226
        %v2228 = vmul.f32 %v2219, %v2219
        %v2229 = vmul.f32 %v2228, -0.00019511016
        %v2230 = vadd.f32 %v2229, 0.008332121
        %v2231 = vmul.f32 %v2228, %v2230
        %v2232 = vadd.f32 %v2231, -0.16666654
        %v2233 = vmul.f32 %v2228, %v2232
        %v2234 = vadd.f32 %v2233, 1.0
        %v2235 = vmul.f32 %v2234, %v2219
        %vm2236 = vweird.f32 %v350
        %v2237 = vadd.s32 %v2220, 3
        %v2238 = vand.u32 %v2237, 3
        %vm2239 = vcmp.lt.s32.totalorder %v2238, 2
        %vm2240 = vcmp.eq.s32.totalorder %v2238, 0
        %v2241 = vxor.u32 %v2235, 2147483648
        %v2242 = vsel %vm2240, %v2227, %v2241
        %vm2243 = vcmp.eq.s32.totalorder %v2238, 2
        %v2244 = vxor.u32 %v2227, 2147483648
        %v2245 = vsel %vm2243, %v2244, %v2235
        %v2246 = vsel %vm2239, %v2242, %v2245
        %v2247 = vsel %vm2236, nan, %v2246
        %v2248 = vand.u32 2147483647, %v463
        %vm2249 = vcmp.le.f32.partialorder %v2248, 0.7853982
        %vm2250 = vcmp.lt.s32.totalorder %v463, 0
        %v2251 = vand.u32 %v463, 2139095040
        %v2252 = vshrl.u32 %v2251, 23
        %v2253 = vsub.s32 %v2252, 127
        %v2254 = vand.u32 2147483647, %v463
        %v2255 = vand.u32 %v2254, 8388607
        %v2256 = vor.u32 %v2255, 8388608
        %v2257 = vsub.s32 0, %v2256
        %v2258 = vadd.s32 %v2253, 1
        %vm2259 = vcmp.gt.s32.totalorder %v2258, 0
        %v2260 = vsel %vm2259, %v2258, 0
        %v2261 = vshrl.u32 %v2260, 5
        %v2262 = vand.u32 %v2260, 31
        %v2263 = vsub.s32 32, %v2262
        %v2264 = vshrl.u32 683565275, %v2263
        %v2265 = vshll.u32 683565275, %v2262
        %v2266 = vshrl.u32 2475754826, %v2263
        %v2267 = vor.u32 %v2265, %v2266
        %v2268 = vshll.u32 2475754826, %v2262
        %v2269 = vshrl.u32 2131351028, %v2263
        %v2270 = vor.u32 %v2268, %v2269
        %v2271 = vshll.u32 2131351028, %v2262
        %v2272 = vshrl.u32 2102212464, %v2263
        %v2273 = vor.u32 %v2271, %v2272
        %v2274 = vshll.u32 2102212464, %v2262
        %v2275 = vshrl.u32 920167782, %v2263
        %v2276 = vor.u32 %v2274, %v2275
        %v2277 = vshll.u32 920167782, %v2262
        %v2278 = vshrl.u32 1326507024, %v2263
        %v2279 = vor.u32 %v2277, %v2278
        %vm2280 = vcmp.lt.s32.totalorder %v2261, 1
        %vm2281 = vcmp.lt.s32.totalorder %v2261, 2
        %vm2282 = vcmp.lt.s32.totalorder %v2261, 3
        %vm2283 = vcmp.lt.s32.totalorder %v2261, 4
        %v2284 = vsel %vm2280, %v2264, %v2267
        %v2285 = vsel %vm2283, %v2273, 2102212464
        %v2286 = vsel %vm2282, %v2270, %v2285
        %v2287 = vsel %vm2281, %v2284, %v2286
        %v2288 = vsel %vm2280, %v2267, %v2270
        %v2289 = vsel %vm2283, %v2276, 920167782
        %v2290 = vsel %vm2282, %v2273, %v2289
        %v2291 = vsel %vm2281, %v2288, %v2290
        %v2292 = vsel %vm2280, %v2270, %v2273
        %v2293 = vsel %vm2283, %v2279, 1326507024
        %v2294 = vsel %vm2282, %v2276, %v2293
        %v2295 = vsel %vm2281, %v2292, %v2294
        %v2296 = vshll.u32 %v2256, 8
        %v2297 = vand.u32 %v2296, 65535
        %v2298 = vshrl.u32 %v2296, 16
        %v2299 = vand.u32 %v2295, 65535
        %v2300 = vshrl.u32 %v2295, 16
        %v2301 = vmul.u32 %v2297, %v2299
        %v2302 = vmul.u32 %v2297, %v2300
        %v2303 = vmul.u32 %v2298, %v2299
        %v2304 = vmul.u32 %v2298, %v2300
        %v2305 = vshll.u32 %v2302, 16
        %v2306 = vshrl.u32 %v2302, 16
        %v2307 = vshll.u32 %v2303, 16
        %v2308 = vshrl.u32 %v2303, 16
        %vm2309 = vc.u32 %v2301, %v2305
        %v2310 = vsel %vm2309, 1, 0
        %v2311 = vadd.s32 %v2301, %v2305
        %v2312 = vadd.s32 %v2304, %v2310
        %vm2313 = vc.u32 %v2311, %v2307
        %v2314 = vsel %vm2313, 1, 0
        %v2315 = vadd.s32 %v2311, %v2307
        %v2316 = vadd.s32 %v2312, %v2314
        %v2317 = vadd.s32 %v2316, %v2306
        %v2318 = vadd.s32 %v2317, %v2308
        %v2319 = vand.u32 %v2296, 65535
        %v2320 = vshrl.u32 %v2296, 16
        %v2321 = vand.u32 %v2291, 65535
        %v2322 = vshrl.u32 %v2291, 16
        %v2323 = vmul.u32 %v2319, %v2321
        %v2324 = vmul.u32 %v2319, %v2322
        %v2325 = vmul.u32 %v2320, %v2321
        %v2326 = vmul.u32 %v2320, %v2322
        %v2327 = vshll.u32 %v2324, 16
        %v2328 = vshrl.u32 %v2324, 16
        %v2329 = vshll.u32 %v2325, 16
        %v2330 = vshrl.u32 %v2325, 16
        %vm2331 = vc.u32 %v2323, %v2327
        %v2332 = vsel %vm2331, 1, 0
        %v2333 = vadd.s32 %v2323, %v2327
        %v2334 = vadd.s32 %v2326, %v2332
        %vm2335 = vc.u32 %v2333, %v2329
        %v2336 = vsel %vm2335, 1, 0
        %v2337 = vadd.s32 %v2333, %v2329
        %v2338 = vadd.s32 %v2334, %v2336
        %v2339 = vadd.s32 %v2338, %v2328
        %v2340 = vadd.s32 %v2339, %v2330
        %v2341 = vmul.u32 %v2296, %v2287
        %v2342 = vadd.s32 %v2318, %v2337
        %vm2343 = vc.u32 %v2318, %v2337
        %v2344 = vadd.s32 %v2340, 1
        %v2345 = vsel %vm2343, %v2344, %v2340
        %v2346 = vadd.s32 %v2341, %v2345
        %v2347 = vadd.s32 %v2346, 536870912
        %v2348 = vshrl.u32 %v2347, 30
        %v2349 = vshll.u32 %v2348, 30
        %v2350 = vsub.s32 %v2346, %v2349
        %vm2351 = vcmp.lt.s32.totalorder %v2350, 0
        %v2352 = vsub.s32 0, %v2350
        %v2353 = vsel %vm2351, %v2352, %v2350
        %v2354 = vclz %v2353
        %v2355 = vsub.s32 %v2354, 2
        %vm2356 = vcmp.gt.s32.totalorder 0, %v2355
        %v2357 = vsel %vm2356, 0, %v2355
        %v2358 = vsub.s32 32, %v2357
        %v2359 = vshll.u32 %v2350, %v2357
        %v2360 = vshrl.u32 %v2342, %v2358
        %v2361 = vor.u32 %v2359, %v2360
        %v2362 = vsub.s32 4294967266, %v2357
        %v2363 = vadd.s32 %v2362, 127
        %v2364 = vshll.u32 %v2363, 23
        %v2365 = vor.u32 4788187, %v2364
        %v2366 = vand.u32 2147483647, %v2365
        %v2368 = vcvt.s32.f32 %v2361
        %v2369 = vmul.f32 %v2368, %v2366
        %v2370 = vxor.u32 %v2369, 2147483648
        %v2371 = vsel %vm2250, %v2370, %v2369
        %v2372 = vsub.s32 4, %v2348
        %v2373 = vsel %vm2250, %v2372, %v2348
        %v2374 = vsel %vm2249, %v463, %v2371
        %v2375 = vsel %vm2249, 0, %v2373
        %v2376 = vmul.f32 %v2374, %v2374
        %v2377 = vmul.f32 %v2376, -0.001358992
        %v2378 = vadd.f32 %v2377, 0.041655596
        %v2379 = vmul.f32 %v2376, %v2378
        %v2380 = vadd.f32 %v2379, -0.4999988
        %v2381 = vmul.f32 %v2376, %v2380
        %v2382 = vadd.f32 1.0, %v2381
        %v2383 = vmul.f32 %v2374, %v2374
        %v2384 = vmul.f32 %v2383, -0.00019511016
        %v2385 = vadd.f32 %v2384, 0.008332121
        %v2386 = vmul.f32 %v2383, %v2385
        %v2387 = vadd.f32 %v2386, -0.16666654
        %v2388 = vmul.f32 %v2383, %v2387
        %v2389 = vadd.f32 %v2388, 1.0
        %v2390 = vmul.f32 %v2389, %v2374
        %vm2391 = vweird.f32 %v463
        %v2392 = vadd.s32 %v2375, 3
        %v2393 = vand.u32 %v2392, 3
        %vm2394 = vcmp.lt.s32.totalorder %v2393, 2
        %vm2395 = vcmp.eq.s32.totalorder %v2393, 0
        %v2396 = vxor.u32 %v2390, 2147483648
        %v2397 = vsel %vm2395, %v2382, %v2396
        %vm2398 = vcmp.eq.s32.totalorder %v2393, 2
        %v2399 = vxor.u32 %v2382, 2147483648
        %v2400 = vsel %vm2398, %v2399, %v2390
        %v2401 = vsel %vm2394, %v2397, %v2400
        %v2402 = vsel %vm2391, nan, %v2401
        %v2403 = vand.u32 2147483647, %v353
        %vm2404 = vcmp.le.f32.partialorder %v2403, 0.7853982
        %vm2405 = vcmp.lt.s32.totalorder %v353, 0
        %v2406 = vand.u32 %v353, 2139095040
        %v2407 = vshrl.u32 %v2406, 23
        %v2408 = vsub.s32 %v2407, 127
        %v2409 = vand.u32 2147483647, %v353
        %v2410 = vand.u32 %v2409, 8388607
        %v2411 = vor.u32 %v2410, 8388608
        %v2412 = vsub.s32 0, %v2411
        %v2413 = vadd.s32 %v2408, 1
        %vm2414 = vcmp.gt.s32.totalorder %v2413, 0
        %v2415 = vsel %vm2414, %v2413, 0
        %v2416 = vshrl.u32 %v2415, 5
        %v2417 = vand.u32 %v2415, 31
        %v2418 = vsub.s32 32, %v2417
        %v2419 = vshrl.u32 683565275, %v2418
        %v2420 = vshll.u32 683565275, %v2417
        %v2421 = vshrl.u32 2475754826, %v2418
        %v2422 = vor.u32 %v2420, %v2421
        %v2423 = vshll.u32 2475754826, %v2417
        %v2424 = vshrl.u32 2131351028, %v2418
        %v2425 = vor.u32 %v2423, %v2424
        %v2426 = vshll.u32 2131351028, %v2417
        %v2427 = vshrl.u32 2102212464, %v2418
        %v2428 = vor.u32 %v2426, %v2427
        %v2429 = vshll.u32 2102212464, %v2417
        %v2430 = vshrl.u32 920167782, %v2418
        %v2431 = vor.u32 %v2429, %v2430
        %v2432 = vshll.u32 920167782, %v2417
        %v2433 = vshrl.u32 1326507024, %v2418
        %v2434 = vor.u32 %v2432, %v2433
        %vm2435 = vcmp.lt.s32.totalorder %v2416, 1
        %vm2436 = vcmp.lt.s32.totalorder %v2416, 2
        %vm2437 = vcmp.lt.s32.totalorder %v2416, 3
        %vm2438 = vcmp.lt.s32.totalorder %v2416, 4
        %v2439 = vsel %vm2435, %v2419, %v2422
        %v2440 = vsel %vm2438, %v2428, 2102212464
        %v2441 = vsel %vm2437, %v2425, %v2440
        %v2442 = vsel %vm2436, %v2439, %v2441
        %v2443 = vsel %vm2435, %v2422, %v2425
        %v2444 = vsel %vm2438, %v2431, 920167782
        %v2445 = vsel %vm2437, %v2428, %v2444
        %v2446 = vsel %vm2436, %v2443, %v2445
        %v2447 = vsel %vm2435, %v2425, %v2428
        %v2448 = vsel %vm2438, %v2434, 1326507024
        %v2449 = vsel %vm2437, %v2431, %v2448
        %v2450 = vsel %vm2436, %v2447, %v2449
        %v2451 = vshll.u32 %v2411, 8
        %v2452 = vand.u32 %v2451, 65535
        %v2453 = vshrl.u32 %v2451, 16
        %v2454 = vand.u32 %v2450, 65535
        %v2455 = vshrl.u32 %v2450, 16
        %v2456 = vmul.u32 %v2452, %v2454
        %v2457 = vmul.u32 %v2452, %v2455
        %v2458 = vmul.u32 %v2453, %v2454
        %v2459 = vmul.u32 %v2453, %v2455
        %v2460 = vshll.u32 %v2457, 16
        %v2461 = vshrl.u32 %v2457, 16
        %v2462 = vshll.u32 %v2458, 16
        %v2463 = vshrl.u32 %v2458, 16
        %vm2464 = vc.u32 %v2456, %v2460
        %v2465 = vsel %vm2464, 1, 0
        %v2466 = vadd.s32 %v2456, %v2460
        %v2467 = vadd.s32 %v2459, %v2465
        %vm2468 = vc.u32 %v2466, %v2462
        %v2469 = vsel %vm2468, 1, 0
        %v2470 = vadd.s32 %v2466, %v2462
        %v2471 = vadd.s32 %v2467, %v2469
        %v2472 = vadd.s32 %v2471, %v2461
        %v2473 = vadd.s32 %v2472, %v2463
        %v2474 = vand.u32 %v2451, 65535
        %v2475 = vshrl.u32 %v2451, 16
        %v2476 = vand.u32 %v2446, 65535
        %v2477 = vshrl.u32 %v2446, 16
        %v2478 = vmul.u32 %v2474, %v2476
        %v2479 = vmul.u32 %v2474, %v2477
        %v2480 = vmul.u32 %v2475, %v2476
        %v2481 = vmul.u32 %v2475, %v2477
        %v2482 = vshll.u32 %v2479, 16
        %v2483 = vshrl.u32 %v2479, 16
        %v2484 = vshll.u32 %v2480, 16
        %v2485 = vshrl.u32 %v2480, 16
        %vm2486 = vc.u32 %v2478, %v2482
        %v2487 = vsel %vm2486, 1, 0
        %v2488 = vadd.s32 %v2478, %v2482
        %v2489 = vadd.s32 %v2481, %v2487
        %vm2490 = vc.u32 %v2488, %v2484
        %v2491 = vsel %vm2490, 1, 0
        %v2492 = vadd.s32 %v2488, %v2484
        %v2493 = vadd.s32 %v2489, %v2491
        %v2494 = vadd.s32 %v2493, %v2483
        %v2495 = vadd.s32 %v2494, %v2485
        %v2496 = vmul.u32 %v2451, %v2442
        %v2497 = vadd.s32 %v2473, %v2492
        %vm2498 = vc.u32 %v2473, %v2492
        %v2499 = vadd.s32 %v2495, 1
        %v2500 = vsel %vm2498, %v2499, %v2495
        %v2501 = vadd.s32 %v2496, %v2500
        %v2502 = vadd.s32 %v2501, 536870912
        %v2503 = vshrl.u32 %v2502, 30
        %v2504 = vshll.u32 %v2503, 30
        %v2505 = vsub.s32 %v2501, %v2504
        %vm2506 = vcmp.lt.s32.totalorder %v2505, 0
        %v2507 = vsub.s32 0, %v2505
        %v2508 = vsel %vm2506, %v2507, %v2505
        %v2509 = vclz %v2508
        %v2510 = vsub.s32 %v2509, 2
        %vm2511 = vcmp.gt.s32.totalorder 0, %v2510
        %v2512 = vsel %vm2511, 0, %v2510
        %v2513 = vsub.s32 32, %v2512
        %v2514 = vshll.u32 %v2505, %v2512
        %v2515 = vshrl.u32 %v2497, %v2513
        %v2516 = vor.u32 %v2514, %v2515
        %v2517 = vsub.s32 4294967266, %v2512
        %v2518 = vadd.s32 %v2517, 127
        %v2519 = vshll.u32 %v2518, 23
        %v2520 = vor.u32 4788187, %v2519
        %v2521 = vand.u32 2147483647, %v2520
        %v2523 = vcvt.s32.f32 %v2516
        %v2524 = vmul.f32 %v2523, %v2521
        %v2525 = vxor.u32 %v2524, 2147483648
        %v2526 = vsel %vm2405, %v2525, %v2524
        %v2527 = vsub.s32 4, %v2503
        %v2528 = vsel %vm2405, %v2527, %v2503
        %v2529 = vsel %vm2404, %v353, %v2526
        %v2530 = vsel %vm2404, 0, %v2528
        %v2531 = vmul.f32 %v2529, %v2529
        %v2532 = vmul.f32 %v2531, -0.001358992
        %v2533 = vadd.f32 %v2532, 0.041655596
        %v2534 = vmul.f32 %v2531, %v2533
        %v2535 = vadd.f32 %v2534, -0.4999988
        %v2536 = vmul.f32 %v2531, %v2535
        %v2537 = vadd.f32 1.0, %v2536
        %v2538 = vmul.f32 %v2529, %v2529
        %v2539 = vmul.f32 %v2538, -0.00019511016
        %v2540 = vadd.f32 %v2539, 0.008332121
        %v2541 = vmul.f32 %v2538, %v2540
        %v2542 = vadd.f32 %v2541, -0.16666654
        %v2543 = vmul.f32 %v2538, %v2542
        %v2544 = vadd.f32 %v2543, 1.0
        %v2545 = vmul.f32 %v2544, %v2529
        %vm2546 = vweird.f32 %v353
        %v2547 = vadd.s32 %v2530, 3
        %v2548 = vand.u32 %v2547, 3
        %vm2549 = vcmp.lt.s32.totalorder %v2548, 2
        %vm2550 = vcmp.eq.s32.totalorder %v2548, 0
        %v2551 = vxor.u32 %v2545, 2147483648
        %v2552 = vsel %vm2550, %v2537, %v2551
        %vm2553 = vcmp.eq.s32.totalorder %v2548, 2
        %v2554 = vxor.u32 %v2537, 2147483648
        %v2555 = vsel %vm2553, %v2554, %v2545
        %v2556 = vsel %vm2549, %v2552, %v2555
        %v2557 = vsel %vm2546, nan, %v2556
        %v2558 = vand.u32 2147483647, %v466
        %vm2559 = vcmp.le.f32.partialorder %v2558, 0.7853982
        %vm2560 = vcmp.lt.s32.totalorder %v466, 0
        %v2561 = vand.u32 %v466, 2139095040
        %v2562 = vshrl.u32 %v2561, 23
        %v2563 = vsub.s32 %v2562, 127
        %v2564 = vand.u32 2147483647, %v466
        %v2565 = vand.u32 %v2564, 8388607
        %v2566 = vor.u32 %v2565, 8388608
        %v2567 = vsub.s32 0, %v2566
        %v2568 = vadd.s32 %v2563, 1
        %vm2569 = vcmp.gt.s32.totalorder %v2568, 0
        %v2570 = vsel %vm2569, %v2568, 0
        %v2571 = vshrl.u32 %v2570, 5
        %v2572 = vand.u32 %v2570, 31
        %v2573 = vsub.s32 32, %v2572
        %v2574 = vshrl.u32 683565275, %v2573
        %v2575 = vshll.u32 683565275, %v2572
        %v2576 = vshrl.u32 2475754826, %v2573
        %v2577 = vor.u32 %v2575, %v2576
        %v2578 = vshll.u32 2475754826, %v2572
        %v2579 = vshrl.u32 2131351028, %v2573
        %v2580 = vor.u32 %v2578, %v2579
        %v2581 = vshll.u32 2131351028, %v2572
        %v2582 = vshrl.u32 2102212464, %v2573
        %v2583 = vor.u32 %v2581, %v2582
        %v2584 = vshll.u32 2102212464, %v2572
        %v2585 = vshrl.u32 920167782, %v2573
        %v2586 = vor.u32 %v2584, %v2585
        %v2587 = vshll.u32 920167782, %v2572
        %v2588 = vshrl.u32 1326507024, %v2573
        %v2589 = vor.u32 %v2587, %v2588
        %vm2590 = vcmp.lt.s32.totalorder %v2571, 1
        %vm2591 = vcmp.lt.s32.totalorder %v2571, 2
        %vm2592 = vcmp.lt.s32.totalorder %v2571, 3
        %vm2593 = vcmp.lt.s32.totalorder %v2571, 4
        %v2594 = vsel %vm2590, %v2574, %v2577
        %v2595 = vsel %vm2593, %v2583, 2102212464
        %v2596 = vsel %vm2592, %v2580, %v2595
        %v2597 = vsel %vm2591, %v2594, %v2596
        %v2598 = vsel %vm2590, %v2577, %v2580
        %v2599 = vsel %vm2593, %v2586, 920167782
        %v2600 = vsel %vm2592, %v2583, %v2599
        %v2601 = vsel %vm2591, %v2598, %v2600
        %v2602 = vsel %vm2590, %v2580, %v2583
        %v2603 = vsel %vm2593, %v2589, 1326507024
        %v2604 = vsel %vm2592, %v2586, %v2603
        %v2605 = vsel %vm2591, %v2602, %v2604
        %v2606 = vshll.u32 %v2566, 8
        %v2607 = vand.u32 %v2606, 65535
        %v2608 = vshrl.u32 %v2606, 16
        %v2609 = vand.u32 %v2605, 65535
        %v2610 = vshrl.u32 %v2605, 16
        %v2611 = vmul.u32 %v2607, %v2609
        %v2612 = vmul.u32 %v2607, %v2610
        %v2613 = vmul.u32 %v2608, %v2609
        %v2614 = vmul.u32 %v2608, %v2610
        %v2615 = vshll.u32 %v2612, 16
        %v2616 = vshrl.u32 %v2612, 16
        %v2617 = vshll.u32 %v2613, 16
        %v2618 = vshrl.u32 %v2613, 16
        %vm2619 = vc.u32 %v2611, %v2615
        %v2620 = vsel %vm2619, 1, 0
        %v2621 = vadd.s32 %v2611, %v2615
        %v2622 = vadd.s32 %v2614, %v2620
        %vm2623 = vc.u32 %v2621, %v2617
        %v2624 = vsel %vm2623, 1, 0
        %v2625 = vadd.s32 %v2621, %v2617
        %v2626 = vadd.s32 %v2622, %v2624
        %v2627 = vadd.s32 %v2626, %v2616
        %v2628 = vadd.s32 %v2627, %v2618
        %v2629 = vand.u32 %v2606, 65535
        %v2630 = vshrl.u32 %v2606, 16
        %v2631 = vand.u32 %v2601, 65535
        %v2632 = vshrl.u32 %v2601, 16
        %v2633 = vmul.u32 %v2629, %v2631
        %v2634 = vmul.u32 %v2629, %v2632
        %v2635 = vmul.u32 %v2630, %v2631
        %v2636 = vmul.u32 %v2630, %v2632
        %v2637 = vshll.u32 %v2634, 16
        %v2638 = vshrl.u32 %v2634, 16
        %v2639 = vshll.u32 %v2635, 16
        %v2640 = vshrl.u32 %v2635, 16
        %vm2641 = vc.u32 %v2633, %v2637
        %v2642 = vsel %vm2641, 1, 0
        %v2643 = vadd.s32 %v2633, %v2637
        %v2644 = vadd.s32 %v2636, %v2642
        %vm2645 = vc.u32 %v2643, %v2639
        %v2646 = vsel %vm2645, 1, 0
        %v2647 = vadd.s32 %v2643, %v2639
        %v2648 = vadd.s32 %v2644, %v2646
        %v2649 = vadd.s32 %v2648, %v2638
        %v2650 = vadd.s32 %v2649, %v2640
        %v2651 = vmul.u32 %v2606, %v2597
        %v2652 = vadd.s32 %v2628, %v2647
        %vm2653 = vc.u32 %v2628, %v2647
        %v2654 = vadd.s32 %v2650, 1
        %v2655 = vsel %vm2653, %v2654, %v2650
        %v2656 = vadd.s32 %v2651, %v2655
        %v2657 = vadd.s32 %v2656, 536870912
        %v2658 = vshrl.u32 %v2657, 30
        %v2659 = vshll.u32 %v2658, 30
        %v2660 = vsub.s32 %v2656, %v2659
        %vm2661 = vcmp.lt.s32.totalorder %v2660, 0
        %v2662 = vsub.s32 0, %v2660
        %v2663 = vsel %vm2661, %v2662, %v2660
        %v2664 = vclz %v2663
        %v2665 = vsub.s32 %v2664, 2
        %vm2666 = vcmp.gt.s32.totalorder 0, %v2665
        %v2667 = vsel %vm2666, 0, %v2665
        %v2668 = vsub.s32 32, %v2667
        %v2669 = vshll.u32 %v2660, %v2667
        %v2670 = vshrl.u32 %v2652, %v2668
        %v2671 = vor.u32 %v2669, %v2670
        %v2672 = vsub.s32 4294967266, %v2667
        %v2673 = vadd.s32 %v2672, 127
        %v2674 = vshll.u32 %v2673, 23
        %v2675 = vor.u32 4788187, %v2674
        %v2676 = vand.u32 2147483647, %v2675
        %v2678 = vcvt.s32.f32 %v2671
        %v2679 = vmul.f32 %v2678, %v2676
        %v2680 = vxor.u32 %v2679, 2147483648
        %v2681 = vsel %vm2560, %v2680, %v2679
        %v2682 = vsub.s32 4, %v2658
        %v2683 = vsel %vm2560, %v2682, %v2658
        %v2684 = vsel %vm2559, %v466, %v2681
        %v2685 = vsel %vm2559, 0, %v2683
        %v2686 = vmul.f32 %v2684, %v2684
        %v2687 = vmul.f32 %v2686, -0.001358992
        %v2688 = vadd.f32 %v2687, 0.041655596
        %v2689 = vmul.f32 %v2686, %v2688
        %v2690 = vadd.f32 %v2689, -0.4999988
        %v2691 = vmul.f32 %v2686, %v2690
        %v2692 = vadd.f32 1.0, %v2691
        %v2693 = vmul.f32 %v2684, %v2684
        %v2694 = vmul.f32 %v2693, -0.00019511016
        %v2695 = vadd.f32 %v2694, 0.008332121
        %v2696 = vmul.f32 %v2693, %v2695
        %v2697 = vadd.f32 %v2696, -0.16666654
        %v2698 = vmul.f32 %v2693, %v2697
        %v2699 = vadd.f32 %v2698, 1.0
        %v2700 = vmul.f32 %v2699, %v2684
        %vm2701 = vweird.f32 %v466
        %v2702 = vadd.s32 %v2685, 3
        %v2703 = vand.u32 %v2702, 3
        %vm2704 = vcmp.lt.s32.totalorder %v2703, 2
        %vm2705 = vcmp.eq.s32.totalorder %v2703, 0
        %v2706 = vxor.u32 %v2700, 2147483648
        %v2707 = vsel %vm2705, %v2692, %v2706
        %vm2708 = vcmp.eq.s32.totalorder %v2703, 2
        %v2709 = vxor.u32 %v2692, 2147483648
        %v2710 = vsel %vm2708, %v2709, %v2700
        %v2711 = vsel %vm2704, %v2707, %v2710
        %v2712 = vsel %vm2701, nan, %v2711
        %v2713 = vand.u32 2147483647, %v356
        %vm2714 = vcmp.le.f32.partialorder %v2713, 0.7853982
        %vm2715 = vcmp.lt.s32.totalorder %v356, 0
        %v2716 = vand.u32 %v356, 2139095040
        %v2717 = vshrl.u32 %v2716, 23
        %v2718 = vsub.s32 %v2717, 127
        %v2719 = vand.u32 2147483647, %v356
        %v2720 = vand.u32 %v2719, 8388607
        %v2721 = vor.u32 %v2720, 8388608
        %v2722 = vsub.s32 0, %v2721
        %v2723 = vadd.s32 %v2718, 1
        %vm2724 = vcmp.gt.s32.totalorder %v2723, 0
        %v2725 = vsel %vm2724, %v2723, 0
        %v2726 = vshrl.u32 %v2725, 5
        %v2727 = vand.u32 %v2725, 31
        %v2728 = vsub.s32 32, %v2727
        %v2729 = vshrl.u32 683565275, %v2728
        %v2730 = vshll.u32 683565275, %v2727
        %v2731 = vshrl.u32 2475754826, %v2728
        %v2732 = vor.u32 %v2730, %v2731
        %v2733 = vshll.u32 2475754826, %v2727
        %v2734 = vshrl.u32 2131351028, %v2728
        %v2735 = vor.u32 %v2733, %v2734
        %v2736 = vshll.u32 2131351028, %v2727
        %v2737 = vshrl.u32 2102212464, %v2728
        %v2738 = vor.u32 %v2736, %v2737
        %v2739 = vshll.u32 2102212464, %v2727
        %v2740 = vshrl.u32 920167782, %v2728
        %v2741 = vor.u32 %v2739, %v2740
        %v2742 = vshll.u32 920167782, %v2727
        %v2743 = vshrl.u32 1326507024, %v2728
        %v2744 = vor.u32 %v2742, %v2743
        %vm2745 = vcmp.lt.s32.totalorder %v2726, 1
        %vm2746 = vcmp.lt.s32.totalorder %v2726, 2
        %vm2747 = vcmp.lt.s32.totalorder %v2726, 3
        %vm2748 = vcmp.lt.s32.totalorder %v2726, 4
        %v2749 = vsel %vm2745, %v2729, %v2732
        %v2750 = vsel %vm2748, %v2738, 2102212464
        %v2751 = vsel %vm2747, %v2735, %v2750
        %v2752 = vsel %vm2746, %v2749, %v2751
        %v2753 = vsel %vm2745, %v2732, %v2735
        %v2754 = vsel %vm2748, %v2741, 920167782
        %v2755 = vsel %vm2747, %v2738, %v2754
        %v2756 = vsel %vm2746, %v2753, %v2755
        %v2757 = vsel %vm2745, %v2735, %v2738
        %v2758 = vsel %vm2748, %v2744, 1326507024
        %v2759 = vsel %vm2747, %v2741, %v2758
        %v2760 = vsel %vm2746, %v2757, %v2759
        %v2761 = vshll.u32 %v2721, 8
        %v2762 = vand.u32 %v2761, 65535
        %v2763 = vshrl.u32 %v2761, 16
        %v2764 = vand.u32 %v2760, 65535
        %v2765 = vshrl.u32 %v2760, 16
        %v2766 = vmul.u32 %v2762, %v2764
        %v2767 = vmul.u32 %v2762, %v2765
        %v2768 = vmul.u32 %v2763, %v2764
        %v2769 = vmul.u32 %v2763, %v2765
        %v2770 = vshll.u32 %v2767, 16
        %v2771 = vshrl.u32 %v2767, 16
        %v2772 = vshll.u32 %v2768, 16
        %v2773 = vshrl.u32 %v2768, 16
        %vm2774 = vc.u32 %v2766, %v2770
        %v2775 = vsel %vm2774, 1, 0
        %v2776 = vadd.s32 %v2766, %v2770
        %v2777 = vadd.s32 %v2769, %v2775
        %vm2778 = vc.u32 %v2776, %v2772
        %v2779 = vsel %vm2778, 1, 0
        %v2780 = vadd.s32 %v2776, %v2772
        %v2781 = vadd.s32 %v2777, %v2779
        %v2782 = vadd.s32 %v2781, %v2771
        %v2783 = vadd.s32 %v2782, %v2773
        %v2784 = vand.u32 %v2761, 65535
        %v2785 = vshrl.u32 %v2761, 16
        %v2786 = vand.u32 %v2756, 65535
        %v2787 = vshrl.u32 %v2756, 16
        %v2788 = vmul.u32 %v2784, %v2786
        %v2789 = vmul.u32 %v2784, %v2787
        %v2790 = vmul.u32 %v2785, %v2786
        %v2791 = vmul.u32 %v2785, %v2787
        %v2792 = vshll.u32 %v2789, 16
        %v2793 = vshrl.u32 %v2789, 16
        %v2794 = vshll.u32 %v2790, 16
        %v2795 = vshrl.u32 %v2790, 16
        %vm2796 = vc.u32 %v2788, %v2792
        %v2797 = vsel %vm2796, 1, 0
        %v2798 = vadd.s32 %v2788, %v2792
        %v2799 = vadd.s32 %v2791, %v2797
        %vm2800 = vc.u32 %v2798, %v2794
        %v2801 = vsel %vm2800, 1, 0
        %v2802 = vadd.s32 %v2798, %v2794
        %v2803 = vadd.s32 %v2799, %v2801
        %v2804 = vadd.s32 %v2803, %v2793
        %v2805 = vadd.s32 %v2804, %v2795
        %v2806 = vmul.u32 %v2761, %v2752
        %v2807 = vadd.s32 %v2783, %v2802
        %vm2808 = vc.u32 %v2783, %v2802
        %v2809 = vadd.s32 %v2805, 1
        %v2810 = vsel %vm2808, %v2809, %v2805
        %v2811 = vadd.s32 %v2806, %v2810
        %v2812 = vadd.s32 %v2811, 536870912
        %v2813 = vshrl.u32 %v2812, 30
        %v2814 = vshll.u32 %v2813, 30
        %v2815 = vsub.s32 %v2811, %v2814
        %vm2816 = vcmp.lt.s32.totalorder %v2815, 0
        %v2817 = vsub.s32 0, %v2815
        %v2818 = vsel %vm2816, %v2817, %v2815
        %v2819 = vclz %v2818
        %v2820 = vsub.s32 %v2819, 2
        %vm2821 = vcmp.gt.s32.totalorder 0, %v2820
        %v2822 = vsel %vm2821, 0, %v2820
        %v2823 = vsub.s32 32, %v2822
        %v2824 = vshll.u32 %v2815, %v2822
        %v2825 = vshrl.u32 %v2807, %v2823
        %v2826 = vor.u32 %v2824, %v2825
        %v2827 = vsub.s32 4294967266, %v2822
        %v2828 = vadd.s32 %v2827, 127
        %v2829 = vshll.u32 %v2828, 23
        %v2830 = vor.u32 4788187, %v2829
        %v2831 = vand.u32 2147483647, %v2830
        %v2833 = vcvt.s32.f32 %v2826
        %v2834 = vmul.f32 %v2833, %v2831
        %v2835 = vxor.u32 %v2834, 2147483648
        %v2836 = vsel %vm2715, %v2835, %v2834
        %v2837 = vsub.s32 4, %v2813
        %v2838 = vsel %vm2715, %v2837, %v2813
        %v2839 = vsel %vm2714, %v356, %v2836
        %v2840 = vsel %vm2714, 0, %v2838
        %v2841 = vmul.f32 %v2839, %v2839
        %v2842 = vmul.f32 %v2841, -0.001358992
        %v2843 = vadd.f32 %v2842, 0.041655596
        %v2844 = vmul.f32 %v2841, %v2843
        %v2845 = vadd.f32 %v2844, -0.4999988
        %v2846 = vmul.f32 %v2841, %v2845
        %v2847 = vadd.f32 1.0, %v2846
        %v2848 = vmul.f32 %v2839, %v2839
        %v2849 = vmul.f32 %v2848, -0.00019511016
        %v2850 = vadd.f32 %v2849, 0.008332121
        %v2851 = vmul.f32 %v2848, %v2850
        %v2852 = vadd.f32 %v2851, -0.16666654
        %v2853 = vmul.f32 %v2848, %v2852
        %v2854 = vadd.f32 %v2853, 1.0
        %v2855 = vmul.f32 %v2854, %v2839
        %vm2856 = vweird.f32 %v356
        %v2857 = vadd.s32 %v2840, 3
        %v2858 = vand.u32 %v2857, 3
        %vm2859 = vcmp.lt.s32.totalorder %v2858, 2
        %vm2860 = vcmp.eq.s32.totalorder %v2858, 0
        %v2861 = vxor.u32 %v2855, 2147483648
        %v2862 = vsel %vm2860, %v2847, %v2861
        %vm2863 = vcmp.eq.s32.totalorder %v2858, 2
        %v2864 = vxor.u32 %v2847, 2147483648
        %v2865 = vsel %vm2863, %v2864, %v2855
        %v2866 = vsel %vm2859, %v2862, %v2865
        %v2867 = vsel %vm2856, nan, %v2866
        %v2868 = vand.u32 2147483647, %v469
        %vm2869 = vcmp.le.f32.partialorder %v2868, 0.7853982
        %vm2870 = vcmp.lt.s32.totalorder %v469, 0
        %v2871 = vand.u32 %v469, 2139095040
        %v2872 = vshrl.u32 %v2871, 23
        %v2873 = vsub.s32 %v2872, 127
        %v2874 = vand.u32 2147483647, %v469
        %v2875 = vand.u32 %v2874, 8388607
        %v2876 = vor.u32 %v2875, 8388608
        %v2877 = vsub.s32 0, %v2876
        %v2878 = vadd.s32 %v2873, 1
        %vm2879 = vcmp.gt.s32.totalorder %v2878, 0
        %v2880 = vsel %vm2879, %v2878, 0
        %v2881 = vshrl.u32 %v2880, 5
        %v2882 = vand.u32 %v2880, 31
        %v2883 = vsub.s32 32, %v2882
        %v2884 = vshrl.u32 683565275, %v2883
        %v2885 = vshll.u32 683565275, %v2882
        %v2886 = vshrl.u32 2475754826, %v2883
        %v2887 = vor.u32 %v2885, %v2886
        %v2888 = vshll.u32 2475754826, %v2882
        %v2889 = vshrl.u32 2131351028, %v2883
        %v2890 = vor.u32 %v2888, %v2889
        %v2891 = vshll.u32 2131351028, %v2882
        %v2892 = vshrl.u32 2102212464, %v2883
        %v2893 = vor.u32 %v2891, %v2892
        %v2894 = vshll.u32 2102212464, %v2882
        %v2895 = vshrl.u32 920167782, %v2883
        %v2896 = vor.u32 %v2894, %v2895
        %v2897 = vshll.u32 920167782, %v2882
        %v2898 = vshrl.u32 1326507024, %v2883
        %v2899 = vor.u32 %v2897, %v2898
        %vm2900 = vcmp.lt.s32.totalorder %v2881, 1
        %vm2901 = vcmp.lt.s32.totalorder %v2881, 2
        %vm2902 = vcmp.lt.s32.totalorder %v2881, 3
        %vm2903 = vcmp.lt.s32.totalorder %v2881, 4
        %v2904 = vsel %vm2900, %v2884, %v2887
        %v2905 = vsel %vm2903, %v2893, 2102212464
        %v2906 = vsel %vm2902, %v2890, %v2905
        %v2907 = vsel %vm2901, %v2904, %v2906
        %v2908 = vsel %vm2900, %v2887, %v2890
        %v2909 = vsel %vm2903, %v2896, 920167782
        %v2910 = vsel %vm2902, %v2893, %v2909
        %v2911 = vsel %vm2901, %v2908, %v2910
        %v2912 = vsel %vm2900, %v2890, %v2893
        %v2913 = vsel %vm2903, %v2899, 1326507024
        %v2914 = vsel %vm2902, %v2896, %v2913
        %v2915 = vsel %vm2901, %v2912, %v2914
        %v2916 = vshll.u32 %v2876, 8
        %v2917 = vand.u32 %v2916, 65535
        %v2918 = vshrl.u32 %v2916, 16
        %v2919 = vand.u32 %v2915, 65535
        %v2920 = vshrl.u32 %v2915, 16
        %v2921 = vmul.u32 %v2917, %v2919
        %v2922 = vmul.u32 %v2917, %v2920
        %v2923 = vmul.u32 %v2918, %v2919
        %v2924 = vmul.u32 %v2918, %v2920
        %v2925 = vshll.u32 %v2922, 16
        %v2926 = vshrl.u32 %v2922, 16
        %v2927 = vshll.u32 %v2923, 16
        %v2928 = vshrl.u32 %v2923, 16
        %vm2929 = vc.u32 %v2921, %v2925
        %v2930 = vsel %vm2929, 1, 0
        %v2931 = vadd.s32 %v2921, %v2925
        %v2932 = vadd.s32 %v2924, %v2930
        %vm2933 = vc.u32 %v2931, %v2927
        %v2934 = vsel %vm2933, 1, 0
        %v2935 = vadd.s32 %v2931, %v2927
        %v2936 = vadd.s32 %v2932, %v2934
        %v2937 = vadd.s32 %v2936, %v2926
        %v2938 = vadd.s32 %v2937, %v2928
        %v2939 = vand.u32 %v2916, 65535
        %v2940 = vshrl.u32 %v2916, 16
        %v2941 = vand.u32 %v2911, 65535
        %v2942 = vshrl.u32 %v2911, 16
        %v2943 = vmul.u32 %v2939, %v2941
        %v2944 = vmul.u32 %v2939, %v2942
        %v2945 = vmul.u32 %v2940, %v2941
        %v2946 = vmul.u32 %v2940, %v2942
        %v2947 = vshll.u32 %v2944, 16
        %v2948 = vshrl.u32 %v2944, 16
        %v2949 = vshll.u32 %v2945, 16
        %v2950 = vshrl.u32 %v2945, 16
        %vm2951 = vc.u32 %v2943, %v2947
        %v2952 = vsel %vm2951, 1, 0
        %v2953 = vadd.s32 %v2943, %v2947
        %v2954 = vadd.s32 %v2946, %v2952
        %vm2955 = vc.u32 %v2953, %v2949
        %v2956 = vsel %vm2955, 1, 0
        %v2957 = vadd.s32 %v2953, %v2949
        %v2958 = vadd.s32 %v2954, %v2956
        %v2959 = vadd.s32 %v2958, %v2948
        %v2960 = vadd.s32 %v2959, %v2950
        %v2961 = vmul.u32 %v2916, %v2907
        %v2962 = vadd.s32 %v2938, %v2957
        %vm2963 = vc.u32 %v2938, %v2957
        %v2964 = vadd.s32 %v2960, 1
        %v2965 = vsel %vm2963, %v2964, %v2960
        %v2966 = vadd.s32 %v2961, %v2965
        %v2967 = vadd.s32 %v2966, 536870912
        %v2968 = vshrl.u32 %v2967, 30
        %v2969 = vshll.u32 %v2968, 30
        %v2970 = vsub.s32 %v2966, %v2969
        %vm2971 = vcmp.lt.s32.totalorder %v2970, 0
        %v2972 = vsub.s32 0, %v2970
        %v2973 = vsel %vm2971, %v2972, %v2970
        %v2974 = vclz %v2973
        %v2975 = vsub.s32 %v2974, 2
        %vm2976 = vcmp.gt.s32.totalorder 0, %v2975
        %v2977 = vsel %vm2976, 0, %v2975
        %v2978 = vsub.s32 32, %v2977
        %v2979 = vshll.u32 %v2970, %v2977
        %v2980 = vshrl.u32 %v2962, %v2978
        %v2981 = vor.u32 %v2979, %v2980
        %v2982 = vsub.s32 4294967266, %v2977
        %v2983 = vadd.s32 %v2982, 127
        %v2984 = vshll.u32 %v2983, 23
        %v2985 = vor.u32 4788187, %v2984
        %v2986 = vand.u32 2147483647, %v2985
        %v2988 = vcvt.s32.f32 %v2981
        %v2989 = vmul.f32 %v2988, %v2986
        %v2990 = vxor.u32 %v2989, 2147483648
        %v2991 = vsel %vm2870, %v2990, %v2989
        %v2992 = vsub.s32 4, %v2968
        %v2993 = vsel %vm2870, %v2992, %v2968
        %v2994 = vsel %vm2869, %v469, %v2991
        %v2995 = vsel %vm2869, 0, %v2993
        %v2996 = vmul.f32 %v2994, %v2994
        %v2997 = vmul.f32 %v2996, -0.001358992
        %v2998 = vadd.f32 %v2997, 0.041655596
        %v2999 = vmul.f32 %v2996, %v2998
        %v3000 = vadd.f32 %v2999, -0.4999988
        %v3001 = vmul.f32 %v2996, %v3000
        %v3002 = vadd.f32 1.0, %v3001
        %v3003 = vmul.f32 %v2994, %v2994
        %v3004 = vmul.f32 %v3003, -0.00019511016
        %v3005 = vadd.f32 %v3004, 0.008332121
        %v3006 = vmul.f32 %v3003, %v3005
        %v3007 = vadd.f32 %v3006, -0.16666654
        %v3008 = vmul.f32 %v3003, %v3007
        %v3009 = vadd.f32 %v3008, 1.0
        %v3010 = vmul.f32 %v3009, %v2994
        %vm3011 = vweird.f32 %v469
        %v3012 = vadd.s32 %v2995, 3
        %v3013 = vand.u32 %v3012, 3
        %vm3014 = vcmp.lt.s32.totalorder %v3013, 2
        %vm3015 = vcmp.eq.s32.totalorder %v3013, 0
        %v3016 = vxor.u32 %v3010, 2147483648
        %v3017 = vsel %vm3015, %v3002, %v3016
        %vm3018 = vcmp.eq.s32.totalorder %v3013, 2
        %v3019 = vxor.u32 %v3002, 2147483648
        %v3020 = vsel %vm3018, %v3019, %v3010
        %v3021 = vsel %vm3014, %v3017, %v3020
        %v3022 = vsel %vm3011, nan, %v3021
        %v3023 = vand.u32 2147483647, %v359
        %vm3024 = vcmp.le.f32.partialorder %v3023, 0.7853982
        %vm3025 = vcmp.lt.s32.totalorder %v359, 0
        %v3026 = vand.u32 %v359, 2139095040
        %v3027 = vshrl.u32 %v3026, 23
        %v3028 = vsub.s32 %v3027, 127
        %v3029 = vand.u32 2147483647, %v359
        %v3030 = vand.u32 %v3029, 8388607
        %v3031 = vor.u32 %v3030, 8388608
        %v3032 = vsub.s32 0, %v3031
        %v3033 = vadd.s32 %v3028, 1
        %vm3034 = vcmp.gt.s32.totalorder %v3033, 0
        %v3035 = vsel %vm3034, %v3033, 0
        %v3036 = vshrl.u32 %v3035, 5
        %v3037 = vand.u32 %v3035, 31
        %v3038 = vsub.s32 32, %v3037
        %v3039 = vshrl.u32 683565275, %v3038
        %v3040 = vshll.u32 683565275, %v3037
        %v3041 = vshrl.u32 2475754826, %v3038
        %v3042 = vor.u32 %v3040, %v3041
        %v3043 = vshll.u32 2475754826, %v3037
        %v3044 = vshrl.u32 2131351028, %v3038
        %v3045 = vor.u32 %v3043, %v3044
        %v3046 = vshll.u32 2131351028, %v3037
        %v3047 = vshrl.u32 2102212464, %v3038
        %v3048 = vor.u32 %v3046, %v3047
        %v3049 = vshll.u32 2102212464, %v3037
        %v3050 = vshrl.u32 920167782, %v3038
        %v3051 = vor.u32 %v3049, %v3050
        %v3052 = vshll.u32 920167782, %v3037
        %v3053 = vshrl.u32 1326507024, %v3038
        %v3054 = vor.u32 %v3052, %v3053
        %vm3055 = vcmp.lt.s32.totalorder %v3036, 1
        %vm3056 = vcmp.lt.s32.totalorder %v3036, 2
        %vm3057 = vcmp.lt.s32.totalorder %v3036, 3
        %vm3058 = vcmp.lt.s32.totalorder %v3036, 4
        %v3059 = vsel %vm3055, %v3039, %v3042
        %v3060 = vsel %vm3058, %v3048, 2102212464
        %v3061 = vsel %vm3057, %v3045, %v3060
        %v3062 = vsel %vm3056, %v3059, %v3061
        %v3063 = vsel %vm3055, %v3042, %v3045
        %v3064 = vsel %vm3058, %v3051, 920167782
        %v3065 = vsel %vm3057, %v3048, %v3064
        %v3066 = vsel %vm3056, %v3063, %v3065
        %v3067 = vsel %vm3055, %v3045, %v3048
        %v3068 = vsel %vm3058, %v3054, 1326507024
        %v3069 = vsel %vm3057, %v3051, %v3068
        %v3070 = vsel %vm3056, %v3067, %v3069
        %v3071 = vshll.u32 %v3031, 8
        %v3072 = vand.u32 %v3071, 65535
        %v3073 = vshrl.u32 %v3071, 16
        %v3074 = vand.u32 %v3070, 65535
        %v3075 = vshrl.u32 %v3070, 16
        %v3076 = vmul.u32 %v3072, %v3074
        %v3077 = vmul.u32 %v3072, %v3075
        %v3078 = vmul.u32 %v3073, %v3074
        %v3079 = vmul.u32 %v3073, %v3075
        %v3080 = vshll.u32 %v3077, 16
        %v3081 = vshrl.u32 %v3077, 16
        %v3082 = vshll.u32 %v3078, 16
        %v3083 = vshrl.u32 %v3078, 16
        %vm3084 = vc.u32 %v3076, %v3080
        %v3085 = vsel %vm3084, 1, 0
        %v3086 = vadd.s32 %v3076, %v3080
        %v3087 = vadd.s32 %v3079, %v3085
        %vm3088 = vc.u32 %v3086, %v3082
        %v3089 = vsel %vm3088, 1, 0
        %v3090 = vadd.s32 %v3086, %v3082
        %v3091 = vadd.s32 %v3087, %v3089
        %v3092 = vadd.s32 %v3091, %v3081
        %v3093 = vadd.s32 %v3092, %v3083
        %v3094 = vand.u32 %v3071, 65535
        %v3095 = vshrl.u32 %v3071, 16
        %v3096 = vand.u32 %v3066, 65535
        %v3097 = vshrl.u32 %v3066, 16
        %v3098 = vmul.u32 %v3094, %v3096
        %v3099 = vmul.u32 %v3094, %v3097
        %v3100 = vmul.u32 %v3095, %v3096
        %v3101 = vmul.u32 %v3095, %v3097
        %v3102 = vshll.u32 %v3099, 16
        %v3103 = vshrl.u32 %v3099, 16
        %v3104 = vshll.u32 %v3100, 16
        %v3105 = vshrl.u32 %v3100, 16
        %vm3106 = vc.u32 %v3098, %v3102
        %v3107 = vsel %vm3106, 1, 0
        %v3108 = vadd.s32 %v3098, %v3102
        %v3109 = vadd.s32 %v3101, %v3107
        %vm3110 = vc.u32 %v3108, %v3104
        %v3111 = vsel %vm3110, 1, 0
        %v3112 = vadd.s32 %v3108, %v3104
        %v3113 = vadd.s32 %v3109, %v3111
        %v3114 = vadd.s32 %v3113, %v3103
        %v3115 = vadd.s32 %v3114, %v3105
        %v3116 = vmul.u32 %v3071, %v3062
        %v3117 = vadd.s32 %v3093, %v3112
        %vm3118 = vc.u32 %v3093, %v3112
        %v3119 = vadd.s32 %v3115, 1
        %v3120 = vsel %vm3118, %v3119, %v3115
        %v3121 = vadd.s32 %v3116, %v3120
        %v3122 = vadd.s32 %v3121, 536870912
        %v3123 = vshrl.u32 %v3122, 30
        %v3124 = vshll.u32 %v3123, 30
        %v3125 = vsub.s32 %v3121, %v3124
        %vm3126 = vcmp.lt.s32.totalorder %v3125, 0
        %v3127 = vsub.s32 0, %v3125
        %v3128 = vsel %vm3126, %v3127, %v3125
        %v3129 = vclz %v3128
        %v3130 = vsub.s32 %v3129, 2
        %vm3131 = vcmp.gt.s32.totalorder 0, %v3130
        %v3132 = vsel %vm3131, 0, %v3130
        %v3133 = vsub.s32 32, %v3132
        %v3134 = vshll.u32 %v3125, %v3132
        %v3135 = vshrl.u32 %v3117, %v3133
        %v3136 = vor.u32 %v3134, %v3135
        %v3137 = vsub.s32 4294967266, %v3132
        %v3138 = vadd.s32 %v3137, 127
        %v3139 = vshll.u32 %v3138, 23
        %v3140 = vor.u32 4788187, %v3139
        %v3141 = vand.u32 2147483647, %v3140
        %v3143 = vcvt.s32.f32 %v3136
        %v3144 = vmul.f32 %v3143, %v3141
        %v3145 = vxor.u32 %v3144, 2147483648
        %v3146 = vsel %vm3025, %v3145, %v3144
        %v3147 = vsub.s32 4, %v3123
        %v3148 = vsel %vm3025, %v3147, %v3123
        %v3149 = vsel %vm3024, %v359, %v3146
        %v3150 = vsel %vm3024, 0, %v3148
        %v3151 = vmul.f32 %v3149, %v3149
        %v3152 = vmul.f32 %v3151, -0.001358992
        %v3153 = vadd.f32 %v3152, 0.041655596
        %v3154 = vmul.f32 %v3151, %v3153
        %v3155 = vadd.f32 %v3154, -0.4999988
        %v3156 = vmul.f32 %v3151, %v3155
        %v3157 = vadd.f32 1.0, %v3156
        %v3158 = vmul.f32 %v3149, %v3149
        %v3159 = vmul.f32 %v3158, -0.00019511016
        %v3160 = vadd.f32 %v3159, 0.008332121
        %v3161 = vmul.f32 %v3158, %v3160
        %v3162 = vadd.f32 %v3161, -0.16666654
        %v3163 = vmul.f32 %v3158, %v3162
        %v3164 = vadd.f32 %v3163, 1.0
        %v3165 = vmul.f32 %v3164, %v3149
        %vm3166 = vweird.f32 %v359
        %v3167 = vadd.s32 %v3150, 3
        %v3168 = vand.u32 %v3167, 3
        %vm3169 = vcmp.lt.s32.totalorder %v3168, 2
        %vm3170 = vcmp.eq.s32.totalorder %v3168, 0
        %v3171 = vxor.u32 %v3165, 2147483648
        %v3172 = vsel %vm3170, %v3157, %v3171
        %vm3173 = vcmp.eq.s32.totalorder %v3168, 2
        %v3174 = vxor.u32 %v3157, 2147483648
        %v3175 = vsel %vm3173, %v3174, %v3165
        %v3176 = vsel %vm3169, %v3172, %v3175
        %v3177 = vsel %vm3166, nan, %v3176
        %v3178 = vand.u32 2147483647, %v472
        %vm3179 = vcmp.le.f32.partialorder %v3178, 0.7853982
        %vm3180 = vcmp.lt.s32.totalorder %v472, 0
        %v3181 = vand.u32 %v472, 2139095040
        %v3182 = vshrl.u32 %v3181, 23
        %v3183 = vsub.s32 %v3182, 127
        %v3184 = vand.u32 2147483647, %v472
        %v3185 = vand.u32 %v3184, 8388607
        %v3186 = vor.u32 %v3185, 8388608
        %v3187 = vsub.s32 0, %v3186
        %v3188 = vadd.s32 %v3183, 1
        %vm3189 = vcmp.gt.s32.totalorder %v3188, 0
        %v3190 = vsel %vm3189, %v3188, 0
        %v3191 = vshrl.u32 %v3190, 5
        %v3192 = vand.u32 %v3190, 31
        %v3193 = vsub.s32 32, %v3192
        %v3194 = vshrl.u32 683565275, %v3193
        %v3195 = vshll.u32 683565275, %v3192
        %v3196 = vshrl.u32 2475754826, %v3193
        %v3197 = vor.u32 %v3195, %v3196
        %v3198 = vshll.u32 2475754826, %v3192
        %v3199 = vshrl.u32 2131351028, %v3193
        %v3200 = vor.u32 %v3198, %v3199
        %v3201 = vshll.u32 2131351028, %v3192
        %v3202 = vshrl.u32 2102212464, %v3193
        %v3203 = vor.u32 %v3201, %v3202
        %v3204 = vshll.u32 2102212464, %v3192
        %v3205 = vshrl.u32 920167782, %v3193
        %v3206 = vor.u32 %v3204, %v3205
        %v3207 = vshll.u32 920167782, %v3192
        %v3208 = vshrl.u32 1326507024, %v3193
        %v3209 = vor.u32 %v3207, %v3208
        %vm3210 = vcmp.lt.s32.totalorder %v3191, 1
        %vm3211 = vcmp.lt.s32.totalorder %v3191, 2
        %vm3212 = vcmp.lt.s32.totalorder %v3191, 3
        %vm3213 = vcmp.lt.s32.totalorder %v3191, 4
        %v3214 = vsel %vm3210, %v3194, %v3197
        %v3215 = vsel %vm3213, %v3203, 2102212464
        %v3216 = vsel %vm3212, %v3200, %v3215
        %v3217 = vsel %vm3211, %v3214, %v3216
        %v3218 = vsel %vm3210, %v3197, %v3200
        %v3219 = vsel %vm3213, %v3206, 920167782
        %v3220 = vsel %vm3212, %v3203, %v3219
        %v3221 = vsel %vm3211, %v3218, %v3220
        %v3222 = vsel %vm3210, %v3200, %v3203
        %v3223 = vsel %vm3213, %v3209, 1326507024
        %v3224 = vsel %vm3212, %v3206, %v3223
        %v3225 = vsel %vm3211, %v3222, %v3224
        %v3226 = vshll.u32 %v3186, 8
        %v3227 = vand.u32 %v3226, 65535
        %v3228 = vshrl.u32 %v3226, 16
        %v3229 = vand.u32 %v3225, 65535
        %v3230 = vshrl.u32 %v3225, 16
        %v3231 = vmul.u32 %v3227, %v3229
        %v3232 = vmul.u32 %v3227, %v3230
        %v3233 = vmul.u32 %v3228, %v3229
        %v3234 = vmul.u32 %v3228, %v3230
        %v3235 = vshll.u32 %v3232, 16
        %v3236 = vshrl.u32 %v3232, 16
        %v3237 = vshll.u32 %v3233, 16
        %v3238 = vshrl.u32 %v3233, 16
        %vm3239 = vc.u32 %v3231, %v3235
        %v3240 = vsel %vm3239, 1, 0
        %v3241 = vadd.s32 %v3231, %v3235
        %v3242 = vadd.s32 %v3234, %v3240
        %vm3243 = vc.u32 %v3241, %v3237
        %v3244 = vsel %vm3243, 1, 0
        %v3245 = vadd.s32 %v3241, %v3237
        %v3246 = vadd.s32 %v3242, %v3244
        %v3247 = vadd.s32 %v3246, %v3236
        %v3248 = vadd.s32 %v3247, %v3238
        %v3249 = vand.u32 %v3226, 65535
        %v3250 = vshrl.u32 %v3226, 16
        %v3251 = vand.u32 %v3221, 65535
        %v3252 = vshrl.u32 %v3221, 16
        %v3253 = vmul.u32 %v3249, %v3251
        %v3254 = vmul.u32 %v3249, %v3252
        %v3255 = vmul.u32 %v3250, %v3251
        %v3256 = vmul.u32 %v3250, %v3252
        %v3257 = vshll.u32 %v3254, 16
        %v3258 = vshrl.u32 %v3254, 16
        %v3259 = vshll.u32 %v3255, 16
        %v3260 = vshrl.u32 %v3255, 16
        %vm3261 = vc.u32 %v3253, %v3257
        %v3262 = vsel %vm3261, 1, 0
        %v3263 = vadd.s32 %v3253, %v3257
        %v3264 = vadd.s32 %v3256, %v3262
        %vm3265 = vc.u32 %v3263, %v3259
        %v3266 = vsel %vm3265, 1, 0
        %v3267 = vadd.s32 %v3263, %v3259
        %v3268 = vadd.s32 %v3264, %v3266
        %v3269 = vadd.s32 %v3268, %v3258
        %v3270 = vadd.s32 %v3269, %v3260
        %v3271 = vmul.u32 %v3226, %v3217
        %v3272 = vadd.s32 %v3248, %v3267
        %vm3273 = vc.u32 %v3248, %v3267
        %v3274 = vadd.s32 %v3270, 1
        %v3275 = vsel %vm3273, %v3274, %v3270
        %v3276 = vadd.s32 %v3271, %v3275
        %v3277 = vadd.s32 %v3276, 536870912
        %v3278 = vshrl.u32 %v3277, 30
        %v3279 = vshll.u32 %v3278, 30
        %v3280 = vsub.s32 %v3276, %v3279
        %vm3281 = vcmp.lt.s32.totalorder %v3280, 0
        %v3282 = vsub.s32 0, %v3280
        %v3283 = vsel %vm3281, %v3282, %v3280
        %v3284 = vclz %v3283
        %v3285 = vsub.s32 %v3284, 2
        %vm3286 = vcmp.gt.s32.totalorder 0, %v3285
        %v3287 = vsel %vm3286, 0, %v3285
        %v3288 = vsub.s32 32, %v3287
        %v3289 = vshll.u32 %v3280, %v3287
        %v3290 = vshrl.u32 %v3272, %v3288
        %v3291 = vor.u32 %v3289, %v3290
        %v3292 = vsub.s32 4294967266, %v3287
        %v3293 = vadd.s32 %v3292, 127
        %v3294 = vshll.u32 %v3293, 23
        %v3295 = vor.u32 4788187, %v3294
        %v3296 = vand.u32 2147483647, %v3295
        %v3298 = vcvt.s32.f32 %v3291
        %v3299 = vmul.f32 %v3298, %v3296
        %v3300 = vxor.u32 %v3299, 2147483648
        %v3301 = vsel %vm3180, %v3300, %v3299
        %v3302 = vsub.s32 4, %v3278
        %v3303 = vsel %vm3180, %v3302, %v3278
        %v3304 = vsel %vm3179, %v472, %v3301
        %v3305 = vsel %vm3179, 0, %v3303
        %v3306 = vmul.f32 %v3304, %v3304
        %v3307 = vmul.f32 %v3306, -0.001358992
        %v3308 = vadd.f32 %v3307, 0.041655596
        %v3309 = vmul.f32 %v3306, %v3308
        %v3310 = vadd.f32 %v3309, -0.4999988
        %v3311 = vmul.f32 %v3306, %v3310
        %v3312 = vadd.f32 1.0, %v3311
        %v3313 = vmul.f32 %v3304, %v3304
        %v3314 = vmul.f32 %v3313, -0.00019511016
        %v3315 = vadd.f32 %v3314, 0.008332121
        %v3316 = vmul.f32 %v3313, %v3315
        %v3317 = vadd.f32 %v3316, -0.16666654
        %v3318 = vmul.f32 %v3313, %v3317
        %v3319 = vadd.f32 %v3318, 1.0
        %v3320 = vmul.f32 %v3319, %v3304
        %vm3321 = vweird.f32 %v472
        %v3322 = vadd.s32 %v3305, 3
        %v3323 = vand.u32 %v3322, 3
        %vm3324 = vcmp.lt.s32.totalorder %v3323, 2
        %vm3325 = vcmp.eq.s32.totalorder %v3323, 0
        %v3326 = vxor.u32 %v3320, 2147483648
        %v3327 = vsel %vm3325, %v3312, %v3326
        %vm3328 = vcmp.eq.s32.totalorder %v3323, 2
        %v3329 = vxor.u32 %v3312, 2147483648
        %v3330 = vsel %vm3328, %v3329, %v3320
        %v3331 = vsel %vm3324, %v3327, %v3330
        %v3332 = vsel %vm3321, nan, %v3331
        %v3333 = vand.u32 2147483647, %v362
        %vm3334 = vcmp.le.f32.partialorder %v3333, 0.7853982
        %vm3335 = vcmp.lt.s32.totalorder %v362, 0
        %v3336 = vand.u32 %v362, 2139095040
        %v3337 = vshrl.u32 %v3336, 23
        %v3338 = vsub.s32 %v3337, 127
        %v3339 = vand.u32 2147483647, %v362
        %v3340 = vand.u32 %v3339, 8388607
        %v3341 = vor.u32 %v3340, 8388608
        %v3342 = vsub.s32 0, %v3341
        %v3343 = vadd.s32 %v3338, 1
        %vm3344 = vcmp.gt.s32.totalorder %v3343, 0
        %v3345 = vsel %vm3344, %v3343, 0
        %v3346 = vshrl.u32 %v3345, 5
        %v3347 = vand.u32 %v3345, 31
        %v3348 = vsub.s32 32, %v3347
        %v3349 = vshrl.u32 683565275, %v3348
        %v3350 = vshll.u32 683565275, %v3347
        %v3351 = vshrl.u32 2475754826, %v3348
        %v3352 = vor.u32 %v3350, %v3351
        %v3353 = vshll.u32 2475754826, %v3347
        %v3354 = vshrl.u32 2131351028, %v3348
        %v3355 = vor.u32 %v3353, %v3354
        %v3356 = vshll.u32 2131351028, %v3347
        %v3357 = vshrl.u32 2102212464, %v3348
        %v3358 = vor.u32 %v3356, %v3357
        %v3359 = vshll.u32 2102212464, %v3347
        %v3360 = vshrl.u32 920167782, %v3348
        %v3361 = vor.u32 %v3359, %v3360
        %v3362 = vshll.u32 920167782, %v3347
        %v3363 = vshrl.u32 1326507024, %v3348
        %v3364 = vor.u32 %v3362, %v3363
        %vm3365 = vcmp.lt.s32.totalorder %v3346, 1
        %vm3366 = vcmp.lt.s32.totalorder %v3346, 2
        %vm3367 = vcmp.lt.s32.totalorder %v3346, 3
        %vm3368 = vcmp.lt.s32.totalorder %v3346, 4
        %v3369 = vsel %vm3365, %v3349, %v3352
        %v3370 = vsel %vm3368, %v3358, 2102212464
        %v3371 = vsel %vm3367, %v3355, %v3370
        %v3372 = vsel %vm3366, %v3369, %v3371
        %v3373 = vsel %vm3365, %v3352, %v3355
        %v3374 = vsel %vm3368, %v3361, 920167782
        %v3375 = vsel %vm3367, %v3358, %v3374
        %v3376 = vsel %vm3366, %v3373, %v3375
        %v3377 = vsel %vm3365, %v3355, %v3358
        %v3378 = vsel %vm3368, %v3364, 1326507024
        %v3379 = vsel %vm3367, %v3361, %v3378
        %v3380 = vsel %vm3366, %v3377, %v3379
        %v3381 = vshll.u32 %v3341, 8
        %v3382 = vand.u32 %v3381, 65535
        %v3383 = vshrl.u32 %v3381, 16
        %v3384 = vand.u32 %v3380, 65535
        %v3385 = vshrl.u32 %v3380, 16
        %v3386 = vmul.u32 %v3382, %v3384
        %v3387 = vmul.u32 %v3382, %v3385
        %v3388 = vmul.u32 %v3383, %v3384
        %v3389 = vmul.u32 %v3383, %v3385
        %v3390 = vshll.u32 %v3387, 16
        %v3391 = vshrl.u32 %v3387, 16
        %v3392 = vshll.u32 %v3388, 16
        %v3393 = vshrl.u32 %v3388, 16
        %vm3394 = vc.u32 %v3386, %v3390
        %v3395 = vsel %vm3394, 1, 0
        %v3396 = vadd.s32 %v3386, %v3390
        %v3397 = vadd.s32 %v3389, %v3395
        %vm3398 = vc.u32 %v3396, %v3392
        %v3399 = vsel %vm3398, 1, 0
        %v3400 = vadd.s32 %v3396, %v3392
        %v3401 = vadd.s32 %v3397, %v3399
        %v3402 = vadd.s32 %v3401, %v3391
        %v3403 = vadd.s32 %v3402, %v3393
        %v3404 = vand.u32 %v3381, 65535
        %v3405 = vshrl.u32 %v3381, 16
        %v3406 = vand.u32 %v3376, 65535
        %v3407 = vshrl.u32 %v3376, 16
        %v3408 = vmul.u32 %v3404, %v3406
        %v3409 = vmul.u32 %v3404, %v3407
        %v3410 = vmul.u32 %v3405, %v3406
        %v3411 = vmul.u32 %v3405, %v3407
        %v3412 = vshll.u32 %v3409, 16
        %v3413 = vshrl.u32 %v3409, 16
        %v3414 = vshll.u32 %v3410, 16
        %v3415 = vshrl.u32 %v3410, 16
        %vm3416 = vc.u32 %v3408, %v3412
        %v3417 = vsel %vm3416, 1, 0
        %v3418 = vadd.s32 %v3408, %v3412
        %v3419 = vadd.s32 %v3411, %v3417
        %vm3420 = vc.u32 %v3418, %v3414
        %v3421 = vsel %vm3420, 1, 0
        %v3422 = vadd.s32 %v3418, %v3414
        %v3423 = vadd.s32 %v3419, %v3421
        %v3424 = vadd.s32 %v3423, %v3413
        %v3425 = vadd.s32 %v3424, %v3415
        %v3426 = vmul.u32 %v3381, %v3372
        %v3427 = vadd.s32 %v3403, %v3422
        %vm3428 = vc.u32 %v3403, %v3422
        %v3429 = vadd.s32 %v3425, 1
        %v3430 = vsel %vm3428, %v3429, %v3425
        %v3431 = vadd.s32 %v3426, %v3430
        %v3432 = vadd.s32 %v3431, 536870912
        %v3433 = vshrl.u32 %v3432, 30
        %v3434 = vshll.u32 %v3433, 30
        %v3435 = vsub.s32 %v3431, %v3434
        %vm3436 = vcmp.lt.s32.totalorder %v3435, 0
        %v3437 = vsub.s32 0, %v3435
        %v3438 = vsel %vm3436, %v3437, %v3435
        %v3439 = vclz %v3438
        %v3440 = vsub.s32 %v3439, 2
        %vm3441 = vcmp.gt.s32.totalorder 0, %v3440
        %v3442 = vsel %vm3441, 0, %v3440
        %v3443 = vsub.s32 32, %v3442
        %v3444 = vshll.u32 %v3435, %v3442
        %v3445 = vshrl.u32 %v3427, %v3443
        %v3446 = vor.u32 %v3444, %v3445
        %v3447 = vsub.s32 4294967266, %v3442
        %v3448 = vadd.s32 %v3447, 127
        %v3449 = vshll.u32 %v3448, 23
        %v3450 = vor.u32 4788187, %v3449
        %v3451 = vand.u32 2147483647, %v3450
        %v3453 = vcvt.s32.f32 %v3446
        %v3454 = vmul.f32 %v3453, %v3451
        %v3455 = vxor.u32 %v3454, 2147483648
        %v3456 = vsel %vm3335, %v3455, %v3454
        %v3457 = vsub.s32 4, %v3433
        %v3458 = vsel %vm3335, %v3457, %v3433
        %v3459 = vsel %vm3334, %v362, %v3456
        %v3460 = vsel %vm3334, 0, %v3458
        %v3461 = vmul.f32 %v3459, %v3459
        %v3462 = vmul.f32 %v3461, -0.001358992
        %v3463 = vadd.f32 %v3462, 0.041655596
        %v3464 = vmul.f32 %v3461, %v3463
        %v3465 = vadd.f32 %v3464, -0.4999988
        %v3466 = vmul.f32 %v3461, %v3465
        %v3467 = vadd.f32 1.0, %v3466
        %v3468 = vmul.f32 %v3459, %v3459
        %v3469 = vmul.f32 %v3468, -0.00019511016
        %v3470 = vadd.f32 %v3469, 0.008332121
        %v3471 = vmul.f32 %v3468, %v3470
        %v3472 = vadd.f32 %v3471, -0.16666654
        %v3473 = vmul.f32 %v3468, %v3472
        %v3474 = vadd.f32 %v3473, 1.0
        %v3475 = vmul.f32 %v3474, %v3459
        %vm3476 = vweird.f32 %v362
        %v3477 = vadd.s32 %v3460, 3
        %v3478 = vand.u32 %v3477, 3
        %vm3479 = vcmp.lt.s32.totalorder %v3478, 2
        %vm3480 = vcmp.eq.s32.totalorder %v3478, 0
        %v3481 = vxor.u32 %v3475, 2147483648
        %v3482 = vsel %vm3480, %v3467, %v3481
        %vm3483 = vcmp.eq.s32.totalorder %v3478, 2
        %v3484 = vxor.u32 %v3467, 2147483648
        %v3485 = vsel %vm3483, %v3484, %v3475
        %v3486 = vsel %vm3479, %v3482, %v3485
        %v3487 = vsel %vm3476, nan, %v3486
        %v3488 = vand.u32 2147483647, %v475
        %vm3489 = vcmp.le.f32.partialorder %v3488, 0.7853982
        %vm3490 = vcmp.lt.s32.totalorder %v475, 0
        %v3491 = vand.u32 %v475, 2139095040
        %v3492 = vshrl.u32 %v3491, 23
        %v3493 = vsub.s32 %v3492, 127
        %v3494 = vand.u32 2147483647, %v475
        %v3495 = vand.u32 %v3494, 8388607
        %v3496 = vor.u32 %v3495, 8388608
        %v3497 = vsub.s32 0, %v3496
        %v3498 = vadd.s32 %v3493, 1
        %vm3499 = vcmp.gt.s32.totalorder %v3498, 0
        %v3500 = vsel %vm3499, %v3498, 0
        %v3501 = vshrl.u32 %v3500, 5
        %v3502 = vand.u32 %v3500, 31
        %v3503 = vsub.s32 32, %v3502
        %v3504 = vshrl.u32 683565275, %v3503
        %v3505 = vshll.u32 683565275, %v3502
        %v3506 = vshrl.u32 2475754826, %v3503
        %v3507 = vor.u32 %v3505, %v3506
        %v3508 = vshll.u32 2475754826, %v3502
        %v3509 = vshrl.u32 2131351028, %v3503
        %v3510 = vor.u32 %v3508, %v3509
        %v3511 = vshll.u32 2131351028, %v3502
        %v3512 = vshrl.u32 2102212464, %v3503
        %v3513 = vor.u32 %v3511, %v3512
        %v3514 = vshll.u32 2102212464, %v3502
        %v3515 = vshrl.u32 920167782, %v3503
        %v3516 = vor.u32 %v3514, %v3515
        %v3517 = vshll.u32 920167782, %v3502
        %v3518 = vshrl.u32 1326507024, %v3503
        %v3519 = vor.u32 %v3517, %v3518
        %vm3520 = vcmp.lt.s32.totalorder %v3501, 1
        %vm3521 = vcmp.lt.s32.totalorder %v3501, 2
        %vm3522 = vcmp.lt.s32.totalorder %v3501, 3
        %vm3523 = vcmp.lt.s32.totalorder %v3501, 4
        %v3524 = vsel %vm3520, %v3504, %v3507
        %v3525 = vsel %vm3523, %v3513, 2102212464
        %v3526 = vsel %vm3522, %v3510, %v3525
        %v3527 = vsel %vm3521, %v3524, %v3526
        %v3528 = vsel %vm3520, %v3507, %v3510
        %v3529 = vsel %vm3523, %v3516, 920167782
        %v3530 = vsel %vm3522, %v3513, %v3529
        %v3531 = vsel %vm3521, %v3528, %v3530
        %v3532 = vsel %vm3520, %v3510, %v3513
        %v3533 = vsel %vm3523, %v3519, 1326507024
        %v3534 = vsel %vm3522, %v3516, %v3533
        %v3535 = vsel %vm3521, %v3532, %v3534
        %v3536 = vshll.u32 %v3496, 8
        %v3537 = vand.u32 %v3536, 65535
        %v3538 = vshrl.u32 %v3536, 16
        %v3539 = vand.u32 %v3535, 65535
        %v3540 = vshrl.u32 %v3535, 16
        %v3541 = vmul.u32 %v3537, %v3539
        %v3542 = vmul.u32 %v3537, %v3540
        %v3543 = vmul.u32 %v3538, %v3539
        %v3544 = vmul.u32 %v3538, %v3540
        %v3545 = vshll.u32 %v3542, 16
        %v3546 = vshrl.u32 %v3542, 16
        %v3547 = vshll.u32 %v3543, 16
        %v3548 = vshrl.u32 %v3543, 16
        %vm3549 = vc.u32 %v3541, %v3545
        %v3550 = vsel %vm3549, 1, 0
        %v3551 = vadd.s32 %v3541, %v3545
        %v3552 = vadd.s32 %v3544, %v3550
        %vm3553 = vc.u32 %v3551, %v3547
        %v3554 = vsel %vm3553, 1, 0
        %v3555 = vadd.s32 %v3551, %v3547
        %v3556 = vadd.s32 %v3552, %v3554
        %v3557 = vadd.s32 %v3556, %v3546
        %v3558 = vadd.s32 %v3557, %v3548
        %v3559 = vand.u32 %v3536, 65535
        %v3560 = vshrl.u32 %v3536, 16
        %v3561 = vand.u32 %v3531, 65535
        %v3562 = vshrl.u32 %v3531, 16
        %v3563 = vmul.u32 %v3559, %v3561
        %v3564 = vmul.u32 %v3559, %v3562
        %v3565 = vmul.u32 %v3560, %v3561
        %v3566 = vmul.u32 %v3560, %v3562
        %v3567 = vshll.u32 %v3564, 16
        %v3568 = vshrl.u32 %v3564, 16
        %v3569 = vshll.u32 %v3565, 16
        %v3570 = vshrl.u32 %v3565, 16
        %vm3571 = vc.u32 %v3563, %v3567
        %v3572 = vsel %vm3571, 1, 0
        %v3573 = vadd.s32 %v3563, %v3567
        %v3574 = vadd.s32 %v3566, %v3572
        %vm3575 = vc.u32 %v3573, %v3569
        %v3576 = vsel %vm3575, 1, 0
        %v3577 = vadd.s32 %v3573, %v3569
        %v3578 = vadd.s32 %v3574, %v3576
        %v3579 = vadd.s32 %v3578, %v3568
        %v3580 = vadd.s32 %v3579, %v3570
        %v3581 = vmul.u32 %v3536, %v3527
        %v3582 = vadd.s32 %v3558, %v3577
        %vm3583 = vc.u32 %v3558, %v3577
        %v3584 = vadd.s32 %v3580, 1
        %v3585 = vsel %vm3583, %v3584, %v3580
        %v3586 = vadd.s32 %v3581, %v3585
        %v3587 = vadd.s32 %v3586, 536870912
        %v3588 = vshrl.u32 %v3587, 30
        %v3589 = vshll.u32 %v3588, 30
        %v3590 = vsub.s32 %v3586, %v3589
        %vm3591 = vcmp.lt.s32.totalorder %v3590, 0
        %v3592 = vsub.s32 0, %v3590
        %v3593 = vsel %vm3591, %v3592, %v3590
        %v3594 = vclz %v3593
        %v3595 = vsub.s32 %v3594, 2
        %vm3596 = vcmp.gt.s32.totalorder 0, %v3595
        %v3597 = vsel %vm3596, 0, %v3595
        %v3598 = vsub.s32 32, %v3597
        %v3599 = vshll.u32 %v3590, %v3597
        %v3600 = vshrl.u32 %v3582, %v3598
        %v3601 = vor.u32 %v3599, %v3600
        %v3602 = vsub.s32 4294967266, %v3597
        %v3603 = vadd.s32 %v3602, 127
        %v3604 = vshll.u32 %v3603, 23
        %v3605 = vor.u32 4788187, %v3604
        %v3606 = vand.u32 2147483647, %v3605
        %v3608 = vcvt.s32.f32 %v3601
        %v3609 = vmul.f32 %v3608, %v3606
        %v3610 = vxor.u32 %v3609, 2147483648
        %v3611 = vsel %vm3490, %v3610, %v3609
        %v3612 = vsub.s32 4, %v3588
        %v3613 = vsel %vm3490, %v3612, %v3588
        %v3614 = vsel %vm3489, %v475, %v3611
        %v3615 = vsel %vm3489, 0, %v3613
        %v3616 = vmul.f32 %v3614, %v3614
        %v3617 = vmul.f32 %v3616, -0.001358992
        %v3618 = vadd.f32 %v3617, 0.041655596
        %v3619 = vmul.f32 %v3616, %v3618
        %v3620 = vadd.f32 %v3619, -0.4999988
        %v3621 = vmul.f32 %v3616, %v3620
        %v3622 = vadd.f32 1.0, %v3621
        %v3623 = vmul.f32 %v3614, %v3614
        %v3624 = vmul.f32 %v3623, -0.00019511016
        %v3625 = vadd.f32 %v3624, 0.008332121
        %v3626 = vmul.f32 %v3623, %v3625
        %v3627 = vadd.f32 %v3626, -0.16666654
        %v3628 = vmul.f32 %v3623, %v3627
        %v3629 = vadd.f32 %v3628, 1.0
        %v3630 = vmul.f32 %v3629, %v3614
        %vm3631 = vweird.f32 %v475
        %v3632 = vadd.s32 %v3615, 3
        %v3633 = vand.u32 %v3632, 3
        %vm3634 = vcmp.lt.s32.totalorder %v3633, 2
        %vm3635 = vcmp.eq.s32.totalorder %v3633, 0
        %v3636 = vxor.u32 %v3630, 2147483648
        %v3637 = vsel %vm3635, %v3622, %v3636
        %vm3638 = vcmp.eq.s32.totalorder %v3633, 2
        %v3639 = vxor.u32 %v3622, 2147483648
        %v3640 = vsel %vm3638, %v3639, %v3630
        %v3641 = vsel %vm3634, %v3637, %v3640
        %v3642 = vsel %vm3631, nan, %v3641
        %v3643 = vand.u32 2147483647, %v365
        %vm3644 = vcmp.le.f32.partialorder %v3643, 0.7853982
        %vm3645 = vcmp.lt.s32.totalorder %v365, 0
        %v3646 = vand.u32 %v365, 2139095040
        %v3647 = vshrl.u32 %v3646, 23
        %v3648 = vsub.s32 %v3647, 127
        %v3649 = vand.u32 2147483647, %v365
        %v3650 = vand.u32 %v3649, 8388607
        %v3651 = vor.u32 %v3650, 8388608
        %v3652 = vsub.s32 0, %v3651
        %v3653 = vadd.s32 %v3648, 1
        %vm3654 = vcmp.gt.s32.totalorder %v3653, 0
        %v3655 = vsel %vm3654, %v3653, 0
        %v3656 = vshrl.u32 %v3655, 5
        %v3657 = vand.u32 %v3655, 31
        %v3658 = vsub.s32 32, %v3657
        %v3659 = vshrl.u32 683565275, %v3658
        %v3660 = vshll.u32 683565275, %v3657
        %v3661 = vshrl.u32 2475754826, %v3658
        %v3662 = vor.u32 %v3660, %v3661
        %v3663 = vshll.u32 2475754826, %v3657
        %v3664 = vshrl.u32 2131351028, %v3658
        %v3665 = vor.u32 %v3663, %v3664
        %v3666 = vshll.u32 2131351028, %v3657
        %v3667 = vshrl.u32 2102212464, %v3658
        %v3668 = vor.u32 %v3666, %v3667
        %v3669 = vshll.u32 2102212464, %v3657
        %v3670 = vshrl.u32 920167782, %v3658
        %v3671 = vor.u32 %v3669, %v3670
        %v3672 = vshll.u32 920167782, %v3657
        %v3673 = vshrl.u32 1326507024, %v3658
        %v3674 = vor.u32 %v3672, %v3673
        %vm3675 = vcmp.lt.s32.totalorder %v3656, 1
        %vm3676 = vcmp.lt.s32.totalorder %v3656, 2
        %vm3677 = vcmp.lt.s32.totalorder %v3656, 3
        %vm3678 = vcmp.lt.s32.totalorder %v3656, 4
        %v3679 = vsel %vm3675, %v3659, %v3662
        %v3680 = vsel %vm3678, %v3668, 2102212464
        %v3681 = vsel %vm3677, %v3665, %v3680
        %v3682 = vsel %vm3676, %v3679, %v3681
        %v3683 = vsel %vm3675, %v3662, %v3665
        %v3684 = vsel %vm3678, %v3671, 920167782
        %v3685 = vsel %vm3677, %v3668, %v3684
        %v3686 = vsel %vm3676, %v3683, %v3685
        %v3687 = vsel %vm3675, %v3665, %v3668
        %v3688 = vsel %vm3678, %v3674, 1326507024
        %v3689 = vsel %vm3677, %v3671, %v3688
        %v3690 = vsel %vm3676, %v3687, %v3689
        %v3691 = vshll.u32 %v3651, 8
        %v3692 = vand.u32 %v3691, 65535
        %v3693 = vshrl.u32 %v3691, 16
        %v3694 = vand.u32 %v3690, 65535
        %v3695 = vshrl.u32 %v3690, 16
        %v3696 = vmul.u32 %v3692, %v3694
        %v3697 = vmul.u32 %v3692, %v3695
        %v3698 = vmul.u32 %v3693, %v3694
        %v3699 = vmul.u32 %v3693, %v3695
        %v3700 = vshll.u32 %v3697, 16
        %v3701 = vshrl.u32 %v3697, 16
        %v3702 = vshll.u32 %v3698, 16
        %v3703 = vshrl.u32 %v3698, 16
        %vm3704 = vc.u32 %v3696, %v3700
        %v3705 = vsel %vm3704, 1, 0
        %v3706 = vadd.s32 %v3696, %v3700
        %v3707 = vadd.s32 %v3699, %v3705
        %vm3708 = vc.u32 %v3706, %v3702
        %v3709 = vsel %vm3708, 1, 0
        %v3710 = vadd.s32 %v3706, %v3702
        %v3711 = vadd.s32 %v3707, %v3709
        %v3712 = vadd.s32 %v3711, %v3701
        %v3713 = vadd.s32 %v3712, %v3703
        %v3714 = vand.u32 %v3691, 65535
        %v3715 = vshrl.u32 %v3691, 16
        %v3716 = vand.u32 %v3686, 65535
        %v3717 = vshrl.u32 %v3686, 16
        %v3718 = vmul.u32 %v3714, %v3716
        %v3719 = vmul.u32 %v3714, %v3717
        %v3720 = vmul.u32 %v3715, %v3716
        %v3721 = vmul.u32 %v3715, %v3717
        %v3722 = vshll.u32 %v3719, 16
        %v3723 = vshrl.u32 %v3719, 16
        %v3724 = vshll.u32 %v3720, 16
        %v3725 = vshrl.u32 %v3720, 16
        %vm3726 = vc.u32 %v3718, %v3722
        %v3727 = vsel %vm3726, 1, 0
        %v3728 = vadd.s32 %v3718, %v3722
        %v3729 = vadd.s32 %v3721, %v3727
        %vm3730 = vc.u32 %v3728, %v3724
        %v3731 = vsel %vm3730, 1, 0
        %v3732 = vadd.s32 %v3728, %v3724
        %v3733 = vadd.s32 %v3729, %v3731
        %v3734 = vadd.s32 %v3733, %v3723
        %v3735 = vadd.s32 %v3734, %v3725
        %v3736 = vmul.u32 %v3691, %v3682
        %v3737 = vadd.s32 %v3713, %v3732
        %vm3738 = vc.u32 %v3713, %v3732
        %v3739 = vadd.s32 %v3735, 1
        %v3740 = vsel %vm3738, %v3739, %v3735
        %v3741 = vadd.s32 %v3736, %v3740
        %v3742 = vadd.s32 %v3741, 536870912
        %v3743 = vshrl.u32 %v3742, 30
        %v3744 = vshll.u32 %v3743, 30
        %v3745 = vsub.s32 %v3741, %v3744
        %vm3746 = vcmp.lt.s32.totalorder %v3745, 0
        %v3747 = vsub.s32 0, %v3745
        %v3748 = vsel %vm3746, %v3747, %v3745
        %v3749 = vclz %v3748
        %v3750 = vsub.s32 %v3749, 2
        %vm3751 = vcmp.gt.s32.totalorder 0, %v3750
        %v3752 = vsel %vm3751, 0, %v3750
        %v3753 = vsub.s32 32, %v3752
        %v3754 = vshll.u32 %v3745, %v3752
        %v3755 = vshrl.u32 %v3737, %v3753
        %v3756 = vor.u32 %v3754, %v3755
        %v3757 = vsub.s32 4294967266, %v3752
        %v3758 = vadd.s32 %v3757, 127
        %v3759 = vshll.u32 %v3758, 23
        %v3760 = vor.u32 4788187, %v3759
        %v3761 = vand.u32 2147483647, %v3760
        %v3763 = vcvt.s32.f32 %v3756
        %v3764 = vmul.f32 %v3763, %v3761
        %v3765 = vxor.u32 %v3764, 2147483648
        %v3766 = vsel %vm3645, %v3765, %v3764
        %v3767 = vsub.s32 4, %v3743
        %v3768 = vsel %vm3645, %v3767, %v3743
        %v3769 = vsel %vm3644, %v365, %v3766
        %v3770 = vsel %vm3644, 0, %v3768
        %v3771 = vmul.f32 %v3769, %v3769
        %v3772 = vmul.f32 %v3771, -0.001358992
        %v3773 = vadd.f32 %v3772, 0.041655596
        %v3774 = vmul.f32 %v3771, %v3773
        %v3775 = vadd.f32 %v3774, -0.4999988
        %v3776 = vmul.f32 %v3771, %v3775
        %v3777 = vadd.f32 1.0, %v3776
        %v3778 = vmul.f32 %v3769, %v3769
        %v3779 = vmul.f32 %v3778, -0.00019511016
        %v3780 = vadd.f32 %v3779, 0.008332121
        %v3781 = vmul.f32 %v3778, %v3780
        %v3782 = vadd.f32 %v3781, -0.16666654
        %v3783 = vmul.f32 %v3778, %v3782
        %v3784 = vadd.f32 %v3783, 1.0
        %v3785 = vmul.f32 %v3784, %v3769
        %vm3786 = vweird.f32 %v365
        %v3787 = vadd.s32 %v3770, 3
        %v3788 = vand.u32 %v3787, 3
        %vm3789 = vcmp.lt.s32.totalorder %v3788, 2
        %vm3790 = vcmp.eq.s32.totalorder %v3788, 0
        %v3791 = vxor.u32 %v3785, 2147483648
        %v3792 = vsel %vm3790, %v3777, %v3791
        %vm3793 = vcmp.eq.s32.totalorder %v3788, 2
        %v3794 = vxor.u32 %v3777, 2147483648
        %v3795 = vsel %vm3793, %v3794, %v3785
        %v3796 = vsel %vm3789, %v3792, %v3795
        %v3797 = vsel %vm3786, nan, %v3796
        %v3798 = vand.u32 2147483647, %v478
        %vm3799 = vcmp.le.f32.partialorder %v3798, 0.7853982
        %vm3800 = vcmp.lt.s32.totalorder %v478, 0
        %v3801 = vand.u32 %v478, 2139095040
        %v3802 = vshrl.u32 %v3801, 23
        %v3803 = vsub.s32 %v3802, 127
        %v3804 = vand.u32 2147483647, %v478
        %v3805 = vand.u32 %v3804, 8388607
        %v3806 = vor.u32 %v3805, 8388608
        %v3807 = vsub.s32 0, %v3806
        %v3808 = vadd.s32 %v3803, 1
        %vm3809 = vcmp.gt.s32.totalorder %v3808, 0
        %v3810 = vsel %vm3809, %v3808, 0
        %v3811 = vshrl.u32 %v3810, 5
        %v3812 = vand.u32 %v3810, 31
        %v3813 = vsub.s32 32, %v3812
        %v3814 = vshrl.u32 683565275, %v3813
        %v3815 = vshll.u32 683565275, %v3812
        %v3816 = vshrl.u32 2475754826, %v3813
        %v3817 = vor.u32 %v3815, %v3816
        %v3818 = vshll.u32 2475754826, %v3812
        %v3819 = vshrl.u32 2131351028, %v3813
        %v3820 = vor.u32 %v3818, %v3819
        %v3821 = vshll.u32 2131351028, %v3812
        %v3822 = vshrl.u32 2102212464, %v3813
        %v3823 = vor.u32 %v3821, %v3822
        %v3824 = vshll.u32 2102212464, %v3812
        %v3825 = vshrl.u32 920167782, %v3813
        %v3826 = vor.u32 %v3824, %v3825
        %v3827 = vshll.u32 920167782, %v3812
        %v3828 = vshrl.u32 1326507024, %v3813
        %v3829 = vor.u32 %v3827, %v3828
        %vm3830 = vcmp.lt.s32.totalorder %v3811, 1
        %vm3831 = vcmp.lt.s32.totalorder %v3811, 2
        %vm3832 = vcmp.lt.s32.totalorder %v3811, 3
        %vm3833 = vcmp.lt.s32.totalorder %v3811, 4
        %v3834 = vsel %vm3830, %v3814, %v3817
        %v3835 = vsel %vm3833, %v3823, 2102212464
        %v3836 = vsel %vm3832, %v3820, %v3835
        %v3837 = vsel %vm3831, %v3834, %v3836
        %v3838 = vsel %vm3830, %v3817, %v3820
        %v3839 = vsel %vm3833, %v3826, 920167782
        %v3840 = vsel %vm3832, %v3823, %v3839
        %v3841 = vsel %vm3831, %v3838, %v3840
        %v3842 = vsel %vm3830, %v3820, %v3823
        %v3843 = vsel %vm3833, %v3829, 1326507024
        %v3844 = vsel %vm3832, %v3826, %v3843
        %v3845 = vsel %vm3831, %v3842, %v3844
        %v3846 = vshll.u32 %v3806, 8
        %v3847 = vand.u32 %v3846, 65535
        %v3848 = vshrl.u32 %v3846, 16
        %v3849 = vand.u32 %v3845, 65535
        %v3850 = vshrl.u32 %v3845, 16
        %v3851 = vmul.u32 %v3847, %v3849
        %v3852 = vmul.u32 %v3847, %v3850
        %v3853 = vmul.u32 %v3848, %v3849
        %v3854 = vmul.u32 %v3848, %v3850
        %v3855 = vshll.u32 %v3852, 16
        %v3856 = vshrl.u32 %v3852, 16
        %v3857 = vshll.u32 %v3853, 16
        %v3858 = vshrl.u32 %v3853, 16
        %vm3859 = vc.u32 %v3851, %v3855
        %v3860 = vsel %vm3859, 1, 0
        %v3861 = vadd.s32 %v3851, %v3855
        %v3862 = vadd.s32 %v3854, %v3860
        %vm3863 = vc.u32 %v3861, %v3857
        %v3864 = vsel %vm3863, 1, 0
        %v3865 = vadd.s32 %v3861, %v3857
        %v3866 = vadd.s32 %v3862, %v3864
        %v3867 = vadd.s32 %v3866, %v3856
        %v3868 = vadd.s32 %v3867, %v3858
        %v3869 = vand.u32 %v3846, 65535
        %v3870 = vshrl.u32 %v3846, 16
        %v3871 = vand.u32 %v3841, 65535
        %v3872 = vshrl.u32 %v3841, 16
        %v3873 = vmul.u32 %v3869, %v3871
        %v3874 = vmul.u32 %v3869, %v3872
        %v3875 = vmul.u32 %v3870, %v3871
        %v3876 = vmul.u32 %v3870, %v3872
        %v3877 = vshll.u32 %v3874, 16
        %v3878 = vshrl.u32 %v3874, 16
        %v3879 = vshll.u32 %v3875, 16
        %v3880 = vshrl.u32 %v3875, 16
        %vm3881 = vc.u32 %v3873, %v3877
        %v3882 = vsel %vm3881, 1, 0
        %v3883 = vadd.s32 %v3873, %v3877
        %v3884 = vadd.s32 %v3876, %v3882
        %vm3885 = vc.u32 %v3883, %v3879
        %v3886 = vsel %vm3885, 1, 0
        %v3887 = vadd.s32 %v3883, %v3879
        %v3888 = vadd.s32 %v3884, %v3886
        %v3889 = vadd.s32 %v3888, %v3878
        %v3890 = vadd.s32 %v3889, %v3880
        %v3891 = vmul.u32 %v3846, %v3837
        %v3892 = vadd.s32 %v3868, %v3887
        %vm3893 = vc.u32 %v3868, %v3887
        %v3894 = vadd.s32 %v3890, 1
        %v3895 = vsel %vm3893, %v3894, %v3890
        %v3896 = vadd.s32 %v3891, %v3895
        %v3897 = vadd.s32 %v3896, 536870912
        %v3898 = vshrl.u32 %v3897, 30
        %v3899 = vshll.u32 %v3898, 30
        %v3900 = vsub.s32 %v3896, %v3899
        %vm3901 = vcmp.lt.s32.totalorder %v3900, 0
        %v3902 = vsub.s32 0, %v3900
        %v3903 = vsel %vm3901, %v3902, %v3900
        %v3904 = vclz %v3903
        %v3905 = vsub.s32 %v3904, 2
        %vm3906 = vcmp.gt.s32.totalorder 0, %v3905
        %v3907 = vsel %vm3906, 0, %v3905
        %v3908 = vsub.s32 32, %v3907
        %v3909 = vshll.u32 %v3900, %v3907
        %v3910 = vshrl.u32 %v3892, %v3908
        %v3911 = vor.u32 %v3909, %v3910
        %v3912 = vsub.s32 4294967266, %v3907
        %v3913 = vadd.s32 %v3912, 127
        %v3914 = vshll.u32 %v3913, 23
        %v3915 = vor.u32 4788187, %v3914
        %v3916 = vand.u32 2147483647, %v3915
        %v3918 = vcvt.s32.f32 %v3911
        %v3919 = vmul.f32 %v3918, %v3916
        %v3920 = vxor.u32 %v3919, 2147483648
        %v3921 = vsel %vm3800, %v3920, %v3919
        %v3922 = vsub.s32 4, %v3898
        %v3923 = vsel %vm3800, %v3922, %v3898
        %v3924 = vsel %vm3799, %v478, %v3921
        %v3925 = vsel %vm3799, 0, %v3923
        %v3926 = vmul.f32 %v3924, %v3924
        %v3927 = vmul.f32 %v3926, -0.001358992
        %v3928 = vadd.f32 %v3927, 0.041655596
        %v3929 = vmul.f32 %v3926, %v3928
        %v3930 = vadd.f32 %v3929, -0.4999988
        %v3931 = vmul.f32 %v3926, %v3930
        %v3932 = vadd.f32 1.0, %v3931
        %v3933 = vmul.f32 %v3924, %v3924
        %v3934 = vmul.f32 %v3933, -0.00019511016
        %v3935 = vadd.f32 %v3934, 0.008332121
        %v3936 = vmul.f32 %v3933, %v3935
        %v3937 = vadd.f32 %v3936, -0.16666654
        %v3938 = vmul.f32 %v3933, %v3937
        %v3939 = vadd.f32 %v3938, 1.0
        %v3940 = vmul.f32 %v3939, %v3924
        %vm3941 = vweird.f32 %v478
        %v3942 = vadd.s32 %v3925, 3
        %v3943 = vand.u32 %v3942, 3
        %vm3944 = vcmp.lt.s32.totalorder %v3943, 2
        %vm3945 = vcmp.eq.s32.totalorder %v3943, 0
        %v3946 = vxor.u32 %v3940, 2147483648
        %v3947 = vsel %vm3945, %v3932, %v3946
        %vm3948 = vcmp.eq.s32.totalorder %v3943, 2
        %v3949 = vxor.u32 %v3932, 2147483648
        %v3950 = vsel %vm3948, %v3949, %v3940
        %v3951 = vsel %vm3944, %v3947, %v3950
        %v3952 = vsel %vm3941, nan, %v3951
        %v3953 = vand.u32 2147483647, %v368
        %vm3954 = vcmp.le.f32.partialorder %v3953, 0.7853982
        %vm3955 = vcmp.lt.s32.totalorder %v368, 0
        %v3956 = vand.u32 %v368, 2139095040
        %v3957 = vshrl.u32 %v3956, 23
        %v3958 = vsub.s32 %v3957, 127
        %v3959 = vand.u32 2147483647, %v368
        %v3960 = vand.u32 %v3959, 8388607
        %v3961 = vor.u32 %v3960, 8388608
        %v3962 = vsub.s32 0, %v3961
        %v3963 = vadd.s32 %v3958, 1
        %vm3964 = vcmp.gt.s32.totalorder %v3963, 0
        %v3965 = vsel %vm3964, %v3963, 0
        %v3966 = vshrl.u32 %v3965, 5
        %v3967 = vand.u32 %v3965, 31
        %v3968 = vsub.s32 32, %v3967
        %v3969 = vshrl.u32 683565275, %v3968
        %v3970 = vshll.u32 683565275, %v3967
        %v3971 = vshrl.u32 2475754826, %v3968
        %v3972 = vor.u32 %v3970, %v3971
        %v3973 = vshll.u32 2475754826, %v3967
        %v3974 = vshrl.u32 2131351028, %v3968
        %v3975 = vor.u32 %v3973, %v3974
        %v3976 = vshll.u32 2131351028, %v3967
        %v3977 = vshrl.u32 2102212464, %v3968
        %v3978 = vor.u32 %v3976, %v3977
        %v3979 = vshll.u32 2102212464, %v3967
        %v3980 = vshrl.u32 920167782, %v3968
        %v3981 = vor.u32 %v3979, %v3980
        %v3982 = vshll.u32 920167782, %v3967
        %v3983 = vshrl.u32 1326507024, %v3968
        %v3984 = vor.u32 %v3982, %v3983
        %vm3985 = vcmp.lt.s32.totalorder %v3966, 1
        %vm3986 = vcmp.lt.s32.totalorder %v3966, 2
        %vm3987 = vcmp.lt.s32.totalorder %v3966, 3
        %vm3988 = vcmp.lt.s32.totalorder %v3966, 4
        %v3989 = vsel %vm3985, %v3969, %v3972
        %v3990 = vsel %vm3988, %v3978, 2102212464
        %v3991 = vsel %vm3987, %v3975, %v3990
        %v3992 = vsel %vm3986, %v3989, %v3991
        %v3993 = vsel %vm3985, %v3972, %v3975
        %v3994 = vsel %vm3988, %v3981, 920167782
        %v3995 = vsel %vm3987, %v3978, %v3994
        %v3996 = vsel %vm3986, %v3993, %v3995
        %v3997 = vsel %vm3985, %v3975, %v3978
        %v3998 = vsel %vm3988, %v3984, 1326507024
        %v3999 = vsel %vm3987, %v3981, %v3998
        %v4000 = vsel %vm3986, %v3997, %v3999
        %v4001 = vshll.u32 %v3961, 8
        %v4002 = vand.u32 %v4001, 65535
        %v4003 = vshrl.u32 %v4001, 16
        %v4004 = vand.u32 %v4000, 65535
        %v4005 = vshrl.u32 %v4000, 16
        %v4006 = vmul.u32 %v4002, %v4004
        %v4007 = vmul.u32 %v4002, %v4005
        %v4008 = vmul.u32 %v4003, %v4004
        %v4009 = vmul.u32 %v4003, %v4005
        %v4010 = vshll.u32 %v4007, 16
        %v4011 = vshrl.u32 %v4007, 16
        %v4012 = vshll.u32 %v4008, 16
        %v4013 = vshrl.u32 %v4008, 16
        %vm4014 = vc.u32 %v4006, %v4010
        %v4015 = vsel %vm4014, 1, 0
        %v4016 = vadd.s32 %v4006, %v4010
        %v4017 = vadd.s32 %v4009, %v4015
        %vm4018 = vc.u32 %v4016, %v4012
        %v4019 = vsel %vm4018, 1, 0
        %v4020 = vadd.s32 %v4016, %v4012
        %v4021 = vadd.s32 %v4017, %v4019
        %v4022 = vadd.s32 %v4021, %v4011
        %v4023 = vadd.s32 %v4022, %v4013
        %v4024 = vand.u32 %v4001, 65535
        %v4025 = vshrl.u32 %v4001, 16
        %v4026 = vand.u32 %v3996, 65535
        %v4027 = vshrl.u32 %v3996, 16
        %v4028 = vmul.u32 %v4024, %v4026
        %v4029 = vmul.u32 %v4024, %v4027
        %v4030 = vmul.u32 %v4025, %v4026
        %v4031 = vmul.u32 %v4025, %v4027
        %v4032 = vshll.u32 %v4029, 16
        %v4033 = vshrl.u32 %v4029, 16
        %v4034 = vshll.u32 %v4030, 16
        %v4035 = vshrl.u32 %v4030, 16
        %vm4036 = vc.u32 %v4028, %v4032
        %v4037 = vsel %vm4036, 1, 0
        %v4038 = vadd.s32 %v4028, %v4032
        %v4039 = vadd.s32 %v4031, %v4037
        %vm4040 = vc.u32 %v4038, %v4034
        %v4041 = vsel %vm4040, 1, 0
        %v4042 = vadd.s32 %v4038, %v4034
        %v4043 = vadd.s32 %v4039, %v4041
        %v4044 = vadd.s32 %v4043, %v4033
        %v4045 = vadd.s32 %v4044, %v4035
        %v4046 = vmul.u32 %v4001, %v3992
        %v4047 = vadd.s32 %v4023, %v4042
        %vm4048 = vc.u32 %v4023, %v4042
        %v4049 = vadd.s32 %v4045, 1
        %v4050 = vsel %vm4048, %v4049, %v4045
        %v4051 = vadd.s32 %v4046, %v4050
        %v4052 = vadd.s32 %v4051, 536870912
        %v4053 = vshrl.u32 %v4052, 30
        %v4054 = vshll.u32 %v4053, 30
        %v4055 = vsub.s32 %v4051, %v4054
        %vm4056 = vcmp.lt.s32.totalorder %v4055, 0
        %v4057 = vsub.s32 0, %v4055
        %v4058 = vsel %vm4056, %v4057, %v4055
        %v4059 = vclz %v4058
        %v4060 = vsub.s32 %v4059, 2
        %vm4061 = vcmp.gt.s32.totalorder 0, %v4060
        %v4062 = vsel %vm4061, 0, %v4060
        %v4063 = vsub.s32 32, %v4062
        %v4064 = vshll.u32 %v4055, %v4062
        %v4065 = vshrl.u32 %v4047, %v4063
        %v4066 = vor.u32 %v4064, %v4065
        %v4067 = vsub.s32 4294967266, %v4062
        %v4068 = vadd.s32 %v4067, 127
        %v4069 = vshll.u32 %v4068, 23
        %v4070 = vor.u32 4788187, %v4069
        %v4071 = vand.u32 2147483647, %v4070
        %v4073 = vcvt.s32.f32 %v4066
        %v4074 = vmul.f32 %v4073, %v4071
        %v4075 = vxor.u32 %v4074, 2147483648
        %v4076 = vsel %vm3955, %v4075, %v4074
        %v4077 = vsub.s32 4, %v4053
        %v4078 = vsel %vm3955, %v4077, %v4053
        %v4079 = vsel %vm3954, %v368, %v4076
        %v4080 = vsel %vm3954, 0, %v4078
        %v4081 = vmul.f32 %v4079, %v4079
        %v4082 = vmul.f32 %v4081, -0.001358992
        %v4083 = vadd.f32 %v4082, 0.041655596
        %v4084 = vmul.f32 %v4081, %v4083
        %v4085 = vadd.f32 %v4084, -0.4999988
        %v4086 = vmul.f32 %v4081, %v4085
        %v4087 = vadd.f32 1.0, %v4086
        %v4088 = vmul.f32 %v4079, %v4079
        %v4089 = vmul.f32 %v4088, -0.00019511016
        %v4090 = vadd.f32 %v4089, 0.008332121
        %v4091 = vmul.f32 %v4088, %v4090
        %v4092 = vadd.f32 %v4091, -0.16666654
        %v4093 = vmul.f32 %v4088, %v4092
        %v4094 = vadd.f32 %v4093, 1.0
        %v4095 = vmul.f32 %v4094, %v4079
        %vm4096 = vweird.f32 %v368
        %v4097 = vadd.s32 %v4080, 3
        %v4098 = vand.u32 %v4097, 3
        %vm4099 = vcmp.lt.s32.totalorder %v4098, 2
        %vm4100 = vcmp.eq.s32.totalorder %v4098, 0
        %v4101 = vxor.u32 %v4095, 2147483648
        %v4102 = vsel %vm4100, %v4087, %v4101
        %vm4103 = vcmp.eq.s32.totalorder %v4098, 2
        %v4104 = vxor.u32 %v4087, 2147483648
        %v4105 = vsel %vm4103, %v4104, %v4095
        %v4106 = vsel %vm4099, %v4102, %v4105
        %v4107 = vsel %vm4096, nan, %v4106
        %v4108 = vand.u32 2147483647, %v481
        %vm4109 = vcmp.le.f32.partialorder %v4108, 0.7853982
        %vm4110 = vcmp.lt.s32.totalorder %v481, 0
        %v4111 = vand.u32 %v481, 2139095040
        %v4112 = vshrl.u32 %v4111, 23
        %v4113 = vsub.s32 %v4112, 127
        %v4114 = vand.u32 2147483647, %v481
        %v4115 = vand.u32 %v4114, 8388607
        %v4116 = vor.u32 %v4115, 8388608
        %v4117 = vsub.s32 0, %v4116
        %v4118 = vadd.s32 %v4113, 1
        %vm4119 = vcmp.gt.s32.totalorder %v4118, 0
        %v4120 = vsel %vm4119, %v4118, 0
        %v4121 = vshrl.u32 %v4120, 5
        %v4122 = vand.u32 %v4120, 31
        %v4123 = vsub.s32 32, %v4122
        %v4124 = vshrl.u32 683565275, %v4123
        %v4125 = vshll.u32 683565275, %v4122
        %v4126 = vshrl.u32 2475754826, %v4123
        %v4127 = vor.u32 %v4125, %v4126
        %v4128 = vshll.u32 2475754826, %v4122
        %v4129 = vshrl.u32 2131351028, %v4123
        %v4130 = vor.u32 %v4128, %v4129
        %v4131 = vshll.u32 2131351028, %v4122
        %v4132 = vshrl.u32 2102212464, %v4123
        %v4133 = vor.u32 %v4131, %v4132
        %v4134 = vshll.u32 2102212464, %v4122
        %v4135 = vshrl.u32 920167782, %v4123
        %v4136 = vor.u32 %v4134, %v4135
        %v4137 = vshll.u32 920167782, %v4122
        %v4138 = vshrl.u32 1326507024, %v4123
        %v4139 = vor.u32 %v4137, %v4138
        %vm4140 = vcmp.lt.s32.totalorder %v4121, 1
        %vm4141 = vcmp.lt.s32.totalorder %v4121, 2
        %vm4142 = vcmp.lt.s32.totalorder %v4121, 3
        %vm4143 = vcmp.lt.s32.totalorder %v4121, 4
        %v4144 = vsel %vm4140, %v4124, %v4127
        %v4145 = vsel %vm4143, %v4133, 2102212464
        %v4146 = vsel %vm4142, %v4130, %v4145
        %v4147 = vsel %vm4141, %v4144, %v4146
        %v4148 = vsel %vm4140, %v4127, %v4130
        %v4149 = vsel %vm4143, %v4136, 920167782
        %v4150 = vsel %vm4142, %v4133, %v4149
        %v4151 = vsel %vm4141, %v4148, %v4150
        %v4152 = vsel %vm4140, %v4130, %v4133
        %v4153 = vsel %vm4143, %v4139, 1326507024
        %v4154 = vsel %vm4142, %v4136, %v4153
        %v4155 = vsel %vm4141, %v4152, %v4154
        %v4156 = vshll.u32 %v4116, 8
        %v4157 = vand.u32 %v4156, 65535
        %v4158 = vshrl.u32 %v4156, 16
        %v4159 = vand.u32 %v4155, 65535
        %v4160 = vshrl.u32 %v4155, 16
        %v4161 = vmul.u32 %v4157, %v4159
        %v4162 = vmul.u32 %v4157, %v4160
        %v4163 = vmul.u32 %v4158, %v4159
        %v4164 = vmul.u32 %v4158, %v4160
        %v4165 = vshll.u32 %v4162, 16
        %v4166 = vshrl.u32 %v4162, 16
        %v4167 = vshll.u32 %v4163, 16
        %v4168 = vshrl.u32 %v4163, 16
        %vm4169 = vc.u32 %v4161, %v4165
        %v4170 = vsel %vm4169, 1, 0
        %v4171 = vadd.s32 %v4161, %v4165
        %v4172 = vadd.s32 %v4164, %v4170
        %vm4173 = vc.u32 %v4171, %v4167
        %v4174 = vsel %vm4173, 1, 0
        %v4175 = vadd.s32 %v4171, %v4167
        %v4176 = vadd.s32 %v4172, %v4174
        %v4177 = vadd.s32 %v4176, %v4166
        %v4178 = vadd.s32 %v4177, %v4168
        %v4179 = vand.u32 %v4156, 65535
        %v4180 = vshrl.u32 %v4156, 16
        %v4181 = vand.u32 %v4151, 65535
        %v4182 = vshrl.u32 %v4151, 16
        %v4183 = vmul.u32 %v4179, %v4181
        %v4184 = vmul.u32 %v4179, %v4182
        %v4185 = vmul.u32 %v4180, %v4181
        %v4186 = vmul.u32 %v4180, %v4182
        %v4187 = vshll.u32 %v4184, 16
        %v4188 = vshrl.u32 %v4184, 16
        %v4189 = vshll.u32 %v4185, 16
        %v4190 = vshrl.u32 %v4185, 16
        %vm4191 = vc.u32 %v4183, %v4187
        %v4192 = vsel %vm4191, 1, 0
        %v4193 = vadd.s32 %v4183, %v4187
        %v4194 = vadd.s32 %v4186, %v4192
        %vm4195 = vc.u32 %v4193, %v4189
        %v4196 = vsel %vm4195, 1, 0
        %v4197 = vadd.s32 %v4193, %v4189
        %v4198 = vadd.s32 %v4194, %v4196
        %v4199 = vadd.s32 %v4198, %v4188
        %v4200 = vadd.s32 %v4199, %v4190
        %v4201 = vmul.u32 %v4156, %v4147
        %v4202 = vadd.s32 %v4178, %v4197
        %vm4203 = vc.u32 %v4178, %v4197
        %v4204 = vadd.s32 %v4200, 1
        %v4205 = vsel %vm4203, %v4204, %v4200
        %v4206 = vadd.s32 %v4201, %v4205
        %v4207 = vadd.s32 %v4206, 536870912
        %v4208 = vshrl.u32 %v4207, 30
        %v4209 = vshll.u32 %v4208, 30
        %v4210 = vsub.s32 %v4206, %v4209
        %vm4211 = vcmp.lt.s32.totalorder %v4210, 0
        %v4212 = vsub.s32 0, %v4210
        %v4213 = vsel %vm4211, %v4212, %v4210
        %v4214 = vclz %v4213
        %v4215 = vsub.s32 %v4214, 2
        %vm4216 = vcmp.gt.s32.totalorder 0, %v4215
        %v4217 = vsel %vm4216, 0, %v4215
        %v4218 = vsub.s32 32, %v4217
        %v4219 = vshll.u32 %v4210, %v4217
        %v4220 = vshrl.u32 %v4202, %v4218
        %v4221 = vor.u32 %v4219, %v4220
        %v4222 = vsub.s32 4294967266, %v4217
        %v4223 = vadd.s32 %v4222, 127
        %v4224 = vshll.u32 %v4223, 23
        %v4225 = vor.u32 4788187, %v4224
        %v4226 = vand.u32 2147483647, %v4225
        %v4228 = vcvt.s32.f32 %v4221
        %v4229 = vmul.f32 %v4228, %v4226
        %v4230 = vxor.u32 %v4229, 2147483648
        %v4231 = vsel %vm4110, %v4230, %v4229
        %v4232 = vsub.s32 4, %v4208
        %v4233 = vsel %vm4110, %v4232, %v4208
        %v4234 = vsel %vm4109, %v481, %v4231
        %v4235 = vsel %vm4109, 0, %v4233
        %v4236 = vmul.f32 %v4234, %v4234
        %v4237 = vmul.f32 %v4236, -0.001358992
        %v4238 = vadd.f32 %v4237, 0.041655596
        %v4239 = vmul.f32 %v4236, %v4238
        %v4240 = vadd.f32 %v4239, -0.4999988
        %v4241 = vmul.f32 %v4236, %v4240
        %v4242 = vadd.f32 1.0, %v4241
        %v4243 = vmul.f32 %v4234, %v4234
        %v4244 = vmul.f32 %v4243, -0.00019511016
        %v4245 = vadd.f32 %v4244, 0.008332121
        %v4246 = vmul.f32 %v4243, %v4245
        %v4247 = vadd.f32 %v4246, -0.16666654
        %v4248 = vmul.f32 %v4243, %v4247
        %v4249 = vadd.f32 %v4248, 1.0
        %v4250 = vmul.f32 %v4249, %v4234
        %vm4251 = vweird.f32 %v481
        %v4252 = vadd.s32 %v4235, 3
        %v4253 = vand.u32 %v4252, 3
        %vm4254 = vcmp.lt.s32.totalorder %v4253, 2
        %vm4255 = vcmp.eq.s32.totalorder %v4253, 0
        %v4256 = vxor.u32 %v4250, 2147483648
        %v4257 = vsel %vm4255, %v4242, %v4256
        %vm4258 = vcmp.eq.s32.totalorder %v4253, 2
        %v4259 = vxor.u32 %v4242, 2147483648
        %v4260 = vsel %vm4258, %v4259, %v4250
        %v4261 = vsel %vm4254, %v4257, %v4260
        %v4262 = vsel %vm4251, nan, %v4261
        %v4263 = vand.u32 2147483647, %v371
        %vm4264 = vcmp.le.f32.partialorder %v4263, 0.7853982
        %vm4265 = vcmp.lt.s32.totalorder %v371, 0
        %v4266 = vand.u32 %v371, 2139095040
        %v4267 = vshrl.u32 %v4266, 23
        %v4268 = vsub.s32 %v4267, 127
        %v4269 = vand.u32 2147483647, %v371
        %v4270 = vand.u32 %v4269, 8388607
        %v4271 = vor.u32 %v4270, 8388608
        %v4272 = vsub.s32 0, %v4271
        %v4273 = vadd.s32 %v4268, 1
        %vm4274 = vcmp.gt.s32.totalorder %v4273, 0
        %v4275 = vsel %vm4274, %v4273, 0
        %v4276 = vshrl.u32 %v4275, 5
        %v4277 = vand.u32 %v4275, 31
        %v4278 = vsub.s32 32, %v4277
        %v4279 = vshrl.u32 683565275, %v4278
        %v4280 = vshll.u32 683565275, %v4277
        %v4281 = vshrl.u32 2475754826, %v4278
        %v4282 = vor.u32 %v4280, %v4281
        %v4283 = vshll.u32 2475754826, %v4277
        %v4284 = vshrl.u32 2131351028, %v4278
        %v4285 = vor.u32 %v4283, %v4284
        %v4286 = vshll.u32 2131351028, %v4277
        %v4287 = vshrl.u32 2102212464, %v4278
        %v4288 = vor.u32 %v4286, %v4287
        %v4289 = vshll.u32 2102212464, %v4277
        %v4290 = vshrl.u32 920167782, %v4278
        %v4291 = vor.u32 %v4289, %v4290
        %v4292 = vshll.u32 920167782, %v4277
        %v4293 = vshrl.u32 1326507024, %v4278
        %v4294 = vor.u32 %v4292, %v4293
        %vm4295 = vcmp.lt.s32.totalorder %v4276, 1
        %vm4296 = vcmp.lt.s32.totalorder %v4276, 2
        %vm4297 = vcmp.lt.s32.totalorder %v4276, 3
        %vm4298 = vcmp.lt.s32.totalorder %v4276, 4
        %v4299 = vsel %vm4295, %v4279, %v4282
        %v4300 = vsel %vm4298, %v4288, 2102212464
        %v4301 = vsel %vm4297, %v4285, %v4300
        %v4302 = vsel %vm4296, %v4299, %v4301
        %v4303 = vsel %vm4295, %v4282, %v4285
        %v4304 = vsel %vm4298, %v4291, 920167782
        %v4305 = vsel %vm4297, %v4288, %v4304
        %v4306 = vsel %vm4296, %v4303, %v4305
        %v4307 = vsel %vm4295, %v4285, %v4288
        %v4308 = vsel %vm4298, %v4294, 1326507024
        %v4309 = vsel %vm4297, %v4291, %v4308
        %v4310 = vsel %vm4296, %v4307, %v4309
        %v4311 = vshll.u32 %v4271, 8
        %v4312 = vand.u32 %v4311, 65535
        %v4313 = vshrl.u32 %v4311, 16
        %v4314 = vand.u32 %v4310, 65535
        %v4315 = vshrl.u32 %v4310, 16
        %v4316 = vmul.u32 %v4312, %v4314
        %v4317 = vmul.u32 %v4312, %v4315
        %v4318 = vmul.u32 %v4313, %v4314
        %v4319 = vmul.u32 %v4313, %v4315
        %v4320 = vshll.u32 %v4317, 16
        %v4321 = vshrl.u32 %v4317, 16
        %v4322 = vshll.u32 %v4318, 16
        %v4323 = vshrl.u32 %v4318, 16
        %vm4324 = vc.u32 %v4316, %v4320
        %v4325 = vsel %vm4324, 1, 0
        %v4326 = vadd.s32 %v4316, %v4320
        %v4327 = vadd.s32 %v4319, %v4325
        %vm4328 = vc.u32 %v4326, %v4322
        %v4329 = vsel %vm4328, 1, 0
        %v4330 = vadd.s32 %v4326, %v4322
        %v4331 = vadd.s32 %v4327, %v4329
        %v4332 = vadd.s32 %v4331, %v4321
        %v4333 = vadd.s32 %v4332, %v4323
        %v4334 = vand.u32 %v4311, 65535
        %v4335 = vshrl.u32 %v4311, 16
        %v4336 = vand.u32 %v4306, 65535
        %v4337 = vshrl.u32 %v4306, 16
        %v4338 = vmul.u32 %v4334, %v4336
        %v4339 = vmul.u32 %v4334, %v4337
        %v4340 = vmul.u32 %v4335, %v4336
        %v4341 = vmul.u32 %v4335, %v4337
        %v4342 = vshll.u32 %v4339, 16
        %v4343 = vshrl.u32 %v4339, 16
        %v4344 = vshll.u32 %v4340, 16
        %v4345 = vshrl.u32 %v4340, 16
        %vm4346 = vc.u32 %v4338, %v4342
        %v4347 = vsel %vm4346, 1, 0
        %v4348 = vadd.s32 %v4338, %v4342
        %v4349 = vadd.s32 %v4341, %v4347
        %vm4350 = vc.u32 %v4348, %v4344
        %v4351 = vsel %vm4350, 1, 0
        %v4352 = vadd.s32 %v4348, %v4344
        %v4353 = vadd.s32 %v4349, %v4351
        %v4354 = vadd.s32 %v4353, %v4343
        %v4355 = vadd.s32 %v4354, %v4345
        %v4356 = vmul.u32 %v4311, %v4302
        %v4357 = vadd.s32 %v4333, %v4352
        %vm4358 = vc.u32 %v4333, %v4352
        %v4359 = vadd.s32 %v4355, 1
        %v4360 = vsel %vm4358, %v4359, %v4355
        %v4361 = vadd.s32 %v4356, %v4360
        %v4362 = vadd.s32 %v4361, 536870912
        %v4363 = vshrl.u32 %v4362, 30
        %v4364 = vshll.u32 %v4363, 30
        %v4365 = vsub.s32 %v4361, %v4364
        %vm4366 = vcmp.lt.s32.totalorder %v4365, 0
        %v4367 = vsub.s32 0, %v4365
        %v4368 = vsel %vm4366, %v4367, %v4365
        %v4369 = vclz %v4368
        %v4370 = vsub.s32 %v4369, 2
        %vm4371 = vcmp.gt.s32.totalorder 0, %v4370
        %v4372 = vsel %vm4371, 0, %v4370
        %v4373 = vsub.s32 32, %v4372
        %v4374 = vshll.u32 %v4365, %v4372
        %v4375 = vshrl.u32 %v4357, %v4373
        %v4376 = vor.u32 %v4374, %v4375
        %v4377 = vsub.s32 4294967266, %v4372
        %v4378 = vadd.s32 %v4377, 127
        %v4379 = vshll.u32 %v4378, 23
        %v4380 = vor.u32 4788187, %v4379
        %v4381 = vand.u32 2147483647, %v4380
        %v4383 = vcvt.s32.f32 %v4376
        %v4384 = vmul.f32 %v4383, %v4381
        %v4385 = vxor.u32 %v4384, 2147483648
        %v4386 = vsel %vm4265, %v4385, %v4384
        %v4387 = vsub.s32 4, %v4363
        %v4388 = vsel %vm4265, %v4387, %v4363
        %v4389 = vsel %vm4264, %v371, %v4386
        %v4390 = vsel %vm4264, 0, %v4388
        %v4391 = vmul.f32 %v4389, %v4389
        %v4392 = vmul.f32 %v4391, -0.001358992
        %v4393 = vadd.f32 %v4392, 0.041655596
        %v4394 = vmul.f32 %v4391, %v4393
        %v4395 = vadd.f32 %v4394, -0.4999988
        %v4396 = vmul.f32 %v4391, %v4395
        %v4397 = vadd.f32 1.0, %v4396
        %v4398 = vmul.f32 %v4389, %v4389
        %v4399 = vmul.f32 %v4398, -0.00019511016
        %v4400 = vadd.f32 %v4399, 0.008332121
        %v4401 = vmul.f32 %v4398, %v4400
        %v4402 = vadd.f32 %v4401, -0.16666654
        %v4403 = vmul.f32 %v4398, %v4402
        %v4404 = vadd.f32 %v4403, 1.0
        %v4405 = vmul.f32 %v4404, %v4389
        %vm4406 = vweird.f32 %v371
        %v4407 = vadd.s32 %v4390, 3
        %v4408 = vand.u32 %v4407, 3
        %vm4409 = vcmp.lt.s32.totalorder %v4408, 2
        %vm4410 = vcmp.eq.s32.totalorder %v4408, 0
        %v4411 = vxor.u32 %v4405, 2147483648
        %v4412 = vsel %vm4410, %v4397, %v4411
        %vm4413 = vcmp.eq.s32.totalorder %v4408, 2
        %v4414 = vxor.u32 %v4397, 2147483648
        %v4415 = vsel %vm4413, %v4414, %v4405
        %v4416 = vsel %vm4409, %v4412, %v4415
        %v4417 = vsel %vm4406, nan, %v4416
        %v4418 = vand.u32 2147483647, %v484
        %vm4419 = vcmp.le.f32.partialorder %v4418, 0.7853982
        %vm4420 = vcmp.lt.s32.totalorder %v484, 0
        %v4421 = vand.u32 %v484, 2139095040
        %v4422 = vshrl.u32 %v4421, 23
        %v4423 = vsub.s32 %v4422, 127
        %v4424 = vand.u32 2147483647, %v484
        %v4425 = vand.u32 %v4424, 8388607
        %v4426 = vor.u32 %v4425, 8388608
        %v4427 = vsub.s32 0, %v4426
        %v4428 = vadd.s32 %v4423, 1
        %vm4429 = vcmp.gt.s32.totalorder %v4428, 0
        %v4430 = vsel %vm4429, %v4428, 0
        %v4431 = vshrl.u32 %v4430, 5
        %v4432 = vand.u32 %v4430, 31
        %v4433 = vsub.s32 32, %v4432
        %v4434 = vshrl.u32 683565275, %v4433
        %v4435 = vshll.u32 683565275, %v4432
        %v4436 = vshrl.u32 2475754826, %v4433
        %v4437 = vor.u32 %v4435, %v4436
        %v4438 = vshll.u32 2475754826, %v4432
        %v4439 = vshrl.u32 2131351028, %v4433
        %v4440 = vor.u32 %v4438, %v4439
        %v4441 = vshll.u32 2131351028, %v4432
        %v4442 = vshrl.u32 2102212464, %v4433
        %v4443 = vor.u32 %v4441, %v4442
        %v4444 = vshll.u32 2102212464, %v4432
        %v4445 = vshrl.u32 920167782, %v4433
        %v4446 = vor.u32 %v4444, %v4445
        %v4447 = vshll.u32 920167782, %v4432
        %v4448 = vshrl.u32 1326507024, %v4433
        %v4449 = vor.u32 %v4447, %v4448
        %vm4450 = vcmp.lt.s32.totalorder %v4431, 1
        %vm4451 = vcmp.lt.s32.totalorder %v4431, 2
        %vm4452 = vcmp.lt.s32.totalorder %v4431, 3
        %vm4453 = vcmp.lt.s32.totalorder %v4431, 4
        %v4454 = vsel %vm4450, %v4434, %v4437
        %v4455 = vsel %vm4453, %v4443, 2102212464
        %v4456 = vsel %vm4452, %v4440, %v4455
        %v4457 = vsel %vm4451, %v4454, %v4456
        %v4458 = vsel %vm4450, %v4437, %v4440
        %v4459 = vsel %vm4453, %v4446, 920167782
        %v4460 = vsel %vm4452, %v4443, %v4459
        %v4461 = vsel %vm4451, %v4458, %v4460
        %v4462 = vsel %vm4450, %v4440, %v4443
        %v4463 = vsel %vm4453, %v4449, 1326507024
        %v4464 = vsel %vm4452, %v4446, %v4463
        %v4465 = vsel %vm4451, %v4462, %v4464
        %v4466 = vshll.u32 %v4426, 8
        %v4467 = vand.u32 %v4466, 65535
        %v4468 = vshrl.u32 %v4466, 16
        %v4469 = vand.u32 %v4465, 65535
        %v4470 = vshrl.u32 %v4465, 16
        %v4471 = vmul.u32 %v4467, %v4469
        %v4472 = vmul.u32 %v4467, %v4470
        %v4473 = vmul.u32 %v4468, %v4469
        %v4474 = vmul.u32 %v4468, %v4470
        %v4475 = vshll.u32 %v4472, 16
        %v4476 = vshrl.u32 %v4472, 16
        %v4477 = vshll.u32 %v4473, 16
        %v4478 = vshrl.u32 %v4473, 16
        %vm4479 = vc.u32 %v4471, %v4475
        %v4480 = vsel %vm4479, 1, 0
        %v4481 = vadd.s32 %v4471, %v4475
        %v4482 = vadd.s32 %v4474, %v4480
        %vm4483 = vc.u32 %v4481, %v4477
        %v4484 = vsel %vm4483, 1, 0
        %v4485 = vadd.s32 %v4481, %v4477
        %v4486 = vadd.s32 %v4482, %v4484
        %v4487 = vadd.s32 %v4486, %v4476
        %v4488 = vadd.s32 %v4487, %v4478
        %v4489 = vand.u32 %v4466, 65535
        %v4490 = vshrl.u32 %v4466, 16
        %v4491 = vand.u32 %v4461, 65535
        %v4492 = vshrl.u32 %v4461, 16
        %v4493 = vmul.u32 %v4489, %v4491
        %v4494 = vmul.u32 %v4489, %v4492
        %v4495 = vmul.u32 %v4490, %v4491
        %v4496 = vmul.u32 %v4490, %v4492
        %v4497 = vshll.u32 %v4494, 16
        %v4498 = vshrl.u32 %v4494, 16
        %v4499 = vshll.u32 %v4495, 16
        %v4500 = vshrl.u32 %v4495, 16
        %vm4501 = vc.u32 %v4493, %v4497
        %v4502 = vsel %vm4501, 1, 0
        %v4503 = vadd.s32 %v4493, %v4497
        %v4504 = vadd.s32 %v4496, %v4502
        %vm4505 = vc.u32 %v4503, %v4499
        %v4506 = vsel %vm4505, 1, 0
        %v4507 = vadd.s32 %v4503, %v4499
        %v4508 = vadd.s32 %v4504, %v4506
        %v4509 = vadd.s32 %v4508, %v4498
        %v4510 = vadd.s32 %v4509, %v4500
        %v4511 = vmul.u32 %v4466, %v4457
        %v4512 = vadd.s32 %v4488, %v4507
        %vm4513 = vc.u32 %v4488, %v4507
        %v4514 = vadd.s32 %v4510, 1
        %v4515 = vsel %vm4513, %v4514, %v4510
        %v4516 = vadd.s32 %v4511, %v4515
        %v4517 = vadd.s32 %v4516, 536870912
        %v4518 = vshrl.u32 %v4517, 30
        %v4519 = vshll.u32 %v4518, 30
        %v4520 = vsub.s32 %v4516, %v4519
        %vm4521 = vcmp.lt.s32.totalorder %v4520, 0
        %v4522 = vsub.s32 0, %v4520
        %v4523 = vsel %vm4521, %v4522, %v4520
        %v4524 = vclz %v4523
        %v4525 = vsub.s32 %v4524, 2
        %vm4526 = vcmp.gt.s32.totalorder 0, %v4525
        %v4527 = vsel %vm4526, 0, %v4525
        %v4528 = vsub.s32 32, %v4527
        %v4529 = vshll.u32 %v4520, %v4527
        %v4530 = vshrl.u32 %v4512, %v4528
        %v4531 = vor.u32 %v4529, %v4530
        %v4532 = vsub.s32 4294967266, %v4527
        %v4533 = vadd.s32 %v4532, 127
        %v4534 = vshll.u32 %v4533, 23
        %v4535 = vor.u32 4788187, %v4534
        %v4536 = vand.u32 2147483647, %v4535
        %v4538 = vcvt.s32.f32 %v4531
        %v4539 = vmul.f32 %v4538, %v4536
        %v4540 = vxor.u32 %v4539, 2147483648
        %v4541 = vsel %vm4420, %v4540, %v4539
        %v4542 = vsub.s32 4, %v4518
        %v4543 = vsel %vm4420, %v4542, %v4518
        %v4544 = vsel %vm4419, %v484, %v4541
        %v4545 = vsel %vm4419, 0, %v4543
        %v4546 = vmul.f32 %v4544, %v4544
        %v4547 = vmul.f32 %v4546, -0.001358992
        %v4548 = vadd.f32 %v4547, 0.041655596
        %v4549 = vmul.f32 %v4546, %v4548
        %v4550 = vadd.f32 %v4549, -0.4999988
        %v4551 = vmul.f32 %v4546, %v4550
        %v4552 = vadd.f32 1.0, %v4551
        %v4553 = vmul.f32 %v4544, %v4544
        %v4554 = vmul.f32 %v4553, -0.00019511016
        %v4555 = vadd.f32 %v4554, 0.008332121
        %v4556 = vmul.f32 %v4553, %v4555
        %v4557 = vadd.f32 %v4556, -0.16666654
        %v4558 = vmul.f32 %v4553, %v4557
        %v4559 = vadd.f32 %v4558, 1.0
        %v4560 = vmul.f32 %v4559, %v4544
        %vm4561 = vweird.f32 %v484
        %v4562 = vadd.s32 %v4545, 3
        %v4563 = vand.u32 %v4562, 3
        %vm4564 = vcmp.lt.s32.totalorder %v4563, 2
        %vm4565 = vcmp.eq.s32.totalorder %v4563, 0
        %v4566 = vxor.u32 %v4560, 2147483648
        %v4567 = vsel %vm4565, %v4552, %v4566
        %vm4568 = vcmp.eq.s32.totalorder %v4563, 2
        %v4569 = vxor.u32 %v4552, 2147483648
        %v4570 = vsel %vm4568, %v4569, %v4560
        %v4571 = vsel %vm4564, %v4567, %v4570
        %v4572 = vsel %vm4561, nan, %v4571
        %v4573 = vand.u32 2147483647, %v374
        %vm4574 = vcmp.le.f32.partialorder %v4573, 0.7853982
        %vm4575 = vcmp.lt.s32.totalorder %v374, 0
        %v4576 = vand.u32 %v374, 2139095040
        %v4577 = vshrl.u32 %v4576, 23
        %v4578 = vsub.s32 %v4577, 127
        %v4579 = vand.u32 2147483647, %v374
        %v4580 = vand.u32 %v4579, 8388607
        %v4581 = vor.u32 %v4580, 8388608
        %v4582 = vsub.s32 0, %v4581
        %v4583 = vadd.s32 %v4578, 1
        %vm4584 = vcmp.gt.s32.totalorder %v4583, 0
        %v4585 = vsel %vm4584, %v4583, 0
        %v4586 = vshrl.u32 %v4585, 5
        %v4587 = vand.u32 %v4585, 31
        %v4588 = vsub.s32 32, %v4587
        %v4589 = vshrl.u32 683565275, %v4588
        %v4590 = vshll.u32 683565275, %v4587
        %v4591 = vshrl.u32 2475754826, %v4588
        %v4592 = vor.u32 %v4590, %v4591
        %v4593 = vshll.u32 2475754826, %v4587
        %v4594 = vshrl.u32 2131351028, %v4588
        %v4595 = vor.u32 %v4593, %v4594
        %v4596 = vshll.u32 2131351028, %v4587
        %v4597 = vshrl.u32 2102212464, %v4588
        %v4598 = vor.u32 %v4596, %v4597
        %v4599 = vshll.u32 2102212464, %v4587
        %v4600 = vshrl.u32 920167782, %v4588
        %v4601 = vor.u32 %v4599, %v4600
        %v4602 = vshll.u32 920167782, %v4587
        %v4603 = vshrl.u32 1326507024, %v4588
        %v4604 = vor.u32 %v4602, %v4603
        %vm4605 = vcmp.lt.s32.totalorder %v4586, 1
        %vm4606 = vcmp.lt.s32.totalorder %v4586, 2
        %vm4607 = vcmp.lt.s32.totalorder %v4586, 3
        %vm4608 = vcmp.lt.s32.totalorder %v4586, 4
        %v4609 = vsel %vm4605, %v4589, %v4592
        %v4610 = vsel %vm4608, %v4598, 2102212464
        %v4611 = vsel %vm4607, %v4595, %v4610
        %v4612 = vsel %vm4606, %v4609, %v4611
        %v4613 = vsel %vm4605, %v4592, %v4595
        %v4614 = vsel %vm4608, %v4601, 920167782
        %v4615 = vsel %vm4607, %v4598, %v4614
        %v4616 = vsel %vm4606, %v4613, %v4615
        %v4617 = vsel %vm4605, %v4595, %v4598
        %v4618 = vsel %vm4608, %v4604, 1326507024
        %v4619 = vsel %vm4607, %v4601, %v4618
        %v4620 = vsel %vm4606, %v4617, %v4619
        %v4621 = vshll.u32 %v4581, 8
        %v4622 = vand.u32 %v4621, 65535
        %v4623 = vshrl.u32 %v4621, 16
        %v4624 = vand.u32 %v4620, 65535
        %v4625 = vshrl.u32 %v4620, 16
        %v4626 = vmul.u32 %v4622, %v4624
        %v4627 = vmul.u32 %v4622, %v4625
        %v4628 = vmul.u32 %v4623, %v4624
        %v4629 = vmul.u32 %v4623, %v4625
        %v4630 = vshll.u32 %v4627, 16
        %v4631 = vshrl.u32 %v4627, 16
        %v4632 = vshll.u32 %v4628, 16
        %v4633 = vshrl.u32 %v4628, 16
        %vm4634 = vc.u32 %v4626, %v4630
        %v4635 = vsel %vm4634, 1, 0
        %v4636 = vadd.s32 %v4626, %v4630
        %v4637 = vadd.s32 %v4629, %v4635
        %vm4638 = vc.u32 %v4636, %v4632
        %v4639 = vsel %vm4638, 1, 0
        %v4640 = vadd.s32 %v4636, %v4632
        %v4641 = vadd.s32 %v4637, %v4639
        %v4642 = vadd.s32 %v4641, %v4631
        %v4643 = vadd.s32 %v4642, %v4633
        %v4644 = vand.u32 %v4621, 65535
        %v4645 = vshrl.u32 %v4621, 16
        %v4646 = vand.u32 %v4616, 65535
        %v4647 = vshrl.u32 %v4616, 16
        %v4648 = vmul.u32 %v4644, %v4646
        %v4649 = vmul.u32 %v4644, %v4647
        %v4650 = vmul.u32 %v4645, %v4646
        %v4651 = vmul.u32 %v4645, %v4647
        %v4652 = vshll.u32 %v4649, 16
        %v4653 = vshrl.u32 %v4649, 16
        %v4654 = vshll.u32 %v4650, 16
        %v4655 = vshrl.u32 %v4650, 16
        %vm4656 = vc.u32 %v4648, %v4652
        %v4657 = vsel %vm4656, 1, 0
        %v4658 = vadd.s32 %v4648, %v4652
        %v4659 = vadd.s32 %v4651, %v4657
        %vm4660 = vc.u32 %v4658, %v4654
        %v4661 = vsel %vm4660, 1, 0
        %v4662 = vadd.s32 %v4658, %v4654
        %v4663 = vadd.s32 %v4659, %v4661
        %v4664 = vadd.s32 %v4663, %v4653
        %v4665 = vadd.s32 %v4664, %v4655
        %v4666 = vmul.u32 %v4621, %v4612
        %v4667 = vadd.s32 %v4643, %v4662
        %vm4668 = vc.u32 %v4643, %v4662
        %v4669 = vadd.s32 %v4665, 1
        %v4670 = vsel %vm4668, %v4669, %v4665
        %v4671 = vadd.s32 %v4666, %v4670
        %v4672 = vadd.s32 %v4671, 536870912
        %v4673 = vshrl.u32 %v4672, 30
        %v4674 = vshll.u32 %v4673, 30
        %v4675 = vsub.s32 %v4671, %v4674
        %vm4676 = vcmp.lt.s32.totalorder %v4675, 0
        %v4677 = vsub.s32 0, %v4675
        %v4678 = vsel %vm4676, %v4677, %v4675
        %v4679 = vclz %v4678
        %v4680 = vsub.s32 %v4679, 2
        %vm4681 = vcmp.gt.s32.totalorder 0, %v4680
        %v4682 = vsel %vm4681, 0, %v4680
        %v4683 = vsub.s32 32, %v4682
        %v4684 = vshll.u32 %v4675, %v4682
        %v4685 = vshrl.u32 %v4667, %v4683
        %v4686 = vor.u32 %v4684, %v4685
        %v4687 = vsub.s32 4294967266, %v4682
        %v4688 = vadd.s32 %v4687, 127
        %v4689 = vshll.u32 %v4688, 23
        %v4690 = vor.u32 4788187, %v4689
        %v4691 = vand.u32 2147483647, %v4690
        %v4693 = vcvt.s32.f32 %v4686
        %v4694 = vmul.f32 %v4693, %v4691
        %v4695 = vxor.u32 %v4694, 2147483648
        %v4696 = vsel %vm4575, %v4695, %v4694
        %v4697 = vsub.s32 4, %v4673
        %v4698 = vsel %vm4575, %v4697, %v4673
        %v4699 = vsel %vm4574, %v374, %v4696
        %v4700 = vsel %vm4574, 0, %v4698
        %v4701 = vmul.f32 %v4699, %v4699
        %v4702 = vmul.f32 %v4701, -0.001358992
        %v4703 = vadd.f32 %v4702, 0.041655596
        %v4704 = vmul.f32 %v4701, %v4703
        %v4705 = vadd.f32 %v4704, -0.4999988
        %v4706 = vmul.f32 %v4701, %v4705
        %v4707 = vadd.f32 1.0, %v4706
        %v4708 = vmul.f32 %v4699, %v4699
        %v4709 = vmul.f32 %v4708, -0.00019511016
        %v4710 = vadd.f32 %v4709, 0.008332121
        %v4711 = vmul.f32 %v4708, %v4710
        %v4712 = vadd.f32 %v4711, -0.16666654
        %v4713 = vmul.f32 %v4708, %v4712
        %v4714 = vadd.f32 %v4713, 1.0
        %v4715 = vmul.f32 %v4714, %v4699
        %vm4716 = vweird.f32 %v374
        %v4717 = vadd.s32 %v4700, 3
        %v4718 = vand.u32 %v4717, 3
        %vm4719 = vcmp.lt.s32.totalorder %v4718, 2
        %vm4720 = vcmp.eq.s32.totalorder %v4718, 0
        %v4721 = vxor.u32 %v4715, 2147483648
        %v4722 = vsel %vm4720, %v4707, %v4721
        %vm4723 = vcmp.eq.s32.totalorder %v4718, 2
        %v4724 = vxor.u32 %v4707, 2147483648
        %v4725 = vsel %vm4723, %v4724, %v4715
        %v4726 = vsel %vm4719, %v4722, %v4725
        %v4727 = vsel %vm4716, nan, %v4726
        %v4728 = vand.u32 2147483647, %v487
        %vm4729 = vcmp.le.f32.partialorder %v4728, 0.7853982
        %vm4730 = vcmp.lt.s32.totalorder %v487, 0
        %v4731 = vand.u32 %v487, 2139095040
        %v4732 = vshrl.u32 %v4731, 23
        %v4733 = vsub.s32 %v4732, 127
        %v4734 = vand.u32 2147483647, %v487
        %v4735 = vand.u32 %v4734, 8388607
        %v4736 = vor.u32 %v4735, 8388608
        %v4737 = vsub.s32 0, %v4736
        %v4738 = vadd.s32 %v4733, 1
        %vm4739 = vcmp.gt.s32.totalorder %v4738, 0
        %v4740 = vsel %vm4739, %v4738, 0
        %v4741 = vshrl.u32 %v4740, 5
        %v4742 = vand.u32 %v4740, 31
        %v4743 = vsub.s32 32, %v4742
        %v4744 = vshrl.u32 683565275, %v4743
        %v4745 = vshll.u32 683565275, %v4742
        %v4746 = vshrl.u32 2475754826, %v4743
        %v4747 = vor.u32 %v4745, %v4746
        %v4748 = vshll.u32 2475754826, %v4742
        %v4749 = vshrl.u32 2131351028, %v4743
        %v4750 = vor.u32 %v4748, %v4749
        %v4751 = vshll.u32 2131351028, %v4742
        %v4752 = vshrl.u32 2102212464, %v4743
        %v4753 = vor.u32 %v4751, %v4752
        %v4754 = vshll.u32 2102212464, %v4742
        %v4755 = vshrl.u32 920167782, %v4743
        %v4756 = vor.u32 %v4754, %v4755
        %v4757 = vshll.u32 920167782, %v4742
        %v4758 = vshrl.u32 1326507024, %v4743
        %v4759 = vor.u32 %v4757, %v4758
        %vm4760 = vcmp.lt.s32.totalorder %v4741, 1
        %vm4761 = vcmp.lt.s32.totalorder %v4741, 2
        %vm4762 = vcmp.lt.s32.totalorder %v4741, 3
        %vm4763 = vcmp.lt.s32.totalorder %v4741, 4
        %v4764 = vsel %vm4760, %v4744, %v4747
        %v4765 = vsel %vm4763, %v4753, 2102212464
        %v4766 = vsel %vm4762, %v4750, %v4765
        %v4767 = vsel %vm4761, %v4764, %v4766
        %v4768 = vsel %vm4760, %v4747, %v4750
        %v4769 = vsel %vm4763, %v4756, 920167782
        %v4770 = vsel %vm4762, %v4753, %v4769
        %v4771 = vsel %vm4761, %v4768, %v4770
        %v4772 = vsel %vm4760, %v4750, %v4753
        %v4773 = vsel %vm4763, %v4759, 1326507024
        %v4774 = vsel %vm4762, %v4756, %v4773
        %v4775 = vsel %vm4761, %v4772, %v4774
        %v4776 = vshll.u32 %v4736, 8
        %v4777 = vand.u32 %v4776, 65535
        %v4778 = vshrl.u32 %v4776, 16
        %v4779 = vand.u32 %v4775, 65535
        %v4780 = vshrl.u32 %v4775, 16
        %v4781 = vmul.u32 %v4777, %v4779
        %v4782 = vmul.u32 %v4777, %v4780
        %v4783 = vmul.u32 %v4778, %v4779
        %v4784 = vmul.u32 %v4778, %v4780
        %v4785 = vshll.u32 %v4782, 16
        %v4786 = vshrl.u32 %v4782, 16
        %v4787 = vshll.u32 %v4783, 16
        %v4788 = vshrl.u32 %v4783, 16
        %vm4789 = vc.u32 %v4781, %v4785
        %v4790 = vsel %vm4789, 1, 0
        %v4791 = vadd.s32 %v4781, %v4785
        %v4792 = vadd.s32 %v4784, %v4790
        %vm4793 = vc.u32 %v4791, %v4787
        %v4794 = vsel %vm4793, 1, 0
        %v4795 = vadd.s32 %v4791, %v4787
        %v4796 = vadd.s32 %v4792, %v4794
        %v4797 = vadd.s32 %v4796, %v4786
        %v4798 = vadd.s32 %v4797, %v4788
        %v4799 = vand.u32 %v4776, 65535
        %v4800 = vshrl.u32 %v4776, 16
        %v4801 = vand.u32 %v4771, 65535
        %v4802 = vshrl.u32 %v4771, 16
        %v4803 = vmul.u32 %v4799, %v4801
        %v4804 = vmul.u32 %v4799, %v4802
        %v4805 = vmul.u32 %v4800, %v4801
        %v4806 = vmul.u32 %v4800, %v4802
        %v4807 = vshll.u32 %v4804, 16
        %v4808 = vshrl.u32 %v4804, 16
        %v4809 = vshll.u32 %v4805, 16
        %v4810 = vshrl.u32 %v4805, 16
        %vm4811 = vc.u32 %v4803, %v4807
        %v4812 = vsel %vm4811, 1, 0
        %v4813 = vadd.s32 %v4803, %v4807
        %v4814 = vadd.s32 %v4806, %v4812
        %vm4815 = vc.u32 %v4813, %v4809
        %v4816 = vsel %vm4815, 1, 0
        %v4817 = vadd.s32 %v4813, %v4809
        %v4818 = vadd.s32 %v4814, %v4816
        %v4819 = vadd.s32 %v4818, %v4808
        %v4820 = vadd.s32 %v4819, %v4810
        %v4821 = vmul.u32 %v4776, %v4767
        %v4822 = vadd.s32 %v4798, %v4817
        %vm4823 = vc.u32 %v4798, %v4817
        %v4824 = vadd.s32 %v4820, 1
        %v4825 = vsel %vm4823, %v4824, %v4820
        %v4826 = vadd.s32 %v4821, %v4825
        %v4827 = vadd.s32 %v4826, 536870912
        %v4828 = vshrl.u32 %v4827, 30
        %v4829 = vshll.u32 %v4828, 30
        %v4830 = vsub.s32 %v4826, %v4829
        %vm4831 = vcmp.lt.s32.totalorder %v4830, 0
        %v4832 = vsub.s32 0, %v4830
        %v4833 = vsel %vm4831, %v4832, %v4830
        %v4834 = vclz %v4833
        %v4835 = vsub.s32 %v4834, 2
        %vm4836 = vcmp.gt.s32.totalorder 0, %v4835
        %v4837 = vsel %vm4836, 0, %v4835
        %v4838 = vsub.s32 32, %v4837
        %v4839 = vshll.u32 %v4830, %v4837
        %v4840 = vshrl.u32 %v4822, %v4838
        %v4841 = vor.u32 %v4839, %v4840
        %v4842 = vsub.s32 4294967266, %v4837
        %v4843 = vadd.s32 %v4842, 127
        %v4844 = vshll.u32 %v4843, 23
        %v4845 = vor.u32 4788187, %v4844
        %v4846 = vand.u32 2147483647, %v4845
        %v4848 = vcvt.s32.f32 %v4841
        %v4849 = vmul.f32 %v4848, %v4846
        %v4850 = vxor.u32 %v4849, 2147483648
        %v4851 = vsel %vm4730, %v4850, %v4849
        %v4852 = vsub.s32 4, %v4828
        %v4853 = vsel %vm4730, %v4852, %v4828
        %v4854 = vsel %vm4729, %v487, %v4851
        %v4855 = vsel %vm4729, 0, %v4853
        %v4856 = vmul.f32 %v4854, %v4854
        %v4857 = vmul.f32 %v4856, -0.001358992
        %v4858 = vadd.f32 %v4857, 0.041655596
        %v4859 = vmul.f32 %v4856, %v4858
        %v4860 = vadd.f32 %v4859, -0.4999988
        %v4861 = vmul.f32 %v4856, %v4860
        %v4862 = vadd.f32 1.0, %v4861
        %v4863 = vmul.f32 %v4854, %v4854
        %v4864 = vmul.f32 %v4863, -0.00019511016
        %v4865 = vadd.f32 %v4864, 0.008332121
        %v4866 = vmul.f32 %v4863, %v4865
        %v4867 = vadd.f32 %v4866, -0.16666654
        %v4868 = vmul.f32 %v4863, %v4867
        %v4869 = vadd.f32 %v4868, 1.0
        %v4870 = vmul.f32 %v4869, %v4854
        %vm4871 = vweird.f32 %v487
        %v4872 = vadd.s32 %v4855, 3
        %v4873 = vand.u32 %v4872, 3
        %vm4874 = vcmp.lt.s32.totalorder %v4873, 2
        %vm4875 = vcmp.eq.s32.totalorder %v4873, 0
        %v4876 = vxor.u32 %v4870, 2147483648
        %v4877 = vsel %vm4875, %v4862, %v4876
        %vm4878 = vcmp.eq.s32.totalorder %v4873, 2
        %v4879 = vxor.u32 %v4862, 2147483648
        %v4880 = vsel %vm4878, %v4879, %v4870
        %v4881 = vsel %vm4874, %v4877, %v4880
        %v4882 = vsel %vm4871, nan, %v4881
        %v4883 = vand.u32 2147483647, %v377
        %vm4884 = vcmp.le.f32.partialorder %v4883, 0.7853982
        %vm4885 = vcmp.lt.s32.totalorder %v377, 0
        %v4886 = vand.u32 %v377, 2139095040
        %v4887 = vshrl.u32 %v4886, 23
        %v4888 = vsub.s32 %v4887, 127
        %v4889 = vand.u32 2147483647, %v377
        %v4890 = vand.u32 %v4889, 8388607
        %v4891 = vor.u32 %v4890, 8388608
        %v4892 = vsub.s32 0, %v4891
        %v4893 = vadd.s32 %v4888, 1
        %vm4894 = vcmp.gt.s32.totalorder %v4893, 0
        %v4895 = vsel %vm4894, %v4893, 0
        %v4896 = vshrl.u32 %v4895, 5
        %v4897 = vand.u32 %v4895, 31
        %v4898 = vsub.s32 32, %v4897
        %v4899 = vshrl.u32 683565275, %v4898
        %v4900 = vshll.u32 683565275, %v4897
        %v4901 = vshrl.u32 2475754826, %v4898
        %v4902 = vor.u32 %v4900, %v4901
        %v4903 = vshll.u32 2475754826, %v4897
        %v4904 = vshrl.u32 2131351028, %v4898
        %v4905 = vor.u32 %v4903, %v4904
        %v4906 = vshll.u32 2131351028, %v4897
        %v4907 = vshrl.u32 2102212464, %v4898
        %v4908 = vor.u32 %v4906, %v4907
        %v4909 = vshll.u32 2102212464, %v4897
        %v4910 = vshrl.u32 920167782, %v4898
        %v4911 = vor.u32 %v4909, %v4910
        %v4912 = vshll.u32 920167782, %v4897
        %v4913 = vshrl.u32 1326507024, %v4898
        %v4914 = vor.u32 %v4912, %v4913
        %vm4915 = vcmp.lt.s32.totalorder %v4896, 1
        %vm4916 = vcmp.lt.s32.totalorder %v4896, 2
        %vm4917 = vcmp.lt.s32.totalorder %v4896, 3
        %vm4918 = vcmp.lt.s32.totalorder %v4896, 4
        %v4919 = vsel %vm4915, %v4899, %v4902
        %v4920 = vsel %vm4918, %v4908, 2102212464
        %v4921 = vsel %vm4917, %v4905, %v4920
        %v4922 = vsel %vm4916, %v4919, %v4921
        %v4923 = vsel %vm4915, %v4902, %v4905
        %v4924 = vsel %vm4918, %v4911, 920167782
        %v4925 = vsel %vm4917, %v4908, %v4924
        %v4926 = vsel %vm4916, %v4923, %v4925
        %v4927 = vsel %vm4915, %v4905, %v4908
        %v4928 = vsel %vm4918, %v4914, 1326507024
        %v4929 = vsel %vm4917, %v4911, %v4928
        %v4930 = vsel %vm4916, %v4927, %v4929
        %v4931 = vshll.u32 %v4891, 8
        %v4932 = vand.u32 %v4931, 65535
        %v4933 = vshrl.u32 %v4931, 16
        %v4934 = vand.u32 %v4930, 65535
        %v4935 = vshrl.u32 %v4930, 16
        %v4936 = vmul.u32 %v4932, %v4934
        %v4937 = vmul.u32 %v4932, %v4935
        %v4938 = vmul.u32 %v4933, %v4934
        %v4939 = vmul.u32 %v4933, %v4935
        %v4940 = vshll.u32 %v4937, 16
        %v4941 = vshrl.u32 %v4937, 16
        %v4942 = vshll.u32 %v4938, 16
        %v4943 = vshrl.u32 %v4938, 16
        %vm4944 = vc.u32 %v4936, %v4940
        %v4945 = vsel %vm4944, 1, 0
        %v4946 = vadd.s32 %v4936, %v4940
        %v4947 = vadd.s32 %v4939, %v4945
        %vm4948 = vc.u32 %v4946, %v4942
        %v4949 = vsel %vm4948, 1, 0
        %v4950 = vadd.s32 %v4946, %v4942
        %v4951 = vadd.s32 %v4947, %v4949
        %v4952 = vadd.s32 %v4951, %v4941
        %v4953 = vadd.s32 %v4952, %v4943
        %v4954 = vand.u32 %v4931, 65535
        %v4955 = vshrl.u32 %v4931, 16
        %v4956 = vand.u32 %v4926, 65535
        %v4957 = vshrl.u32 %v4926, 16
        %v4958 = vmul.u32 %v4954, %v4956
        %v4959 = vmul.u32 %v4954, %v4957
        %v4960 = vmul.u32 %v4955, %v4956
        %v4961 = vmul.u32 %v4955, %v4957
        %v4962 = vshll.u32 %v4959, 16
        %v4963 = vshrl.u32 %v4959, 16
        %v4964 = vshll.u32 %v4960, 16
        %v4965 = vshrl.u32 %v4960, 16
        %vm4966 = vc.u32 %v4958, %v4962
        %v4967 = vsel %vm4966, 1, 0
        %v4968 = vadd.s32 %v4958, %v4962
        %v4969 = vadd.s32 %v4961, %v4967
        %vm4970 = vc.u32 %v4968, %v4964
        %v4971 = vsel %vm4970, 1, 0
        %v4972 = vadd.s32 %v4968, %v4964
        %v4973 = vadd.s32 %v4969, %v4971
        %v4974 = vadd.s32 %v4973, %v4963
        %v4975 = vadd.s32 %v4974, %v4965
        %v4976 = vmul.u32 %v4931, %v4922
        %v4977 = vadd.s32 %v4953, %v4972
        %vm4978 = vc.u32 %v4953, %v4972
        %v4979 = vadd.s32 %v4975, 1
        %v4980 = vsel %vm4978, %v4979, %v4975
        %v4981 = vadd.s32 %v4976, %v4980
        %v4982 = vadd.s32 %v4981, 536870912
        %v4983 = vshrl.u32 %v4982, 30
        %v4984 = vshll.u32 %v4983, 30
        %v4985 = vsub.s32 %v4981, %v4984
        %vm4986 = vcmp.lt.s32.totalorder %v4985, 0
        %v4987 = vsub.s32 0, %v4985
        %v4988 = vsel %vm4986, %v4987, %v4985
        %v4989 = vclz %v4988
        %v4990 = vsub.s32 %v4989, 2
        %vm4991 = vcmp.gt.s32.totalorder 0, %v4990
        %v4992 = vsel %vm4991, 0, %v4990
        %v4993 = vsub.s32 32, %v4992
        %v4994 = vshll.u32 %v4985, %v4992
        %v4995 = vshrl.u32 %v4977, %v4993
        %v4996 = vor.u32 %v4994, %v4995
        %v4997 = vsub.s32 4294967266, %v4992
        %v4998 = vadd.s32 %v4997, 127
        %v4999 = vshll.u32 %v4998, 23
        %v5000 = vor.u32 4788187, %v4999
        %v5001 = vand.u32 2147483647, %v5000
        %v5003 = vcvt.s32.f32 %v4996
        %v5004 = vmul.f32 %v5003, %v5001
        %v5005 = vxor.u32 %v5004, 2147483648
        %v5006 = vsel %vm4885, %v5005, %v5004
        %v5007 = vsub.s32 4, %v4983
        %v5008 = vsel %vm4885, %v5007, %v4983
        %v5009 = vsel %vm4884, %v377, %v5006
        %v5010 = vsel %vm4884, 0, %v5008
        %v5011 = vmul.f32 %v5009, %v5009
        %v5012 = vmul.f32 %v5011, -0.001358992
        %v5013 = vadd.f32 %v5012, 0.041655596
        %v5014 = vmul.f32 %v5011, %v5013
        %v5015 = vadd.f32 %v5014, -0.4999988
        %v5016 = vmul.f32 %v5011, %v5015
        %v5017 = vadd.f32 1.0, %v5016
        %v5018 = vmul.f32 %v5009, %v5009
        %v5019 = vmul.f32 %v5018, -0.00019511016
        %v5020 = vadd.f32 %v5019, 0.008332121
        %v5021 = vmul.f32 %v5018, %v5020
        %v5022 = vadd.f32 %v5021, -0.16666654
        %v5023 = vmul.f32 %v5018, %v5022
        %v5024 = vadd.f32 %v5023, 1.0
        %v5025 = vmul.f32 %v5024, %v5009
        %vm5026 = vweird.f32 %v377
        %v5027 = vadd.s32 %v5010, 3
        %v5028 = vand.u32 %v5027, 3
        %vm5029 = vcmp.lt.s32.totalorder %v5028, 2
        %vm5030 = vcmp.eq.s32.totalorder %v5028, 0
        %v5031 = vxor.u32 %v5025, 2147483648
        %v5032 = vsel %vm5030, %v5017, %v5031
        %vm5033 = vcmp.eq.s32.totalorder %v5028, 2
        %v5034 = vxor.u32 %v5017, 2147483648
        %v5035 = vsel %vm5033, %v5034, %v5025
        %v5036 = vsel %vm5029, %v5032, %v5035
        %v5037 = vsel %vm5026, nan, %v5036
        %v5038 = vand.u32 2147483647, %v490
        %vm5039 = vcmp.le.f32.partialorder %v5038, 0.7853982
        %vm5040 = vcmp.lt.s32.totalorder %v490, 0
        %v5041 = vand.u32 %v490, 2139095040
        %v5042 = vshrl.u32 %v5041, 23
        %v5043 = vsub.s32 %v5042, 127
        %v5044 = vand.u32 2147483647, %v490
        %v5045 = vand.u32 %v5044, 8388607
        %v5046 = vor.u32 %v5045, 8388608
        %v5047 = vsub.s32 0, %v5046
        %v5048 = vadd.s32 %v5043, 1
        %vm5049 = vcmp.gt.s32.totalorder %v5048, 0
        %v5050 = vsel %vm5049, %v5048, 0
        %v5051 = vshrl.u32 %v5050, 5
        %v5052 = vand.u32 %v5050, 31
        %v5053 = vsub.s32 32, %v5052
        %v5054 = vshrl.u32 683565275, %v5053
        %v5055 = vshll.u32 683565275, %v5052
        %v5056 = vshrl.u32 2475754826, %v5053
        %v5057 = vor.u32 %v5055, %v5056
        %v5058 = vshll.u32 2475754826, %v5052
        %v5059 = vshrl.u32 2131351028, %v5053
        %v5060 = vor.u32 %v5058, %v5059
        %v5061 = vshll.u32 2131351028, %v5052
        %v5062 = vshrl.u32 2102212464, %v5053
        %v5063 = vor.u32 %v5061, %v5062
        %v5064 = vshll.u32 2102212464, %v5052
        %v5065 = vshrl.u32 920167782, %v5053
        %v5066 = vor.u32 %v5064, %v5065
        %v5067 = vshll.u32 920167782, %v5052
        %v5068 = vshrl.u32 1326507024, %v5053
        %v5069 = vor.u32 %v5067, %v5068
        %vm5070 = vcmp.lt.s32.totalorder %v5051, 1
        %vm5071 = vcmp.lt.s32.totalorder %v5051, 2
        %vm5072 = vcmp.lt.s32.totalorder %v5051, 3
        %vm5073 = vcmp.lt.s32.totalorder %v5051, 4
        %v5074 = vsel %vm5070, %v5054, %v5057
        %v5075 = vsel %vm5073, %v5063, 2102212464
        %v5076 = vsel %vm5072, %v5060, %v5075
        %v5077 = vsel %vm5071, %v5074, %v5076
        %v5078 = vsel %vm5070, %v5057, %v5060
        %v5079 = vsel %vm5073, %v5066, 920167782
        %v5080 = vsel %vm5072, %v5063, %v5079
        %v5081 = vsel %vm5071, %v5078, %v5080
        %v5082 = vsel %vm5070, %v5060, %v5063
        %v5083 = vsel %vm5073, %v5069, 1326507024
        %v5084 = vsel %vm5072, %v5066, %v5083
        %v5085 = vsel %vm5071, %v5082, %v5084
        %v5086 = vshll.u32 %v5046, 8
        %v5087 = vand.u32 %v5086, 65535
        %v5088 = vshrl.u32 %v5086, 16
        %v5089 = vand.u32 %v5085, 65535
        %v5090 = vshrl.u32 %v5085, 16
        %v5091 = vmul.u32 %v5087, %v5089
        %v5092 = vmul.u32 %v5087, %v5090
        %v5093 = vmul.u32 %v5088, %v5089
        %v5094 = vmul.u32 %v5088, %v5090
        %v5095 = vshll.u32 %v5092, 16
        %v5096 = vshrl.u32 %v5092, 16
        %v5097 = vshll.u32 %v5093, 16
        %v5098 = vshrl.u32 %v5093, 16
        %vm5099 = vc.u32 %v5091, %v5095
        %v5100 = vsel %vm5099, 1, 0
        %v5101 = vadd.s32 %v5091, %v5095
        %v5102 = vadd.s32 %v5094, %v5100
        %vm5103 = vc.u32 %v5101, %v5097
        %v5104 = vsel %vm5103, 1, 0
        %v5105 = vadd.s32 %v5101, %v5097
        %v5106 = vadd.s32 %v5102, %v5104
        %v5107 = vadd.s32 %v5106, %v5096
        %v5108 = vadd.s32 %v5107, %v5098
        %v5109 = vand.u32 %v5086, 65535
        %v5110 = vshrl.u32 %v5086, 16
        %v5111 = vand.u32 %v5081, 65535
        %v5112 = vshrl.u32 %v5081, 16
        %v5113 = vmul.u32 %v5109, %v5111
        %v5114 = vmul.u32 %v5109, %v5112
        %v5115 = vmul.u32 %v5110, %v5111
        %v5116 = vmul.u32 %v5110, %v5112
        %v5117 = vshll.u32 %v5114, 16
        %v5118 = vshrl.u32 %v5114, 16
        %v5119 = vshll.u32 %v5115, 16
        %v5120 = vshrl.u32 %v5115, 16
        %vm5121 = vc.u32 %v5113, %v5117
        %v5122 = vsel %vm5121, 1, 0
        %v5123 = vadd.s32 %v5113, %v5117
        %v5124 = vadd.s32 %v5116, %v5122
        %vm5125 = vc.u32 %v5123, %v5119
        %v5126 = vsel %vm5125, 1, 0
        %v5127 = vadd.s32 %v5123, %v5119
        %v5128 = vadd.s32 %v5124, %v5126
        %v5129 = vadd.s32 %v5128, %v5118
        %v5130 = vadd.s32 %v5129, %v5120
        %v5131 = vmul.u32 %v5086, %v5077
        %v5132 = vadd.s32 %v5108, %v5127
        %vm5133 = vc.u32 %v5108, %v5127
        %v5134 = vadd.s32 %v5130, 1
        %v5135 = vsel %vm5133, %v5134, %v5130
        %v5136 = vadd.s32 %v5131, %v5135
        %v5137 = vadd.s32 %v5136, 536870912
        %v5138 = vshrl.u32 %v5137, 30
        %v5139 = vshll.u32 %v5138, 30
        %v5140 = vsub.s32 %v5136, %v5139
        %vm5141 = vcmp.lt.s32.totalorder %v5140, 0
        %v5142 = vsub.s32 0, %v5140
        %v5143 = vsel %vm5141, %v5142, %v5140
        %v5144 = vclz %v5143
        %v5145 = vsub.s32 %v5144, 2
        %vm5146 = vcmp.gt.s32.totalorder 0, %v5145
        %v5147 = vsel %vm5146, 0, %v5145
        %v5148 = vsub.s32 32, %v5147
        %v5149 = vshll.u32 %v5140, %v5147
        %v5150 = vshrl.u32 %v5132, %v5148
        %v5151 = vor.u32 %v5149, %v5150
        %v5152 = vsub.s32 4294967266, %v5147
        %v5153 = vadd.s32 %v5152, 127
        %v5154 = vshll.u32 %v5153, 23
        %v5155 = vor.u32 4788187, %v5154
        %v5156 = vand.u32 2147483647, %v5155
        %v5158 = vcvt.s32.f32 %v5151
        %v5159 = vmul.f32 %v5158, %v5156
        %v5160 = vxor.u32 %v5159, 2147483648
        %v5161 = vsel %vm5040, %v5160, %v5159
        %v5162 = vsub.s32 4, %v5138
        %v5163 = vsel %vm5040, %v5162, %v5138
        %v5164 = vsel %vm5039, %v490, %v5161
        %v5165 = vsel %vm5039, 0, %v5163
        %v5166 = vmul.f32 %v5164, %v5164
        %v5167 = vmul.f32 %v5166, -0.001358992
        %v5168 = vadd.f32 %v5167, 0.041655596
        %v5169 = vmul.f32 %v5166, %v5168
        %v5170 = vadd.f32 %v5169, -0.4999988
        %v5171 = vmul.f32 %v5166, %v5170
        %v5172 = vadd.f32 1.0, %v5171
        %v5173 = vmul.f32 %v5164, %v5164
        %v5174 = vmul.f32 %v5173, -0.00019511016
        %v5175 = vadd.f32 %v5174, 0.008332121
        %v5176 = vmul.f32 %v5173, %v5175
        %v5177 = vadd.f32 %v5176, -0.16666654
        %v5178 = vmul.f32 %v5173, %v5177
        %v5179 = vadd.f32 %v5178, 1.0
        %v5180 = vmul.f32 %v5179, %v5164
        %vm5181 = vweird.f32 %v490
        %v5182 = vadd.s32 %v5165, 3
        %v5183 = vand.u32 %v5182, 3
        %vm5184 = vcmp.lt.s32.totalorder %v5183, 2
        %vm5185 = vcmp.eq.s32.totalorder %v5183, 0
        %v5186 = vxor.u32 %v5180, 2147483648
        %v5187 = vsel %vm5185, %v5172, %v5186
        %vm5188 = vcmp.eq.s32.totalorder %v5183, 2
        %v5189 = vxor.u32 %v5172, 2147483648
        %v5190 = vsel %vm5188, %v5189, %v5180
        %v5191 = vsel %vm5184, %v5187, %v5190
        %v5192 = vsel %vm5181, nan, %v5191
        %v5193 = vand.u32 2147483647, %v380
        %vm5194 = vcmp.le.f32.partialorder %v5193, 0.7853982
        %vm5195 = vcmp.lt.s32.totalorder %v380, 0
        %v5196 = vand.u32 %v380, 2139095040
        %v5197 = vshrl.u32 %v5196, 23
        %v5198 = vsub.s32 %v5197, 127
        %v5199 = vand.u32 2147483647, %v380
        %v5200 = vand.u32 %v5199, 8388607
        %v5201 = vor.u32 %v5200, 8388608
        %v5202 = vsub.s32 0, %v5201
        %v5203 = vadd.s32 %v5198, 1
        %vm5204 = vcmp.gt.s32.totalorder %v5203, 0
        %v5205 = vsel %vm5204, %v5203, 0
        %v5206 = vshrl.u32 %v5205, 5
        %v5207 = vand.u32 %v5205, 31
        %v5208 = vsub.s32 32, %v5207
        %v5209 = vshrl.u32 683565275, %v5208
        %v5210 = vshll.u32 683565275, %v5207
        %v5211 = vshrl.u32 2475754826, %v5208
        %v5212 = vor.u32 %v5210, %v5211
        %v5213 = vshll.u32 2475754826, %v5207
        %v5214 = vshrl.u32 2131351028, %v5208
        %v5215 = vor.u32 %v5213, %v5214
        %v5216 = vshll.u32 2131351028, %v5207
        %v5217 = vshrl.u32 2102212464, %v5208
        %v5218 = vor.u32 %v5216, %v5217
        %v5219 = vshll.u32 2102212464, %v5207
        %v5220 = vshrl.u32 920167782, %v5208
        %v5221 = vor.u32 %v5219, %v5220
        %v5222 = vshll.u32 920167782, %v5207
        %v5223 = vshrl.u32 1326507024, %v5208
        %v5224 = vor.u32 %v5222, %v5223
        %vm5225 = vcmp.lt.s32.totalorder %v5206, 1
        %vm5226 = vcmp.lt.s32.totalorder %v5206, 2
        %vm5227 = vcmp.lt.s32.totalorder %v5206, 3
        %vm5228 = vcmp.lt.s32.totalorder %v5206, 4
        %v5229 = vsel %vm5225, %v5209, %v5212
        %v5230 = vsel %vm5228, %v5218, 2102212464
        %v5231 = vsel %vm5227, %v5215, %v5230
        %v5232 = vsel %vm5226, %v5229, %v5231
        %v5233 = vsel %vm5225, %v5212, %v5215
        %v5234 = vsel %vm5228, %v5221, 920167782
        %v5235 = vsel %vm5227, %v5218, %v5234
        %v5236 = vsel %vm5226, %v5233, %v5235
        %v5237 = vsel %vm5225, %v5215, %v5218
        %v5238 = vsel %vm5228, %v5224, 1326507024
        %v5239 = vsel %vm5227, %v5221, %v5238
        %v5240 = vsel %vm5226, %v5237, %v5239
        %v5241 = vshll.u32 %v5201, 8
        %v5242 = vand.u32 %v5241, 65535
        %v5243 = vshrl.u32 %v5241, 16
        %v5244 = vand.u32 %v5240, 65535
        %v5245 = vshrl.u32 %v5240, 16
        %v5246 = vmul.u32 %v5242, %v5244
        %v5247 = vmul.u32 %v5242, %v5245
        %v5248 = vmul.u32 %v5243, %v5244
        %v5249 = vmul.u32 %v5243, %v5245
        %v5250 = vshll.u32 %v5247, 16
        %v5251 = vshrl.u32 %v5247, 16
        %v5252 = vshll.u32 %v5248, 16
        %v5253 = vshrl.u32 %v5248, 16
        %vm5254 = vc.u32 %v5246, %v5250
        %v5255 = vsel %vm5254, 1, 0
        %v5256 = vadd.s32 %v5246, %v5250
        %v5257 = vadd.s32 %v5249, %v5255
        %vm5258 = vc.u32 %v5256, %v5252
        %v5259 = vsel %vm5258, 1, 0
        %v5260 = vadd.s32 %v5256, %v5252
        %v5261 = vadd.s32 %v5257, %v5259
        %v5262 = vadd.s32 %v5261, %v5251
        %v5263 = vadd.s32 %v5262, %v5253
        %v5264 = vand.u32 %v5241, 65535
        %v5265 = vshrl.u32 %v5241, 16
        %v5266 = vand.u32 %v5236, 65535
        %v5267 = vshrl.u32 %v5236, 16
        %v5268 = vmul.u32 %v5264, %v5266
        %v5269 = vmul.u32 %v5264, %v5267
        %v5270 = vmul.u32 %v5265, %v5266
        %v5271 = vmul.u32 %v5265, %v5267
        %v5272 = vshll.u32 %v5269, 16
        %v5273 = vshrl.u32 %v5269, 16
        %v5274 = vshll.u32 %v5270, 16
        %v5275 = vshrl.u32 %v5270, 16
        %vm5276 = vc.u32 %v5268, %v5272
        %v5277 = vsel %vm5276, 1, 0
        %v5278 = vadd.s32 %v5268, %v5272
        %v5279 = vadd.s32 %v5271, %v5277
        %vm5280 = vc.u32 %v5278, %v5274
        %v5281 = vsel %vm5280, 1, 0
        %v5282 = vadd.s32 %v5278, %v5274
        %v5283 = vadd.s32 %v5279, %v5281
        %v5284 = vadd.s32 %v5283, %v5273
        %v5285 = vadd.s32 %v5284, %v5275
        %v5286 = vmul.u32 %v5241, %v5232
        %v5287 = vadd.s32 %v5263, %v5282
        %vm5288 = vc.u32 %v5263, %v5282
        %v5289 = vadd.s32 %v5285, 1
        %v5290 = vsel %vm5288, %v5289, %v5285
        %v5291 = vadd.s32 %v5286, %v5290
        %v5292 = vadd.s32 %v5291, 536870912
        %v5293 = vshrl.u32 %v5292, 30
        %v5294 = vshll.u32 %v5293, 30
        %v5295 = vsub.s32 %v5291, %v5294
        %vm5296 = vcmp.lt.s32.totalorder %v5295, 0
        %v5297 = vsub.s32 0, %v5295
        %v5298 = vsel %vm5296, %v5297, %v5295
        %v5299 = vclz %v5298
        %v5300 = vsub.s32 %v5299, 2
        %vm5301 = vcmp.gt.s32.totalorder 0, %v5300
        %v5302 = vsel %vm5301, 0, %v5300
        %v5303 = vsub.s32 32, %v5302
        %v5304 = vshll.u32 %v5295, %v5302
        %v5305 = vshrl.u32 %v5287, %v5303
        %v5306 = vor.u32 %v5304, %v5305
        %v5307 = vsub.s32 4294967266, %v5302
        %v5308 = vadd.s32 %v5307, 127
        %v5309 = vshll.u32 %v5308, 23
        %v5310 = vor.u32 4788187, %v5309
        %v5311 = vand.u32 2147483647, %v5310
        %v5313 = vcvt.s32.f32 %v5306
        %v5314 = vmul.f32 %v5313, %v5311
        %v5315 = vxor.u32 %v5314, 2147483648
        %v5316 = vsel %vm5195, %v5315, %v5314
        %v5317 = vsub.s32 4, %v5293
        %v5318 = vsel %vm5195, %v5317, %v5293
        %v5319 = vsel %vm5194, %v380, %v5316
        %v5320 = vsel %vm5194, 0, %v5318
        %v5321 = vmul.f32 %v5319, %v5319
        %v5322 = vmul.f32 %v5321, -0.001358992
        %v5323 = vadd.f32 %v5322, 0.041655596
        %v5324 = vmul.f32 %v5321, %v5323
        %v5325 = vadd.f32 %v5324, -0.4999988
        %v5326 = vmul.f32 %v5321, %v5325
        %v5327 = vadd.f32 1.0, %v5326
        %v5328 = vmul.f32 %v5319, %v5319
        %v5329 = vmul.f32 %v5328, -0.00019511016
        %v5330 = vadd.f32 %v5329, 0.008332121
        %v5331 = vmul.f32 %v5328, %v5330
        %v5332 = vadd.f32 %v5331, -0.16666654
        %v5333 = vmul.f32 %v5328, %v5332
        %v5334 = vadd.f32 %v5333, 1.0
        %v5335 = vmul.f32 %v5334, %v5319
        %vm5336 = vweird.f32 %v380
        %v5337 = vadd.s32 %v5320, 3
        %v5338 = vand.u32 %v5337, 3
        %vm5339 = vcmp.lt.s32.totalorder %v5338, 2
        %vm5340 = vcmp.eq.s32.totalorder %v5338, 0
        %v5341 = vxor.u32 %v5335, 2147483648
        %v5342 = vsel %vm5340, %v5327, %v5341
        %vm5343 = vcmp.eq.s32.totalorder %v5338, 2
        %v5344 = vxor.u32 %v5327, 2147483648
        %v5345 = vsel %vm5343, %v5344, %v5335
        %v5346 = vsel %vm5339, %v5342, %v5345
        %v5347 = vsel %vm5336, nan, %v5346
        %v5348 = vand.u32 2147483647, %v493
        %vm5349 = vcmp.le.f32.partialorder %v5348, 0.7853982
        %vm5350 = vcmp.lt.s32.totalorder %v493, 0
        %v5351 = vand.u32 %v493, 2139095040
        %v5352 = vshrl.u32 %v5351, 23
        %v5353 = vsub.s32 %v5352, 127
        %v5354 = vand.u32 2147483647, %v493
        %v5355 = vand.u32 %v5354, 8388607
        %v5356 = vor.u32 %v5355, 8388608
        %v5357 = vsub.s32 0, %v5356
        %v5358 = vadd.s32 %v5353, 1
        %vm5359 = vcmp.gt.s32.totalorder %v5358, 0
        %v5360 = vsel %vm5359, %v5358, 0
        %v5361 = vshrl.u32 %v5360, 5
        %v5362 = vand.u32 %v5360, 31
        %v5363 = vsub.s32 32, %v5362
        %v5364 = vshrl.u32 683565275, %v5363
        %v5365 = vshll.u32 683565275, %v5362
        %v5366 = vshrl.u32 2475754826, %v5363
        %v5367 = vor.u32 %v5365, %v5366
        %v5368 = vshll.u32 2475754826, %v5362
        %v5369 = vshrl.u32 2131351028, %v5363
        %v5370 = vor.u32 %v5368, %v5369
        %v5371 = vshll.u32 2131351028, %v5362
        %v5372 = vshrl.u32 2102212464, %v5363
        %v5373 = vor.u32 %v5371, %v5372
        %v5374 = vshll.u32 2102212464, %v5362
        %v5375 = vshrl.u32 920167782, %v5363
        %v5376 = vor.u32 %v5374, %v5375
        %v5377 = vshll.u32 920167782, %v5362
        %v5378 = vshrl.u32 1326507024, %v5363
        %v5379 = vor.u32 %v5377, %v5378
        %vm5380 = vcmp.lt.s32.totalorder %v5361, 1
        %vm5381 = vcmp.lt.s32.totalorder %v5361, 2
        %vm5382 = vcmp.lt.s32.totalorder %v5361, 3
        %vm5383 = vcmp.lt.s32.totalorder %v5361, 4
        %v5384 = vsel %vm5380, %v5364, %v5367
        %v5385 = vsel %vm5383, %v5373, 2102212464
        %v5386 = vsel %vm5382, %v5370, %v5385
        %v5387 = vsel %vm5381, %v5384, %v5386
        %v5388 = vsel %vm5380, %v5367, %v5370
        %v5389 = vsel %vm5383, %v5376, 920167782
        %v5390 = vsel %vm5382, %v5373, %v5389
        %v5391 = vsel %vm5381, %v5388, %v5390
        %v5392 = vsel %vm5380, %v5370, %v5373
        %v5393 = vsel %vm5383, %v5379, 1326507024
        %v5394 = vsel %vm5382, %v5376, %v5393
        %v5395 = vsel %vm5381, %v5392, %v5394
        %v5396 = vshll.u32 %v5356, 8
        %v5397 = vand.u32 %v5396, 65535
        %v5398 = vshrl.u32 %v5396, 16
        %v5399 = vand.u32 %v5395, 65535
        %v5400 = vshrl.u32 %v5395, 16
        %v5401 = vmul.u32 %v5397, %v5399
        %v5402 = vmul.u32 %v5397, %v5400
        %v5403 = vmul.u32 %v5398, %v5399
        %v5404 = vmul.u32 %v5398, %v5400
        %v5405 = vshll.u32 %v5402, 16
        %v5406 = vshrl.u32 %v5402, 16
        %v5407 = vshll.u32 %v5403, 16
        %v5408 = vshrl.u32 %v5403, 16
        %vm5409 = vc.u32 %v5401, %v5405
        %v5410 = vsel %vm5409, 1, 0
        %v5411 = vadd.s32 %v5401, %v5405
        %v5412 = vadd.s32 %v5404, %v5410
        %vm5413 = vc.u32 %v5411, %v5407
        %v5414 = vsel %vm5413, 1, 0
        %v5415 = vadd.s32 %v5411, %v5407
        %v5416 = vadd.s32 %v5412, %v5414
        %v5417 = vadd.s32 %v5416, %v5406
        %v5418 = vadd.s32 %v5417, %v5408
        %v5419 = vand.u32 %v5396, 65535
        %v5420 = vshrl.u32 %v5396, 16
        %v5421 = vand.u32 %v5391, 65535
        %v5422 = vshrl.u32 %v5391, 16
        %v5423 = vmul.u32 %v5419, %v5421
        %v5424 = vmul.u32 %v5419, %v5422
        %v5425 = vmul.u32 %v5420, %v5421
        %v5426 = vmul.u32 %v5420, %v5422
        %v5427 = vshll.u32 %v5424, 16
        %v5428 = vshrl.u32 %v5424, 16
        %v5429 = vshll.u32 %v5425, 16
        %v5430 = vshrl.u32 %v5425, 16
        %vm5431 = vc.u32 %v5423, %v5427
        %v5432 = vsel %vm5431, 1, 0
        %v5433 = vadd.s32 %v5423, %v5427
        %v5434 = vadd.s32 %v5426, %v5432
        %vm5435 = vc.u32 %v5433, %v5429
        %v5436 = vsel %vm5435, 1, 0
        %v5437 = vadd.s32 %v5433, %v5429
        %v5438 = vadd.s32 %v5434, %v5436
        %v5439 = vadd.s32 %v5438, %v5428
        %v5440 = vadd.s32 %v5439, %v5430
        %v5441 = vmul.u32 %v5396, %v5387
        %v5442 = vadd.s32 %v5418, %v5437
        %vm5443 = vc.u32 %v5418, %v5437
        %v5444 = vadd.s32 %v5440, 1
        %v5445 = vsel %vm5443, %v5444, %v5440
        %v5446 = vadd.s32 %v5441, %v5445
        %v5447 = vadd.s32 %v5446, 536870912
        %v5448 = vshrl.u32 %v5447, 30
        %v5449 = vshll.u32 %v5448, 30
        %v5450 = vsub.s32 %v5446, %v5449
        %vm5451 = vcmp.lt.s32.totalorder %v5450, 0
        %v5452 = vsub.s32 0, %v5450
        %v5453 = vsel %vm5451, %v5452, %v5450
        %v5454 = vclz %v5453
        %v5455 = vsub.s32 %v5454, 2
        %vm5456 = vcmp.gt.s32.totalorder 0, %v5455
        %v5457 = vsel %vm5456, 0, %v5455
        %v5458 = vsub.s32 32, %v5457
        %v5459 = vshll.u32 %v5450, %v5457
        %v5460 = vshrl.u32 %v5442, %v5458
        %v5461 = vor.u32 %v5459, %v5460
        %v5462 = vsub.s32 4294967266, %v5457
        %v5463 = vadd.s32 %v5462, 127
        %v5464 = vshll.u32 %v5463, 23
        %v5465 = vor.u32 4788187, %v5464
        %v5466 = vand.u32 2147483647, %v5465
        %v5468 = vcvt.s32.f32 %v5461
        %v5469 = vmul.f32 %v5468, %v5466
        %v5470 = vxor.u32 %v5469, 2147483648
        %v5471 = vsel %vm5350, %v5470, %v5469
        %v5472 = vsub.s32 4, %v5448
        %v5473 = vsel %vm5350, %v5472, %v5448
        %v5474 = vsel %vm5349, %v493, %v5471
        %v5475 = vsel %vm5349, 0, %v5473
        %v5476 = vmul.f32 %v5474, %v5474
        %v5477 = vmul.f32 %v5476, -0.001358992
        %v5478 = vadd.f32 %v5477, 0.041655596
        %v5479 = vmul.f32 %v5476, %v5478
        %v5480 = vadd.f32 %v5479, -0.4999988
        %v5481 = vmul.f32 %v5476, %v5480
        %v5482 = vadd.f32 1.0, %v5481
        %v5483 = vmul.f32 %v5474, %v5474
        %v5484 = vmul.f32 %v5483, -0.00019511016
        %v5485 = vadd.f32 %v5484, 0.008332121
        %v5486 = vmul.f32 %v5483, %v5485
        %v5487 = vadd.f32 %v5486, -0.16666654
        %v5488 = vmul.f32 %v5483, %v5487
        %v5489 = vadd.f32 %v5488, 1.0
        %v5490 = vmul.f32 %v5489, %v5474
        %vm5491 = vweird.f32 %v493
        %v5492 = vadd.s32 %v5475, 3
        %v5493 = vand.u32 %v5492, 3
        %vm5494 = vcmp.lt.s32.totalorder %v5493, 2
        %vm5495 = vcmp.eq.s32.totalorder %v5493, 0
        %v5496 = vxor.u32 %v5490, 2147483648
        %v5497 = vsel %vm5495, %v5482, %v5496
        %vm5498 = vcmp.eq.s32.totalorder %v5493, 2
        %v5499 = vxor.u32 %v5482, 2147483648
        %v5500 = vsel %vm5498, %v5499, %v5490
        %v5501 = vsel %vm5494, %v5497, %v5500
        %v5502 = vsel %vm5491, nan, %v5501
        %v5503 = vand.u32 2147483647, %v383
        %vm5504 = vcmp.le.f32.partialorder %v5503, 0.7853982
        %vm5505 = vcmp.lt.s32.totalorder %v383, 0
        %v5506 = vand.u32 %v383, 2139095040
        %v5507 = vshrl.u32 %v5506, 23
        %v5508 = vsub.s32 %v5507, 127
        %v5509 = vand.u32 2147483647, %v383
        %v5510 = vand.u32 %v5509, 8388607
        %v5511 = vor.u32 %v5510, 8388608
        %v5512 = vsub.s32 0, %v5511
        %v5513 = vadd.s32 %v5508, 1
        %vm5514 = vcmp.gt.s32.totalorder %v5513, 0
        %v5515 = vsel %vm5514, %v5513, 0
        %v5516 = vshrl.u32 %v5515, 5
        %v5517 = vand.u32 %v5515, 31
        %v5518 = vsub.s32 32, %v5517
        %v5519 = vshrl.u32 683565275, %v5518
        %v5520 = vshll.u32 683565275, %v5517
        %v5521 = vshrl.u32 2475754826, %v5518
        %v5522 = vor.u32 %v5520, %v5521
        %v5523 = vshll.u32 2475754826, %v5517
        %v5524 = vshrl.u32 2131351028, %v5518
        %v5525 = vor.u32 %v5523, %v5524
        %v5526 = vshll.u32 2131351028, %v5517
        %v5527 = vshrl.u32 2102212464, %v5518
        %v5528 = vor.u32 %v5526, %v5527
        %v5529 = vshll.u32 2102212464, %v5517
        %v5530 = vshrl.u32 920167782, %v5518
        %v5531 = vor.u32 %v5529, %v5530
        %v5532 = vshll.u32 920167782, %v5517
        %v5533 = vshrl.u32 1326507024, %v5518
        %v5534 = vor.u32 %v5532, %v5533
        %vm5535 = vcmp.lt.s32.totalorder %v5516, 1
        %vm5536 = vcmp.lt.s32.totalorder %v5516, 2
        %vm5537 = vcmp.lt.s32.totalorder %v5516, 3
        %vm5538 = vcmp.lt.s32.totalorder %v5516, 4
        %v5539 = vsel %vm5535, %v5519, %v5522
        %v5540 = vsel %vm5538, %v5528, 2102212464
        %v5541 = vsel %vm5537, %v5525, %v5540
        %v5542 = vsel %vm5536, %v5539, %v5541
        %v5543 = vsel %vm5535, %v5522, %v5525
        %v5544 = vsel %vm5538, %v5531, 920167782
        %v5545 = vsel %vm5537, %v5528, %v5544
        %v5546 = vsel %vm5536, %v5543, %v5545
        %v5547 = vsel %vm5535, %v5525, %v5528
        %v5548 = vsel %vm5538, %v5534, 1326507024
        %v5549 = vsel %vm5537, %v5531, %v5548
        %v5550 = vsel %vm5536, %v5547, %v5549
        %v5551 = vshll.u32 %v5511, 8
        %v5552 = vand.u32 %v5551, 65535
        %v5553 = vshrl.u32 %v5551, 16
        %v5554 = vand.u32 %v5550, 65535
        %v5555 = vshrl.u32 %v5550, 16
        %v5556 = vmul.u32 %v5552, %v5554
        %v5557 = vmul.u32 %v5552, %v5555
        %v5558 = vmul.u32 %v5553, %v5554
        %v5559 = vmul.u32 %v5553, %v5555
        %v5560 = vshll.u32 %v5557, 16
        %v5561 = vshrl.u32 %v5557, 16
        %v5562 = vshll.u32 %v5558, 16
        %v5563 = vshrl.u32 %v5558, 16
        %vm5564 = vc.u32 %v5556, %v5560
        %v5565 = vsel %vm5564, 1, 0
        %v5566 = vadd.s32 %v5556, %v5560
        %v5567 = vadd.s32 %v5559, %v5565
        %vm5568 = vc.u32 %v5566, %v5562
        %v5569 = vsel %vm5568, 1, 0
        %v5570 = vadd.s32 %v5566, %v5562
        %v5571 = vadd.s32 %v5567, %v5569
        %v5572 = vadd.s32 %v5571, %v5561
        %v5573 = vadd.s32 %v5572, %v5563
        %v5574 = vand.u32 %v5551, 65535
        %v5575 = vshrl.u32 %v5551, 16
        %v5576 = vand.u32 %v5546, 65535
        %v5577 = vshrl.u32 %v5546, 16
        %v5578 = vmul.u32 %v5574, %v5576
        %v5579 = vmul.u32 %v5574, %v5577
        %v5580 = vmul.u32 %v5575, %v5576
        %v5581 = vmul.u32 %v5575, %v5577
        %v5582 = vshll.u32 %v5579, 16
        %v5583 = vshrl.u32 %v5579, 16
        %v5584 = vshll.u32 %v5580, 16
        %v5585 = vshrl.u32 %v5580, 16
        %vm5586 = vc.u32 %v5578, %v5582
        %v5587 = vsel %vm5586, 1, 0
        %v5588 = vadd.s32 %v5578, %v5582
        %v5589 = vadd.s32 %v5581, %v5587
        %vm5590 = vc.u32 %v5588, %v5584
        %v5591 = vsel %vm5590, 1, 0
        %v5592 = vadd.s32 %v5588, %v5584
        %v5593 = vadd.s32 %v5589, %v5591
        %v5594 = vadd.s32 %v5593, %v5583
        %v5595 = vadd.s32 %v5594, %v5585
        %v5596 = vmul.u32 %v5551, %v5542
        %v5597 = vadd.s32 %v5573, %v5592
        %vm5598 = vc.u32 %v5573, %v5592
        %v5599 = vadd.s32 %v5595, 1
        %v5600 = vsel %vm5598, %v5599, %v5595
        %v5601 = vadd.s32 %v5596, %v5600
        %v5602 = vadd.s32 %v5601, 536870912
        %v5603 = vshrl.u32 %v5602, 30
        %v5604 = vshll.u32 %v5603, 30
        %v5605 = vsub.s32 %v5601, %v5604
        %vm5606 = vcmp.lt.s32.totalorder %v5605, 0
        %v5607 = vsub.s32 0, %v5605
        %v5608 = vsel %vm5606, %v5607, %v5605
        %v5609 = vclz %v5608
        %v5610 = vsub.s32 %v5609, 2
        %vm5611 = vcmp.gt.s32.totalorder 0, %v5610
        %v5612 = vsel %vm5611, 0, %v5610
        %v5613 = vsub.s32 32, %v5612
        %v5614 = vshll.u32 %v5605, %v5612
        %v5615 = vshrl.u32 %v5597, %v5613
        %v5616 = vor.u32 %v5614, %v5615
        %v5617 = vsub.s32 4294967266, %v5612
        %v5618 = vadd.s32 %v5617, 127
        %v5619 = vshll.u32 %v5618, 23
        %v5620 = vor.u32 4788187, %v5619
        %v5621 = vand.u32 2147483647, %v5620
        %v5623 = vcvt.s32.f32 %v5616
        %v5624 = vmul.f32 %v5623, %v5621
        %v5625 = vxor.u32 %v5624, 2147483648
        %v5626 = vsel %vm5505, %v5625, %v5624
        %v5627 = vsub.s32 4, %v5603
        %v5628 = vsel %vm5505, %v5627, %v5603
        %v5629 = vsel %vm5504, %v383, %v5626
        %v5630 = vsel %vm5504, 0, %v5628
        %v5631 = vmul.f32 %v5629, %v5629
        %v5632 = vmul.f32 %v5631, -0.001358992
        %v5633 = vadd.f32 %v5632, 0.041655596
        %v5634 = vmul.f32 %v5631, %v5633
        %v5635 = vadd.f32 %v5634, -0.4999988
        %v5636 = vmul.f32 %v5631, %v5635
        %v5637 = vadd.f32 1.0, %v5636
        %v5638 = vmul.f32 %v5629, %v5629
        %v5639 = vmul.f32 %v5638, -0.00019511016
        %v5640 = vadd.f32 %v5639, 0.008332121
        %v5641 = vmul.f32 %v5638, %v5640
        %v5642 = vadd.f32 %v5641, -0.16666654
        %v5643 = vmul.f32 %v5638, %v5642
        %v5644 = vadd.f32 %v5643, 1.0
        %v5645 = vmul.f32 %v5644, %v5629
        %vm5646 = vweird.f32 %v383
        %v5647 = vadd.s32 %v5630, 3
        %v5648 = vand.u32 %v5647, 3
        %vm5649 = vcmp.lt.s32.totalorder %v5648, 2
        %vm5650 = vcmp.eq.s32.totalorder %v5648, 0
        %v5651 = vxor.u32 %v5645, 2147483648
        %v5652 = vsel %vm5650, %v5637, %v5651
        %vm5653 = vcmp.eq.s32.totalorder %v5648, 2
        %v5654 = vxor.u32 %v5637, 2147483648
        %v5655 = vsel %vm5653, %v5654, %v5645
        %v5656 = vsel %vm5649, %v5652, %v5655
        %v5657 = vsel %vm5646, nan, %v5656
        %v5658 = vand.u32 2147483647, %v496
        %vm5659 = vcmp.le.f32.partialorder %v5658, 0.7853982
        %vm5660 = vcmp.lt.s32.totalorder %v496, 0
        %v5661 = vand.u32 %v496, 2139095040
        %v5662 = vshrl.u32 %v5661, 23
        %v5663 = vsub.s32 %v5662, 127
        %v5664 = vand.u32 2147483647, %v496
        %v5665 = vand.u32 %v5664, 8388607
        %v5666 = vor.u32 %v5665, 8388608
        %v5667 = vsub.s32 0, %v5666
        %v5668 = vadd.s32 %v5663, 1
        %vm5669 = vcmp.gt.s32.totalorder %v5668, 0
        %v5670 = vsel %vm5669, %v5668, 0
        %v5671 = vshrl.u32 %v5670, 5
        %v5672 = vand.u32 %v5670, 31
        %v5673 = vsub.s32 32, %v5672
        %v5674 = vshrl.u32 683565275, %v5673
        %v5675 = vshll.u32 683565275, %v5672
        %v5676 = vshrl.u32 2475754826, %v5673
        %v5677 = vor.u32 %v5675, %v5676
        %v5678 = vshll.u32 2475754826, %v5672
        %v5679 = vshrl.u32 2131351028, %v5673
        %v5680 = vor.u32 %v5678, %v5679
        %v5681 = vshll.u32 2131351028, %v5672
        %v5682 = vshrl.u32 2102212464, %v5673
        %v5683 = vor.u32 %v5681, %v5682
        %v5684 = vshll.u32 2102212464, %v5672
        %v5685 = vshrl.u32 920167782, %v5673
        %v5686 = vor.u32 %v5684, %v5685
        %v5687 = vshll.u32 920167782, %v5672
        %v5688 = vshrl.u32 1326507024, %v5673
        %v5689 = vor.u32 %v5687, %v5688
        %vm5690 = vcmp.lt.s32.totalorder %v5671, 1
        %vm5691 = vcmp.lt.s32.totalorder %v5671, 2
        %vm5692 = vcmp.lt.s32.totalorder %v5671, 3
        %vm5693 = vcmp.lt.s32.totalorder %v5671, 4
        %v5694 = vsel %vm5690, %v5674, %v5677
        %v5695 = vsel %vm5693, %v5683, 2102212464
        %v5696 = vsel %vm5692, %v5680, %v5695
        %v5697 = vsel %vm5691, %v5694, %v5696
        %v5698 = vsel %vm5690, %v5677, %v5680
        %v5699 = vsel %vm5693, %v5686, 920167782
        %v5700 = vsel %vm5692, %v5683, %v5699
        %v5701 = vsel %vm5691, %v5698, %v5700
        %v5702 = vsel %vm5690, %v5680, %v5683
        %v5703 = vsel %vm5693, %v5689, 1326507024
        %v5704 = vsel %vm5692, %v5686, %v5703
        %v5705 = vsel %vm5691, %v5702, %v5704
        %v5706 = vshll.u32 %v5666, 8
        %v5707 = vand.u32 %v5706, 65535
        %v5708 = vshrl.u32 %v5706, 16
        %v5709 = vand.u32 %v5705, 65535
        %v5710 = vshrl.u32 %v5705, 16
        %v5711 = vmul.u32 %v5707, %v5709
        %v5712 = vmul.u32 %v5707, %v5710
        %v5713 = vmul.u32 %v5708, %v5709
        %v5714 = vmul.u32 %v5708, %v5710
        %v5715 = vshll.u32 %v5712, 16
        %v5716 = vshrl.u32 %v5712, 16
        %v5717 = vshll.u32 %v5713, 16
        %v5718 = vshrl.u32 %v5713, 16
        %vm5719 = vc.u32 %v5711, %v5715
        %v5720 = vsel %vm5719, 1, 0
        %v5721 = vadd.s32 %v5711, %v5715
        %v5722 = vadd.s32 %v5714, %v5720
        %vm5723 = vc.u32 %v5721, %v5717
        %v5724 = vsel %vm5723, 1, 0
        %v5725 = vadd.s32 %v5721, %v5717
        %v5726 = vadd.s32 %v5722, %v5724
        %v5727 = vadd.s32 %v5726, %v5716
        %v5728 = vadd.s32 %v5727, %v5718
        %v5729 = vand.u32 %v5706, 65535
        %v5730 = vshrl.u32 %v5706, 16
        %v5731 = vand.u32 %v5701, 65535
        %v5732 = vshrl.u32 %v5701, 16
        %v5733 = vmul.u32 %v5729, %v5731
        %v5734 = vmul.u32 %v5729, %v5732
        %v5735 = vmul.u32 %v5730, %v5731
        %v5736 = vmul.u32 %v5730, %v5732
        %v5737 = vshll.u32 %v5734, 16
        %v5738 = vshrl.u32 %v5734, 16
        %v5739 = vshll.u32 %v5735, 16
        %v5740 = vshrl.u32 %v5735, 16
        %vm5741 = vc.u32 %v5733, %v5737
        %v5742 = vsel %vm5741, 1, 0
        %v5743 = vadd.s32 %v5733, %v5737
        %v5744 = vadd.s32 %v5736, %v5742
        %vm5745 = vc.u32 %v5743, %v5739
        %v5746 = vsel %vm5745, 1, 0
        %v5747 = vadd.s32 %v5743, %v5739
        %v5748 = vadd.s32 %v5744, %v5746
        %v5749 = vadd.s32 %v5748, %v5738
        %v5750 = vadd.s32 %v5749, %v5740
        %v5751 = vmul.u32 %v5706, %v5697
        %v5752 = vadd.s32 %v5728, %v5747
        %vm5753 = vc.u32 %v5728, %v5747
        %v5754 = vadd.s32 %v5750, 1
        %v5755 = vsel %vm5753, %v5754, %v5750
        %v5756 = vadd.s32 %v5751, %v5755
        %v5757 = vadd.s32 %v5756, 536870912
        %v5758 = vshrl.u32 %v5757, 30
        %v5759 = vshll.u32 %v5758, 30
        %v5760 = vsub.s32 %v5756, %v5759
        %vm5761 = vcmp.lt.s32.totalorder %v5760, 0
        %v5762 = vsub.s32 0, %v5760
        %v5763 = vsel %vm5761, %v5762, %v5760
        %v5764 = vclz %v5763
        %v5765 = vsub.s32 %v5764, 2
        %vm5766 = vcmp.gt.s32.totalorder 0, %v5765
        %v5767 = vsel %vm5766, 0, %v5765
        %v5768 = vsub.s32 32, %v5767
        %v5769 = vshll.u32 %v5760, %v5767
        %v5770 = vshrl.u32 %v5752, %v5768
        %v5771 = vor.u32 %v5769, %v5770
        %v5772 = vsub.s32 4294967266, %v5767
        %v5773 = vadd.s32 %v5772, 127
        %v5774 = vshll.u32 %v5773, 23
        %v5775 = vor.u32 4788187, %v5774
        %v5776 = vand.u32 2147483647, %v5775
        %v5778 = vcvt.s32.f32 %v5771
        %v5779 = vmul.f32 %v5778, %v5776
        %v5780 = vxor.u32 %v5779, 2147483648
        %v5781 = vsel %vm5660, %v5780, %v5779
        %v5782 = vsub.s32 4, %v5758
        %v5783 = vsel %vm5660, %v5782, %v5758
        %v5784 = vsel %vm5659, %v496, %v5781
        %v5785 = vsel %vm5659, 0, %v5783
        %v5786 = vmul.f32 %v5784, %v5784
        %v5787 = vmul.f32 %v5786, -0.001358992
        %v5788 = vadd.f32 %v5787, 0.041655596
        %v5789 = vmul.f32 %v5786, %v5788
        %v5790 = vadd.f32 %v5789, -0.4999988
        %v5791 = vmul.f32 %v5786, %v5790
        %v5792 = vadd.f32 1.0, %v5791
        %v5793 = vmul.f32 %v5784, %v5784
        %v5794 = vmul.f32 %v5793, -0.00019511016
        %v5795 = vadd.f32 %v5794, 0.008332121
        %v5796 = vmul.f32 %v5793, %v5795
        %v5797 = vadd.f32 %v5796, -0.16666654
        %v5798 = vmul.f32 %v5793, %v5797
        %v5799 = vadd.f32 %v5798, 1.0
        %v5800 = vmul.f32 %v5799, %v5784
        %vm5801 = vweird.f32 %v496
        %v5802 = vadd.s32 %v5785, 3
        %v5803 = vand.u32 %v5802, 3
        %vm5804 = vcmp.lt.s32.totalorder %v5803, 2
        %vm5805 = vcmp.eq.s32.totalorder %v5803, 0
        %v5806 = vxor.u32 %v5800, 2147483648
        %v5807 = vsel %vm5805, %v5792, %v5806
        %vm5808 = vcmp.eq.s32.totalorder %v5803, 2
        %v5809 = vxor.u32 %v5792, 2147483648
        %v5810 = vsel %vm5808, %v5809, %v5800
        %v5811 = vsel %vm5804, %v5807, %v5810
        %v5812 = vsel %vm5801, nan, %v5811
        %v5813 = vand.u32 2147483647, %v386
        %vm5814 = vcmp.le.f32.partialorder %v5813, 0.7853982
        %vm5815 = vcmp.lt.s32.totalorder %v386, 0
        %v5816 = vand.u32 %v386, 2139095040
        %v5817 = vshrl.u32 %v5816, 23
        %v5818 = vsub.s32 %v5817, 127
        %v5819 = vand.u32 2147483647, %v386
        %v5820 = vand.u32 %v5819, 8388607
        %v5821 = vor.u32 %v5820, 8388608
        %v5822 = vsub.s32 0, %v5821
        %v5823 = vadd.s32 %v5818, 1
        %vm5824 = vcmp.gt.s32.totalorder %v5823, 0
        %v5825 = vsel %vm5824, %v5823, 0
        %v5826 = vshrl.u32 %v5825, 5
        %v5827 = vand.u32 %v5825, 31
        %v5828 = vsub.s32 32, %v5827
        %v5829 = vshrl.u32 683565275, %v5828
        %v5830 = vshll.u32 683565275, %v5827
        %v5831 = vshrl.u32 2475754826, %v5828
        %v5832 = vor.u32 %v5830, %v5831
        %v5833 = vshll.u32 2475754826, %v5827
        %v5834 = vshrl.u32 2131351028, %v5828
        %v5835 = vor.u32 %v5833, %v5834
        %v5836 = vshll.u32 2131351028, %v5827
        %v5837 = vshrl.u32 2102212464, %v5828
        %v5838 = vor.u32 %v5836, %v5837
        %v5839 = vshll.u32 2102212464, %v5827
        %v5840 = vshrl.u32 920167782, %v5828
        %v5841 = vor.u32 %v5839, %v5840
        %v5842 = vshll.u32 920167782, %v5827
        %v5843 = vshrl.u32 1326507024, %v5828
        %v5844 = vor.u32 %v5842, %v5843
        %vm5845 = vcmp.lt.s32.totalorder %v5826, 1
        %vm5846 = vcmp.lt.s32.totalorder %v5826, 2
        %vm5847 = vcmp.lt.s32.totalorder %v5826, 3
        %vm5848 = vcmp.lt.s32.totalorder %v5826, 4
        %v5849 = vsel %vm5845, %v5829, %v5832
        %v5850 = vsel %vm5848, %v5838, 2102212464
        %v5851 = vsel %vm5847, %v5835, %v5850
        %v5852 = vsel %vm5846, %v5849, %v5851
        %v5853 = vsel %vm5845, %v5832, %v5835
        %v5854 = vsel %vm5848, %v5841, 920167782
        %v5855 = vsel %vm5847, %v5838, %v5854
        %v5856 = vsel %vm5846, %v5853, %v5855
        %v5857 = vsel %vm5845, %v5835, %v5838
        %v5858 = vsel %vm5848, %v5844, 1326507024
        %v5859 = vsel %vm5847, %v5841, %v5858
        %v5860 = vsel %vm5846, %v5857, %v5859
        %v5861 = vshll.u32 %v5821, 8
        %v5862 = vand.u32 %v5861, 65535
        %v5863 = vshrl.u32 %v5861, 16
        %v5864 = vand.u32 %v5860, 65535
        %v5865 = vshrl.u32 %v5860, 16
        %v5866 = vmul.u32 %v5862, %v5864
        %v5867 = vmul.u32 %v5862, %v5865
        %v5868 = vmul.u32 %v5863, %v5864
        %v5869 = vmul.u32 %v5863, %v5865
        %v5870 = vshll.u32 %v5867, 16
        %v5871 = vshrl.u32 %v5867, 16
        %v5872 = vshll.u32 %v5868, 16
        %v5873 = vshrl.u32 %v5868, 16
        %vm5874 = vc.u32 %v5866, %v5870
        %v5875 = vsel %vm5874, 1, 0
        %v5876 = vadd.s32 %v5866, %v5870
        %v5877 = vadd.s32 %v5869, %v5875
        %vm5878 = vc.u32 %v5876, %v5872
        %v5879 = vsel %vm5878, 1, 0
        %v5880 = vadd.s32 %v5876, %v5872
        %v5881 = vadd.s32 %v5877, %v5879
        %v5882 = vadd.s32 %v5881, %v5871
        %v5883 = vadd.s32 %v5882, %v5873
        %v5884 = vand.u32 %v5861, 65535
        %v5885 = vshrl.u32 %v5861, 16
        %v5886 = vand.u32 %v5856, 65535
        %v5887 = vshrl.u32 %v5856, 16
        %v5888 = vmul.u32 %v5884, %v5886
        %v5889 = vmul.u32 %v5884, %v5887
        %v5890 = vmul.u32 %v5885, %v5886
        %v5891 = vmul.u32 %v5885, %v5887
        %v5892 = vshll.u32 %v5889, 16
        %v5893 = vshrl.u32 %v5889, 16
        %v5894 = vshll.u32 %v5890, 16
        %v5895 = vshrl.u32 %v5890, 16
        %vm5896 = vc.u32 %v5888, %v5892
        %v5897 = vsel %vm5896, 1, 0
        %v5898 = vadd.s32 %v5888, %v5892
        %v5899 = vadd.s32 %v5891, %v5897
        %vm5900 = vc.u32 %v5898, %v5894
        %v5901 = vsel %vm5900, 1, 0
        %v5902 = vadd.s32 %v5898, %v5894
        %v5903 = vadd.s32 %v5899, %v5901
        %v5904 = vadd.s32 %v5903, %v5893
        %v5905 = vadd.s32 %v5904, %v5895
        %v5906 = vmul.u32 %v5861, %v5852
        %v5907 = vadd.s32 %v5883, %v5902
        %vm5908 = vc.u32 %v5883, %v5902
        %v5909 = vadd.s32 %v5905, 1
        %v5910 = vsel %vm5908, %v5909, %v5905
        %v5911 = vadd.s32 %v5906, %v5910
        %v5912 = vadd.s32 %v5911, 536870912
        %v5913 = vshrl.u32 %v5912, 30
        %v5914 = vshll.u32 %v5913, 30
        %v5915 = vsub.s32 %v5911, %v5914
        %vm5916 = vcmp.lt.s32.totalorder %v5915, 0
        %v5917 = vsub.s32 0, %v5915
        %v5918 = vsel %vm5916, %v5917, %v5915
        %v5919 = vclz %v5918
        %v5920 = vsub.s32 %v5919, 2
        %vm5921 = vcmp.gt.s32.totalorder 0, %v5920
        %v5922 = vsel %vm5921, 0, %v5920
        %v5923 = vsub.s32 32, %v5922
        %v5924 = vshll.u32 %v5915, %v5922
        %v5925 = vshrl.u32 %v5907, %v5923
        %v5926 = vor.u32 %v5924, %v5925
        %v5927 = vsub.s32 4294967266, %v5922
        %v5928 = vadd.s32 %v5927, 127
        %v5929 = vshll.u32 %v5928, 23
        %v5930 = vor.u32 4788187, %v5929
        %v5931 = vand.u32 2147483647, %v5930
        %v5933 = vcvt.s32.f32 %v5926
        %v5934 = vmul.f32 %v5933, %v5931
        %v5935 = vxor.u32 %v5934, 2147483648
        %v5936 = vsel %vm5815, %v5935, %v5934
        %v5937 = vsub.s32 4, %v5913
        %v5938 = vsel %vm5815, %v5937, %v5913
        %v5939 = vsel %vm5814, %v386, %v5936
        %v5940 = vsel %vm5814, 0, %v5938
        %v5941 = vmul.f32 %v5939, %v5939
        %v5942 = vmul.f32 %v5941, -0.001358992
        %v5943 = vadd.f32 %v5942, 0.041655596
        %v5944 = vmul.f32 %v5941, %v5943
        %v5945 = vadd.f32 %v5944, -0.4999988
        %v5946 = vmul.f32 %v5941, %v5945
        %v5947 = vadd.f32 1.0, %v5946
        %v5948 = vmul.f32 %v5939, %v5939
        %v5949 = vmul.f32 %v5948, -0.00019511016
        %v5950 = vadd.f32 %v5949, 0.008332121
        %v5951 = vmul.f32 %v5948, %v5950
        %v5952 = vadd.f32 %v5951, -0.16666654
        %v5953 = vmul.f32 %v5948, %v5952
        %v5954 = vadd.f32 %v5953, 1.0
        %v5955 = vmul.f32 %v5954, %v5939
        %vm5956 = vweird.f32 %v386
        %v5957 = vadd.s32 %v5940, 3
        %v5958 = vand.u32 %v5957, 3
        %vm5959 = vcmp.lt.s32.totalorder %v5958, 2
        %vm5960 = vcmp.eq.s32.totalorder %v5958, 0
        %v5961 = vxor.u32 %v5955, 2147483648
        %v5962 = vsel %vm5960, %v5947, %v5961
        %vm5963 = vcmp.eq.s32.totalorder %v5958, 2
        %v5964 = vxor.u32 %v5947, 2147483648
        %v5965 = vsel %vm5963, %v5964, %v5955
        %v5966 = vsel %vm5959, %v5962, %v5965
        %v5967 = vsel %vm5956, nan, %v5966
        %v5968 = vand.u32 2147483647, %v499
        %vm5969 = vcmp.le.f32.partialorder %v5968, 0.7853982
        %vm5970 = vcmp.lt.s32.totalorder %v499, 0
        %v5971 = vand.u32 %v499, 2139095040
        %v5972 = vshrl.u32 %v5971, 23
        %v5973 = vsub.s32 %v5972, 127
        %v5974 = vand.u32 2147483647, %v499
        %v5975 = vand.u32 %v5974, 8388607
        %v5976 = vor.u32 %v5975, 8388608
        %v5977 = vsub.s32 0, %v5976
        %v5978 = vadd.s32 %v5973, 1
        %vm5979 = vcmp.gt.s32.totalorder %v5978, 0
        %v5980 = vsel %vm5979, %v5978, 0
        %v5981 = vshrl.u32 %v5980, 5
        %v5982 = vand.u32 %v5980, 31
        %v5983 = vsub.s32 32, %v5982
        %v5984 = vshrl.u32 683565275, %v5983
        %v5985 = vshll.u32 683565275, %v5982
        %v5986 = vshrl.u32 2475754826, %v5983
        %v5987 = vor.u32 %v5985, %v5986
        %v5988 = vshll.u32 2475754826, %v5982
        %v5989 = vshrl.u32 2131351028, %v5983
        %v5990 = vor.u32 %v5988, %v5989
        %v5991 = vshll.u32 2131351028, %v5982
        %v5992 = vshrl.u32 2102212464, %v5983
        %v5993 = vor.u32 %v5991, %v5992
        %v5994 = vshll.u32 2102212464, %v5982
        %v5995 = vshrl.u32 920167782, %v5983
        %v5996 = vor.u32 %v5994, %v5995
        %v5997 = vshll.u32 920167782, %v5982
        %v5998 = vshrl.u32 1326507024, %v5983
        %v5999 = vor.u32 %v5997, %v5998
        %vm6000 = vcmp.lt.s32.totalorder %v5981, 1
        %vm6001 = vcmp.lt.s32.totalorder %v5981, 2
        %vm6002 = vcmp.lt.s32.totalorder %v5981, 3
        %vm6003 = vcmp.lt.s32.totalorder %v5981, 4
        %v6004 = vsel %vm6000, %v5984, %v5987
        %v6005 = vsel %vm6003, %v5993, 2102212464
        %v6006 = vsel %vm6002, %v5990, %v6005
        %v6007 = vsel %vm6001, %v6004, %v6006
        %v6008 = vsel %vm6000, %v5987, %v5990
        %v6009 = vsel %vm6003, %v5996, 920167782
        %v6010 = vsel %vm6002, %v5993, %v6009
        %v6011 = vsel %vm6001, %v6008, %v6010
        %v6012 = vsel %vm6000, %v5990, %v5993
        %v6013 = vsel %vm6003, %v5999, 1326507024
        %v6014 = vsel %vm6002, %v5996, %v6013
        %v6015 = vsel %vm6001, %v6012, %v6014
        %v6016 = vshll.u32 %v5976, 8
        %v6017 = vand.u32 %v6016, 65535
        %v6018 = vshrl.u32 %v6016, 16
        %v6019 = vand.u32 %v6015, 65535
        %v6020 = vshrl.u32 %v6015, 16
        %v6021 = vmul.u32 %v6017, %v6019
        %v6022 = vmul.u32 %v6017, %v6020
        %v6023 = vmul.u32 %v6018, %v6019
        %v6024 = vmul.u32 %v6018, %v6020
        %v6025 = vshll.u32 %v6022, 16
        %v6026 = vshrl.u32 %v6022, 16
        %v6027 = vshll.u32 %v6023, 16
        %v6028 = vshrl.u32 %v6023, 16
        %vm6029 = vc.u32 %v6021, %v6025
        %v6030 = vsel %vm6029, 1, 0
        %v6031 = vadd.s32 %v6021, %v6025
        %v6032 = vadd.s32 %v6024, %v6030
        %vm6033 = vc.u32 %v6031, %v6027
        %v6034 = vsel %vm6033, 1, 0
        %v6035 = vadd.s32 %v6031, %v6027
        %v6036 = vadd.s32 %v6032, %v6034
        %v6037 = vadd.s32 %v6036, %v6026
        %v6038 = vadd.s32 %v6037, %v6028
        %v6039 = vand.u32 %v6016, 65535
        %v6040 = vshrl.u32 %v6016, 16
        %v6041 = vand.u32 %v6011, 65535
        %v6042 = vshrl.u32 %v6011, 16
        %v6043 = vmul.u32 %v6039, %v6041
        %v6044 = vmul.u32 %v6039, %v6042
        %v6045 = vmul.u32 %v6040, %v6041
        %v6046 = vmul.u32 %v6040, %v6042
        %v6047 = vshll.u32 %v6044, 16
        %v6048 = vshrl.u32 %v6044, 16
        %v6049 = vshll.u32 %v6045, 16
        %v6050 = vshrl.u32 %v6045, 16
        %vm6051 = vc.u32 %v6043, %v6047
        %v6052 = vsel %vm6051, 1, 0
        %v6053 = vadd.s32 %v6043, %v6047
        %v6054 = vadd.s32 %v6046, %v6052
        %vm6055 = vc.u32 %v6053, %v6049
        %v6056 = vsel %vm6055, 1, 0
        %v6057 = vadd.s32 %v6053, %v6049
        %v6058 = vadd.s32 %v6054, %v6056
        %v6059 = vadd.s32 %v6058, %v6048
        %v6060 = vadd.s32 %v6059, %v6050
        %v6061 = vmul.u32 %v6016, %v6007
        %v6062 = vadd.s32 %v6038, %v6057
        %vm6063 = vc.u32 %v6038, %v6057
        %v6064 = vadd.s32 %v6060, 1
        %v6065 = vsel %vm6063, %v6064, %v6060
        %v6066 = vadd.s32 %v6061, %v6065
        %v6067 = vadd.s32 %v6066, 536870912
        %v6068 = vshrl.u32 %v6067, 30
        %v6069 = vshll.u32 %v6068, 30
        %v6070 = vsub.s32 %v6066, %v6069
        %vm6071 = vcmp.lt.s32.totalorder %v6070, 0
        %v6072 = vsub.s32 0, %v6070
        %v6073 = vsel %vm6071, %v6072, %v6070
        %v6074 = vclz %v6073
        %v6075 = vsub.s32 %v6074, 2
        %vm6076 = vcmp.gt.s32.totalorder 0, %v6075
        %v6077 = vsel %vm6076, 0, %v6075
        %v6078 = vsub.s32 32, %v6077
        %v6079 = vshll.u32 %v6070, %v6077
        %v6080 = vshrl.u32 %v6062, %v6078
        %v6081 = vor.u32 %v6079, %v6080
        %v6082 = vsub.s32 4294967266, %v6077
        %v6083 = vadd.s32 %v6082, 127
        %v6084 = vshll.u32 %v6083, 23
        %v6085 = vor.u32 4788187, %v6084
        %v6086 = vand.u32 2147483647, %v6085
        %v6088 = vcvt.s32.f32 %v6081
        %v6089 = vmul.f32 %v6088, %v6086
        %v6090 = vxor.u32 %v6089, 2147483648
        %v6091 = vsel %vm5970, %v6090, %v6089
        %v6092 = vsub.s32 4, %v6068
        %v6093 = vsel %vm5970, %v6092, %v6068
        %v6094 = vsel %vm5969, %v499, %v6091
        %v6095 = vsel %vm5969, 0, %v6093
        %v6096 = vmul.f32 %v6094, %v6094
        %v6097 = vmul.f32 %v6096, -0.001358992
        %v6098 = vadd.f32 %v6097, 0.041655596
        %v6099 = vmul.f32 %v6096, %v6098
        %v6100 = vadd.f32 %v6099, -0.4999988
        %v6101 = vmul.f32 %v6096, %v6100
        %v6102 = vadd.f32 1.0, %v6101
        %v6103 = vmul.f32 %v6094, %v6094
        %v6104 = vmul.f32 %v6103, -0.00019511016
        %v6105 = vadd.f32 %v6104, 0.008332121
        %v6106 = vmul.f32 %v6103, %v6105
        %v6107 = vadd.f32 %v6106, -0.16666654
        %v6108 = vmul.f32 %v6103, %v6107
        %v6109 = vadd.f32 %v6108, 1.0
        %v6110 = vmul.f32 %v6109, %v6094
        %vm6111 = vweird.f32 %v499
        %v6112 = vadd.s32 %v6095, 3
        %v6113 = vand.u32 %v6112, 3
        %vm6114 = vcmp.lt.s32.totalorder %v6113, 2
        %vm6115 = vcmp.eq.s32.totalorder %v6113, 0
        %v6116 = vxor.u32 %v6110, 2147483648
        %v6117 = vsel %vm6115, %v6102, %v6116
        %vm6118 = vcmp.eq.s32.totalorder %v6113, 2
        %v6119 = vxor.u32 %v6102, 2147483648
        %v6120 = vsel %vm6118, %v6119, %v6110
        %v6121 = vsel %vm6114, %v6117, %v6120
        %v6122 = vsel %vm6111, nan, %v6121
        %v6123 = vand.u32 2147483647, %v389
        %vm6124 = vcmp.le.f32.partialorder %v6123, 0.7853982
        %vm6125 = vcmp.lt.s32.totalorder %v389, 0
        %v6126 = vand.u32 %v389, 2139095040
        %v6127 = vshrl.u32 %v6126, 23
        %v6128 = vsub.s32 %v6127, 127
        %v6129 = vand.u32 2147483647, %v389
        %v6130 = vand.u32 %v6129, 8388607
        %v6131 = vor.u32 %v6130, 8388608
        %v6132 = vsub.s32 0, %v6131
        %v6133 = vadd.s32 %v6128, 1
        %vm6134 = vcmp.gt.s32.totalorder %v6133, 0
        %v6135 = vsel %vm6134, %v6133, 0
        %v6136 = vshrl.u32 %v6135, 5
        %v6137 = vand.u32 %v6135, 31
        %v6138 = vsub.s32 32, %v6137
        %v6139 = vshrl.u32 683565275, %v6138
        %v6140 = vshll.u32 683565275, %v6137
        %v6141 = vshrl.u32 2475754826, %v6138
        %v6142 = vor.u32 %v6140, %v6141
        %v6143 = vshll.u32 2475754826, %v6137
        %v6144 = vshrl.u32 2131351028, %v6138
        %v6145 = vor.u32 %v6143, %v6144
        %v6146 = vshll.u32 2131351028, %v6137
        %v6147 = vshrl.u32 2102212464, %v6138
        %v6148 = vor.u32 %v6146, %v6147
        %v6149 = vshll.u32 2102212464, %v6137
        %v6150 = vshrl.u32 920167782, %v6138
        %v6151 = vor.u32 %v6149, %v6150
        %v6152 = vshll.u32 920167782, %v6137
        %v6153 = vshrl.u32 1326507024, %v6138
        %v6154 = vor.u32 %v6152, %v6153
        %vm6155 = vcmp.lt.s32.totalorder %v6136, 1
        %vm6156 = vcmp.lt.s32.totalorder %v6136, 2
        %vm6157 = vcmp.lt.s32.totalorder %v6136, 3
        %vm6158 = vcmp.lt.s32.totalorder %v6136, 4
        %v6159 = vsel %vm6155, %v6139, %v6142
        %v6160 = vsel %vm6158, %v6148, 2102212464
        %v6161 = vsel %vm6157, %v6145, %v6160
        %v6162 = vsel %vm6156, %v6159, %v6161
        %v6163 = vsel %vm6155, %v6142, %v6145
        %v6164 = vsel %vm6158, %v6151, 920167782
        %v6165 = vsel %vm6157, %v6148, %v6164
        %v6166 = vsel %vm6156, %v6163, %v6165
        %v6167 = vsel %vm6155, %v6145, %v6148
        %v6168 = vsel %vm6158, %v6154, 1326507024
        %v6169 = vsel %vm6157, %v6151, %v6168
        %v6170 = vsel %vm6156, %v6167, %v6169
        %v6171 = vshll.u32 %v6131, 8
        %v6172 = vand.u32 %v6171, 65535
        %v6173 = vshrl.u32 %v6171, 16
        %v6174 = vand.u32 %v6170, 65535
        %v6175 = vshrl.u32 %v6170, 16
        %v6176 = vmul.u32 %v6172, %v6174
        %v6177 = vmul.u32 %v6172, %v6175
        %v6178 = vmul.u32 %v6173, %v6174
        %v6179 = vmul.u32 %v6173, %v6175
        %v6180 = vshll.u32 %v6177, 16
        %v6181 = vshrl.u32 %v6177, 16
        %v6182 = vshll.u32 %v6178, 16
        %v6183 = vshrl.u32 %v6178, 16
        %vm6184 = vc.u32 %v6176, %v6180
        %v6185 = vsel %vm6184, 1, 0
        %v6186 = vadd.s32 %v6176, %v6180
        %v6187 = vadd.s32 %v6179, %v6185
        %vm6188 = vc.u32 %v6186, %v6182
        %v6189 = vsel %vm6188, 1, 0
        %v6190 = vadd.s32 %v6186, %v6182
        %v6191 = vadd.s32 %v6187, %v6189
        %v6192 = vadd.s32 %v6191, %v6181
        %v6193 = vadd.s32 %v6192, %v6183
        %v6194 = vand.u32 %v6171, 65535
        %v6195 = vshrl.u32 %v6171, 16
        %v6196 = vand.u32 %v6166, 65535
        %v6197 = vshrl.u32 %v6166, 16
        %v6198 = vmul.u32 %v6194, %v6196
        %v6199 = vmul.u32 %v6194, %v6197
        %v6200 = vmul.u32 %v6195, %v6196
        %v6201 = vmul.u32 %v6195, %v6197
        %v6202 = vshll.u32 %v6199, 16
        %v6203 = vshrl.u32 %v6199, 16
        %v6204 = vshll.u32 %v6200, 16
        %v6205 = vshrl.u32 %v6200, 16
        %vm6206 = vc.u32 %v6198, %v6202
        %v6207 = vsel %vm6206, 1, 0
        %v6208 = vadd.s32 %v6198, %v6202
        %v6209 = vadd.s32 %v6201, %v6207
        %vm6210 = vc.u32 %v6208, %v6204
        %v6211 = vsel %vm6210, 1, 0
        %v6212 = vadd.s32 %v6208, %v6204
        %v6213 = vadd.s32 %v6209, %v6211
        %v6214 = vadd.s32 %v6213, %v6203
        %v6215 = vadd.s32 %v6214, %v6205
        %v6216 = vmul.u32 %v6171, %v6162
        %v6217 = vadd.s32 %v6193, %v6212
        %vm6218 = vc.u32 %v6193, %v6212
        %v6219 = vadd.s32 %v6215, 1
        %v6220 = vsel %vm6218, %v6219, %v6215
        %v6221 = vadd.s32 %v6216, %v6220
        %v6222 = vadd.s32 %v6221, 536870912
        %v6223 = vshrl.u32 %v6222, 30
        %v6224 = vshll.u32 %v6223, 30
        %v6225 = vsub.s32 %v6221, %v6224
        %vm6226 = vcmp.lt.s32.totalorder %v6225, 0
        %v6227 = vsub.s32 0, %v6225
        %v6228 = vsel %vm6226, %v6227, %v6225
        %v6229 = vclz %v6228
        %v6230 = vsub.s32 %v6229, 2
        %vm6231 = vcmp.gt.s32.totalorder 0, %v6230
        %v6232 = vsel %vm6231, 0, %v6230
        %v6233 = vsub.s32 32, %v6232
        %v6234 = vshll.u32 %v6225, %v6232
        %v6235 = vshrl.u32 %v6217, %v6233
        %v6236 = vor.u32 %v6234, %v6235
        %v6237 = vsub.s32 4294967266, %v6232
        %v6238 = vadd.s32 %v6237, 127
        %v6239 = vshll.u32 %v6238, 23
        %v6240 = vor.u32 4788187, %v6239
        %v6241 = vand.u32 2147483647, %v6240
        %v6243 = vcvt.s32.f32 %v6236
        %v6244 = vmul.f32 %v6243, %v6241
        %v6245 = vxor.u32 %v6244, 2147483648
        %v6246 = vsel %vm6125, %v6245, %v6244
        %v6247 = vsub.s32 4, %v6223
        %v6248 = vsel %vm6125, %v6247, %v6223
        %v6249 = vsel %vm6124, %v389, %v6246
        %v6250 = vsel %vm6124, 0, %v6248
        %v6251 = vmul.f32 %v6249, %v6249
        %v6252 = vmul.f32 %v6251, -0.001358992
        %v6253 = vadd.f32 %v6252, 0.041655596
        %v6254 = vmul.f32 %v6251, %v6253
        %v6255 = vadd.f32 %v6254, -0.4999988
        %v6256 = vmul.f32 %v6251, %v6255
        %v6257 = vadd.f32 1.0, %v6256
        %v6258 = vmul.f32 %v6249, %v6249
        %v6259 = vmul.f32 %v6258, -0.00019511016
        %v6260 = vadd.f32 %v6259, 0.008332121
        %v6261 = vmul.f32 %v6258, %v6260
        %v6262 = vadd.f32 %v6261, -0.16666654
        %v6263 = vmul.f32 %v6258, %v6262
        %v6264 = vadd.f32 %v6263, 1.0
        %v6265 = vmul.f32 %v6264, %v6249
        %vm6266 = vweird.f32 %v389
        %v6267 = vadd.s32 %v6250, 3
        %v6268 = vand.u32 %v6267, 3
        %vm6269 = vcmp.lt.s32.totalorder %v6268, 2
        %vm6270 = vcmp.eq.s32.totalorder %v6268, 0
        %v6271 = vxor.u32 %v6265, 2147483648
        %v6272 = vsel %vm6270, %v6257, %v6271
        %vm6273 = vcmp.eq.s32.totalorder %v6268, 2
        %v6274 = vxor.u32 %v6257, 2147483648
        %v6275 = vsel %vm6273, %v6274, %v6265
        %v6276 = vsel %vm6269, %v6272, %v6275
        %v6277 = vsel %vm6266, nan, %v6276
        %v6278 = vand.u32 2147483647, %v502
        %vm6279 = vcmp.le.f32.partialorder %v6278, 0.7853982
        %vm6280 = vcmp.lt.s32.totalorder %v502, 0
        %v6281 = vand.u32 %v502, 2139095040
        %v6282 = vshrl.u32 %v6281, 23
        %v6283 = vsub.s32 %v6282, 127
        %v6284 = vand.u32 2147483647, %v502
        %v6285 = vand.u32 %v6284, 8388607
        %v6286 = vor.u32 %v6285, 8388608
        %v6287 = vsub.s32 0, %v6286
        %v6288 = vadd.s32 %v6283, 1
        %vm6289 = vcmp.gt.s32.totalorder %v6288, 0
        %v6290 = vsel %vm6289, %v6288, 0
        %v6291 = vshrl.u32 %v6290, 5
        %v6292 = vand.u32 %v6290, 31
        %v6293 = vsub.s32 32, %v6292
        %v6294 = vshrl.u32 683565275, %v6293
        %v6295 = vshll.u32 683565275, %v6292
        %v6296 = vshrl.u32 2475754826, %v6293
        %v6297 = vor.u32 %v6295, %v6296
        %v6298 = vshll.u32 2475754826, %v6292
        %v6299 = vshrl.u32 2131351028, %v6293
        %v6300 = vor.u32 %v6298, %v6299
        %v6301 = vshll.u32 2131351028, %v6292
        %v6302 = vshrl.u32 2102212464, %v6293
        %v6303 = vor.u32 %v6301, %v6302
        %v6304 = vshll.u32 2102212464, %v6292
        %v6305 = vshrl.u32 920167782, %v6293
        %v6306 = vor.u32 %v6304, %v6305
        %v6307 = vshll.u32 920167782, %v6292
        %v6308 = vshrl.u32 1326507024, %v6293
        %v6309 = vor.u32 %v6307, %v6308
        %vm6310 = vcmp.lt.s32.totalorder %v6291, 1
        %vm6311 = vcmp.lt.s32.totalorder %v6291, 2
        %vm6312 = vcmp.lt.s32.totalorder %v6291, 3
        %vm6313 = vcmp.lt.s32.totalorder %v6291, 4
        %v6314 = vsel %vm6310, %v6294, %v6297
        %v6315 = vsel %vm6313, %v6303, 2102212464
        %v6316 = vsel %vm6312, %v6300, %v6315
        %v6317 = vsel %vm6311, %v6314, %v6316
        %v6318 = vsel %vm6310, %v6297, %v6300
        %v6319 = vsel %vm6313, %v6306, 920167782
        %v6320 = vsel %vm6312, %v6303, %v6319
        %v6321 = vsel %vm6311, %v6318, %v6320
        %v6322 = vsel %vm6310, %v6300, %v6303
        %v6323 = vsel %vm6313, %v6309, 1326507024
        %v6324 = vsel %vm6312, %v6306, %v6323
        %v6325 = vsel %vm6311, %v6322, %v6324
        %v6326 = vshll.u32 %v6286, 8
        %v6327 = vand.u32 %v6326, 65535
        %v6328 = vshrl.u32 %v6326, 16
        %v6329 = vand.u32 %v6325, 65535
        %v6330 = vshrl.u32 %v6325, 16
        %v6331 = vmul.u32 %v6327, %v6329
        %v6332 = vmul.u32 %v6327, %v6330
        %v6333 = vmul.u32 %v6328, %v6329
        %v6334 = vmul.u32 %v6328, %v6330
        %v6335 = vshll.u32 %v6332, 16
        %v6336 = vshrl.u32 %v6332, 16
        %v6337 = vshll.u32 %v6333, 16
        %v6338 = vshrl.u32 %v6333, 16
        %vm6339 = vc.u32 %v6331, %v6335
        %v6340 = vsel %vm6339, 1, 0
        %v6341 = vadd.s32 %v6331, %v6335
        %v6342 = vadd.s32 %v6334, %v6340
        %vm6343 = vc.u32 %v6341, %v6337
        %v6344 = vsel %vm6343, 1, 0
        %v6345 = vadd.s32 %v6341, %v6337
        %v6346 = vadd.s32 %v6342, %v6344
        %v6347 = vadd.s32 %v6346, %v6336
        %v6348 = vadd.s32 %v6347, %v6338
        %v6349 = vand.u32 %v6326, 65535
        %v6350 = vshrl.u32 %v6326, 16
        %v6351 = vand.u32 %v6321, 65535
        %v6352 = vshrl.u32 %v6321, 16
        %v6353 = vmul.u32 %v6349, %v6351
        %v6354 = vmul.u32 %v6349, %v6352
        %v6355 = vmul.u32 %v6350, %v6351
        %v6356 = vmul.u32 %v6350, %v6352
        %v6357 = vshll.u32 %v6354, 16
        %v6358 = vshrl.u32 %v6354, 16
        %v6359 = vshll.u32 %v6355, 16
        %v6360 = vshrl.u32 %v6355, 16
        %vm6361 = vc.u32 %v6353, %v6357
        %v6362 = vsel %vm6361, 1, 0
        %v6363 = vadd.s32 %v6353, %v6357
        %v6364 = vadd.s32 %v6356, %v6362
        %vm6365 = vc.u32 %v6363, %v6359
        %v6366 = vsel %vm6365, 1, 0
        %v6367 = vadd.s32 %v6363, %v6359
        %v6368 = vadd.s32 %v6364, %v6366
        %v6369 = vadd.s32 %v6368, %v6358
        %v6370 = vadd.s32 %v6369, %v6360
        %v6371 = vmul.u32 %v6326, %v6317
        %v6372 = vadd.s32 %v6348, %v6367
        %vm6373 = vc.u32 %v6348, %v6367
        %v6374 = vadd.s32 %v6370, 1
        %v6375 = vsel %vm6373, %v6374, %v6370
        %v6376 = vadd.s32 %v6371, %v6375
        %v6377 = vadd.s32 %v6376, 536870912
        %v6378 = vshrl.u32 %v6377, 30
        %v6379 = vshll.u32 %v6378, 30
        %v6380 = vsub.s32 %v6376, %v6379
        %vm6381 = vcmp.lt.s32.totalorder %v6380, 0
        %v6382 = vsub.s32 0, %v6380
        %v6383 = vsel %vm6381, %v6382, %v6380
        %v6384 = vclz %v6383
        %v6385 = vsub.s32 %v6384, 2
        %vm6386 = vcmp.gt.s32.totalorder 0, %v6385
        %v6387 = vsel %vm6386, 0, %v6385
        %v6388 = vsub.s32 32, %v6387
        %v6389 = vshll.u32 %v6380, %v6387
        %v6390 = vshrl.u32 %v6372, %v6388
        %v6391 = vor.u32 %v6389, %v6390
        %v6392 = vsub.s32 4294967266, %v6387
        %v6393 = vadd.s32 %v6392, 127
        %v6394 = vshll.u32 %v6393, 23
        %v6395 = vor.u32 4788187, %v6394
        %v6396 = vand.u32 2147483647, %v6395
        %v6398 = vcvt.s32.f32 %v6391
        %v6399 = vmul.f32 %v6398, %v6396
        %v6400 = vxor.u32 %v6399, 2147483648
        %v6401 = vsel %vm6280, %v6400, %v6399
        %v6402 = vsub.s32 4, %v6378
        %v6403 = vsel %vm6280, %v6402, %v6378
        %v6404 = vsel %vm6279, %v502, %v6401
        %v6405 = vsel %vm6279, 0, %v6403
        %v6406 = vmul.f32 %v6404, %v6404
        %v6407 = vmul.f32 %v6406, -0.001358992
        %v6408 = vadd.f32 %v6407, 0.041655596
        %v6409 = vmul.f32 %v6406, %v6408
        %v6410 = vadd.f32 %v6409, -0.4999988
        %v6411 = vmul.f32 %v6406, %v6410
        %v6412 = vadd.f32 1.0, %v6411
        %v6413 = vmul.f32 %v6404, %v6404
        %v6414 = vmul.f32 %v6413, -0.00019511016
        %v6415 = vadd.f32 %v6414, 0.008332121
        %v6416 = vmul.f32 %v6413, %v6415
        %v6417 = vadd.f32 %v6416, -0.16666654
        %v6418 = vmul.f32 %v6413, %v6417
        %v6419 = vadd.f32 %v6418, 1.0
        %v6420 = vmul.f32 %v6419, %v6404
        %vm6421 = vweird.f32 %v502
        %v6422 = vadd.s32 %v6405, 3
        %v6423 = vand.u32 %v6422, 3
        %vm6424 = vcmp.lt.s32.totalorder %v6423, 2
        %vm6425 = vcmp.eq.s32.totalorder %v6423, 0
        %v6426 = vxor.u32 %v6420, 2147483648
        %v6427 = vsel %vm6425, %v6412, %v6426
        %vm6428 = vcmp.eq.s32.totalorder %v6423, 2
        %v6429 = vxor.u32 %v6412, 2147483648
        %v6430 = vsel %vm6428, %v6429, %v6420
        %v6431 = vsel %vm6424, %v6427, %v6430
        %v6432 = vsel %vm6421, nan, %v6431
        %v6433 = vand.u32 2147483647, %v392
        %vm6434 = vcmp.le.f32.partialorder %v6433, 0.7853982
        %vm6435 = vcmp.lt.s32.totalorder %v392, 0
        %v6436 = vand.u32 %v392, 2139095040
        %v6437 = vshrl.u32 %v6436, 23
        %v6438 = vsub.s32 %v6437, 127
        %v6439 = vand.u32 2147483647, %v392
        %v6440 = vand.u32 %v6439, 8388607
        %v6441 = vor.u32 %v6440, 8388608
        %v6442 = vsub.s32 0, %v6441
        %v6443 = vadd.s32 %v6438, 1
        %vm6444 = vcmp.gt.s32.totalorder %v6443, 0
        %v6445 = vsel %vm6444, %v6443, 0
        %v6446 = vshrl.u32 %v6445, 5
        %v6447 = vand.u32 %v6445, 31
        %v6448 = vsub.s32 32, %v6447
        %v6449 = vshrl.u32 683565275, %v6448
        %v6450 = vshll.u32 683565275, %v6447
        %v6451 = vshrl.u32 2475754826, %v6448
        %v6452 = vor.u32 %v6450, %v6451
        %v6453 = vshll.u32 2475754826, %v6447
        %v6454 = vshrl.u32 2131351028, %v6448
        %v6455 = vor.u32 %v6453, %v6454
        %v6456 = vshll.u32 2131351028, %v6447
        %v6457 = vshrl.u32 2102212464, %v6448
        %v6458 = vor.u32 %v6456, %v6457
        %v6459 = vshll.u32 2102212464, %v6447
        %v6460 = vshrl.u32 920167782, %v6448
        %v6461 = vor.u32 %v6459, %v6460
        %v6462 = vshll.u32 920167782, %v6447
        %v6463 = vshrl.u32 1326507024, %v6448
        %v6464 = vor.u32 %v6462, %v6463
        %vm6465 = vcmp.lt.s32.totalorder %v6446, 1
        %vm6466 = vcmp.lt.s32.totalorder %v6446, 2
        %vm6467 = vcmp.lt.s32.totalorder %v6446, 3
        %vm6468 = vcmp.lt.s32.totalorder %v6446, 4
        %v6469 = vsel %vm6465, %v6449, %v6452
        %v6470 = vsel %vm6468, %v6458, 2102212464
        %v6471 = vsel %vm6467, %v6455, %v6470
        %v6472 = vsel %vm6466, %v6469, %v6471
        %v6473 = vsel %vm6465, %v6452, %v6455
        %v6474 = vsel %vm6468, %v6461, 920167782
        %v6475 = vsel %vm6467, %v6458, %v6474
        %v6476 = vsel %vm6466, %v6473, %v6475
        %v6477 = vsel %vm6465, %v6455, %v6458
        %v6478 = vsel %vm6468, %v6464, 1326507024
        %v6479 = vsel %vm6467, %v6461, %v6478
        %v6480 = vsel %vm6466, %v6477, %v6479
        %v6481 = vshll.u32 %v6441, 8
        %v6482 = vand.u32 %v6481, 65535
        %v6483 = vshrl.u32 %v6481, 16
        %v6484 = vand.u32 %v6480, 65535
        %v6485 = vshrl.u32 %v6480, 16
        %v6486 = vmul.u32 %v6482, %v6484
        %v6487 = vmul.u32 %v6482, %v6485
        %v6488 = vmul.u32 %v6483, %v6484
        %v6489 = vmul.u32 %v6483, %v6485
        %v6490 = vshll.u32 %v6487, 16
        %v6491 = vshrl.u32 %v6487, 16
        %v6492 = vshll.u32 %v6488, 16
        %v6493 = vshrl.u32 %v6488, 16
        %vm6494 = vc.u32 %v6486, %v6490
        %v6495 = vsel %vm6494, 1, 0
        %v6496 = vadd.s32 %v6486, %v6490
        %v6497 = vadd.s32 %v6489, %v6495
        %vm6498 = vc.u32 %v6496, %v6492
        %v6499 = vsel %vm6498, 1, 0
        %v6500 = vadd.s32 %v6496, %v6492
        %v6501 = vadd.s32 %v6497, %v6499
        %v6502 = vadd.s32 %v6501, %v6491
        %v6503 = vadd.s32 %v6502, %v6493
        %v6504 = vand.u32 %v6481, 65535
        %v6505 = vshrl.u32 %v6481, 16
        %v6506 = vand.u32 %v6476, 65535
        %v6507 = vshrl.u32 %v6476, 16
        %v6508 = vmul.u32 %v6504, %v6506
        %v6509 = vmul.u32 %v6504, %v6507
        %v6510 = vmul.u32 %v6505, %v6506
        %v6511 = vmul.u32 %v6505, %v6507
        %v6512 = vshll.u32 %v6509, 16
        %v6513 = vshrl.u32 %v6509, 16
        %v6514 = vshll.u32 %v6510, 16
        %v6515 = vshrl.u32 %v6510, 16
        %vm6516 = vc.u32 %v6508, %v6512
        %v6517 = vsel %vm6516, 1, 0
        %v6518 = vadd.s32 %v6508, %v6512
        %v6519 = vadd.s32 %v6511, %v6517
        %vm6520 = vc.u32 %v6518, %v6514
        %v6521 = vsel %vm6520, 1, 0
        %v6522 = vadd.s32 %v6518, %v6514
        %v6523 = vadd.s32 %v6519, %v6521
        %v6524 = vadd.s32 %v6523, %v6513
        %v6525 = vadd.s32 %v6524, %v6515
        %v6526 = vmul.u32 %v6481, %v6472
        %v6527 = vadd.s32 %v6503, %v6522
        %vm6528 = vc.u32 %v6503, %v6522
        %v6529 = vadd.s32 %v6525, 1
        %v6530 = vsel %vm6528, %v6529, %v6525
        %v6531 = vadd.s32 %v6526, %v6530
        %v6532 = vadd.s32 %v6531, 536870912
        %v6533 = vshrl.u32 %v6532, 30
        %v6534 = vshll.u32 %v6533, 30
        %v6535 = vsub.s32 %v6531, %v6534
        %vm6536 = vcmp.lt.s32.totalorder %v6535, 0
        %v6537 = vsub.s32 0, %v6535
        %v6538 = vsel %vm6536, %v6537, %v6535
        %v6539 = vclz %v6538
        %v6540 = vsub.s32 %v6539, 2
        %vm6541 = vcmp.gt.s32.totalorder 0, %v6540
        %v6542 = vsel %vm6541, 0, %v6540
        %v6543 = vsub.s32 32, %v6542
        %v6544 = vshll.u32 %v6535, %v6542
        %v6545 = vshrl.u32 %v6527, %v6543
        %v6546 = vor.u32 %v6544, %v6545
        %v6547 = vsub.s32 4294967266, %v6542
        %v6548 = vadd.s32 %v6547, 127
        %v6549 = vshll.u32 %v6548, 23
        %v6550 = vor.u32 4788187, %v6549
        %v6551 = vand.u32 2147483647, %v6550
        %v6553 = vcvt.s32.f32 %v6546
        %v6554 = vmul.f32 %v6553, %v6551
        %v6555 = vxor.u32 %v6554, 2147483648
        %v6556 = vsel %vm6435, %v6555, %v6554
        %v6557 = vsub.s32 4, %v6533
        %v6558 = vsel %vm6435, %v6557, %v6533
        %v6559 = vsel %vm6434, %v392, %v6556
        %v6560 = vsel %vm6434, 0, %v6558
        %v6561 = vmul.f32 %v6559, %v6559
        %v6562 = vmul.f32 %v6561, -0.001358992
        %v6563 = vadd.f32 %v6562, 0.041655596
        %v6564 = vmul.f32 %v6561, %v6563
        %v6565 = vadd.f32 %v6564, -0.4999988
        %v6566 = vmul.f32 %v6561, %v6565
        %v6567 = vadd.f32 1.0, %v6566
        %v6568 = vmul.f32 %v6559, %v6559
        %v6569 = vmul.f32 %v6568, -0.00019511016
        %v6570 = vadd.f32 %v6569, 0.008332121
        %v6571 = vmul.f32 %v6568, %v6570
        %v6572 = vadd.f32 %v6571, -0.16666654
        %v6573 = vmul.f32 %v6568, %v6572
        %v6574 = vadd.f32 %v6573, 1.0
        %v6575 = vmul.f32 %v6574, %v6559
        %vm6576 = vweird.f32 %v392
        %v6577 = vadd.s32 %v6560, 3
        %v6578 = vand.u32 %v6577, 3
        %vm6579 = vcmp.lt.s32.totalorder %v6578, 2
        %vm6580 = vcmp.eq.s32.totalorder %v6578, 0
        %v6581 = vxor.u32 %v6575, 2147483648
        %v6582 = vsel %vm6580, %v6567, %v6581
        %vm6583 = vcmp.eq.s32.totalorder %v6578, 2
        %v6584 = vxor.u32 %v6567, 2147483648
        %v6585 = vsel %vm6583, %v6584, %v6575
        %v6586 = vsel %vm6579, %v6582, %v6585
        %v6587 = vsel %vm6576, nan, %v6586
        %v6588 = vand.u32 2147483647, %v505
        %vm6589 = vcmp.le.f32.partialorder %v6588, 0.7853982
        %vm6590 = vcmp.lt.s32.totalorder %v505, 0
        %v6591 = vand.u32 %v505, 2139095040
        %v6592 = vshrl.u32 %v6591, 23
        %v6593 = vsub.s32 %v6592, 127
        %v6594 = vand.u32 2147483647, %v505
        %v6595 = vand.u32 %v6594, 8388607
        %v6596 = vor.u32 %v6595, 8388608
        %v6597 = vsub.s32 0, %v6596
        %v6598 = vadd.s32 %v6593, 1
        %vm6599 = vcmp.gt.s32.totalorder %v6598, 0
        %v6600 = vsel %vm6599, %v6598, 0
        %v6601 = vshrl.u32 %v6600, 5
        %v6602 = vand.u32 %v6600, 31
        %v6603 = vsub.s32 32, %v6602
        %v6604 = vshrl.u32 683565275, %v6603
        %v6605 = vshll.u32 683565275, %v6602
        %v6606 = vshrl.u32 2475754826, %v6603
        %v6607 = vor.u32 %v6605, %v6606
        %v6608 = vshll.u32 2475754826, %v6602
        %v6609 = vshrl.u32 2131351028, %v6603
        %v6610 = vor.u32 %v6608, %v6609
        %v6611 = vshll.u32 2131351028, %v6602
        %v6612 = vshrl.u32 2102212464, %v6603
        %v6613 = vor.u32 %v6611, %v6612
        %v6614 = vshll.u32 2102212464, %v6602
        %v6615 = vshrl.u32 920167782, %v6603
        %v6616 = vor.u32 %v6614, %v6615
        %v6617 = vshll.u32 920167782, %v6602
        %v6618 = vshrl.u32 1326507024, %v6603
        %v6619 = vor.u32 %v6617, %v6618
        %vm6620 = vcmp.lt.s32.totalorder %v6601, 1
        %vm6621 = vcmp.lt.s32.totalorder %v6601, 2
        %vm6622 = vcmp.lt.s32.totalorder %v6601, 3
        %vm6623 = vcmp.lt.s32.totalorder %v6601, 4
        %v6624 = vsel %vm6620, %v6604, %v6607
        %v6625 = vsel %vm6623, %v6613, 2102212464
        %v6626 = vsel %vm6622, %v6610, %v6625
        %v6627 = vsel %vm6621, %v6624, %v6626
        %v6628 = vsel %vm6620, %v6607, %v6610
        %v6629 = vsel %vm6623, %v6616, 920167782
        %v6630 = vsel %vm6622, %v6613, %v6629
        %v6631 = vsel %vm6621, %v6628, %v6630
        %v6632 = vsel %vm6620, %v6610, %v6613
        %v6633 = vsel %vm6623, %v6619, 1326507024
        %v6634 = vsel %vm6622, %v6616, %v6633
        %v6635 = vsel %vm6621, %v6632, %v6634
        %v6636 = vshll.u32 %v6596, 8
        %v6637 = vand.u32 %v6636, 65535
        %v6638 = vshrl.u32 %v6636, 16
        %v6639 = vand.u32 %v6635, 65535
        %v6640 = vshrl.u32 %v6635, 16
        %v6641 = vmul.u32 %v6637, %v6639
        %v6642 = vmul.u32 %v6637, %v6640
        %v6643 = vmul.u32 %v6638, %v6639
        %v6644 = vmul.u32 %v6638, %v6640
        %v6645 = vshll.u32 %v6642, 16
        %v6646 = vshrl.u32 %v6642, 16
        %v6647 = vshll.u32 %v6643, 16
        %v6648 = vshrl.u32 %v6643, 16
        %vm6649 = vc.u32 %v6641, %v6645
        %v6650 = vsel %vm6649, 1, 0
        %v6651 = vadd.s32 %v6641, %v6645
        %v6652 = vadd.s32 %v6644, %v6650
        %vm6653 = vc.u32 %v6651, %v6647
        %v6654 = vsel %vm6653, 1, 0
        %v6655 = vadd.s32 %v6651, %v6647
        %v6656 = vadd.s32 %v6652, %v6654
        %v6657 = vadd.s32 %v6656, %v6646
        %v6658 = vadd.s32 %v6657, %v6648
        %v6659 = vand.u32 %v6636, 65535
        %v6660 = vshrl.u32 %v6636, 16
        %v6661 = vand.u32 %v6631, 65535
        %v6662 = vshrl.u32 %v6631, 16
        %v6663 = vmul.u32 %v6659, %v6661
        %v6664 = vmul.u32 %v6659, %v6662
        %v6665 = vmul.u32 %v6660, %v6661
        %v6666 = vmul.u32 %v6660, %v6662
        %v6667 = vshll.u32 %v6664, 16
        %v6668 = vshrl.u32 %v6664, 16
        %v6669 = vshll.u32 %v6665, 16
        %v6670 = vshrl.u32 %v6665, 16
        %vm6671 = vc.u32 %v6663, %v6667
        %v6672 = vsel %vm6671, 1, 0
        %v6673 = vadd.s32 %v6663, %v6667
        %v6674 = vadd.s32 %v6666, %v6672
        %vm6675 = vc.u32 %v6673, %v6669
        %v6676 = vsel %vm6675, 1, 0
        %v6677 = vadd.s32 %v6673, %v6669
        %v6678 = vadd.s32 %v6674, %v6676
        %v6679 = vadd.s32 %v6678, %v6668
        %v6680 = vadd.s32 %v6679, %v6670
        %v6681 = vmul.u32 %v6636, %v6627
        %v6682 = vadd.s32 %v6658, %v6677
        %vm6683 = vc.u32 %v6658, %v6677
        %v6684 = vadd.s32 %v6680, 1
        %v6685 = vsel %vm6683, %v6684, %v6680
        %v6686 = vadd.s32 %v6681, %v6685
        %v6687 = vadd.s32 %v6686, 536870912
        %v6688 = vshrl.u32 %v6687, 30
        %v6689 = vshll.u32 %v6688, 30
        %v6690 = vsub.s32 %v6686, %v6689
        %vm6691 = vcmp.lt.s32.totalorder %v6690, 0
        %v6692 = vsub.s32 0, %v6690
        %v6693 = vsel %vm6691, %v6692, %v6690
        %v6694 = vclz %v6693
        %v6695 = vsub.s32 %v6694, 2
        %vm6696 = vcmp.gt.s32.totalorder 0, %v6695
        %v6697 = vsel %vm6696, 0, %v6695
        %v6698 = vsub.s32 32, %v6697
        %v6699 = vshll.u32 %v6690, %v6697
        %v6700 = vshrl.u32 %v6682, %v6698
        %v6701 = vor.u32 %v6699, %v6700
        %v6702 = vsub.s32 4294967266, %v6697
        %v6703 = vadd.s32 %v6702, 127
        %v6704 = vshll.u32 %v6703, 23
        %v6705 = vor.u32 4788187, %v6704
        %v6706 = vand.u32 2147483647, %v6705
        %v6708 = vcvt.s32.f32 %v6701
        %v6709 = vmul.f32 %v6708, %v6706
        %v6710 = vxor.u32 %v6709, 2147483648
        %v6711 = vsel %vm6590, %v6710, %v6709
        %v6712 = vsub.s32 4, %v6688
        %v6713 = vsel %vm6590, %v6712, %v6688
        %v6714 = vsel %vm6589, %v505, %v6711
        %v6715 = vsel %vm6589, 0, %v6713
        %v6716 = vmul.f32 %v6714, %v6714
        %v6717 = vmul.f32 %v6716, -0.001358992
        %v6718 = vadd.f32 %v6717, 0.041655596
        %v6719 = vmul.f32 %v6716, %v6718
        %v6720 = vadd.f32 %v6719, -0.4999988
        %v6721 = vmul.f32 %v6716, %v6720
        %v6722 = vadd.f32 1.0, %v6721
        %v6723 = vmul.f32 %v6714, %v6714
        %v6724 = vmul.f32 %v6723, -0.00019511016
        %v6725 = vadd.f32 %v6724, 0.008332121
        %v6726 = vmul.f32 %v6723, %v6725
        %v6727 = vadd.f32 %v6726, -0.16666654
        %v6728 = vmul.f32 %v6723, %v6727
        %v6729 = vadd.f32 %v6728, 1.0
        %v6730 = vmul.f32 %v6729, %v6714
        %vm6731 = vweird.f32 %v505
        %v6732 = vadd.s32 %v6715, 3
        %v6733 = vand.u32 %v6732, 3
        %vm6734 = vcmp.lt.s32.totalorder %v6733, 2
        %vm6735 = vcmp.eq.s32.totalorder %v6733, 0
        %v6736 = vxor.u32 %v6730, 2147483648
        %v6737 = vsel %vm6735, %v6722, %v6736
        %vm6738 = vcmp.eq.s32.totalorder %v6733, 2
        %v6739 = vxor.u32 %v6722, 2147483648
        %v6740 = vsel %vm6738, %v6739, %v6730
        %v6741 = vsel %vm6734, %v6737, %v6740
        %v6742 = vsel %vm6731, nan, %v6741
        %v6743 = vand.u32 2147483647, %v395
        %vm6744 = vcmp.le.f32.partialorder %v6743, 0.7853982
        %vm6745 = vcmp.lt.s32.totalorder %v395, 0
        %v6746 = vand.u32 %v395, 2139095040
        %v6747 = vshrl.u32 %v6746, 23
        %v6748 = vsub.s32 %v6747, 127
        %v6749 = vand.u32 2147483647, %v395
        %v6750 = vand.u32 %v6749, 8388607
        %v6751 = vor.u32 %v6750, 8388608
        %v6752 = vsub.s32 0, %v6751
        %v6753 = vadd.s32 %v6748, 1
        %vm6754 = vcmp.gt.s32.totalorder %v6753, 0
        %v6755 = vsel %vm6754, %v6753, 0
        %v6756 = vshrl.u32 %v6755, 5
        %v6757 = vand.u32 %v6755, 31
        %v6758 = vsub.s32 32, %v6757
        %v6759 = vshrl.u32 683565275, %v6758
        %v6760 = vshll.u32 683565275, %v6757
        %v6761 = vshrl.u32 2475754826, %v6758
        %v6762 = vor.u32 %v6760, %v6761
        %v6763 = vshll.u32 2475754826, %v6757
        %v6764 = vshrl.u32 2131351028, %v6758
        %v6765 = vor.u32 %v6763, %v6764
        %v6766 = vshll.u32 2131351028, %v6757
        %v6767 = vshrl.u32 2102212464, %v6758
        %v6768 = vor.u32 %v6766, %v6767
        %v6769 = vshll.u32 2102212464, %v6757
        %v6770 = vshrl.u32 920167782, %v6758
        %v6771 = vor.u32 %v6769, %v6770
        %v6772 = vshll.u32 920167782, %v6757
        %v6773 = vshrl.u32 1326507024, %v6758
        %v6774 = vor.u32 %v6772, %v6773
        %vm6775 = vcmp.lt.s32.totalorder %v6756, 1
        %vm6776 = vcmp.lt.s32.totalorder %v6756, 2
        %vm6777 = vcmp.lt.s32.totalorder %v6756, 3
        %vm6778 = vcmp.lt.s32.totalorder %v6756, 4
        %v6779 = vsel %vm6775, %v6759, %v6762
        %v6780 = vsel %vm6778, %v6768, 2102212464
        %v6781 = vsel %vm6777, %v6765, %v6780
        %v6782 = vsel %vm6776, %v6779, %v6781
        %v6783 = vsel %vm6775, %v6762, %v6765
        %v6784 = vsel %vm6778, %v6771, 920167782
        %v6785 = vsel %vm6777, %v6768, %v6784
        %v6786 = vsel %vm6776, %v6783, %v6785
        %v6787 = vsel %vm6775, %v6765, %v6768
        %v6788 = vsel %vm6778, %v6774, 1326507024
        %v6789 = vsel %vm6777, %v6771, %v6788
        %v6790 = vsel %vm6776, %v6787, %v6789
        %v6791 = vshll.u32 %v6751, 8
        %v6792 = vand.u32 %v6791, 65535
        %v6793 = vshrl.u32 %v6791, 16
        %v6794 = vand.u32 %v6790, 65535
        %v6795 = vshrl.u32 %v6790, 16
        %v6796 = vmul.u32 %v6792, %v6794
        %v6797 = vmul.u32 %v6792, %v6795
        %v6798 = vmul.u32 %v6793, %v6794
        %v6799 = vmul.u32 %v6793, %v6795
        %v6800 = vshll.u32 %v6797, 16
        %v6801 = vshrl.u32 %v6797, 16
        %v6802 = vshll.u32 %v6798, 16
        %v6803 = vshrl.u32 %v6798, 16
        %vm6804 = vc.u32 %v6796, %v6800
        %v6805 = vsel %vm6804, 1, 0
        %v6806 = vadd.s32 %v6796, %v6800
        %v6807 = vadd.s32 %v6799, %v6805
        %vm6808 = vc.u32 %v6806, %v6802
        %v6809 = vsel %vm6808, 1, 0
        %v6810 = vadd.s32 %v6806, %v6802
        %v6811 = vadd.s32 %v6807, %v6809
        %v6812 = vadd.s32 %v6811, %v6801
        %v6813 = vadd.s32 %v6812, %v6803
        %v6814 = vand.u32 %v6791, 65535
        %v6815 = vshrl.u32 %v6791, 16
        %v6816 = vand.u32 %v6786, 65535
        %v6817 = vshrl.u32 %v6786, 16
        %v6818 = vmul.u32 %v6814, %v6816
        %v6819 = vmul.u32 %v6814, %v6817
        %v6820 = vmul.u32 %v6815, %v6816
        %v6821 = vmul.u32 %v6815, %v6817
        %v6822 = vshll.u32 %v6819, 16
        %v6823 = vshrl.u32 %v6819, 16
        %v6824 = vshll.u32 %v6820, 16
        %v6825 = vshrl.u32 %v6820, 16
        %vm6826 = vc.u32 %v6818, %v6822
        %v6827 = vsel %vm6826, 1, 0
        %v6828 = vadd.s32 %v6818, %v6822
        %v6829 = vadd.s32 %v6821, %v6827
        %vm6830 = vc.u32 %v6828, %v6824
        %v6831 = vsel %vm6830, 1, 0
        %v6832 = vadd.s32 %v6828, %v6824
        %v6833 = vadd.s32 %v6829, %v6831
        %v6834 = vadd.s32 %v6833, %v6823
        %v6835 = vadd.s32 %v6834, %v6825
        %v6836 = vmul.u32 %v6791, %v6782
        %v6837 = vadd.s32 %v6813, %v6832
        %vm6838 = vc.u32 %v6813, %v6832
        %v6839 = vadd.s32 %v6835, 1
        %v6840 = vsel %vm6838, %v6839, %v6835
        %v6841 = vadd.s32 %v6836, %v6840
        %v6842 = vadd.s32 %v6841, 536870912
        %v6843 = vshrl.u32 %v6842, 30
        %v6844 = vshll.u32 %v6843, 30
        %v6845 = vsub.s32 %v6841, %v6844
        %vm6846 = vcmp.lt.s32.totalorder %v6845, 0
        %v6847 = vsub.s32 0, %v6845
        %v6848 = vsel %vm6846, %v6847, %v6845
        %v6849 = vclz %v6848
        %v6850 = vsub.s32 %v6849, 2
        %vm6851 = vcmp.gt.s32.totalorder 0, %v6850
        %v6852 = vsel %vm6851, 0, %v6850
        %v6853 = vsub.s32 32, %v6852
        %v6854 = vshll.u32 %v6845, %v6852
        %v6855 = vshrl.u32 %v6837, %v6853
        %v6856 = vor.u32 %v6854, %v6855
        %v6857 = vsub.s32 4294967266, %v6852
        %v6858 = vadd.s32 %v6857, 127
        %v6859 = vshll.u32 %v6858, 23
        %v6860 = vor.u32 4788187, %v6859
        %v6861 = vand.u32 2147483647, %v6860
        %v6863 = vcvt.s32.f32 %v6856
        %v6864 = vmul.f32 %v6863, %v6861
        %v6865 = vxor.u32 %v6864, 2147483648
        %v6866 = vsel %vm6745, %v6865, %v6864
        %v6867 = vsub.s32 4, %v6843
        %v6868 = vsel %vm6745, %v6867, %v6843
        %v6869 = vsel %vm6744, %v395, %v6866
        %v6870 = vsel %vm6744, 0, %v6868
        %v6871 = vmul.f32 %v6869, %v6869
        %v6872 = vmul.f32 %v6871, -0.001358992
        %v6873 = vadd.f32 %v6872, 0.041655596
        %v6874 = vmul.f32 %v6871, %v6873
        %v6875 = vadd.f32 %v6874, -0.4999988
        %v6876 = vmul.f32 %v6871, %v6875
        %v6877 = vadd.f32 1.0, %v6876
        %v6878 = vmul.f32 %v6869, %v6869
        %v6879 = vmul.f32 %v6878, -0.00019511016
        %v6880 = vadd.f32 %v6879, 0.008332121
        %v6881 = vmul.f32 %v6878, %v6880
        %v6882 = vadd.f32 %v6881, -0.16666654
        %v6883 = vmul.f32 %v6878, %v6882
        %v6884 = vadd.f32 %v6883, 1.0
        %v6885 = vmul.f32 %v6884, %v6869
        %vm6886 = vweird.f32 %v395
        %v6887 = vadd.s32 %v6870, 3
        %v6888 = vand.u32 %v6887, 3
        %vm6889 = vcmp.lt.s32.totalorder %v6888, 2
        %vm6890 = vcmp.eq.s32.totalorder %v6888, 0
        %v6891 = vxor.u32 %v6885, 2147483648
        %v6892 = vsel %vm6890, %v6877, %v6891
        %vm6893 = vcmp.eq.s32.totalorder %v6888, 2
        %v6894 = vxor.u32 %v6877, 2147483648
        %v6895 = vsel %vm6893, %v6894, %v6885
        %v6896 = vsel %vm6889, %v6892, %v6895
        %v6897 = vsel %vm6886, nan, %v6896
        %v6898 = vand.u32 2147483647, %v508
        %vm6899 = vcmp.le.f32.partialorder %v6898, 0.7853982
        %vm6900 = vcmp.lt.s32.totalorder %v508, 0
        %v6901 = vand.u32 %v508, 2139095040
        %v6902 = vshrl.u32 %v6901, 23
        %v6903 = vsub.s32 %v6902, 127
        %v6904 = vand.u32 2147483647, %v508
        %v6905 = vand.u32 %v6904, 8388607
        %v6906 = vor.u32 %v6905, 8388608
        %v6907 = vsub.s32 0, %v6906
        %v6908 = vadd.s32 %v6903, 1
        %vm6909 = vcmp.gt.s32.totalorder %v6908, 0
        %v6910 = vsel %vm6909, %v6908, 0
        %v6911 = vshrl.u32 %v6910, 5
        %v6912 = vand.u32 %v6910, 31
        %v6913 = vsub.s32 32, %v6912
        %v6914 = vshrl.u32 683565275, %v6913
        %v6915 = vshll.u32 683565275, %v6912
        %v6916 = vshrl.u32 2475754826, %v6913
        %v6917 = vor.u32 %v6915, %v6916
        %v6918 = vshll.u32 2475754826, %v6912
        %v6919 = vshrl.u32 2131351028, %v6913
        %v6920 = vor.u32 %v6918, %v6919
        %v6921 = vshll.u32 2131351028, %v6912
        %v6922 = vshrl.u32 2102212464, %v6913
        %v6923 = vor.u32 %v6921, %v6922
        %v6924 = vshll.u32 2102212464, %v6912
        %v6925 = vshrl.u32 920167782, %v6913
        %v6926 = vor.u32 %v6924, %v6925
        %v6927 = vshll.u32 920167782, %v6912
        %v6928 = vshrl.u32 1326507024, %v6913
        %v6929 = vor.u32 %v6927, %v6928
        %vm6930 = vcmp.lt.s32.totalorder %v6911, 1
        %vm6931 = vcmp.lt.s32.totalorder %v6911, 2
        %vm6932 = vcmp.lt.s32.totalorder %v6911, 3
        %vm6933 = vcmp.lt.s32.totalorder %v6911, 4
        %v6934 = vsel %vm6930, %v6914, %v6917
        %v6935 = vsel %vm6933, %v6923, 2102212464
        %v6936 = vsel %vm6932, %v6920, %v6935
        %v6937 = vsel %vm6931, %v6934, %v6936
        %v6938 = vsel %vm6930, %v6917, %v6920
        %v6939 = vsel %vm6933, %v6926, 920167782
        %v6940 = vsel %vm6932, %v6923, %v6939
        %v6941 = vsel %vm6931, %v6938, %v6940
        %v6942 = vsel %vm6930, %v6920, %v6923
        %v6943 = vsel %vm6933, %v6929, 1326507024
        %v6944 = vsel %vm6932, %v6926, %v6943
        %v6945 = vsel %vm6931, %v6942, %v6944
        %v6946 = vshll.u32 %v6906, 8
        %v6947 = vand.u32 %v6946, 65535
        %v6948 = vshrl.u32 %v6946, 16
        %v6949 = vand.u32 %v6945, 65535
        %v6950 = vshrl.u32 %v6945, 16
        %v6951 = vmul.u32 %v6947, %v6949
        %v6952 = vmul.u32 %v6947, %v6950
        %v6953 = vmul.u32 %v6948, %v6949
        %v6954 = vmul.u32 %v6948, %v6950
        %v6955 = vshll.u32 %v6952, 16
        %v6956 = vshrl.u32 %v6952, 16
        %v6957 = vshll.u32 %v6953, 16
        %v6958 = vshrl.u32 %v6953, 16
        %vm6959 = vc.u32 %v6951, %v6955
        %v6960 = vsel %vm6959, 1, 0
        %v6961 = vadd.s32 %v6951, %v6955
        %v6962 = vadd.s32 %v6954, %v6960
        %vm6963 = vc.u32 %v6961, %v6957
        %v6964 = vsel %vm6963, 1, 0
        %v6965 = vadd.s32 %v6961, %v6957
        %v6966 = vadd.s32 %v6962, %v6964
        %v6967 = vadd.s32 %v6966, %v6956
        %v6968 = vadd.s32 %v6967, %v6958
        %v6969 = vand.u32 %v6946, 65535
        %v6970 = vshrl.u32 %v6946, 16
        %v6971 = vand.u32 %v6941, 65535
        %v6972 = vshrl.u32 %v6941, 16
        %v6973 = vmul.u32 %v6969, %v6971
        %v6974 = vmul.u32 %v6969, %v6972
        %v6975 = vmul.u32 %v6970, %v6971
        %v6976 = vmul.u32 %v6970, %v6972
        %v6977 = vshll.u32 %v6974, 16
        %v6978 = vshrl.u32 %v6974, 16
        %v6979 = vshll.u32 %v6975, 16
        %v6980 = vshrl.u32 %v6975, 16
        %vm6981 = vc.u32 %v6973, %v6977
        %v6982 = vsel %vm6981, 1, 0
        %v6983 = vadd.s32 %v6973, %v6977
        %v6984 = vadd.s32 %v6976, %v6982
        %vm6985 = vc.u32 %v6983, %v6979
        %v6986 = vsel %vm6985, 1, 0
        %v6987 = vadd.s32 %v6983, %v6979
        %v6988 = vadd.s32 %v6984, %v6986
        %v6989 = vadd.s32 %v6988, %v6978
        %v6990 = vadd.s32 %v6989, %v6980
        %v6991 = vmul.u32 %v6946, %v6937
        %v6992 = vadd.s32 %v6968, %v6987
        %vm6993 = vc.u32 %v6968, %v6987
        %v6994 = vadd.s32 %v6990, 1
        %v6995 = vsel %vm6993, %v6994, %v6990
        %v6996 = vadd.s32 %v6991, %v6995
        %v6997 = vadd.s32 %v6996, 536870912
        %v6998 = vshrl.u32 %v6997, 30
        %v6999 = vshll.u32 %v6998, 30
        %v7000 = vsub.s32 %v6996, %v6999
        %vm7001 = vcmp.lt.s32.totalorder %v7000, 0
        %v7002 = vsub.s32 0, %v7000
        %v7003 = vsel %vm7001, %v7002, %v7000
        %v7004 = vclz %v7003
        %v7005 = vsub.s32 %v7004, 2
        %vm7006 = vcmp.gt.s32.totalorder 0, %v7005
        %v7007 = vsel %vm7006, 0, %v7005
        %v7008 = vsub.s32 32, %v7007
        %v7009 = vshll.u32 %v7000, %v7007
        %v7010 = vshrl.u32 %v6992, %v7008
        %v7011 = vor.u32 %v7009, %v7010
        %v7012 = vsub.s32 4294967266, %v7007
        %v7013 = vadd.s32 %v7012, 127
        %v7014 = vshll.u32 %v7013, 23
        %v7015 = vor.u32 4788187, %v7014
        %v7016 = vand.u32 2147483647, %v7015
        %v7018 = vcvt.s32.f32 %v7011
        %v7019 = vmul.f32 %v7018, %v7016
        %v7020 = vxor.u32 %v7019, 2147483648
        %v7021 = vsel %vm6900, %v7020, %v7019
        %v7022 = vsub.s32 4, %v6998
        %v7023 = vsel %vm6900, %v7022, %v6998
        %v7024 = vsel %vm6899, %v508, %v7021
        %v7025 = vsel %vm6899, 0, %v7023
        %v7026 = vmul.f32 %v7024, %v7024
        %v7027 = vmul.f32 %v7026, -0.001358992
        %v7028 = vadd.f32 %v7027, 0.041655596
        %v7029 = vmul.f32 %v7026, %v7028
        %v7030 = vadd.f32 %v7029, -0.4999988
        %v7031 = vmul.f32 %v7026, %v7030
        %v7032 = vadd.f32 1.0, %v7031
        %v7033 = vmul.f32 %v7024, %v7024
        %v7034 = vmul.f32 %v7033, -0.00019511016
        %v7035 = vadd.f32 %v7034, 0.008332121
        %v7036 = vmul.f32 %v7033, %v7035
        %v7037 = vadd.f32 %v7036, -0.16666654
        %v7038 = vmul.f32 %v7033, %v7037
        %v7039 = vadd.f32 %v7038, 1.0
        %v7040 = vmul.f32 %v7039, %v7024
        %vm7041 = vweird.f32 %v508
        %v7042 = vadd.s32 %v7025, 3
        %v7043 = vand.u32 %v7042, 3
        %vm7044 = vcmp.lt.s32.totalorder %v7043, 2
        %vm7045 = vcmp.eq.s32.totalorder %v7043, 0
        %v7046 = vxor.u32 %v7040, 2147483648
        %v7047 = vsel %vm7045, %v7032, %v7046
        %vm7048 = vcmp.eq.s32.totalorder %v7043, 2
        %v7049 = vxor.u32 %v7032, 2147483648
        %v7050 = vsel %vm7048, %v7049, %v7040
        %v7051 = vsel %vm7044, %v7047, %v7050
        %v7052 = vsel %vm7041, nan, %v7051
        %v7053 = vand.u32 2147483647, %v398
        %vm7054 = vcmp.le.f32.partialorder %v7053, 0.7853982
        %vm7055 = vcmp.lt.s32.totalorder %v398, 0
        %v7056 = vand.u32 %v398, 2139095040
        %v7057 = vshrl.u32 %v7056, 23
        %v7058 = vsub.s32 %v7057, 127
        %v7059 = vand.u32 2147483647, %v398
        %v7060 = vand.u32 %v7059, 8388607
        %v7061 = vor.u32 %v7060, 8388608
        %v7062 = vsub.s32 0, %v7061
        %v7063 = vadd.s32 %v7058, 1
        %vm7064 = vcmp.gt.s32.totalorder %v7063, 0
        %v7065 = vsel %vm7064, %v7063, 0
        %v7066 = vshrl.u32 %v7065, 5
        %v7067 = vand.u32 %v7065, 31
        %v7068 = vsub.s32 32, %v7067
        %v7069 = vshrl.u32 683565275, %v7068
        %v7070 = vshll.u32 683565275, %v7067
        %v7071 = vshrl.u32 2475754826, %v7068
        %v7072 = vor.u32 %v7070, %v7071
        %v7073 = vshll.u32 2475754826, %v7067
        %v7074 = vshrl.u32 2131351028, %v7068
        %v7075 = vor.u32 %v7073, %v7074
        %v7076 = vshll.u32 2131351028, %v7067
        %v7077 = vshrl.u32 2102212464, %v7068
        %v7078 = vor.u32 %v7076, %v7077
        %v7079 = vshll.u32 2102212464, %v7067
        %v7080 = vshrl.u32 920167782, %v7068
        %v7081 = vor.u32 %v7079, %v7080
        %v7082 = vshll.u32 920167782, %v7067
        %v7083 = vshrl.u32 1326507024, %v7068
        %v7084 = vor.u32 %v7082, %v7083
        %vm7085 = vcmp.lt.s32.totalorder %v7066, 1
        %vm7086 = vcmp.lt.s32.totalorder %v7066, 2
        %vm7087 = vcmp.lt.s32.totalorder %v7066, 3
        %vm7088 = vcmp.lt.s32.totalorder %v7066, 4
        %v7089 = vsel %vm7085, %v7069, %v7072
        %v7090 = vsel %vm7088, %v7078, 2102212464
        %v7091 = vsel %vm7087, %v7075, %v7090
        %v7092 = vsel %vm7086, %v7089, %v7091
        %v7093 = vsel %vm7085, %v7072, %v7075
        %v7094 = vsel %vm7088, %v7081, 920167782
        %v7095 = vsel %vm7087, %v7078, %v7094
        %v7096 = vsel %vm7086, %v7093, %v7095
        %v7097 = vsel %vm7085, %v7075, %v7078
        %v7098 = vsel %vm7088, %v7084, 1326507024
        %v7099 = vsel %vm7087, %v7081, %v7098
        %v7100 = vsel %vm7086, %v7097, %v7099
        %v7101 = vshll.u32 %v7061, 8
        %v7102 = vand.u32 %v7101, 65535
        %v7103 = vshrl.u32 %v7101, 16
        %v7104 = vand.u32 %v7100, 65535
        %v7105 = vshrl.u32 %v7100, 16
        %v7106 = vmul.u32 %v7102, %v7104
        %v7107 = vmul.u32 %v7102, %v7105
        %v7108 = vmul.u32 %v7103, %v7104
        %v7109 = vmul.u32 %v7103, %v7105
        %v7110 = vshll.u32 %v7107, 16
        %v7111 = vshrl.u32 %v7107, 16
        %v7112 = vshll.u32 %v7108, 16
        %v7113 = vshrl.u32 %v7108, 16
        %vm7114 = vc.u32 %v7106, %v7110
        %v7115 = vsel %vm7114, 1, 0
        %v7116 = vadd.s32 %v7106, %v7110
        %v7117 = vadd.s32 %v7109, %v7115
        %vm7118 = vc.u32 %v7116, %v7112
        %v7119 = vsel %vm7118, 1, 0
        %v7120 = vadd.s32 %v7116, %v7112
        %v7121 = vadd.s32 %v7117, %v7119
        %v7122 = vadd.s32 %v7121, %v7111
        %v7123 = vadd.s32 %v7122, %v7113
        %v7124 = vand.u32 %v7101, 65535
        %v7125 = vshrl.u32 %v7101, 16
        %v7126 = vand.u32 %v7096, 65535
        %v7127 = vshrl.u32 %v7096, 16
        %v7128 = vmul.u32 %v7124, %v7126
        %v7129 = vmul.u32 %v7124, %v7127
        %v7130 = vmul.u32 %v7125, %v7126
        %v7131 = vmul.u32 %v7125, %v7127
        %v7132 = vshll.u32 %v7129, 16
        %v7133 = vshrl.u32 %v7129, 16
        %v7134 = vshll.u32 %v7130, 16
        %v7135 = vshrl.u32 %v7130, 16
        %vm7136 = vc.u32 %v7128, %v7132
        %v7137 = vsel %vm7136, 1, 0
        %v7138 = vadd.s32 %v7128, %v7132
        %v7139 = vadd.s32 %v7131, %v7137
        %vm7140 = vc.u32 %v7138, %v7134
        %v7141 = vsel %vm7140, 1, 0
        %v7142 = vadd.s32 %v7138, %v7134
        %v7143 = vadd.s32 %v7139, %v7141
        %v7144 = vadd.s32 %v7143, %v7133
        %v7145 = vadd.s32 %v7144, %v7135
        %v7146 = vmul.u32 %v7101, %v7092
        %v7147 = vadd.s32 %v7123, %v7142
        %vm7148 = vc.u32 %v7123, %v7142
        %v7149 = vadd.s32 %v7145, 1
        %v7150 = vsel %vm7148, %v7149, %v7145
        %v7151 = vadd.s32 %v7146, %v7150
        %v7152 = vadd.s32 %v7151, 536870912
        %v7153 = vshrl.u32 %v7152, 30
        %v7154 = vshll.u32 %v7153, 30
        %v7155 = vsub.s32 %v7151, %v7154
        %vm7156 = vcmp.lt.s32.totalorder %v7155, 0
        %v7157 = vsub.s32 0, %v7155
        %v7158 = vsel %vm7156, %v7157, %v7155
        %v7159 = vclz %v7158
        %v7160 = vsub.s32 %v7159, 2
        %vm7161 = vcmp.gt.s32.totalorder 0, %v7160
        %v7162 = vsel %vm7161, 0, %v7160
        %v7163 = vsub.s32 32, %v7162
        %v7164 = vshll.u32 %v7155, %v7162
        %v7165 = vshrl.u32 %v7147, %v7163
        %v7166 = vor.u32 %v7164, %v7165
        %v7167 = vsub.s32 4294967266, %v7162
        %v7168 = vadd.s32 %v7167, 127
        %v7169 = vshll.u32 %v7168, 23
        %v7170 = vor.u32 4788187, %v7169
        %v7171 = vand.u32 2147483647, %v7170
        %v7173 = vcvt.s32.f32 %v7166
        %v7174 = vmul.f32 %v7173, %v7171
        %v7175 = vxor.u32 %v7174, 2147483648
        %v7176 = vsel %vm7055, %v7175, %v7174
        %v7177 = vsub.s32 4, %v7153
        %v7178 = vsel %vm7055, %v7177, %v7153
        %v7179 = vsel %vm7054, %v398, %v7176
        %v7180 = vsel %vm7054, 0, %v7178
        %v7181 = vmul.f32 %v7179, %v7179
        %v7182 = vmul.f32 %v7181, -0.001358992
        %v7183 = vadd.f32 %v7182, 0.041655596
        %v7184 = vmul.f32 %v7181, %v7183
        %v7185 = vadd.f32 %v7184, -0.4999988
        %v7186 = vmul.f32 %v7181, %v7185
        %v7187 = vadd.f32 1.0, %v7186
        %v7188 = vmul.f32 %v7179, %v7179
        %v7189 = vmul.f32 %v7188, -0.00019511016
        %v7190 = vadd.f32 %v7189, 0.008332121
        %v7191 = vmul.f32 %v7188, %v7190
        %v7192 = vadd.f32 %v7191, -0.16666654
        %v7193 = vmul.f32 %v7188, %v7192
        %v7194 = vadd.f32 %v7193, 1.0
        %v7195 = vmul.f32 %v7194, %v7179
        %vm7196 = vweird.f32 %v398
        %v7197 = vadd.s32 %v7180, 3
        %v7198 = vand.u32 %v7197, 3
        %vm7199 = vcmp.lt.s32.totalorder %v7198, 2
        %vm7200 = vcmp.eq.s32.totalorder %v7198, 0
        %v7201 = vxor.u32 %v7195, 2147483648
        %v7202 = vsel %vm7200, %v7187, %v7201
        %vm7203 = vcmp.eq.s32.totalorder %v7198, 2
        %v7204 = vxor.u32 %v7187, 2147483648
        %v7205 = vsel %vm7203, %v7204, %v7195
        %v7206 = vsel %vm7199, %v7202, %v7205
        %v7207 = vsel %vm7196, nan, %v7206
        %v7208 = vand.u32 2147483647, %v511
        %vm7209 = vcmp.le.f32.partialorder %v7208, 0.7853982
        %vm7210 = vcmp.lt.s32.totalorder %v511, 0
        %v7211 = vand.u32 %v511, 2139095040
        %v7212 = vshrl.u32 %v7211, 23
        %v7213 = vsub.s32 %v7212, 127
        %v7214 = vand.u32 2147483647, %v511
        %v7215 = vand.u32 %v7214, 8388607
        %v7216 = vor.u32 %v7215, 8388608
        %v7217 = vsub.s32 0, %v7216
        %v7218 = vadd.s32 %v7213, 1
        %vm7219 = vcmp.gt.s32.totalorder %v7218, 0
        %v7220 = vsel %vm7219, %v7218, 0
        %v7221 = vshrl.u32 %v7220, 5
        %v7222 = vand.u32 %v7220, 31
        %v7223 = vsub.s32 32, %v7222
        %v7224 = vshrl.u32 683565275, %v7223
        %v7225 = vshll.u32 683565275, %v7222
        %v7226 = vshrl.u32 2475754826, %v7223
        %v7227 = vor.u32 %v7225, %v7226
        %v7228 = vshll.u32 2475754826, %v7222
        %v7229 = vshrl.u32 2131351028, %v7223
        %v7230 = vor.u32 %v7228, %v7229
        %v7231 = vshll.u32 2131351028, %v7222
        %v7232 = vshrl.u32 2102212464, %v7223
        %v7233 = vor.u32 %v7231, %v7232
        %v7234 = vshll.u32 2102212464, %v7222
        %v7235 = vshrl.u32 920167782, %v7223
        %v7236 = vor.u32 %v7234, %v7235
        %v7237 = vshll.u32 920167782, %v7222
        %v7238 = vshrl.u32 1326507024, %v7223
        %v7239 = vor.u32 %v7237, %v7238
        %vm7240 = vcmp.lt.s32.totalorder %v7221, 1
        %vm7241 = vcmp.lt.s32.totalorder %v7221, 2
        %vm7242 = vcmp.lt.s32.totalorder %v7221, 3
        %vm7243 = vcmp.lt.s32.totalorder %v7221, 4
        %v7244 = vsel %vm7240, %v7224, %v7227
        %v7245 = vsel %vm7243, %v7233, 2102212464
        %v7246 = vsel %vm7242, %v7230, %v7245
        %v7247 = vsel %vm7241, %v7244, %v7246
        %v7248 = vsel %vm7240, %v7227, %v7230
        %v7249 = vsel %vm7243, %v7236, 920167782
        %v7250 = vsel %vm7242, %v7233, %v7249
        %v7251 = vsel %vm7241, %v7248, %v7250
        %v7252 = vsel %vm7240, %v7230, %v7233
        %v7253 = vsel %vm7243, %v7239, 1326507024
        %v7254 = vsel %vm7242, %v7236, %v7253
        %v7255 = vsel %vm7241, %v7252, %v7254
        %v7256 = vshll.u32 %v7216, 8
        %v7257 = vand.u32 %v7256, 65535
        %v7258 = vshrl.u32 %v7256, 16
        %v7259 = vand.u32 %v7255, 65535
        %v7260 = vshrl.u32 %v7255, 16
        %v7261 = vmul.u32 %v7257, %v7259
        %v7262 = vmul.u32 %v7257, %v7260
        %v7263 = vmul.u32 %v7258, %v7259
        %v7264 = vmul.u32 %v7258, %v7260
        %v7265 = vshll.u32 %v7262, 16
        %v7266 = vshrl.u32 %v7262, 16
        %v7267 = vshll.u32 %v7263, 16
        %v7268 = vshrl.u32 %v7263, 16
        %vm7269 = vc.u32 %v7261, %v7265
        %v7270 = vsel %vm7269, 1, 0
        %v7271 = vadd.s32 %v7261, %v7265
        %v7272 = vadd.s32 %v7264, %v7270
        %vm7273 = vc.u32 %v7271, %v7267
        %v7274 = vsel %vm7273, 1, 0
        %v7275 = vadd.s32 %v7271, %v7267
        %v7276 = vadd.s32 %v7272, %v7274
        %v7277 = vadd.s32 %v7276, %v7266
        %v7278 = vadd.s32 %v7277, %v7268
        %v7279 = vand.u32 %v7256, 65535
        %v7280 = vshrl.u32 %v7256, 16
        %v7281 = vand.u32 %v7251, 65535
        %v7282 = vshrl.u32 %v7251, 16
        %v7283 = vmul.u32 %v7279, %v7281
        %v7284 = vmul.u32 %v7279, %v7282
        %v7285 = vmul.u32 %v7280, %v7281
        %v7286 = vmul.u32 %v7280, %v7282
        %v7287 = vshll.u32 %v7284, 16
        %v7288 = vshrl.u32 %v7284, 16
        %v7289 = vshll.u32 %v7285, 16
        %v7290 = vshrl.u32 %v7285, 16
        %vm7291 = vc.u32 %v7283, %v7287
        %v7292 = vsel %vm7291, 1, 0
        %v7293 = vadd.s32 %v7283, %v7287
        %v7294 = vadd.s32 %v7286, %v7292
        %vm7295 = vc.u32 %v7293, %v7289
        %v7296 = vsel %vm7295, 1, 0
        %v7297 = vadd.s32 %v7293, %v7289
        %v7298 = vadd.s32 %v7294, %v7296
        %v7299 = vadd.s32 %v7298, %v7288
        %v7300 = vadd.s32 %v7299, %v7290
        %v7301 = vmul.u32 %v7256, %v7247
        %v7302 = vadd.s32 %v7278, %v7297
        %vm7303 = vc.u32 %v7278, %v7297
        %v7304 = vadd.s32 %v7300, 1
        %v7305 = vsel %vm7303, %v7304, %v7300
        %v7306 = vadd.s32 %v7301, %v7305
        %v7307 = vadd.s32 %v7306, 536870912
        %v7308 = vshrl.u32 %v7307, 30
        %v7309 = vshll.u32 %v7308, 30
        %v7310 = vsub.s32 %v7306, %v7309
        %vm7311 = vcmp.lt.s32.totalorder %v7310, 0
        %v7312 = vsub.s32 0, %v7310
        %v7313 = vsel %vm7311, %v7312, %v7310
        %v7314 = vclz %v7313
        %v7315 = vsub.s32 %v7314, 2
        %vm7316 = vcmp.gt.s32.totalorder 0, %v7315
        %v7317 = vsel %vm7316, 0, %v7315
        %v7318 = vsub.s32 32, %v7317
        %v7319 = vshll.u32 %v7310, %v7317
        %v7320 = vshrl.u32 %v7302, %v7318
        %v7321 = vor.u32 %v7319, %v7320
        %v7322 = vsub.s32 4294967266, %v7317
        %v7323 = vadd.s32 %v7322, 127
        %v7324 = vshll.u32 %v7323, 23
        %v7325 = vor.u32 4788187, %v7324
        %v7326 = vand.u32 2147483647, %v7325
        %v7328 = vcvt.s32.f32 %v7321
        %v7329 = vmul.f32 %v7328, %v7326
        %v7330 = vxor.u32 %v7329, 2147483648
        %v7331 = vsel %vm7210, %v7330, %v7329
        %v7332 = vsub.s32 4, %v7308
        %v7333 = vsel %vm7210, %v7332, %v7308
        %v7334 = vsel %vm7209, %v511, %v7331
        %v7335 = vsel %vm7209, 0, %v7333
        %v7336 = vmul.f32 %v7334, %v7334
        %v7337 = vmul.f32 %v7336, -0.001358992
        %v7338 = vadd.f32 %v7337, 0.041655596
        %v7339 = vmul.f32 %v7336, %v7338
        %v7340 = vadd.f32 %v7339, -0.4999988
        %v7341 = vmul.f32 %v7336, %v7340
        %v7342 = vadd.f32 1.0, %v7341
        %v7343 = vmul.f32 %v7334, %v7334
        %v7344 = vmul.f32 %v7343, -0.00019511016
        %v7345 = vadd.f32 %v7344, 0.008332121
        %v7346 = vmul.f32 %v7343, %v7345
        %v7347 = vadd.f32 %v7346, -0.16666654
        %v7348 = vmul.f32 %v7343, %v7347
        %v7349 = vadd.f32 %v7348, 1.0
        %v7350 = vmul.f32 %v7349, %v7334
        %vm7351 = vweird.f32 %v511
        %v7352 = vadd.s32 %v7335, 3
        %v7353 = vand.u32 %v7352, 3
        %vm7354 = vcmp.lt.s32.totalorder %v7353, 2
        %vm7355 = vcmp.eq.s32.totalorder %v7353, 0
        %v7356 = vxor.u32 %v7350, 2147483648
        %v7357 = vsel %vm7355, %v7342, %v7356
        %vm7358 = vcmp.eq.s32.totalorder %v7353, 2
        %v7359 = vxor.u32 %v7342, 2147483648
        %v7360 = vsel %vm7358, %v7359, %v7350
        %v7361 = vsel %vm7354, %v7357, %v7360
        %v7362 = vsel %vm7351, nan, %v7361
        %v7363 = vand.u32 2147483647, %v401
        %vm7364 = vcmp.le.f32.partialorder %v7363, 0.7853982
        %vm7365 = vcmp.lt.s32.totalorder %v401, 0
        %v7366 = vand.u32 %v401, 2139095040
        %v7367 = vshrl.u32 %v7366, 23
        %v7368 = vsub.s32 %v7367, 127
        %v7369 = vand.u32 2147483647, %v401
        %v7370 = vand.u32 %v7369, 8388607
        %v7371 = vor.u32 %v7370, 8388608
        %v7372 = vsub.s32 0, %v7371
        %v7373 = vadd.s32 %v7368, 1
        %vm7374 = vcmp.gt.s32.totalorder %v7373, 0
        %v7375 = vsel %vm7374, %v7373, 0
        %v7376 = vshrl.u32 %v7375, 5
        %v7377 = vand.u32 %v7375, 31
        %v7378 = vsub.s32 32, %v7377
        %v7379 = vshrl.u32 683565275, %v7378
        %v7380 = vshll.u32 683565275, %v7377
        %v7381 = vshrl.u32 2475754826, %v7378
        %v7382 = vor.u32 %v7380, %v7381
        %v7383 = vshll.u32 2475754826, %v7377
        %v7384 = vshrl.u32 2131351028, %v7378
        %v7385 = vor.u32 %v7383, %v7384
        %v7386 = vshll.u32 2131351028, %v7377
        %v7387 = vshrl.u32 2102212464, %v7378
        %v7388 = vor.u32 %v7386, %v7387
        %v7389 = vshll.u32 2102212464, %v7377
        %v7390 = vshrl.u32 920167782, %v7378
        %v7391 = vor.u32 %v7389, %v7390
        %v7392 = vshll.u32 920167782, %v7377
        %v7393 = vshrl.u32 1326507024, %v7378
        %v7394 = vor.u32 %v7392, %v7393
        %vm7395 = vcmp.lt.s32.totalorder %v7376, 1
        %vm7396 = vcmp.lt.s32.totalorder %v7376, 2
        %vm7397 = vcmp.lt.s32.totalorder %v7376, 3
        %vm7398 = vcmp.lt.s32.totalorder %v7376, 4
        %v7399 = vsel %vm7395, %v7379, %v7382
        %v7400 = vsel %vm7398, %v7388, 2102212464
        %v7401 = vsel %vm7397, %v7385, %v7400
        %v7402 = vsel %vm7396, %v7399, %v7401
        %v7403 = vsel %vm7395, %v7382, %v7385
        %v7404 = vsel %vm7398, %v7391, 920167782
        %v7405 = vsel %vm7397, %v7388, %v7404
        %v7406 = vsel %vm7396, %v7403, %v7405
        %v7407 = vsel %vm7395, %v7385, %v7388
        %v7408 = vsel %vm7398, %v7394, 1326507024
        %v7409 = vsel %vm7397, %v7391, %v7408
        %v7410 = vsel %vm7396, %v7407, %v7409
        %v7411 = vshll.u32 %v7371, 8
        %v7412 = vand.u32 %v7411, 65535
        %v7413 = vshrl.u32 %v7411, 16
        %v7414 = vand.u32 %v7410, 65535
        %v7415 = vshrl.u32 %v7410, 16
        %v7416 = vmul.u32 %v7412, %v7414
        %v7417 = vmul.u32 %v7412, %v7415
        %v7418 = vmul.u32 %v7413, %v7414
        %v7419 = vmul.u32 %v7413, %v7415
        %v7420 = vshll.u32 %v7417, 16
        %v7421 = vshrl.u32 %v7417, 16
        %v7422 = vshll.u32 %v7418, 16
        %v7423 = vshrl.u32 %v7418, 16
        %vm7424 = vc.u32 %v7416, %v7420
        %v7425 = vsel %vm7424, 1, 0
        %v7426 = vadd.s32 %v7416, %v7420
        %v7427 = vadd.s32 %v7419, %v7425
        %vm7428 = vc.u32 %v7426, %v7422
        %v7429 = vsel %vm7428, 1, 0
        %v7430 = vadd.s32 %v7426, %v7422
        %v7431 = vadd.s32 %v7427, %v7429
        %v7432 = vadd.s32 %v7431, %v7421
        %v7433 = vadd.s32 %v7432, %v7423
        %v7434 = vand.u32 %v7411, 65535
        %v7435 = vshrl.u32 %v7411, 16
        %v7436 = vand.u32 %v7406, 65535
        %v7437 = vshrl.u32 %v7406, 16
        %v7438 = vmul.u32 %v7434, %v7436
        %v7439 = vmul.u32 %v7434, %v7437
        %v7440 = vmul.u32 %v7435, %v7436
        %v7441 = vmul.u32 %v7435, %v7437
        %v7442 = vshll.u32 %v7439, 16
        %v7443 = vshrl.u32 %v7439, 16
        %v7444 = vshll.u32 %v7440, 16
        %v7445 = vshrl.u32 %v7440, 16
        %vm7446 = vc.u32 %v7438, %v7442
        %v7447 = vsel %vm7446, 1, 0
        %v7448 = vadd.s32 %v7438, %v7442
        %v7449 = vadd.s32 %v7441, %v7447
        %vm7450 = vc.u32 %v7448, %v7444
        %v7451 = vsel %vm7450, 1, 0
        %v7452 = vadd.s32 %v7448, %v7444
        %v7453 = vadd.s32 %v7449, %v7451
        %v7454 = vadd.s32 %v7453, %v7443
        %v7455 = vadd.s32 %v7454, %v7445
        %v7456 = vmul.u32 %v7411, %v7402
        %v7457 = vadd.s32 %v7433, %v7452
        %vm7458 = vc.u32 %v7433, %v7452
        %v7459 = vadd.s32 %v7455, 1
        %v7460 = vsel %vm7458, %v7459, %v7455
        %v7461 = vadd.s32 %v7456, %v7460
        %v7462 = vadd.s32 %v7461, 536870912
        %v7463 = vshrl.u32 %v7462, 30
        %v7464 = vshll.u32 %v7463, 30
        %v7465 = vsub.s32 %v7461, %v7464
        %vm7466 = vcmp.lt.s32.totalorder %v7465, 0
        %v7467 = vsub.s32 0, %v7465
        %v7468 = vsel %vm7466, %v7467, %v7465
        %v7469 = vclz %v7468
        %v7470 = vsub.s32 %v7469, 2
        %vm7471 = vcmp.gt.s32.totalorder 0, %v7470
        %v7472 = vsel %vm7471, 0, %v7470
        %v7473 = vsub.s32 32, %v7472
        %v7474 = vshll.u32 %v7465, %v7472
        %v7475 = vshrl.u32 %v7457, %v7473
        %v7476 = vor.u32 %v7474, %v7475
        %v7477 = vsub.s32 4294967266, %v7472
        %v7478 = vadd.s32 %v7477, 127
        %v7479 = vshll.u32 %v7478, 23
        %v7480 = vor.u32 4788187, %v7479
        %v7481 = vand.u32 2147483647, %v7480
        %v7483 = vcvt.s32.f32 %v7476
        %v7484 = vmul.f32 %v7483, %v7481
        %v7485 = vxor.u32 %v7484, 2147483648
        %v7486 = vsel %vm7365, %v7485, %v7484
        %v7487 = vsub.s32 4, %v7463
        %v7488 = vsel %vm7365, %v7487, %v7463
        %v7489 = vsel %vm7364, %v401, %v7486
        %v7490 = vsel %vm7364, 0, %v7488
        %v7491 = vmul.f32 %v7489, %v7489
        %v7492 = vmul.f32 %v7491, -0.001358992
        %v7493 = vadd.f32 %v7492, 0.041655596
        %v7494 = vmul.f32 %v7491, %v7493
        %v7495 = vadd.f32 %v7494, -0.4999988
        %v7496 = vmul.f32 %v7491, %v7495
        %v7497 = vadd.f32 1.0, %v7496
        %v7498 = vmul.f32 %v7489, %v7489
        %v7499 = vmul.f32 %v7498, -0.00019511016
        %v7500 = vadd.f32 %v7499, 0.008332121
        %v7501 = vmul.f32 %v7498, %v7500
        %v7502 = vadd.f32 %v7501, -0.16666654
        %v7503 = vmul.f32 %v7498, %v7502
        %v7504 = vadd.f32 %v7503, 1.0
        %v7505 = vmul.f32 %v7504, %v7489
        %vm7506 = vweird.f32 %v401
        %v7507 = vadd.s32 %v7490, 3
        %v7508 = vand.u32 %v7507, 3
        %vm7509 = vcmp.lt.s32.totalorder %v7508, 2
        %vm7510 = vcmp.eq.s32.totalorder %v7508, 0
        %v7511 = vxor.u32 %v7505, 2147483648
        %v7512 = vsel %vm7510, %v7497, %v7511
        %vm7513 = vcmp.eq.s32.totalorder %v7508, 2
        %v7514 = vxor.u32 %v7497, 2147483648
        %v7515 = vsel %vm7513, %v7514, %v7505
        %v7516 = vsel %vm7509, %v7512, %v7515
        %v7517 = vsel %vm7506, nan, %v7516
        %v7518 = vand.u32 2147483647, %v514
        %vm7519 = vcmp.le.f32.partialorder %v7518, 0.7853982
        %vm7520 = vcmp.lt.s32.totalorder %v514, 0
        %v7521 = vand.u32 %v514, 2139095040
        %v7522 = vshrl.u32 %v7521, 23
        %v7523 = vsub.s32 %v7522, 127
        %v7524 = vand.u32 2147483647, %v514
        %v7525 = vand.u32 %v7524, 8388607
        %v7526 = vor.u32 %v7525, 8388608
        %v7527 = vsub.s32 0, %v7526
        %v7528 = vadd.s32 %v7523, 1
        %vm7529 = vcmp.gt.s32.totalorder %v7528, 0
        %v7530 = vsel %vm7529, %v7528, 0
        %v7531 = vshrl.u32 %v7530, 5
        %v7532 = vand.u32 %v7530, 31
        %v7533 = vsub.s32 32, %v7532
        %v7534 = vshrl.u32 683565275, %v7533
        %v7535 = vshll.u32 683565275, %v7532
        %v7536 = vshrl.u32 2475754826, %v7533
        %v7537 = vor.u32 %v7535, %v7536
        %v7538 = vshll.u32 2475754826, %v7532
        %v7539 = vshrl.u32 2131351028, %v7533
        %v7540 = vor.u32 %v7538, %v7539
        %v7541 = vshll.u32 2131351028, %v7532
        %v7542 = vshrl.u32 2102212464, %v7533
        %v7543 = vor.u32 %v7541, %v7542
        %v7544 = vshll.u32 2102212464, %v7532
        %v7545 = vshrl.u32 920167782, %v7533
        %v7546 = vor.u32 %v7544, %v7545
        %v7547 = vshll.u32 920167782, %v7532
        %v7548 = vshrl.u32 1326507024, %v7533
        %v7549 = vor.u32 %v7547, %v7548
        %vm7550 = vcmp.lt.s32.totalorder %v7531, 1
        %vm7551 = vcmp.lt.s32.totalorder %v7531, 2
        %vm7552 = vcmp.lt.s32.totalorder %v7531, 3
        %vm7553 = vcmp.lt.s32.totalorder %v7531, 4
        %v7554 = vsel %vm7550, %v7534, %v7537
        %v7555 = vsel %vm7553, %v7543, 2102212464
        %v7556 = vsel %vm7552, %v7540, %v7555
        %v7557 = vsel %vm7551, %v7554, %v7556
        %v7558 = vsel %vm7550, %v7537, %v7540
        %v7559 = vsel %vm7553, %v7546, 920167782
        %v7560 = vsel %vm7552, %v7543, %v7559
        %v7561 = vsel %vm7551, %v7558, %v7560
        %v7562 = vsel %vm7550, %v7540, %v7543
        %v7563 = vsel %vm7553, %v7549, 1326507024
        %v7564 = vsel %vm7552, %v7546, %v7563
        %v7565 = vsel %vm7551, %v7562, %v7564
        %v7566 = vshll.u32 %v7526, 8
        %v7567 = vand.u32 %v7566, 65535
        %v7568 = vshrl.u32 %v7566, 16
        %v7569 = vand.u32 %v7565, 65535
        %v7570 = vshrl.u32 %v7565, 16
        %v7571 = vmul.u32 %v7567, %v7569
        %v7572 = vmul.u32 %v7567, %v7570
        %v7573 = vmul.u32 %v7568, %v7569
        %v7574 = vmul.u32 %v7568, %v7570
        %v7575 = vshll.u32 %v7572, 16
        %v7576 = vshrl.u32 %v7572, 16
        %v7577 = vshll.u32 %v7573, 16
        %v7578 = vshrl.u32 %v7573, 16
        %vm7579 = vc.u32 %v7571, %v7575
        %v7580 = vsel %vm7579, 1, 0
        %v7581 = vadd.s32 %v7571, %v7575
        %v7582 = vadd.s32 %v7574, %v7580
        %vm7583 = vc.u32 %v7581, %v7577
        %v7584 = vsel %vm7583, 1, 0
        %v7585 = vadd.s32 %v7581, %v7577
        %v7586 = vadd.s32 %v7582, %v7584
        %v7587 = vadd.s32 %v7586, %v7576
        %v7588 = vadd.s32 %v7587, %v7578
        %v7589 = vand.u32 %v7566, 65535
        %v7590 = vshrl.u32 %v7566, 16
        %v7591 = vand.u32 %v7561, 65535
        %v7592 = vshrl.u32 %v7561, 16
        %v7593 = vmul.u32 %v7589, %v7591
        %v7594 = vmul.u32 %v7589, %v7592
        %v7595 = vmul.u32 %v7590, %v7591
        %v7596 = vmul.u32 %v7590, %v7592
        %v7597 = vshll.u32 %v7594, 16
        %v7598 = vshrl.u32 %v7594, 16
        %v7599 = vshll.u32 %v7595, 16
        %v7600 = vshrl.u32 %v7595, 16
        %vm7601 = vc.u32 %v7593, %v7597
        %v7602 = vsel %vm7601, 1, 0
        %v7603 = vadd.s32 %v7593, %v7597
        %v7604 = vadd.s32 %v7596, %v7602
        %vm7605 = vc.u32 %v7603, %v7599
        %v7606 = vsel %vm7605, 1, 0
        %v7607 = vadd.s32 %v7603, %v7599
        %v7608 = vadd.s32 %v7604, %v7606
        %v7609 = vadd.s32 %v7608, %v7598
        %v7610 = vadd.s32 %v7609, %v7600
        %v7611 = vmul.u32 %v7566, %v7557
        %v7612 = vadd.s32 %v7588, %v7607
        %vm7613 = vc.u32 %v7588, %v7607
        %v7614 = vadd.s32 %v7610, 1
        %v7615 = vsel %vm7613, %v7614, %v7610
        %v7616 = vadd.s32 %v7611, %v7615
        %v7617 = vadd.s32 %v7616, 536870912
        %v7618 = vshrl.u32 %v7617, 30
        %v7619 = vshll.u32 %v7618, 30
        %v7620 = vsub.s32 %v7616, %v7619
        %vm7621 = vcmp.lt.s32.totalorder %v7620, 0
        %v7622 = vsub.s32 0, %v7620
        %v7623 = vsel %vm7621, %v7622, %v7620
        %v7624 = vclz %v7623
        %v7625 = vsub.s32 %v7624, 2
        %vm7626 = vcmp.gt.s32.totalorder 0, %v7625
        %v7627 = vsel %vm7626, 0, %v7625
        %v7628 = vsub.s32 32, %v7627
        %v7629 = vshll.u32 %v7620, %v7627
        %v7630 = vshrl.u32 %v7612, %v7628
        %v7631 = vor.u32 %v7629, %v7630
        %v7632 = vsub.s32 4294967266, %v7627
        %v7633 = vadd.s32 %v7632, 127
        %v7634 = vshll.u32 %v7633, 23
        %v7635 = vor.u32 4788187, %v7634
        %v7636 = vand.u32 2147483647, %v7635
        %v7638 = vcvt.s32.f32 %v7631
        %v7639 = vmul.f32 %v7638, %v7636
        %v7640 = vxor.u32 %v7639, 2147483648
        %v7641 = vsel %vm7520, %v7640, %v7639
        %v7642 = vsub.s32 4, %v7618
        %v7643 = vsel %vm7520, %v7642, %v7618
        %v7644 = vsel %vm7519, %v514, %v7641
        %v7645 = vsel %vm7519, 0, %v7643
        %v7646 = vmul.f32 %v7644, %v7644
        %v7647 = vmul.f32 %v7646, -0.001358992
        %v7648 = vadd.f32 %v7647, 0.041655596
        %v7649 = vmul.f32 %v7646, %v7648
        %v7650 = vadd.f32 %v7649, -0.4999988
        %v7651 = vmul.f32 %v7646, %v7650
        %v7652 = vadd.f32 1.0, %v7651
        %v7653 = vmul.f32 %v7644, %v7644
        %v7654 = vmul.f32 %v7653, -0.00019511016
        %v7655 = vadd.f32 %v7654, 0.008332121
        %v7656 = vmul.f32 %v7653, %v7655
        %v7657 = vadd.f32 %v7656, -0.16666654
        %v7658 = vmul.f32 %v7653, %v7657
        %v7659 = vadd.f32 %v7658, 1.0
        %v7660 = vmul.f32 %v7659, %v7644
        %vm7661 = vweird.f32 %v514
        %v7662 = vadd.s32 %v7645, 3
        %v7663 = vand.u32 %v7662, 3
        %vm7664 = vcmp.lt.s32.totalorder %v7663, 2
        %vm7665 = vcmp.eq.s32.totalorder %v7663, 0
        %v7666 = vxor.u32 %v7660, 2147483648
        %v7667 = vsel %vm7665, %v7652, %v7666
        %vm7668 = vcmp.eq.s32.totalorder %v7663, 2
        %v7669 = vxor.u32 %v7652, 2147483648
        %v7670 = vsel %vm7668, %v7669, %v7660
        %v7671 = vsel %vm7664, %v7667, %v7670
        %v7672 = vsel %vm7661, nan, %v7671
        %v7673 = vand.u32 2147483647, %v404
        %vm7674 = vcmp.le.f32.partialorder %v7673, 0.7853982
        %vm7675 = vcmp.lt.s32.totalorder %v404, 0
        %v7676 = vand.u32 %v404, 2139095040
        %v7677 = vshrl.u32 %v7676, 23
        %v7678 = vsub.s32 %v7677, 127
        %v7679 = vand.u32 2147483647, %v404
        %v7680 = vand.u32 %v7679, 8388607
        %v7681 = vor.u32 %v7680, 8388608
        %v7682 = vsub.s32 0, %v7681
        %v7683 = vadd.s32 %v7678, 1
        %vm7684 = vcmp.gt.s32.totalorder %v7683, 0
        %v7685 = vsel %vm7684, %v7683, 0
        %v7686 = vshrl.u32 %v7685, 5
        %v7687 = vand.u32 %v7685, 31
        %v7688 = vsub.s32 32, %v7687
        %v7689 = vshrl.u32 683565275, %v7688
        %v7690 = vshll.u32 683565275, %v7687
        %v7691 = vshrl.u32 2475754826, %v7688
        %v7692 = vor.u32 %v7690, %v7691
        %v7693 = vshll.u32 2475754826, %v7687
        %v7694 = vshrl.u32 2131351028, %v7688
        %v7695 = vor.u32 %v7693, %v7694
        %v7696 = vshll.u32 2131351028, %v7687
        %v7697 = vshrl.u32 2102212464, %v7688
        %v7698 = vor.u32 %v7696, %v7697
        %v7699 = vshll.u32 2102212464, %v7687
        %v7700 = vshrl.u32 920167782, %v7688
        %v7701 = vor.u32 %v7699, %v7700
        %v7702 = vshll.u32 920167782, %v7687
        %v7703 = vshrl.u32 1326507024, %v7688
        %v7704 = vor.u32 %v7702, %v7703
        %vm7705 = vcmp.lt.s32.totalorder %v7686, 1
        %vm7706 = vcmp.lt.s32.totalorder %v7686, 2
        %vm7707 = vcmp.lt.s32.totalorder %v7686, 3
        %vm7708 = vcmp.lt.s32.totalorder %v7686, 4
        %v7709 = vsel %vm7705, %v7689, %v7692
        %v7710 = vsel %vm7708, %v7698, 2102212464
        %v7711 = vsel %vm7707, %v7695, %v7710
        %v7712 = vsel %vm7706, %v7709, %v7711
        %v7713 = vsel %vm7705, %v7692, %v7695
        %v7714 = vsel %vm7708, %v7701, 920167782
        %v7715 = vsel %vm7707, %v7698, %v7714
        %v7716 = vsel %vm7706, %v7713, %v7715
        %v7717 = vsel %vm7705, %v7695, %v7698
        %v7718 = vsel %vm7708, %v7704, 1326507024
        %v7719 = vsel %vm7707, %v7701, %v7718
        %v7720 = vsel %vm7706, %v7717, %v7719
        %v7721 = vshll.u32 %v7681, 8
        %v7722 = vand.u32 %v7721, 65535
        %v7723 = vshrl.u32 %v7721, 16
        %v7724 = vand.u32 %v7720, 65535
        %v7725 = vshrl.u32 %v7720, 16
        %v7726 = vmul.u32 %v7722, %v7724
        %v7727 = vmul.u32 %v7722, %v7725
        %v7728 = vmul.u32 %v7723, %v7724
        %v7729 = vmul.u32 %v7723, %v7725
        %v7730 = vshll.u32 %v7727, 16
        %v7731 = vshrl.u32 %v7727, 16
        %v7732 = vshll.u32 %v7728, 16
        %v7733 = vshrl.u32 %v7728, 16
        %vm7734 = vc.u32 %v7726, %v7730
        %v7735 = vsel %vm7734, 1, 0
        %v7736 = vadd.s32 %v7726, %v7730
        %v7737 = vadd.s32 %v7729, %v7735
        %vm7738 = vc.u32 %v7736, %v7732
        %v7739 = vsel %vm7738, 1, 0
        %v7740 = vadd.s32 %v7736, %v7732
        %v7741 = vadd.s32 %v7737, %v7739
        %v7742 = vadd.s32 %v7741, %v7731
        %v7743 = vadd.s32 %v7742, %v7733
        %v7744 = vand.u32 %v7721, 65535
        %v7745 = vshrl.u32 %v7721, 16
        %v7746 = vand.u32 %v7716, 65535
        %v7747 = vshrl.u32 %v7716, 16
        %v7748 = vmul.u32 %v7744, %v7746
        %v7749 = vmul.u32 %v7744, %v7747
        %v7750 = vmul.u32 %v7745, %v7746
        %v7751 = vmul.u32 %v7745, %v7747
        %v7752 = vshll.u32 %v7749, 16
        %v7753 = vshrl.u32 %v7749, 16
        %v7754 = vshll.u32 %v7750, 16
        %v7755 = vshrl.u32 %v7750, 16
        %vm7756 = vc.u32 %v7748, %v7752
        %v7757 = vsel %vm7756, 1, 0
        %v7758 = vadd.s32 %v7748, %v7752
        %v7759 = vadd.s32 %v7751, %v7757
        %vm7760 = vc.u32 %v7758, %v7754
        %v7761 = vsel %vm7760, 1, 0
        %v7762 = vadd.s32 %v7758, %v7754
        %v7763 = vadd.s32 %v7759, %v7761
        %v7764 = vadd.s32 %v7763, %v7753
        %v7765 = vadd.s32 %v7764, %v7755
        %v7766 = vmul.u32 %v7721, %v7712
        %v7767 = vadd.s32 %v7743, %v7762
        %vm7768 = vc.u32 %v7743, %v7762
        %v7769 = vadd.s32 %v7765, 1
        %v7770 = vsel %vm7768, %v7769, %v7765
        %v7771 = vadd.s32 %v7766, %v7770
        %v7772 = vadd.s32 %v7771, 536870912
        %v7773 = vshrl.u32 %v7772, 30
        %v7774 = vshll.u32 %v7773, 30
        %v7775 = vsub.s32 %v7771, %v7774
        %vm7776 = vcmp.lt.s32.totalorder %v7775, 0
        %v7777 = vsub.s32 0, %v7775
        %v7778 = vsel %vm7776, %v7777, %v7775
        %v7779 = vclz %v7778
        %v7780 = vsub.s32 %v7779, 2
        %vm7781 = vcmp.gt.s32.totalorder 0, %v7780
        %v7782 = vsel %vm7781, 0, %v7780
        %v7783 = vsub.s32 32, %v7782
        %v7784 = vshll.u32 %v7775, %v7782
        %v7785 = vshrl.u32 %v7767, %v7783
        %v7786 = vor.u32 %v7784, %v7785
        %v7787 = vsub.s32 4294967266, %v7782
        %v7788 = vadd.s32 %v7787, 127
        %v7789 = vshll.u32 %v7788, 23
        %v7790 = vor.u32 4788187, %v7789
        %v7791 = vand.u32 2147483647, %v7790
        %v7793 = vcvt.s32.f32 %v7786
        %v7794 = vmul.f32 %v7793, %v7791
        %v7795 = vxor.u32 %v7794, 2147483648
        %v7796 = vsel %vm7675, %v7795, %v7794
        %v7797 = vsub.s32 4, %v7773
        %v7798 = vsel %vm7675, %v7797, %v7773
        %v7799 = vsel %vm7674, %v404, %v7796
        %v7800 = vsel %vm7674, 0, %v7798
        %v7801 = vmul.f32 %v7799, %v7799
        %v7802 = vmul.f32 %v7801, -0.001358992
        %v7803 = vadd.f32 %v7802, 0.041655596
        %v7804 = vmul.f32 %v7801, %v7803
        %v7805 = vadd.f32 %v7804, -0.4999988
        %v7806 = vmul.f32 %v7801, %v7805
        %v7807 = vadd.f32 1.0, %v7806
        %v7808 = vmul.f32 %v7799, %v7799
        %v7809 = vmul.f32 %v7808, -0.00019511016
        %v7810 = vadd.f32 %v7809, 0.008332121
        %v7811 = vmul.f32 %v7808, %v7810
        %v7812 = vadd.f32 %v7811, -0.16666654
        %v7813 = vmul.f32 %v7808, %v7812
        %v7814 = vadd.f32 %v7813, 1.0
        %v7815 = vmul.f32 %v7814, %v7799
        %vm7816 = vweird.f32 %v404
        %v7817 = vadd.s32 %v7800, 3
        %v7818 = vand.u32 %v7817, 3
        %vm7819 = vcmp.lt.s32.totalorder %v7818, 2
        %vm7820 = vcmp.eq.s32.totalorder %v7818, 0
        %v7821 = vxor.u32 %v7815, 2147483648
        %v7822 = vsel %vm7820, %v7807, %v7821
        %vm7823 = vcmp.eq.s32.totalorder %v7818, 2
        %v7824 = vxor.u32 %v7807, 2147483648
        %v7825 = vsel %vm7823, %v7824, %v7815
        %v7826 = vsel %vm7819, %v7822, %v7825
        %v7827 = vsel %vm7816, nan, %v7826
        %v7828 = vand.u32 2147483647, %v517
        %vm7829 = vcmp.le.f32.partialorder %v7828, 0.7853982
        %vm7830 = vcmp.lt.s32.totalorder %v517, 0
        %v7831 = vand.u32 %v517, 2139095040
        %v7832 = vshrl.u32 %v7831, 23
        %v7833 = vsub.s32 %v7832, 127
        %v7834 = vand.u32 2147483647, %v517
        %v7835 = vand.u32 %v7834, 8388607
        %v7836 = vor.u32 %v7835, 8388608
        %v7837 = vsub.s32 0, %v7836
        %v7838 = vadd.s32 %v7833, 1
        %vm7839 = vcmp.gt.s32.totalorder %v7838, 0
        %v7840 = vsel %vm7839, %v7838, 0
        %v7841 = vshrl.u32 %v7840, 5
        %v7842 = vand.u32 %v7840, 31
        %v7843 = vsub.s32 32, %v7842
        %v7844 = vshrl.u32 683565275, %v7843
        %v7845 = vshll.u32 683565275, %v7842
        %v7846 = vshrl.u32 2475754826, %v7843
        %v7847 = vor.u32 %v7845, %v7846
        %v7848 = vshll.u32 2475754826, %v7842
        %v7849 = vshrl.u32 2131351028, %v7843
        %v7850 = vor.u32 %v7848, %v7849
        %v7851 = vshll.u32 2131351028, %v7842
        %v7852 = vshrl.u32 2102212464, %v7843
        %v7853 = vor.u32 %v7851, %v7852
        %v7854 = vshll.u32 2102212464, %v7842
        %v7855 = vshrl.u32 920167782, %v7843
        %v7856 = vor.u32 %v7854, %v7855
        %v7857 = vshll.u32 920167782, %v7842
        %v7858 = vshrl.u32 1326507024, %v7843
        %v7859 = vor.u32 %v7857, %v7858
        %vm7860 = vcmp.lt.s32.totalorder %v7841, 1
        %vm7861 = vcmp.lt.s32.totalorder %v7841, 2
        %vm7862 = vcmp.lt.s32.totalorder %v7841, 3
        %vm7863 = vcmp.lt.s32.totalorder %v7841, 4
        %v7864 = vsel %vm7860, %v7844, %v7847
        %v7865 = vsel %vm7863, %v7853, 2102212464
        %v7866 = vsel %vm7862, %v7850, %v7865
        %v7867 = vsel %vm7861, %v7864, %v7866
        %v7868 = vsel %vm7860, %v7847, %v7850
        %v7869 = vsel %vm7863, %v7856, 920167782
        %v7870 = vsel %vm7862, %v7853, %v7869
        %v7871 = vsel %vm7861, %v7868, %v7870
        %v7872 = vsel %vm7860, %v7850, %v7853
        %v7873 = vsel %vm7863, %v7859, 1326507024
        %v7874 = vsel %vm7862, %v7856, %v7873
        %v7875 = vsel %vm7861, %v7872, %v7874
        %v7876 = vshll.u32 %v7836, 8
        %v7877 = vand.u32 %v7876, 65535
        %v7878 = vshrl.u32 %v7876, 16
        %v7879 = vand.u32 %v7875, 65535
        %v7880 = vshrl.u32 %v7875, 16
        %v7881 = vmul.u32 %v7877, %v7879
        %v7882 = vmul.u32 %v7877, %v7880
        %v7883 = vmul.u32 %v7878, %v7879
        %v7884 = vmul.u32 %v7878, %v7880
        %v7885 = vshll.u32 %v7882, 16
        %v7886 = vshrl.u32 %v7882, 16
        %v7887 = vshll.u32 %v7883, 16
        %v7888 = vshrl.u32 %v7883, 16
        %vm7889 = vc.u32 %v7881, %v7885
        %v7890 = vsel %vm7889, 1, 0
        %v7891 = vadd.s32 %v7881, %v7885
        %v7892 = vadd.s32 %v7884, %v7890
        %vm7893 = vc.u32 %v7891, %v7887
        %v7894 = vsel %vm7893, 1, 0
        %v7895 = vadd.s32 %v7891, %v7887
        %v7896 = vadd.s32 %v7892, %v7894
        %v7897 = vadd.s32 %v7896, %v7886
        %v7898 = vadd.s32 %v7897, %v7888
        %v7899 = vand.u32 %v7876, 65535
        %v7900 = vshrl.u32 %v7876, 16
        %v7901 = vand.u32 %v7871, 65535
        %v7902 = vshrl.u32 %v7871, 16
        %v7903 = vmul.u32 %v7899, %v7901
        %v7904 = vmul.u32 %v7899, %v7902
        %v7905 = vmul.u32 %v7900, %v7901
        %v7906 = vmul.u32 %v7900, %v7902
        %v7907 = vshll.u32 %v7904, 16
        %v7908 = vshrl.u32 %v7904, 16
        %v7909 = vshll.u32 %v7905, 16
        %v7910 = vshrl.u32 %v7905, 16
        %vm7911 = vc.u32 %v7903, %v7907
        %v7912 = vsel %vm7911, 1, 0
        %v7913 = vadd.s32 %v7903, %v7907
        %v7914 = vadd.s32 %v7906, %v7912
        %vm7915 = vc.u32 %v7913, %v7909
        %v7916 = vsel %vm7915, 1, 0
        %v7917 = vadd.s32 %v7913, %v7909
        %v7918 = vadd.s32 %v7914, %v7916
        %v7919 = vadd.s32 %v7918, %v7908
        %v7920 = vadd.s32 %v7919, %v7910
        %v7921 = vmul.u32 %v7876, %v7867
        %v7922 = vadd.s32 %v7898, %v7917
        %vm7923 = vc.u32 %v7898, %v7917
        %v7924 = vadd.s32 %v7920, 1
        %v7925 = vsel %vm7923, %v7924, %v7920
        %v7926 = vadd.s32 %v7921, %v7925
        %v7927 = vadd.s32 %v7926, 536870912
        %v7928 = vshrl.u32 %v7927, 30
        %v7929 = vshll.u32 %v7928, 30
        %v7930 = vsub.s32 %v7926, %v7929
        %vm7931 = vcmp.lt.s32.totalorder %v7930, 0
        %v7932 = vsub.s32 0, %v7930
        %v7933 = vsel %vm7931, %v7932, %v7930
        %v7934 = vclz %v7933
        %v7935 = vsub.s32 %v7934, 2
        %vm7936 = vcmp.gt.s32.totalorder 0, %v7935
        %v7937 = vsel %vm7936, 0, %v7935
        %v7938 = vsub.s32 32, %v7937
        %v7939 = vshll.u32 %v7930, %v7937
        %v7940 = vshrl.u32 %v7922, %v7938
        %v7941 = vor.u32 %v7939, %v7940
        %v7942 = vsub.s32 4294967266, %v7937
        %v7943 = vadd.s32 %v7942, 127
        %v7944 = vshll.u32 %v7943, 23
        %v7945 = vor.u32 4788187, %v7944
        %v7946 = vand.u32 2147483647, %v7945
        %v7948 = vcvt.s32.f32 %v7941
        %v7949 = vmul.f32 %v7948, %v7946
        %v7950 = vxor.u32 %v7949, 2147483648
        %v7951 = vsel %vm7830, %v7950, %v7949
        %v7952 = vsub.s32 4, %v7928
        %v7953 = vsel %vm7830, %v7952, %v7928
        %v7954 = vsel %vm7829, %v517, %v7951
        %v7955 = vsel %vm7829, 0, %v7953
        %v7956 = vmul.f32 %v7954, %v7954
        %v7957 = vmul.f32 %v7956, -0.001358992
        %v7958 = vadd.f32 %v7957, 0.041655596
        %v7959 = vmul.f32 %v7956, %v7958
        %v7960 = vadd.f32 %v7959, -0.4999988
        %v7961 = vmul.f32 %v7956, %v7960
        %v7962 = vadd.f32 1.0, %v7961
        %v7963 = vmul.f32 %v7954, %v7954
        %v7964 = vmul.f32 %v7963, -0.00019511016
        %v7965 = vadd.f32 %v7964, 0.008332121
        %v7966 = vmul.f32 %v7963, %v7965
        %v7967 = vadd.f32 %v7966, -0.16666654
        %v7968 = vmul.f32 %v7963, %v7967
        %v7969 = vadd.f32 %v7968, 1.0
        %v7970 = vmul.f32 %v7969, %v7954
        %vm7971 = vweird.f32 %v517
        %v7972 = vadd.s32 %v7955, 3
        %v7973 = vand.u32 %v7972, 3
        %vm7974 = vcmp.lt.s32.totalorder %v7973, 2
        %vm7975 = vcmp.eq.s32.totalorder %v7973, 0
        %v7976 = vxor.u32 %v7970, 2147483648
        %v7977 = vsel %vm7975, %v7962, %v7976
        %vm7978 = vcmp.eq.s32.totalorder %v7973, 2
        %v7979 = vxor.u32 %v7962, 2147483648
        %v7980 = vsel %vm7978, %v7979, %v7970
        %v7981 = vsel %vm7974, %v7977, %v7980
        %v7982 = vsel %vm7971, nan, %v7981
        %v7983 = vand.u32 2147483647, %v407
        %vm7984 = vcmp.le.f32.partialorder %v7983, 0.7853982
        %vm7985 = vcmp.lt.s32.totalorder %v407, 0
        %v7986 = vand.u32 %v407, 2139095040
        %v7987 = vshrl.u32 %v7986, 23
        %v7988 = vsub.s32 %v7987, 127
        %v7989 = vand.u32 2147483647, %v407
        %v7990 = vand.u32 %v7989, 8388607
        %v7991 = vor.u32 %v7990, 8388608
        %v7992 = vsub.s32 0, %v7991
        %v7993 = vadd.s32 %v7988, 1
        %vm7994 = vcmp.gt.s32.totalorder %v7993, 0
        %v7995 = vsel %vm7994, %v7993, 0
        %v7996 = vshrl.u32 %v7995, 5
        %v7997 = vand.u32 %v7995, 31
        %v7998 = vsub.s32 32, %v7997
        %v7999 = vshrl.u32 683565275, %v7998
        %v8000 = vshll.u32 683565275, %v7997
        %v8001 = vshrl.u32 2475754826, %v7998
        %v8002 = vor.u32 %v8000, %v8001
        %v8003 = vshll.u32 2475754826, %v7997
        %v8004 = vshrl.u32 2131351028, %v7998
        %v8005 = vor.u32 %v8003, %v8004
        %v8006 = vshll.u32 2131351028, %v7997
        %v8007 = vshrl.u32 2102212464, %v7998
        %v8008 = vor.u32 %v8006, %v8007
        %v8009 = vshll.u32 2102212464, %v7997
        %v8010 = vshrl.u32 920167782, %v7998
        %v8011 = vor.u32 %v8009, %v8010
        %v8012 = vshll.u32 920167782, %v7997
        %v8013 = vshrl.u32 1326507024, %v7998
        %v8014 = vor.u32 %v8012, %v8013
        %vm8015 = vcmp.lt.s32.totalorder %v7996, 1
        %vm8016 = vcmp.lt.s32.totalorder %v7996, 2
        %vm8017 = vcmp.lt.s32.totalorder %v7996, 3
        %vm8018 = vcmp.lt.s32.totalorder %v7996, 4
        %v8019 = vsel %vm8015, %v7999, %v8002
        %v8020 = vsel %vm8018, %v8008, 2102212464
        %v8021 = vsel %vm8017, %v8005, %v8020
        %v8022 = vsel %vm8016, %v8019, %v8021
        %v8023 = vsel %vm8015, %v8002, %v8005
        %v8024 = vsel %vm8018, %v8011, 920167782
        %v8025 = vsel %vm8017, %v8008, %v8024
        %v8026 = vsel %vm8016, %v8023, %v8025
        %v8027 = vsel %vm8015, %v8005, %v8008
        %v8028 = vsel %vm8018, %v8014, 1326507024
        %v8029 = vsel %vm8017, %v8011, %v8028
        %v8030 = vsel %vm8016, %v8027, %v8029
        %v8031 = vshll.u32 %v7991, 8
        %v8032 = vand.u32 %v8031, 65535
        %v8033 = vshrl.u32 %v8031, 16
        %v8034 = vand.u32 %v8030, 65535
        %v8035 = vshrl.u32 %v8030, 16
        %v8036 = vmul.u32 %v8032, %v8034
        %v8037 = vmul.u32 %v8032, %v8035
        %v8038 = vmul.u32 %v8033, %v8034
        %v8039 = vmul.u32 %v8033, %v8035
        %v8040 = vshll.u32 %v8037, 16
        %v8041 = vshrl.u32 %v8037, 16
        %v8042 = vshll.u32 %v8038, 16
        %v8043 = vshrl.u32 %v8038, 16
        %vm8044 = vc.u32 %v8036, %v8040
        %v8045 = vsel %vm8044, 1, 0
        %v8046 = vadd.s32 %v8036, %v8040
        %v8047 = vadd.s32 %v8039, %v8045
        %vm8048 = vc.u32 %v8046, %v8042
        %v8049 = vsel %vm8048, 1, 0
        %v8050 = vadd.s32 %v8046, %v8042
        %v8051 = vadd.s32 %v8047, %v8049
        %v8052 = vadd.s32 %v8051, %v8041
        %v8053 = vadd.s32 %v8052, %v8043
        %v8054 = vand.u32 %v8031, 65535
        %v8055 = vshrl.u32 %v8031, 16
        %v8056 = vand.u32 %v8026, 65535
        %v8057 = vshrl.u32 %v8026, 16
        %v8058 = vmul.u32 %v8054, %v8056
        %v8059 = vmul.u32 %v8054, %v8057
        %v8060 = vmul.u32 %v8055, %v8056
        %v8061 = vmul.u32 %v8055, %v8057
        %v8062 = vshll.u32 %v8059, 16
        %v8063 = vshrl.u32 %v8059, 16
        %v8064 = vshll.u32 %v8060, 16
        %v8065 = vshrl.u32 %v8060, 16
        %vm8066 = vc.u32 %v8058, %v8062
        %v8067 = vsel %vm8066, 1, 0
        %v8068 = vadd.s32 %v8058, %v8062
        %v8069 = vadd.s32 %v8061, %v8067
        %vm8070 = vc.u32 %v8068, %v8064
        %v8071 = vsel %vm8070, 1, 0
        %v8072 = vadd.s32 %v8068, %v8064
        %v8073 = vadd.s32 %v8069, %v8071
        %v8074 = vadd.s32 %v8073, %v8063
        %v8075 = vadd.s32 %v8074, %v8065
        %v8076 = vmul.u32 %v8031, %v8022
        %v8077 = vadd.s32 %v8053, %v8072
        %vm8078 = vc.u32 %v8053, %v8072
        %v8079 = vadd.s32 %v8075, 1
        %v8080 = vsel %vm8078, %v8079, %v8075
        %v8081 = vadd.s32 %v8076, %v8080
        %v8082 = vadd.s32 %v8081, 536870912
        %v8083 = vshrl.u32 %v8082, 30
        %v8084 = vshll.u32 %v8083, 30
        %v8085 = vsub.s32 %v8081, %v8084
        %vm8086 = vcmp.lt.s32.totalorder %v8085, 0
        %v8087 = vsub.s32 0, %v8085
        %v8088 = vsel %vm8086, %v8087, %v8085
        %v8089 = vclz %v8088
        %v8090 = vsub.s32 %v8089, 2
        %vm8091 = vcmp.gt.s32.totalorder 0, %v8090
        %v8092 = vsel %vm8091, 0, %v8090
        %v8093 = vsub.s32 32, %v8092
        %v8094 = vshll.u32 %v8085, %v8092
        %v8095 = vshrl.u32 %v8077, %v8093
        %v8096 = vor.u32 %v8094, %v8095
        %v8097 = vsub.s32 4294967266, %v8092
        %v8098 = vadd.s32 %v8097, 127
        %v8099 = vshll.u32 %v8098, 23
        %v8100 = vor.u32 4788187, %v8099
        %v8101 = vand.u32 2147483647, %v8100
        %v8103 = vcvt.s32.f32 %v8096
        %v8104 = vmul.f32 %v8103, %v8101
        %v8105 = vxor.u32 %v8104, 2147483648
        %v8106 = vsel %vm7985, %v8105, %v8104
        %v8107 = vsub.s32 4, %v8083
        %v8108 = vsel %vm7985, %v8107, %v8083
        %v8109 = vsel %vm7984, %v407, %v8106
        %v8110 = vsel %vm7984, 0, %v8108
        %v8111 = vmul.f32 %v8109, %v8109
        %v8112 = vmul.f32 %v8111, -0.001358992
        %v8113 = vadd.f32 %v8112, 0.041655596
        %v8114 = vmul.f32 %v8111, %v8113
        %v8115 = vadd.f32 %v8114, -0.4999988
        %v8116 = vmul.f32 %v8111, %v8115
        %v8117 = vadd.f32 1.0, %v8116
        %v8118 = vmul.f32 %v8109, %v8109
        %v8119 = vmul.f32 %v8118, -0.00019511016
        %v8120 = vadd.f32 %v8119, 0.008332121
        %v8121 = vmul.f32 %v8118, %v8120
        %v8122 = vadd.f32 %v8121, -0.16666654
        %v8123 = vmul.f32 %v8118, %v8122
        %v8124 = vadd.f32 %v8123, 1.0
        %v8125 = vmul.f32 %v8124, %v8109
        %vm8126 = vweird.f32 %v407
        %v8127 = vadd.s32 %v8110, 3
        %v8128 = vand.u32 %v8127, 3
        %vm8129 = vcmp.lt.s32.totalorder %v8128, 2
        %vm8130 = vcmp.eq.s32.totalorder %v8128, 0
        %v8131 = vxor.u32 %v8125, 2147483648
        %v8132 = vsel %vm8130, %v8117, %v8131
        %vm8133 = vcmp.eq.s32.totalorder %v8128, 2
        %v8134 = vxor.u32 %v8117, 2147483648
        %v8135 = vsel %vm8133, %v8134, %v8125
        %v8136 = vsel %vm8129, %v8132, %v8135
        %v8137 = vsel %vm8126, nan, %v8136
        %v8138 = vand.u32 2147483647, %v520
        %vm8139 = vcmp.le.f32.partialorder %v8138, 0.7853982
        %vm8140 = vcmp.lt.s32.totalorder %v520, 0
        %v8141 = vand.u32 %v520, 2139095040
        %v8142 = vshrl.u32 %v8141, 23
        %v8143 = vsub.s32 %v8142, 127
        %v8144 = vand.u32 2147483647, %v520
        %v8145 = vand.u32 %v8144, 8388607
        %v8146 = vor.u32 %v8145, 8388608
        %v8147 = vsub.s32 0, %v8146
        %v8148 = vadd.s32 %v8143, 1
        %vm8149 = vcmp.gt.s32.totalorder %v8148, 0
        %v8150 = vsel %vm8149, %v8148, 0
        %v8151 = vshrl.u32 %v8150, 5
        %v8152 = vand.u32 %v8150, 31
        %v8153 = vsub.s32 32, %v8152
        %v8154 = vshrl.u32 683565275, %v8153
        %v8155 = vshll.u32 683565275, %v8152
        %v8156 = vshrl.u32 2475754826, %v8153
        %v8157 = vor.u32 %v8155, %v8156
        %v8158 = vshll.u32 2475754826, %v8152
        %v8159 = vshrl.u32 2131351028, %v8153
        %v8160 = vor.u32 %v8158, %v8159
        %v8161 = vshll.u32 2131351028, %v8152
        %v8162 = vshrl.u32 2102212464, %v8153
        %v8163 = vor.u32 %v8161, %v8162
        %v8164 = vshll.u32 2102212464, %v8152
        %v8165 = vshrl.u32 920167782, %v8153
        %v8166 = vor.u32 %v8164, %v8165
        %v8167 = vshll.u32 920167782, %v8152
        %v8168 = vshrl.u32 1326507024, %v8153
        %v8169 = vor.u32 %v8167, %v8168
        %vm8170 = vcmp.lt.s32.totalorder %v8151, 1
        %vm8171 = vcmp.lt.s32.totalorder %v8151, 2
        %vm8172 = vcmp.lt.s32.totalorder %v8151, 3
        %vm8173 = vcmp.lt.s32.totalorder %v8151, 4
        %v8174 = vsel %vm8170, %v8154, %v8157
        %v8175 = vsel %vm8173, %v8163, 2102212464
        %v8176 = vsel %vm8172, %v8160, %v8175
        %v8177 = vsel %vm8171, %v8174, %v8176
        %v8178 = vsel %vm8170, %v8157, %v8160
        %v8179 = vsel %vm8173, %v8166, 920167782
        %v8180 = vsel %vm8172, %v8163, %v8179
        %v8181 = vsel %vm8171, %v8178, %v8180
        %v8182 = vsel %vm8170, %v8160, %v8163
        %v8183 = vsel %vm8173, %v8169, 1326507024
        %v8184 = vsel %vm8172, %v8166, %v8183
        %v8185 = vsel %vm8171, %v8182, %v8184
        %v8186 = vshll.u32 %v8146, 8
        %v8187 = vand.u32 %v8186, 65535
        %v8188 = vshrl.u32 %v8186, 16
        %v8189 = vand.u32 %v8185, 65535
        %v8190 = vshrl.u32 %v8185, 16
        %v8191 = vmul.u32 %v8187, %v8189
        %v8192 = vmul.u32 %v8187, %v8190
        %v8193 = vmul.u32 %v8188, %v8189
        %v8194 = vmul.u32 %v8188, %v8190
        %v8195 = vshll.u32 %v8192, 16
        %v8196 = vshrl.u32 %v8192, 16
        %v8197 = vshll.u32 %v8193, 16
        %v8198 = vshrl.u32 %v8193, 16
        %vm8199 = vc.u32 %v8191, %v8195
        %v8200 = vsel %vm8199, 1, 0
        %v8201 = vadd.s32 %v8191, %v8195
        %v8202 = vadd.s32 %v8194, %v8200
        %vm8203 = vc.u32 %v8201, %v8197
        %v8204 = vsel %vm8203, 1, 0
        %v8205 = vadd.s32 %v8201, %v8197
        %v8206 = vadd.s32 %v8202, %v8204
        %v8207 = vadd.s32 %v8206, %v8196
        %v8208 = vadd.s32 %v8207, %v8198
        %v8209 = vand.u32 %v8186, 65535
        %v8210 = vshrl.u32 %v8186, 16
        %v8211 = vand.u32 %v8181, 65535
        %v8212 = vshrl.u32 %v8181, 16
        %v8213 = vmul.u32 %v8209, %v8211
        %v8214 = vmul.u32 %v8209, %v8212
        %v8215 = vmul.u32 %v8210, %v8211
        %v8216 = vmul.u32 %v8210, %v8212
        %v8217 = vshll.u32 %v8214, 16
        %v8218 = vshrl.u32 %v8214, 16
        %v8219 = vshll.u32 %v8215, 16
        %v8220 = vshrl.u32 %v8215, 16
        %vm8221 = vc.u32 %v8213, %v8217
        %v8222 = vsel %vm8221, 1, 0
        %v8223 = vadd.s32 %v8213, %v8217
        %v8224 = vadd.s32 %v8216, %v8222
        %vm8225 = vc.u32 %v8223, %v8219
        %v8226 = vsel %vm8225, 1, 0
        %v8227 = vadd.s32 %v8223, %v8219
        %v8228 = vadd.s32 %v8224, %v8226
        %v8229 = vadd.s32 %v8228, %v8218
        %v8230 = vadd.s32 %v8229, %v8220
        %v8231 = vmul.u32 %v8186, %v8177
        %v8232 = vadd.s32 %v8208, %v8227
        %vm8233 = vc.u32 %v8208, %v8227
        %v8234 = vadd.s32 %v8230, 1
        %v8235 = vsel %vm8233, %v8234, %v8230
        %v8236 = vadd.s32 %v8231, %v8235
        %v8237 = vadd.s32 %v8236, 536870912
        %v8238 = vshrl.u32 %v8237, 30
        %v8239 = vshll.u32 %v8238, 30
        %v8240 = vsub.s32 %v8236, %v8239
        %vm8241 = vcmp.lt.s32.totalorder %v8240, 0
        %v8242 = vsub.s32 0, %v8240
        %v8243 = vsel %vm8241, %v8242, %v8240
        %v8244 = vclz %v8243
        %v8245 = vsub.s32 %v8244, 2
        %vm8246 = vcmp.gt.s32.totalorder 0, %v8245
        %v8247 = vsel %vm8246, 0, %v8245
        %v8248 = vsub.s32 32, %v8247
        %v8249 = vshll.u32 %v8240, %v8247
        %v8250 = vshrl.u32 %v8232, %v8248
        %v8251 = vor.u32 %v8249, %v8250
        %v8252 = vsub.s32 4294967266, %v8247
        %v8253 = vadd.s32 %v8252, 127
        %v8254 = vshll.u32 %v8253, 23
        %v8255 = vor.u32 4788187, %v8254
        %v8256 = vand.u32 2147483647, %v8255
        %v8258 = vcvt.s32.f32 %v8251
        %v8259 = vmul.f32 %v8258, %v8256
        %v8260 = vxor.u32 %v8259, 2147483648
        %v8261 = vsel %vm8140, %v8260, %v8259
        %v8262 = vsub.s32 4, %v8238
        %v8263 = vsel %vm8140, %v8262, %v8238
        %v8264 = vsel %vm8139, %v520, %v8261
        %v8265 = vsel %vm8139, 0, %v8263
        %v8266 = vmul.f32 %v8264, %v8264
        %v8267 = vmul.f32 %v8266, -0.001358992
        %v8268 = vadd.f32 %v8267, 0.041655596
        %v8269 = vmul.f32 %v8266, %v8268
        %v8270 = vadd.f32 %v8269, -0.4999988
        %v8271 = vmul.f32 %v8266, %v8270
        %v8272 = vadd.f32 1.0, %v8271
        %v8273 = vmul.f32 %v8264, %v8264
        %v8274 = vmul.f32 %v8273, -0.00019511016
        %v8275 = vadd.f32 %v8274, 0.008332121
        %v8276 = vmul.f32 %v8273, %v8275
        %v8277 = vadd.f32 %v8276, -0.16666654
        %v8278 = vmul.f32 %v8273, %v8277
        %v8279 = vadd.f32 %v8278, 1.0
        %v8280 = vmul.f32 %v8279, %v8264
        %vm8281 = vweird.f32 %v520
        %v8282 = vadd.s32 %v8265, 3
        %v8283 = vand.u32 %v8282, 3
        %vm8284 = vcmp.lt.s32.totalorder %v8283, 2
        %vm8285 = vcmp.eq.s32.totalorder %v8283, 0
        %v8286 = vxor.u32 %v8280, 2147483648
        %v8287 = vsel %vm8285, %v8272, %v8286
        %vm8288 = vcmp.eq.s32.totalorder %v8283, 2
        %v8289 = vxor.u32 %v8272, 2147483648
        %v8290 = vsel %vm8288, %v8289, %v8280
        %v8291 = vsel %vm8284, %v8287, %v8290
        %v8292 = vsel %vm8281, nan, %v8291
        %v8293 = vand.u32 2147483647, %v410
        %vm8294 = vcmp.le.f32.partialorder %v8293, 0.7853982
        %vm8295 = vcmp.lt.s32.totalorder %v410, 0
        %v8296 = vand.u32 %v410, 2139095040
        %v8297 = vshrl.u32 %v8296, 23
        %v8298 = vsub.s32 %v8297, 127
        %v8299 = vand.u32 2147483647, %v410
        %v8300 = vand.u32 %v8299, 8388607
        %v8301 = vor.u32 %v8300, 8388608
        %v8302 = vsub.s32 0, %v8301
        %v8303 = vadd.s32 %v8298, 1
        %vm8304 = vcmp.gt.s32.totalorder %v8303, 0
        %v8305 = vsel %vm8304, %v8303, 0
        %v8306 = vshrl.u32 %v8305, 5
        %v8307 = vand.u32 %v8305, 31
        %v8308 = vsub.s32 32, %v8307
        %v8309 = vshrl.u32 683565275, %v8308
        %v8310 = vshll.u32 683565275, %v8307
        %v8311 = vshrl.u32 2475754826, %v8308
        %v8312 = vor.u32 %v8310, %v8311
        %v8313 = vshll.u32 2475754826, %v8307
        %v8314 = vshrl.u32 2131351028, %v8308
        %v8315 = vor.u32 %v8313, %v8314
        %v8316 = vshll.u32 2131351028, %v8307
        %v8317 = vshrl.u32 2102212464, %v8308
        %v8318 = vor.u32 %v8316, %v8317
        %v8319 = vshll.u32 2102212464, %v8307
        %v8320 = vshrl.u32 920167782, %v8308
        %v8321 = vor.u32 %v8319, %v8320
        %v8322 = vshll.u32 920167782, %v8307
        %v8323 = vshrl.u32 1326507024, %v8308
        %v8324 = vor.u32 %v8322, %v8323
        %vm8325 = vcmp.lt.s32.totalorder %v8306, 1
        %vm8326 = vcmp.lt.s32.totalorder %v8306, 2
        %vm8327 = vcmp.lt.s32.totalorder %v8306, 3
        %vm8328 = vcmp.lt.s32.totalorder %v8306, 4
        %v8329 = vsel %vm8325, %v8309, %v8312
        %v8330 = vsel %vm8328, %v8318, 2102212464
        %v8331 = vsel %vm8327, %v8315, %v8330
        %v8332 = vsel %vm8326, %v8329, %v8331
        %v8333 = vsel %vm8325, %v8312, %v8315
        %v8334 = vsel %vm8328, %v8321, 920167782
        %v8335 = vsel %vm8327, %v8318, %v8334
        %v8336 = vsel %vm8326, %v8333, %v8335
        %v8337 = vsel %vm8325, %v8315, %v8318
        %v8338 = vsel %vm8328, %v8324, 1326507024
        %v8339 = vsel %vm8327, %v8321, %v8338
        %v8340 = vsel %vm8326, %v8337, %v8339
        %v8341 = vshll.u32 %v8301, 8
        %v8342 = vand.u32 %v8341, 65535
        %v8343 = vshrl.u32 %v8341, 16
        %v8344 = vand.u32 %v8340, 65535
        %v8345 = vshrl.u32 %v8340, 16
        %v8346 = vmul.u32 %v8342, %v8344
        %v8347 = vmul.u32 %v8342, %v8345
        %v8348 = vmul.u32 %v8343, %v8344
        %v8349 = vmul.u32 %v8343, %v8345
        %v8350 = vshll.u32 %v8347, 16
        %v8351 = vshrl.u32 %v8347, 16
        %v8352 = vshll.u32 %v8348, 16
        %v8353 = vshrl.u32 %v8348, 16
        %vm8354 = vc.u32 %v8346, %v8350
        %v8355 = vsel %vm8354, 1, 0
        %v8356 = vadd.s32 %v8346, %v8350
        %v8357 = vadd.s32 %v8349, %v8355
        %vm8358 = vc.u32 %v8356, %v8352
        %v8359 = vsel %vm8358, 1, 0
        %v8360 = vadd.s32 %v8356, %v8352
        %v8361 = vadd.s32 %v8357, %v8359
        %v8362 = vadd.s32 %v8361, %v8351
        %v8363 = vadd.s32 %v8362, %v8353
        %v8364 = vand.u32 %v8341, 65535
        %v8365 = vshrl.u32 %v8341, 16
        %v8366 = vand.u32 %v8336, 65535
        %v8367 = vshrl.u32 %v8336, 16
        %v8368 = vmul.u32 %v8364, %v8366
        %v8369 = vmul.u32 %v8364, %v8367
        %v8370 = vmul.u32 %v8365, %v8366
        %v8371 = vmul.u32 %v8365, %v8367
        %v8372 = vshll.u32 %v8369, 16
        %v8373 = vshrl.u32 %v8369, 16
        %v8374 = vshll.u32 %v8370, 16
        %v8375 = vshrl.u32 %v8370, 16
        %vm8376 = vc.u32 %v8368, %v8372
        %v8377 = vsel %vm8376, 1, 0
        %v8378 = vadd.s32 %v8368, %v8372
        %v8379 = vadd.s32 %v8371, %v8377
        %vm8380 = vc.u32 %v8378, %v8374
        %v8381 = vsel %vm8380, 1, 0
        %v8382 = vadd.s32 %v8378, %v8374
        %v8383 = vadd.s32 %v8379, %v8381
        %v8384 = vadd.s32 %v8383, %v8373
        %v8385 = vadd.s32 %v8384, %v8375
        %v8386 = vmul.u32 %v8341, %v8332
        %v8387 = vadd.s32 %v8363, %v8382
        %vm8388 = vc.u32 %v8363, %v8382
        %v8389 = vadd.s32 %v8385, 1
        %v8390 = vsel %vm8388, %v8389, %v8385
        %v8391 = vadd.s32 %v8386, %v8390
        %v8392 = vadd.s32 %v8391, 536870912
        %v8393 = vshrl.u32 %v8392, 30
        %v8394 = vshll.u32 %v8393, 30
        %v8395 = vsub.s32 %v8391, %v8394
        %vm8396 = vcmp.lt.s32.totalorder %v8395, 0
        %v8397 = vsub.s32 0, %v8395
        %v8398 = vsel %vm8396, %v8397, %v8395
        %v8399 = vclz %v8398
        %v8400 = vsub.s32 %v8399, 2
        %vm8401 = vcmp.gt.s32.totalorder 0, %v8400
        %v8402 = vsel %vm8401, 0, %v8400
        %v8403 = vsub.s32 32, %v8402
        %v8404 = vshll.u32 %v8395, %v8402
        %v8405 = vshrl.u32 %v8387, %v8403
        %v8406 = vor.u32 %v8404, %v8405
        %v8407 = vsub.s32 4294967266, %v8402
        %v8408 = vadd.s32 %v8407, 127
        %v8409 = vshll.u32 %v8408, 23
        %v8410 = vor.u32 4788187, %v8409
        %v8411 = vand.u32 2147483647, %v8410
        %v8413 = vcvt.s32.f32 %v8406
        %v8414 = vmul.f32 %v8413, %v8411
        %v8415 = vxor.u32 %v8414, 2147483648
        %v8416 = vsel %vm8295, %v8415, %v8414
        %v8417 = vsub.s32 4, %v8393
        %v8418 = vsel %vm8295, %v8417, %v8393
        %v8419 = vsel %vm8294, %v410, %v8416
        %v8420 = vsel %vm8294, 0, %v8418
        %v8421 = vmul.f32 %v8419, %v8419
        %v8422 = vmul.f32 %v8421, -0.001358992
        %v8423 = vadd.f32 %v8422, 0.041655596
        %v8424 = vmul.f32 %v8421, %v8423
        %v8425 = vadd.f32 %v8424, -0.4999988
        %v8426 = vmul.f32 %v8421, %v8425
        %v8427 = vadd.f32 1.0, %v8426
        %v8428 = vmul.f32 %v8419, %v8419
        %v8429 = vmul.f32 %v8428, -0.00019511016
        %v8430 = vadd.f32 %v8429, 0.008332121
        %v8431 = vmul.f32 %v8428, %v8430
        %v8432 = vadd.f32 %v8431, -0.16666654
        %v8433 = vmul.f32 %v8428, %v8432
        %v8434 = vadd.f32 %v8433, 1.0
        %v8435 = vmul.f32 %v8434, %v8419
        %vm8436 = vweird.f32 %v410
        %v8437 = vadd.s32 %v8420, 3
        %v8438 = vand.u32 %v8437, 3
        %vm8439 = vcmp.lt.s32.totalorder %v8438, 2
        %vm8440 = vcmp.eq.s32.totalorder %v8438, 0
        %v8441 = vxor.u32 %v8435, 2147483648
        %v8442 = vsel %vm8440, %v8427, %v8441
        %vm8443 = vcmp.eq.s32.totalorder %v8438, 2
        %v8444 = vxor.u32 %v8427, 2147483648
        %v8445 = vsel %vm8443, %v8444, %v8435
        %v8446 = vsel %vm8439, %v8442, %v8445
        %v8447 = vsel %vm8436, nan, %v8446
        %v8448 = vand.u32 2147483647, %v523
        %vm8449 = vcmp.le.f32.partialorder %v8448, 0.7853982
        %vm8450 = vcmp.lt.s32.totalorder %v523, 0
        %v8451 = vand.u32 %v523, 2139095040
        %v8452 = vshrl.u32 %v8451, 23
        %v8453 = vsub.s32 %v8452, 127
        %v8454 = vand.u32 2147483647, %v523
        %v8455 = vand.u32 %v8454, 8388607
        %v8456 = vor.u32 %v8455, 8388608
        %v8457 = vsub.s32 0, %v8456
        %v8458 = vadd.s32 %v8453, 1
        %vm8459 = vcmp.gt.s32.totalorder %v8458, 0
        %v8460 = vsel %vm8459, %v8458, 0
        %v8461 = vshrl.u32 %v8460, 5
        %v8462 = vand.u32 %v8460, 31
        %v8463 = vsub.s32 32, %v8462
        %v8464 = vshrl.u32 683565275, %v8463
        %v8465 = vshll.u32 683565275, %v8462
        %v8466 = vshrl.u32 2475754826, %v8463
        %v8467 = vor.u32 %v8465, %v8466
        %v8468 = vshll.u32 2475754826, %v8462
        %v8469 = vshrl.u32 2131351028, %v8463
        %v8470 = vor.u32 %v8468, %v8469
        %v8471 = vshll.u32 2131351028, %v8462
        %v8472 = vshrl.u32 2102212464, %v8463
        %v8473 = vor.u32 %v8471, %v8472
        %v8474 = vshll.u32 2102212464, %v8462
        %v8475 = vshrl.u32 920167782, %v8463
        %v8476 = vor.u32 %v8474, %v8475
        %v8477 = vshll.u32 920167782, %v8462
        %v8478 = vshrl.u32 1326507024, %v8463
        %v8479 = vor.u32 %v8477, %v8478
        %vm8480 = vcmp.lt.s32.totalorder %v8461, 1
        %vm8481 = vcmp.lt.s32.totalorder %v8461, 2
        %vm8482 = vcmp.lt.s32.totalorder %v8461, 3
        %vm8483 = vcmp.lt.s32.totalorder %v8461, 4
        %v8484 = vsel %vm8480, %v8464, %v8467
        %v8485 = vsel %vm8483, %v8473, 2102212464
        %v8486 = vsel %vm8482, %v8470, %v8485
        %v8487 = vsel %vm8481, %v8484, %v8486
        %v8488 = vsel %vm8480, %v8467, %v8470
        %v8489 = vsel %vm8483, %v8476, 920167782
        %v8490 = vsel %vm8482, %v8473, %v8489
        %v8491 = vsel %vm8481, %v8488, %v8490
        %v8492 = vsel %vm8480, %v8470, %v8473
        %v8493 = vsel %vm8483, %v8479, 1326507024
        %v8494 = vsel %vm8482, %v8476, %v8493
        %v8495 = vsel %vm8481, %v8492, %v8494
        %v8496 = vshll.u32 %v8456, 8
        %v8497 = vand.u32 %v8496, 65535
        %v8498 = vshrl.u32 %v8496, 16
        %v8499 = vand.u32 %v8495, 65535
        %v8500 = vshrl.u32 %v8495, 16
        %v8501 = vmul.u32 %v8497, %v8499
        %v8502 = vmul.u32 %v8497, %v8500
        %v8503 = vmul.u32 %v8498, %v8499
        %v8504 = vmul.u32 %v8498, %v8500
        %v8505 = vshll.u32 %v8502, 16
        %v8506 = vshrl.u32 %v8502, 16
        %v8507 = vshll.u32 %v8503, 16
        %v8508 = vshrl.u32 %v8503, 16
        %vm8509 = vc.u32 %v8501, %v8505
        %v8510 = vsel %vm8509, 1, 0
        %v8511 = vadd.s32 %v8501, %v8505
        %v8512 = vadd.s32 %v8504, %v8510
        %vm8513 = vc.u32 %v8511, %v8507
        %v8514 = vsel %vm8513, 1, 0
        %v8515 = vadd.s32 %v8511, %v8507
        %v8516 = vadd.s32 %v8512, %v8514
        %v8517 = vadd.s32 %v8516, %v8506
        %v8518 = vadd.s32 %v8517, %v8508
        %v8519 = vand.u32 %v8496, 65535
        %v8520 = vshrl.u32 %v8496, 16
        %v8521 = vand.u32 %v8491, 65535
        %v8522 = vshrl.u32 %v8491, 16
        %v8523 = vmul.u32 %v8519, %v8521
        %v8524 = vmul.u32 %v8519, %v8522
        %v8525 = vmul.u32 %v8520, %v8521
        %v8526 = vmul.u32 %v8520, %v8522
        %v8527 = vshll.u32 %v8524, 16
        %v8528 = vshrl.u32 %v8524, 16
        %v8529 = vshll.u32 %v8525, 16
        %v8530 = vshrl.u32 %v8525, 16
        %vm8531 = vc.u32 %v8523, %v8527
        %v8532 = vsel %vm8531, 1, 0
        %v8533 = vadd.s32 %v8523, %v8527
        %v8534 = vadd.s32 %v8526, %v8532
        %vm8535 = vc.u32 %v8533, %v8529
        %v8536 = vsel %vm8535, 1, 0
        %v8537 = vadd.s32 %v8533, %v8529
        %v8538 = vadd.s32 %v8534, %v8536
        %v8539 = vadd.s32 %v8538, %v8528
        %v8540 = vadd.s32 %v8539, %v8530
        %v8541 = vmul.u32 %v8496, %v8487
        %v8542 = vadd.s32 %v8518, %v8537
        %vm8543 = vc.u32 %v8518, %v8537
        %v8544 = vadd.s32 %v8540, 1
        %v8545 = vsel %vm8543, %v8544, %v8540
        %v8546 = vadd.s32 %v8541, %v8545
        %v8547 = vadd.s32 %v8546, 536870912
        %v8548 = vshrl.u32 %v8547, 30
        %v8549 = vshll.u32 %v8548, 30
        %v8550 = vsub.s32 %v8546, %v8549
        %vm8551 = vcmp.lt.s32.totalorder %v8550, 0
        %v8552 = vsub.s32 0, %v8550
        %v8553 = vsel %vm8551, %v8552, %v8550
        %v8554 = vclz %v8553
        %v8555 = vsub.s32 %v8554, 2
        %vm8556 = vcmp.gt.s32.totalorder 0, %v8555
        %v8557 = vsel %vm8556, 0, %v8555
        %v8558 = vsub.s32 32, %v8557
        %v8559 = vshll.u32 %v8550, %v8557
        %v8560 = vshrl.u32 %v8542, %v8558
        %v8561 = vor.u32 %v8559, %v8560
        %v8562 = vsub.s32 4294967266, %v8557
        %v8563 = vadd.s32 %v8562, 127
        %v8564 = vshll.u32 %v8563, 23
        %v8565 = vor.u32 4788187, %v8564
        %v8566 = vand.u32 2147483647, %v8565
        %v8568 = vcvt.s32.f32 %v8561
        %v8569 = vmul.f32 %v8568, %v8566
        %v8570 = vxor.u32 %v8569, 2147483648
        %v8571 = vsel %vm8450, %v8570, %v8569
        %v8572 = vsub.s32 4, %v8548
        %v8573 = vsel %vm8450, %v8572, %v8548
        %v8574 = vsel %vm8449, %v523, %v8571
        %v8575 = vsel %vm8449, 0, %v8573
        %v8576 = vmul.f32 %v8574, %v8574
        %v8577 = vmul.f32 %v8576, -0.001358992
        %v8578 = vadd.f32 %v8577, 0.041655596
        %v8579 = vmul.f32 %v8576, %v8578
        %v8580 = vadd.f32 %v8579, -0.4999988
        %v8581 = vmul.f32 %v8576, %v8580
        %v8582 = vadd.f32 1.0, %v8581
        %v8583 = vmul.f32 %v8574, %v8574
        %v8584 = vmul.f32 %v8583, -0.00019511016
        %v8585 = vadd.f32 %v8584, 0.008332121
        %v8586 = vmul.f32 %v8583, %v8585
        %v8587 = vadd.f32 %v8586, -0.16666654
        %v8588 = vmul.f32 %v8583, %v8587
        %v8589 = vadd.f32 %v8588, 1.0
        %v8590 = vmul.f32 %v8589, %v8574
        %vm8591 = vweird.f32 %v523
        %v8592 = vadd.s32 %v8575, 3
        %v8593 = vand.u32 %v8592, 3
        %vm8594 = vcmp.lt.s32.totalorder %v8593, 2
        %vm8595 = vcmp.eq.s32.totalorder %v8593, 0
        %v8596 = vxor.u32 %v8590, 2147483648
        %v8597 = vsel %vm8595, %v8582, %v8596
        %vm8598 = vcmp.eq.s32.totalorder %v8593, 2
        %v8599 = vxor.u32 %v8582, 2147483648
        %v8600 = vsel %vm8598, %v8599, %v8590
        %v8601 = vsel %vm8594, %v8597, %v8600
        %v8602 = vsel %vm8591, nan, %v8601
        %v8603 = vand.u32 2147483647, %v413
        %vm8604 = vcmp.le.f32.partialorder %v8603, 0.7853982
        %vm8605 = vcmp.lt.s32.totalorder %v413, 0
        %v8606 = vand.u32 %v413, 2139095040
        %v8607 = vshrl.u32 %v8606, 23
        %v8608 = vsub.s32 %v8607, 127
        %v8609 = vand.u32 2147483647, %v413
        %v8610 = vand.u32 %v8609, 8388607
        %v8611 = vor.u32 %v8610, 8388608
        %v8612 = vsub.s32 0, %v8611
        %v8613 = vadd.s32 %v8608, 1
        %vm8614 = vcmp.gt.s32.totalorder %v8613, 0
        %v8615 = vsel %vm8614, %v8613, 0
        %v8616 = vshrl.u32 %v8615, 5
        %v8617 = vand.u32 %v8615, 31
        %v8618 = vsub.s32 32, %v8617
        %v8619 = vshrl.u32 683565275, %v8618
        %v8620 = vshll.u32 683565275, %v8617
        %v8621 = vshrl.u32 2475754826, %v8618
        %v8622 = vor.u32 %v8620, %v8621
        %v8623 = vshll.u32 2475754826, %v8617
        %v8624 = vshrl.u32 2131351028, %v8618
        %v8625 = vor.u32 %v8623, %v8624
        %v8626 = vshll.u32 2131351028, %v8617
        %v8627 = vshrl.u32 2102212464, %v8618
        %v8628 = vor.u32 %v8626, %v8627
        %v8629 = vshll.u32 2102212464, %v8617
        %v8630 = vshrl.u32 920167782, %v8618
        %v8631 = vor.u32 %v8629, %v8630
        %v8632 = vshll.u32 920167782, %v8617
        %v8633 = vshrl.u32 1326507024, %v8618
        %v8634 = vor.u32 %v8632, %v8633
        %vm8635 = vcmp.lt.s32.totalorder %v8616, 1
        %vm8636 = vcmp.lt.s32.totalorder %v8616, 2
        %vm8637 = vcmp.lt.s32.totalorder %v8616, 3
        %vm8638 = vcmp.lt.s32.totalorder %v8616, 4
        %v8639 = vsel %vm8635, %v8619, %v8622
        %v8640 = vsel %vm8638, %v8628, 2102212464
        %v8641 = vsel %vm8637, %v8625, %v8640
        %v8642 = vsel %vm8636, %v8639, %v8641
        %v8643 = vsel %vm8635, %v8622, %v8625
        %v8644 = vsel %vm8638, %v8631, 920167782
        %v8645 = vsel %vm8637, %v8628, %v8644
        %v8646 = vsel %vm8636, %v8643, %v8645
        %v8647 = vsel %vm8635, %v8625, %v8628
        %v8648 = vsel %vm8638, %v8634, 1326507024
        %v8649 = vsel %vm8637, %v8631, %v8648
        %v8650 = vsel %vm8636, %v8647, %v8649
        %v8651 = vshll.u32 %v8611, 8
        %v8652 = vand.u32 %v8651, 65535
        %v8653 = vshrl.u32 %v8651, 16
        %v8654 = vand.u32 %v8650, 65535
        %v8655 = vshrl.u32 %v8650, 16
        %v8656 = vmul.u32 %v8652, %v8654
        %v8657 = vmul.u32 %v8652, %v8655
        %v8658 = vmul.u32 %v8653, %v8654
        %v8659 = vmul.u32 %v8653, %v8655
        %v8660 = vshll.u32 %v8657, 16
        %v8661 = vshrl.u32 %v8657, 16
        %v8662 = vshll.u32 %v8658, 16
        %v8663 = vshrl.u32 %v8658, 16
        %vm8664 = vc.u32 %v8656, %v8660
        %v8665 = vsel %vm8664, 1, 0
        %v8666 = vadd.s32 %v8656, %v8660
        %v8667 = vadd.s32 %v8659, %v8665
        %vm8668 = vc.u32 %v8666, %v8662
        %v8669 = vsel %vm8668, 1, 0
        %v8670 = vadd.s32 %v8666, %v8662
        %v8671 = vadd.s32 %v8667, %v8669
        %v8672 = vadd.s32 %v8671, %v8661
        %v8673 = vadd.s32 %v8672, %v8663
        %v8674 = vand.u32 %v8651, 65535
        %v8675 = vshrl.u32 %v8651, 16
        %v8676 = vand.u32 %v8646, 65535
        %v8677 = vshrl.u32 %v8646, 16
        %v8678 = vmul.u32 %v8674, %v8676
        %v8679 = vmul.u32 %v8674, %v8677
        %v8680 = vmul.u32 %v8675, %v8676
        %v8681 = vmul.u32 %v8675, %v8677
        %v8682 = vshll.u32 %v8679, 16
        %v8683 = vshrl.u32 %v8679, 16
        %v8684 = vshll.u32 %v8680, 16
        %v8685 = vshrl.u32 %v8680, 16
        %vm8686 = vc.u32 %v8678, %v8682
        %v8687 = vsel %vm8686, 1, 0
        %v8688 = vadd.s32 %v8678, %v8682
        %v8689 = vadd.s32 %v8681, %v8687
        %vm8690 = vc.u32 %v8688, %v8684
        %v8691 = vsel %vm8690, 1, 0
        %v8692 = vadd.s32 %v8688, %v8684
        %v8693 = vadd.s32 %v8689, %v8691
        %v8694 = vadd.s32 %v8693, %v8683
        %v8695 = vadd.s32 %v8694, %v8685
        %v8696 = vmul.u32 %v8651, %v8642
        %v8697 = vadd.s32 %v8673, %v8692
        %vm8698 = vc.u32 %v8673, %v8692
        %v8699 = vadd.s32 %v8695, 1
        %v8700 = vsel %vm8698, %v8699, %v8695
        %v8701 = vadd.s32 %v8696, %v8700
        %v8702 = vadd.s32 %v8701, 536870912
        %v8703 = vshrl.u32 %v8702, 30
        %v8704 = vshll.u32 %v8703, 30
        %v8705 = vsub.s32 %v8701, %v8704
        %vm8706 = vcmp.lt.s32.totalorder %v8705, 0
        %v8707 = vsub.s32 0, %v8705
        %v8708 = vsel %vm8706, %v8707, %v8705
        %v8709 = vclz %v8708
        %v8710 = vsub.s32 %v8709, 2
        %vm8711 = vcmp.gt.s32.totalorder 0, %v8710
        %v8712 = vsel %vm8711, 0, %v8710
        %v8713 = vsub.s32 32, %v8712
        %v8714 = vshll.u32 %v8705, %v8712
        %v8715 = vshrl.u32 %v8697, %v8713
        %v8716 = vor.u32 %v8714, %v8715
        %v8717 = vsub.s32 4294967266, %v8712
        %v8718 = vadd.s32 %v8717, 127
        %v8719 = vshll.u32 %v8718, 23
        %v8720 = vor.u32 4788187, %v8719
        %v8721 = vand.u32 2147483647, %v8720
        %v8723 = vcvt.s32.f32 %v8716
        %v8724 = vmul.f32 %v8723, %v8721
        %v8725 = vxor.u32 %v8724, 2147483648
        %v8726 = vsel %vm8605, %v8725, %v8724
        %v8727 = vsub.s32 4, %v8703
        %v8728 = vsel %vm8605, %v8727, %v8703
        %v8729 = vsel %vm8604, %v413, %v8726
        %v8730 = vsel %vm8604, 0, %v8728
        %v8731 = vmul.f32 %v8729, %v8729
        %v8732 = vmul.f32 %v8731, -0.001358992
        %v8733 = vadd.f32 %v8732, 0.041655596
        %v8734 = vmul.f32 %v8731, %v8733
        %v8735 = vadd.f32 %v8734, -0.4999988
        %v8736 = vmul.f32 %v8731, %v8735
        %v8737 = vadd.f32 1.0, %v8736
        %v8738 = vmul.f32 %v8729, %v8729
        %v8739 = vmul.f32 %v8738, -0.00019511016
        %v8740 = vadd.f32 %v8739, 0.008332121
        %v8741 = vmul.f32 %v8738, %v8740
        %v8742 = vadd.f32 %v8741, -0.16666654
        %v8743 = vmul.f32 %v8738, %v8742
        %v8744 = vadd.f32 %v8743, 1.0
        %v8745 = vmul.f32 %v8744, %v8729
        %vm8746 = vweird.f32 %v413
        %v8747 = vadd.s32 %v8730, 3
        %v8748 = vand.u32 %v8747, 3
        %vm8749 = vcmp.lt.s32.totalorder %v8748, 2
        %vm8750 = vcmp.eq.s32.totalorder %v8748, 0
        %v8751 = vxor.u32 %v8745, 2147483648
        %v8752 = vsel %vm8750, %v8737, %v8751
        %vm8753 = vcmp.eq.s32.totalorder %v8748, 2
        %v8754 = vxor.u32 %v8737, 2147483648
        %v8755 = vsel %vm8753, %v8754, %v8745
        %v8756 = vsel %vm8749, %v8752, %v8755
        %v8757 = vsel %vm8746, nan, %v8756
        %v8758 = vand.u32 2147483647, %v526
        %vm8759 = vcmp.le.f32.partialorder %v8758, 0.7853982
        %vm8760 = vcmp.lt.s32.totalorder %v526, 0
        %v8761 = vand.u32 %v526, 2139095040
        %v8762 = vshrl.u32 %v8761, 23
        %v8763 = vsub.s32 %v8762, 127
        %v8764 = vand.u32 2147483647, %v526
        %v8765 = vand.u32 %v8764, 8388607
        %v8766 = vor.u32 %v8765, 8388608
        %v8767 = vsub.s32 0, %v8766
        %v8768 = vadd.s32 %v8763, 1
        %vm8769 = vcmp.gt.s32.totalorder %v8768, 0
        %v8770 = vsel %vm8769, %v8768, 0
        %v8771 = vshrl.u32 %v8770, 5
        %v8772 = vand.u32 %v8770, 31
        %v8773 = vsub.s32 32, %v8772
        %v8774 = vshrl.u32 683565275, %v8773
        %v8775 = vshll.u32 683565275, %v8772
        %v8776 = vshrl.u32 2475754826, %v8773
        %v8777 = vor.u32 %v8775, %v8776
        %v8778 = vshll.u32 2475754826, %v8772
        %v8779 = vshrl.u32 2131351028, %v8773
        %v8780 = vor.u32 %v8778, %v8779
        %v8781 = vshll.u32 2131351028, %v8772
        %v8782 = vshrl.u32 2102212464, %v8773
        %v8783 = vor.u32 %v8781, %v8782
        %v8784 = vshll.u32 2102212464, %v8772
        %v8785 = vshrl.u32 920167782, %v8773
        %v8786 = vor.u32 %v8784, %v8785
        %v8787 = vshll.u32 920167782, %v8772
        %v8788 = vshrl.u32 1326507024, %v8773
        %v8789 = vor.u32 %v8787, %v8788
        %vm8790 = vcmp.lt.s32.totalorder %v8771, 1
        %vm8791 = vcmp.lt.s32.totalorder %v8771, 2
        %vm8792 = vcmp.lt.s32.totalorder %v8771, 3
        %vm8793 = vcmp.lt.s32.totalorder %v8771, 4
        %v8794 = vsel %vm8790, %v8774, %v8777
        %v8795 = vsel %vm8793, %v8783, 2102212464
        %v8796 = vsel %vm8792, %v8780, %v8795
        %v8797 = vsel %vm8791, %v8794, %v8796
        %v8798 = vsel %vm8790, %v8777, %v8780
        %v8799 = vsel %vm8793, %v8786, 920167782
        %v8800 = vsel %vm8792, %v8783, %v8799
        %v8801 = vsel %vm8791, %v8798, %v8800
        %v8802 = vsel %vm8790, %v8780, %v8783
        %v8803 = vsel %vm8793, %v8789, 1326507024
        %v8804 = vsel %vm8792, %v8786, %v8803
        %v8805 = vsel %vm8791, %v8802, %v8804
        %v8806 = vshll.u32 %v8766, 8
        %v8807 = vand.u32 %v8806, 65535
        %v8808 = vshrl.u32 %v8806, 16
        %v8809 = vand.u32 %v8805, 65535
        %v8810 = vshrl.u32 %v8805, 16
        %v8811 = vmul.u32 %v8807, %v8809
        %v8812 = vmul.u32 %v8807, %v8810
        %v8813 = vmul.u32 %v8808, %v8809
        %v8814 = vmul.u32 %v8808, %v8810
        %v8815 = vshll.u32 %v8812, 16
        %v8816 = vshrl.u32 %v8812, 16
        %v8817 = vshll.u32 %v8813, 16
        %v8818 = vshrl.u32 %v8813, 16
        %vm8819 = vc.u32 %v8811, %v8815
        %v8820 = vsel %vm8819, 1, 0
        %v8821 = vadd.s32 %v8811, %v8815
        %v8822 = vadd.s32 %v8814, %v8820
        %vm8823 = vc.u32 %v8821, %v8817
        %v8824 = vsel %vm8823, 1, 0
        %v8825 = vadd.s32 %v8821, %v8817
        %v8826 = vadd.s32 %v8822, %v8824
        %v8827 = vadd.s32 %v8826, %v8816
        %v8828 = vadd.s32 %v8827, %v8818
        %v8829 = vand.u32 %v8806, 65535
        %v8830 = vshrl.u32 %v8806, 16
        %v8831 = vand.u32 %v8801, 65535
        %v8832 = vshrl.u32 %v8801, 16
        %v8833 = vmul.u32 %v8829, %v8831
        %v8834 = vmul.u32 %v8829, %v8832
        %v8835 = vmul.u32 %v8830, %v8831
        %v8836 = vmul.u32 %v8830, %v8832
        %v8837 = vshll.u32 %v8834, 16
        %v8838 = vshrl.u32 %v8834, 16
        %v8839 = vshll.u32 %v8835, 16
        %v8840 = vshrl.u32 %v8835, 16
        %vm8841 = vc.u32 %v8833, %v8837
        %v8842 = vsel %vm8841, 1, 0
        %v8843 = vadd.s32 %v8833, %v8837
        %v8844 = vadd.s32 %v8836, %v8842
        %vm8845 = vc.u32 %v8843, %v8839
        %v8846 = vsel %vm8845, 1, 0
        %v8847 = vadd.s32 %v8843, %v8839
        %v8848 = vadd.s32 %v8844, %v8846
        %v8849 = vadd.s32 %v8848, %v8838
        %v8850 = vadd.s32 %v8849, %v8840
        %v8851 = vmul.u32 %v8806, %v8797
        %v8852 = vadd.s32 %v8828, %v8847
        %vm8853 = vc.u32 %v8828, %v8847
        %v8854 = vadd.s32 %v8850, 1
        %v8855 = vsel %vm8853, %v8854, %v8850
        %v8856 = vadd.s32 %v8851, %v8855
        %v8857 = vadd.s32 %v8856, 536870912
        %v8858 = vshrl.u32 %v8857, 30
        %v8859 = vshll.u32 %v8858, 30
        %v8860 = vsub.s32 %v8856, %v8859
        %vm8861 = vcmp.lt.s32.totalorder %v8860, 0
        %v8862 = vsub.s32 0, %v8860
        %v8863 = vsel %vm8861, %v8862, %v8860
        %v8864 = vclz %v8863
        %v8865 = vsub.s32 %v8864, 2
        %vm8866 = vcmp.gt.s32.totalorder 0, %v8865
        %v8867 = vsel %vm8866, 0, %v8865
        %v8868 = vsub.s32 32, %v8867
        %v8869 = vshll.u32 %v8860, %v8867
        %v8870 = vshrl.u32 %v8852, %v8868
        %v8871 = vor.u32 %v8869, %v8870
        %v8872 = vsub.s32 4294967266, %v8867
        %v8873 = vadd.s32 %v8872, 127
        %v8874 = vshll.u32 %v8873, 23
        %v8875 = vor.u32 4788187, %v8874
        %v8876 = vand.u32 2147483647, %v8875
        %v8878 = vcvt.s32.f32 %v8871
        %v8879 = vmul.f32 %v8878, %v8876
        %v8880 = vxor.u32 %v8879, 2147483648
        %v8881 = vsel %vm8760, %v8880, %v8879
        %v8882 = vsub.s32 4, %v8858
        %v8883 = vsel %vm8760, %v8882, %v8858
        %v8884 = vsel %vm8759, %v526, %v8881
        %v8885 = vsel %vm8759, 0, %v8883
        %v8886 = vmul.f32 %v8884, %v8884
        %v8887 = vmul.f32 %v8886, -0.001358992
        %v8888 = vadd.f32 %v8887, 0.041655596
        %v8889 = vmul.f32 %v8886, %v8888
        %v8890 = vadd.f32 %v8889, -0.4999988
        %v8891 = vmul.f32 %v8886, %v8890
        %v8892 = vadd.f32 1.0, %v8891
        %v8893 = vmul.f32 %v8884, %v8884
        %v8894 = vmul.f32 %v8893, -0.00019511016
        %v8895 = vadd.f32 %v8894, 0.008332121
        %v8896 = vmul.f32 %v8893, %v8895
        %v8897 = vadd.f32 %v8896, -0.16666654
        %v8898 = vmul.f32 %v8893, %v8897
        %v8899 = vadd.f32 %v8898, 1.0
        %v8900 = vmul.f32 %v8899, %v8884
        %vm8901 = vweird.f32 %v526
        %v8902 = vadd.s32 %v8885, 3
        %v8903 = vand.u32 %v8902, 3
        %vm8904 = vcmp.lt.s32.totalorder %v8903, 2
        %vm8905 = vcmp.eq.s32.totalorder %v8903, 0
        %v8906 = vxor.u32 %v8900, 2147483648
        %v8907 = vsel %vm8905, %v8892, %v8906
        %vm8908 = vcmp.eq.s32.totalorder %v8903, 2
        %v8909 = vxor.u32 %v8892, 2147483648
        %v8910 = vsel %vm8908, %v8909, %v8900
        %v8911 = vsel %vm8904, %v8907, %v8910
        %v8912 = vsel %vm8901, nan, %v8911
        %v8913 = vand.u32 2147483647, %v416
        %vm8914 = vcmp.le.f32.partialorder %v8913, 0.7853982
        %vm8915 = vcmp.lt.s32.totalorder %v416, 0
        %v8916 = vand.u32 %v416, 2139095040
        %v8917 = vshrl.u32 %v8916, 23
        %v8918 = vsub.s32 %v8917, 127
        %v8919 = vand.u32 2147483647, %v416
        %v8920 = vand.u32 %v8919, 8388607
        %v8921 = vor.u32 %v8920, 8388608
        %v8922 = vsub.s32 0, %v8921
        %v8923 = vadd.s32 %v8918, 1
        %vm8924 = vcmp.gt.s32.totalorder %v8923, 0
        %v8925 = vsel %vm8924, %v8923, 0
        %v8926 = vshrl.u32 %v8925, 5
        %v8927 = vand.u32 %v8925, 31
        %v8928 = vsub.s32 32, %v8927
        %v8929 = vshrl.u32 683565275, %v8928
        %v8930 = vshll.u32 683565275, %v8927
        %v8931 = vshrl.u32 2475754826, %v8928
        %v8932 = vor.u32 %v8930, %v8931
        %v8933 = vshll.u32 2475754826, %v8927
        %v8934 = vshrl.u32 2131351028, %v8928
        %v8935 = vor.u32 %v8933, %v8934
        %v8936 = vshll.u32 2131351028, %v8927
        %v8937 = vshrl.u32 2102212464, %v8928
        %v8938 = vor.u32 %v8936, %v8937
        %v8939 = vshll.u32 2102212464, %v8927
        %v8940 = vshrl.u32 920167782, %v8928
        %v8941 = vor.u32 %v8939, %v8940
        %v8942 = vshll.u32 920167782, %v8927
        %v8943 = vshrl.u32 1326507024, %v8928
        %v8944 = vor.u32 %v8942, %v8943
        %vm8945 = vcmp.lt.s32.totalorder %v8926, 1
        %vm8946 = vcmp.lt.s32.totalorder %v8926, 2
        %vm8947 = vcmp.lt.s32.totalorder %v8926, 3
        %vm8948 = vcmp.lt.s32.totalorder %v8926, 4
        %v8949 = vsel %vm8945, %v8929, %v8932
        %v8950 = vsel %vm8948, %v8938, 2102212464
        %v8951 = vsel %vm8947, %v8935, %v8950
        %v8952 = vsel %vm8946, %v8949, %v8951
        %v8953 = vsel %vm8945, %v8932, %v8935
        %v8954 = vsel %vm8948, %v8941, 920167782
        %v8955 = vsel %vm8947, %v8938, %v8954
        %v8956 = vsel %vm8946, %v8953, %v8955
        %v8957 = vsel %vm8945, %v8935, %v8938
        %v8958 = vsel %vm8948, %v8944, 1326507024
        %v8959 = vsel %vm8947, %v8941, %v8958
        %v8960 = vsel %vm8946, %v8957, %v8959
        %v8961 = vshll.u32 %v8921, 8
        %v8962 = vand.u32 %v8961, 65535
        %v8963 = vshrl.u32 %v8961, 16
        %v8964 = vand.u32 %v8960, 65535
        %v8965 = vshrl.u32 %v8960, 16
        %v8966 = vmul.u32 %v8962, %v8964
        %v8967 = vmul.u32 %v8962, %v8965
        %v8968 = vmul.u32 %v8963, %v8964
        %v8969 = vmul.u32 %v8963, %v8965
        %v8970 = vshll.u32 %v8967, 16
        %v8971 = vshrl.u32 %v8967, 16
        %v8972 = vshll.u32 %v8968, 16
        %v8973 = vshrl.u32 %v8968, 16
        %vm8974 = vc.u32 %v8966, %v8970
        %v8975 = vsel %vm8974, 1, 0
        %v8976 = vadd.s32 %v8966, %v8970
        %v8977 = vadd.s32 %v8969, %v8975
        %vm8978 = vc.u32 %v8976, %v8972
        %v8979 = vsel %vm8978, 1, 0
        %v8980 = vadd.s32 %v8976, %v8972
        %v8981 = vadd.s32 %v8977, %v8979
        %v8982 = vadd.s32 %v8981, %v8971
        %v8983 = vadd.s32 %v8982, %v8973
        %v8984 = vand.u32 %v8961, 65535
        %v8985 = vshrl.u32 %v8961, 16
        %v8986 = vand.u32 %v8956, 65535
        %v8987 = vshrl.u32 %v8956, 16
        %v8988 = vmul.u32 %v8984, %v8986
        %v8989 = vmul.u32 %v8984, %v8987
        %v8990 = vmul.u32 %v8985, %v8986
        %v8991 = vmul.u32 %v8985, %v8987
        %v8992 = vshll.u32 %v8989, 16
        %v8993 = vshrl.u32 %v8989, 16
        %v8994 = vshll.u32 %v8990, 16
        %v8995 = vshrl.u32 %v8990, 16
        %vm8996 = vc.u32 %v8988, %v8992
        %v8997 = vsel %vm8996, 1, 0
        %v8998 = vadd.s32 %v8988, %v8992
        %v8999 = vadd.s32 %v8991, %v8997
        %vm9000 = vc.u32 %v8998, %v8994
        %v9001 = vsel %vm9000, 1, 0
        %v9002 = vadd.s32 %v8998, %v8994
        %v9003 = vadd.s32 %v8999, %v9001
        %v9004 = vadd.s32 %v9003, %v8993
        %v9005 = vadd.s32 %v9004, %v8995
        %v9006 = vmul.u32 %v8961, %v8952
        %v9007 = vadd.s32 %v8983, %v9002
        %vm9008 = vc.u32 %v8983, %v9002
        %v9009 = vadd.s32 %v9005, 1
        %v9010 = vsel %vm9008, %v9009, %v9005
        %v9011 = vadd.s32 %v9006, %v9010
        %v9012 = vadd.s32 %v9011, 536870912
        %v9013 = vshrl.u32 %v9012, 30
        %v9014 = vshll.u32 %v9013, 30
        %v9015 = vsub.s32 %v9011, %v9014
        %vm9016 = vcmp.lt.s32.totalorder %v9015, 0
        %v9017 = vsub.s32 0, %v9015
        %v9018 = vsel %vm9016, %v9017, %v9015
        %v9019 = vclz %v9018
        %v9020 = vsub.s32 %v9019, 2
        %vm9021 = vcmp.gt.s32.totalorder 0, %v9020
        %v9022 = vsel %vm9021, 0, %v9020
        %v9023 = vsub.s32 32, %v9022
        %v9024 = vshll.u32 %v9015, %v9022
        %v9025 = vshrl.u32 %v9007, %v9023
        %v9026 = vor.u32 %v9024, %v9025
        %v9027 = vsub.s32 4294967266, %v9022
        %v9028 = vadd.s32 %v9027, 127
        %v9029 = vshll.u32 %v9028, 23
        %v9030 = vor.u32 4788187, %v9029
        %v9031 = vand.u32 2147483647, %v9030
        %v9033 = vcvt.s32.f32 %v9026
        %v9034 = vmul.f32 %v9033, %v9031
        %v9035 = vxor.u32 %v9034, 2147483648
        %v9036 = vsel %vm8915, %v9035, %v9034
        %v9037 = vsub.s32 4, %v9013
        %v9038 = vsel %vm8915, %v9037, %v9013
        %v9039 = vsel %vm8914, %v416, %v9036
        %v9040 = vsel %vm8914, 0, %v9038
        %v9041 = vmul.f32 %v9039, %v9039
        %v9042 = vmul.f32 %v9041, -0.001358992
        %v9043 = vadd.f32 %v9042, 0.041655596
        %v9044 = vmul.f32 %v9041, %v9043
        %v9045 = vadd.f32 %v9044, -0.4999988
        %v9046 = vmul.f32 %v9041, %v9045
        %v9047 = vadd.f32 1.0, %v9046
        %v9048 = vmul.f32 %v9039, %v9039
        %v9049 = vmul.f32 %v9048, -0.00019511016
        %v9050 = vadd.f32 %v9049, 0.008332121
        %v9051 = vmul.f32 %v9048, %v9050
        %v9052 = vadd.f32 %v9051, -0.16666654
        %v9053 = vmul.f32 %v9048, %v9052
        %v9054 = vadd.f32 %v9053, 1.0
        %v9055 = vmul.f32 %v9054, %v9039
        %vm9056 = vweird.f32 %v416
        %v9057 = vadd.s32 %v9040, 3
        %v9058 = vand.u32 %v9057, 3
        %vm9059 = vcmp.lt.s32.totalorder %v9058, 2
        %vm9060 = vcmp.eq.s32.totalorder %v9058, 0
        %v9061 = vxor.u32 %v9055, 2147483648
        %v9062 = vsel %vm9060, %v9047, %v9061
        %vm9063 = vcmp.eq.s32.totalorder %v9058, 2
        %v9064 = vxor.u32 %v9047, 2147483648
        %v9065 = vsel %vm9063, %v9064, %v9055
        %v9066 = vsel %vm9059, %v9062, %v9065
        %v9067 = vsel %vm9056, nan, %v9066
        %v9068 = vand.u32 2147483647, %v529
        %vm9069 = vcmp.le.f32.partialorder %v9068, 0.7853982
        %vm9070 = vcmp.lt.s32.totalorder %v529, 0
        %v9071 = vand.u32 %v529, 2139095040
        %v9072 = vshrl.u32 %v9071, 23
        %v9073 = vsub.s32 %v9072, 127
        %v9074 = vand.u32 2147483647, %v529
        %v9075 = vand.u32 %v9074, 8388607
        %v9076 = vor.u32 %v9075, 8388608
        %v9077 = vsub.s32 0, %v9076
        %v9078 = vadd.s32 %v9073, 1
        %vm9079 = vcmp.gt.s32.totalorder %v9078, 0
        %v9080 = vsel %vm9079, %v9078, 0
        %v9081 = vshrl.u32 %v9080, 5
        %v9082 = vand.u32 %v9080, 31
        %v9083 = vsub.s32 32, %v9082
        %v9084 = vshrl.u32 683565275, %v9083
        %v9085 = vshll.u32 683565275, %v9082
        %v9086 = vshrl.u32 2475754826, %v9083
        %v9087 = vor.u32 %v9085, %v9086
        %v9088 = vshll.u32 2475754826, %v9082
        %v9089 = vshrl.u32 2131351028, %v9083
        %v9090 = vor.u32 %v9088, %v9089
        %v9091 = vshll.u32 2131351028, %v9082
        %v9092 = vshrl.u32 2102212464, %v9083
        %v9093 = vor.u32 %v9091, %v9092
        %v9094 = vshll.u32 2102212464, %v9082
        %v9095 = vshrl.u32 920167782, %v9083
        %v9096 = vor.u32 %v9094, %v9095
        %v9097 = vshll.u32 920167782, %v9082
        %v9098 = vshrl.u32 1326507024, %v9083
        %v9099 = vor.u32 %v9097, %v9098
        %vm9100 = vcmp.lt.s32.totalorder %v9081, 1
        %vm9101 = vcmp.lt.s32.totalorder %v9081, 2
        %vm9102 = vcmp.lt.s32.totalorder %v9081, 3
        %vm9103 = vcmp.lt.s32.totalorder %v9081, 4
        %v9104 = vsel %vm9100, %v9084, %v9087
        %v9105 = vsel %vm9103, %v9093, 2102212464
        %v9106 = vsel %vm9102, %v9090, %v9105
        %v9107 = vsel %vm9101, %v9104, %v9106
        %v9108 = vsel %vm9100, %v9087, %v9090
        %v9109 = vsel %vm9103, %v9096, 920167782
        %v9110 = vsel %vm9102, %v9093, %v9109
        %v9111 = vsel %vm9101, %v9108, %v9110
        %v9112 = vsel %vm9100, %v9090, %v9093
        %v9113 = vsel %vm9103, %v9099, 1326507024
        %v9114 = vsel %vm9102, %v9096, %v9113
        %v9115 = vsel %vm9101, %v9112, %v9114
        %v9116 = vshll.u32 %v9076, 8
        %v9117 = vand.u32 %v9116, 65535
        %v9118 = vshrl.u32 %v9116, 16
        %v9119 = vand.u32 %v9115, 65535
        %v9120 = vshrl.u32 %v9115, 16
        %v9121 = vmul.u32 %v9117, %v9119
        %v9122 = vmul.u32 %v9117, %v9120
        %v9123 = vmul.u32 %v9118, %v9119
        %v9124 = vmul.u32 %v9118, %v9120
        %v9125 = vshll.u32 %v9122, 16
        %v9126 = vshrl.u32 %v9122, 16
        %v9127 = vshll.u32 %v9123, 16
        %v9128 = vshrl.u32 %v9123, 16
        %vm9129 = vc.u32 %v9121, %v9125
        %v9130 = vsel %vm9129, 1, 0
        %v9131 = vadd.s32 %v9121, %v9125
        %v9132 = vadd.s32 %v9124, %v9130
        %vm9133 = vc.u32 %v9131, %v9127
        %v9134 = vsel %vm9133, 1, 0
        %v9135 = vadd.s32 %v9131, %v9127
        %v9136 = vadd.s32 %v9132, %v9134
        %v9137 = vadd.s32 %v9136, %v9126
        %v9138 = vadd.s32 %v9137, %v9128
        %v9139 = vand.u32 %v9116, 65535
        %v9140 = vshrl.u32 %v9116, 16
        %v9141 = vand.u32 %v9111, 65535
        %v9142 = vshrl.u32 %v9111, 16
        %v9143 = vmul.u32 %v9139, %v9141
        %v9144 = vmul.u32 %v9139, %v9142
        %v9145 = vmul.u32 %v9140, %v9141
        %v9146 = vmul.u32 %v9140, %v9142
        %v9147 = vshll.u32 %v9144, 16
        %v9148 = vshrl.u32 %v9144, 16
        %v9149 = vshll.u32 %v9145, 16
        %v9150 = vshrl.u32 %v9145, 16
        %vm9151 = vc.u32 %v9143, %v9147
        %v9152 = vsel %vm9151, 1, 0
        %v9153 = vadd.s32 %v9143, %v9147
        %v9154 = vadd.s32 %v9146, %v9152
        %vm9155 = vc.u32 %v9153, %v9149
        %v9156 = vsel %vm9155, 1, 0
        %v9157 = vadd.s32 %v9153, %v9149
        %v9158 = vadd.s32 %v9154, %v9156
        %v9159 = vadd.s32 %v9158, %v9148
        %v9160 = vadd.s32 %v9159, %v9150
        %v9161 = vmul.u32 %v9116, %v9107
        %v9162 = vadd.s32 %v9138, %v9157
        %vm9163 = vc.u32 %v9138, %v9157
        %v9164 = vadd.s32 %v9160, 1
        %v9165 = vsel %vm9163, %v9164, %v9160
        %v9166 = vadd.s32 %v9161, %v9165
        %v9167 = vadd.s32 %v9166, 536870912
        %v9168 = vshrl.u32 %v9167, 30
        %v9169 = vshll.u32 %v9168, 30
        %v9170 = vsub.s32 %v9166, %v9169
        %vm9171 = vcmp.lt.s32.totalorder %v9170, 0
        %v9172 = vsub.s32 0, %v9170
        %v9173 = vsel %vm9171, %v9172, %v9170
        %v9174 = vclz %v9173
        %v9175 = vsub.s32 %v9174, 2
        %vm9176 = vcmp.gt.s32.totalorder 0, %v9175
        %v9177 = vsel %vm9176, 0, %v9175
        %v9178 = vsub.s32 32, %v9177
        %v9179 = vshll.u32 %v9170, %v9177
        %v9180 = vshrl.u32 %v9162, %v9178
        %v9181 = vor.u32 %v9179, %v9180
        %v9182 = vsub.s32 4294967266, %v9177
        %v9183 = vadd.s32 %v9182, 127
        %v9184 = vshll.u32 %v9183, 23
        %v9185 = vor.u32 4788187, %v9184
        %v9186 = vand.u32 2147483647, %v9185
        %v9188 = vcvt.s32.f32 %v9181
        %v9189 = vmul.f32 %v9188, %v9186
        %v9190 = vxor.u32 %v9189, 2147483648
        %v9191 = vsel %vm9070, %v9190, %v9189
        %v9192 = vsub.s32 4, %v9168
        %v9193 = vsel %vm9070, %v9192, %v9168
        %v9194 = vsel %vm9069, %v529, %v9191
        %v9195 = vsel %vm9069, 0, %v9193
        %v9196 = vmul.f32 %v9194, %v9194
        %v9197 = vmul.f32 %v9196, -0.001358992
        %v9198 = vadd.f32 %v9197, 0.041655596
        %v9199 = vmul.f32 %v9196, %v9198
        %v9200 = vadd.f32 %v9199, -0.4999988
        %v9201 = vmul.f32 %v9196, %v9200
        %v9202 = vadd.f32 1.0, %v9201
        %v9203 = vmul.f32 %v9194, %v9194
        %v9204 = vmul.f32 %v9203, -0.00019511016
        %v9205 = vadd.f32 %v9204, 0.008332121
        %v9206 = vmul.f32 %v9203, %v9205
        %v9207 = vadd.f32 %v9206, -0.16666654
        %v9208 = vmul.f32 %v9203, %v9207
        %v9209 = vadd.f32 %v9208, 1.0
        %v9210 = vmul.f32 %v9209, %v9194
        %vm9211 = vweird.f32 %v529
        %v9212 = vadd.s32 %v9195, 3
        %v9213 = vand.u32 %v9212, 3
        %vm9214 = vcmp.lt.s32.totalorder %v9213, 2
        %vm9215 = vcmp.eq.s32.totalorder %v9213, 0
        %v9216 = vxor.u32 %v9210, 2147483648
        %v9217 = vsel %vm9215, %v9202, %v9216
        %vm9218 = vcmp.eq.s32.totalorder %v9213, 2
        %v9219 = vxor.u32 %v9202, 2147483648
        %v9220 = vsel %vm9218, %v9219, %v9210
        %v9221 = vsel %vm9214, %v9217, %v9220
        %v9222 = vsel %vm9211, nan, %v9221
        %v9223 = vand.u32 2147483647, %v419
        %vm9224 = vcmp.le.f32.partialorder %v9223, 0.7853982
        %vm9225 = vcmp.lt.s32.totalorder %v419, 0
        %v9226 = vand.u32 %v419, 2139095040
        %v9227 = vshrl.u32 %v9226, 23
        %v9228 = vsub.s32 %v9227, 127
        %v9229 = vand.u32 2147483647, %v419
        %v9230 = vand.u32 %v9229, 8388607
        %v9231 = vor.u32 %v9230, 8388608
        %v9232 = vsub.s32 0, %v9231
        %v9233 = vadd.s32 %v9228, 1
        %vm9234 = vcmp.gt.s32.totalorder %v9233, 0
        %v9235 = vsel %vm9234, %v9233, 0
        %v9236 = vshrl.u32 %v9235, 5
        %v9237 = vand.u32 %v9235, 31
        %v9238 = vsub.s32 32, %v9237
        %v9239 = vshrl.u32 683565275, %v9238
        %v9240 = vshll.u32 683565275, %v9237
        %v9241 = vshrl.u32 2475754826, %v9238
        %v9242 = vor.u32 %v9240, %v9241
        %v9243 = vshll.u32 2475754826, %v9237
        %v9244 = vshrl.u32 2131351028, %v9238
        %v9245 = vor.u32 %v9243, %v9244
        %v9246 = vshll.u32 2131351028, %v9237
        %v9247 = vshrl.u32 2102212464, %v9238
        %v9248 = vor.u32 %v9246, %v9247
        %v9249 = vshll.u32 2102212464, %v9237
        %v9250 = vshrl.u32 920167782, %v9238
        %v9251 = vor.u32 %v9249, %v9250
        %v9252 = vshll.u32 920167782, %v9237
        %v9253 = vshrl.u32 1326507024, %v9238
        %v9254 = vor.u32 %v9252, %v9253
        %vm9255 = vcmp.lt.s32.totalorder %v9236, 1
        %vm9256 = vcmp.lt.s32.totalorder %v9236, 2
        %vm9257 = vcmp.lt.s32.totalorder %v9236, 3
        %vm9258 = vcmp.lt.s32.totalorder %v9236, 4
        %v9259 = vsel %vm9255, %v9239, %v9242
        %v9260 = vsel %vm9258, %v9248, 2102212464
        %v9261 = vsel %vm9257, %v9245, %v9260
        %v9262 = vsel %vm9256, %v9259, %v9261
        %v9263 = vsel %vm9255, %v9242, %v9245
        %v9264 = vsel %vm9258, %v9251, 920167782
        %v9265 = vsel %vm9257, %v9248, %v9264
        %v9266 = vsel %vm9256, %v9263, %v9265
        %v9267 = vsel %vm9255, %v9245, %v9248
        %v9268 = vsel %vm9258, %v9254, 1326507024
        %v9269 = vsel %vm9257, %v9251, %v9268
        %v9270 = vsel %vm9256, %v9267, %v9269
        %v9271 = vshll.u32 %v9231, 8
        %v9272 = vand.u32 %v9271, 65535
        %v9273 = vshrl.u32 %v9271, 16
        %v9274 = vand.u32 %v9270, 65535
        %v9275 = vshrl.u32 %v9270, 16
        %v9276 = vmul.u32 %v9272, %v9274
        %v9277 = vmul.u32 %v9272, %v9275
        %v9278 = vmul.u32 %v9273, %v9274
        %v9279 = vmul.u32 %v9273, %v9275
        %v9280 = vshll.u32 %v9277, 16
        %v9281 = vshrl.u32 %v9277, 16
        %v9282 = vshll.u32 %v9278, 16
        %v9283 = vshrl.u32 %v9278, 16
        %vm9284 = vc.u32 %v9276, %v9280
        %v9285 = vsel %vm9284, 1, 0
        %v9286 = vadd.s32 %v9276, %v9280
        %v9287 = vadd.s32 %v9279, %v9285
        %vm9288 = vc.u32 %v9286, %v9282
        %v9289 = vsel %vm9288, 1, 0
        %v9290 = vadd.s32 %v9286, %v9282
        %v9291 = vadd.s32 %v9287, %v9289
        %v9292 = vadd.s32 %v9291, %v9281
        %v9293 = vadd.s32 %v9292, %v9283
        %v9294 = vand.u32 %v9271, 65535
        %v9295 = vshrl.u32 %v9271, 16
        %v9296 = vand.u32 %v9266, 65535
        %v9297 = vshrl.u32 %v9266, 16
        %v9298 = vmul.u32 %v9294, %v9296
        %v9299 = vmul.u32 %v9294, %v9297
        %v9300 = vmul.u32 %v9295, %v9296
        %v9301 = vmul.u32 %v9295, %v9297
        %v9302 = vshll.u32 %v9299, 16
        %v9303 = vshrl.u32 %v9299, 16
        %v9304 = vshll.u32 %v9300, 16
        %v9305 = vshrl.u32 %v9300, 16
        %vm9306 = vc.u32 %v9298, %v9302
        %v9307 = vsel %vm9306, 1, 0
        %v9308 = vadd.s32 %v9298, %v9302
        %v9309 = vadd.s32 %v9301, %v9307
        %vm9310 = vc.u32 %v9308, %v9304
        %v9311 = vsel %vm9310, 1, 0
        %v9312 = vadd.s32 %v9308, %v9304
        %v9313 = vadd.s32 %v9309, %v9311
        %v9314 = vadd.s32 %v9313, %v9303
        %v9315 = vadd.s32 %v9314, %v9305
        %v9316 = vmul.u32 %v9271, %v9262
        %v9317 = vadd.s32 %v9293, %v9312
        %vm9318 = vc.u32 %v9293, %v9312
        %v9319 = vadd.s32 %v9315, 1
        %v9320 = vsel %vm9318, %v9319, %v9315
        %v9321 = vadd.s32 %v9316, %v9320
        %v9322 = vadd.s32 %v9321, 536870912
        %v9323 = vshrl.u32 %v9322, 30
        %v9324 = vshll.u32 %v9323, 30
        %v9325 = vsub.s32 %v9321, %v9324
        %vm9326 = vcmp.lt.s32.totalorder %v9325, 0
        %v9327 = vsub.s32 0, %v9325
        %v9328 = vsel %vm9326, %v9327, %v9325
        %v9329 = vclz %v9328
        %v9330 = vsub.s32 %v9329, 2
        %vm9331 = vcmp.gt.s32.totalorder 0, %v9330
        %v9332 = vsel %vm9331, 0, %v9330
        %v9333 = vsub.s32 32, %v9332
        %v9334 = vshll.u32 %v9325, %v9332
        %v9335 = vshrl.u32 %v9317, %v9333
        %v9336 = vor.u32 %v9334, %v9335
        %v9337 = vsub.s32 4294967266, %v9332
        %v9338 = vadd.s32 %v9337, 127
        %v9339 = vshll.u32 %v9338, 23
        %v9340 = vor.u32 4788187, %v9339
        %v9341 = vand.u32 2147483647, %v9340
        %v9343 = vcvt.s32.f32 %v9336
        %v9344 = vmul.f32 %v9343, %v9341
        %v9345 = vxor.u32 %v9344, 2147483648
        %v9346 = vsel %vm9225, %v9345, %v9344
        %v9347 = vsub.s32 4, %v9323
        %v9348 = vsel %vm9225, %v9347, %v9323
        %v9349 = vsel %vm9224, %v419, %v9346
        %v9350 = vsel %vm9224, 0, %v9348
        %v9351 = vmul.f32 %v9349, %v9349
        %v9352 = vmul.f32 %v9351, -0.001358992
        %v9353 = vadd.f32 %v9352, 0.041655596
        %v9354 = vmul.f32 %v9351, %v9353
        %v9355 = vadd.f32 %v9354, -0.4999988
        %v9356 = vmul.f32 %v9351, %v9355
        %v9357 = vadd.f32 1.0, %v9356
        %v9358 = vmul.f32 %v9349, %v9349
        %v9359 = vmul.f32 %v9358, -0.00019511016
        %v9360 = vadd.f32 %v9359, 0.008332121
        %v9361 = vmul.f32 %v9358, %v9360
        %v9362 = vadd.f32 %v9361, -0.16666654
        %v9363 = vmul.f32 %v9358, %v9362
        %v9364 = vadd.f32 %v9363, 1.0
        %v9365 = vmul.f32 %v9364, %v9349
        %vm9366 = vweird.f32 %v419
        %v9367 = vadd.s32 %v9350, 3
        %v9368 = vand.u32 %v9367, 3
        %vm9369 = vcmp.lt.s32.totalorder %v9368, 2
        %vm9370 = vcmp.eq.s32.totalorder %v9368, 0
        %v9371 = vxor.u32 %v9365, 2147483648
        %v9372 = vsel %vm9370, %v9357, %v9371
        %vm9373 = vcmp.eq.s32.totalorder %v9368, 2
        %v9374 = vxor.u32 %v9357, 2147483648
        %v9375 = vsel %vm9373, %v9374, %v9365
        %v9376 = vsel %vm9369, %v9372, %v9375
        %v9377 = vsel %vm9366, nan, %v9376
        %v9378 = vand.u32 2147483647, %v532
        %vm9379 = vcmp.le.f32.partialorder %v9378, 0.7853982
        %vm9380 = vcmp.lt.s32.totalorder %v532, 0
        %v9381 = vand.u32 %v532, 2139095040
        %v9382 = vshrl.u32 %v9381, 23
        %v9383 = vsub.s32 %v9382, 127
        %v9384 = vand.u32 2147483647, %v532
        %v9385 = vand.u32 %v9384, 8388607
        %v9386 = vor.u32 %v9385, 8388608
        %v9387 = vsub.s32 0, %v9386
        %v9388 = vadd.s32 %v9383, 1
        %vm9389 = vcmp.gt.s32.totalorder %v9388, 0
        %v9390 = vsel %vm9389, %v9388, 0
        %v9391 = vshrl.u32 %v9390, 5
        %v9392 = vand.u32 %v9390, 31
        %v9393 = vsub.s32 32, %v9392
        %v9394 = vshrl.u32 683565275, %v9393
        %v9395 = vshll.u32 683565275, %v9392
        %v9396 = vshrl.u32 2475754826, %v9393
        %v9397 = vor.u32 %v9395, %v9396
        %v9398 = vshll.u32 2475754826, %v9392
        %v9399 = vshrl.u32 2131351028, %v9393
        %v9400 = vor.u32 %v9398, %v9399
        %v9401 = vshll.u32 2131351028, %v9392
        %v9402 = vshrl.u32 2102212464, %v9393
        %v9403 = vor.u32 %v9401, %v9402
        %v9404 = vshll.u32 2102212464, %v9392
        %v9405 = vshrl.u32 920167782, %v9393
        %v9406 = vor.u32 %v9404, %v9405
        %v9407 = vshll.u32 920167782, %v9392
        %v9408 = vshrl.u32 1326507024, %v9393
        %v9409 = vor.u32 %v9407, %v9408
        %vm9410 = vcmp.lt.s32.totalorder %v9391, 1
        %vm9411 = vcmp.lt.s32.totalorder %v9391, 2
        %vm9412 = vcmp.lt.s32.totalorder %v9391, 3
        %vm9413 = vcmp.lt.s32.totalorder %v9391, 4
        %v9414 = vsel %vm9410, %v9394, %v9397
        %v9415 = vsel %vm9413, %v9403, 2102212464
        %v9416 = vsel %vm9412, %v9400, %v9415
        %v9417 = vsel %vm9411, %v9414, %v9416
        %v9418 = vsel %vm9410, %v9397, %v9400
        %v9419 = vsel %vm9413, %v9406, 920167782
        %v9420 = vsel %vm9412, %v9403, %v9419
        %v9421 = vsel %vm9411, %v9418, %v9420
        %v9422 = vsel %vm9410, %v9400, %v9403
        %v9423 = vsel %vm9413, %v9409, 1326507024
        %v9424 = vsel %vm9412, %v9406, %v9423
        %v9425 = vsel %vm9411, %v9422, %v9424
        %v9426 = vshll.u32 %v9386, 8
        %v9427 = vand.u32 %v9426, 65535
        %v9428 = vshrl.u32 %v9426, 16
        %v9429 = vand.u32 %v9425, 65535
        %v9430 = vshrl.u32 %v9425, 16
        %v9431 = vmul.u32 %v9427, %v9429
        %v9432 = vmul.u32 %v9427, %v9430
        %v9433 = vmul.u32 %v9428, %v9429
        %v9434 = vmul.u32 %v9428, %v9430
        %v9435 = vshll.u32 %v9432, 16
        %v9436 = vshrl.u32 %v9432, 16
        %v9437 = vshll.u32 %v9433, 16
        %v9438 = vshrl.u32 %v9433, 16
        %vm9439 = vc.u32 %v9431, %v9435
        %v9440 = vsel %vm9439, 1, 0
        %v9441 = vadd.s32 %v9431, %v9435
        %v9442 = vadd.s32 %v9434, %v9440
        %vm9443 = vc.u32 %v9441, %v9437
        %v9444 = vsel %vm9443, 1, 0
        %v9445 = vadd.s32 %v9441, %v9437
        %v9446 = vadd.s32 %v9442, %v9444
        %v9447 = vadd.s32 %v9446, %v9436
        %v9448 = vadd.s32 %v9447, %v9438
        %v9449 = vand.u32 %v9426, 65535
        %v9450 = vshrl.u32 %v9426, 16
        %v9451 = vand.u32 %v9421, 65535
        %v9452 = vshrl.u32 %v9421, 16
        %v9453 = vmul.u32 %v9449, %v9451
        %v9454 = vmul.u32 %v9449, %v9452
        %v9455 = vmul.u32 %v9450, %v9451
        %v9456 = vmul.u32 %v9450, %v9452
        %v9457 = vshll.u32 %v9454, 16
        %v9458 = vshrl.u32 %v9454, 16
        %v9459 = vshll.u32 %v9455, 16
        %v9460 = vshrl.u32 %v9455, 16
        %vm9461 = vc.u32 %v9453, %v9457
        %v9462 = vsel %vm9461, 1, 0
        %v9463 = vadd.s32 %v9453, %v9457
        %v9464 = vadd.s32 %v9456, %v9462
        %vm9465 = vc.u32 %v9463, %v9459
        %v9466 = vsel %vm9465, 1, 0
        %v9467 = vadd.s32 %v9463, %v9459
        %v9468 = vadd.s32 %v9464, %v9466
        %v9469 = vadd.s32 %v9468, %v9458
        %v9470 = vadd.s32 %v9469, %v9460
        %v9471 = vmul.u32 %v9426, %v9417
        %v9472 = vadd.s32 %v9448, %v9467
        %vm9473 = vc.u32 %v9448, %v9467
        %v9474 = vadd.s32 %v9470, 1
        %v9475 = vsel %vm9473, %v9474, %v9470
        %v9476 = vadd.s32 %v9471, %v9475
        %v9477 = vadd.s32 %v9476, 536870912
        %v9478 = vshrl.u32 %v9477, 30
        %v9479 = vshll.u32 %v9478, 30
        %v9480 = vsub.s32 %v9476, %v9479
        %vm9481 = vcmp.lt.s32.totalorder %v9480, 0
        %v9482 = vsub.s32 0, %v9480
        %v9483 = vsel %vm9481, %v9482, %v9480
        %v9484 = vclz %v9483
        %v9485 = vsub.s32 %v9484, 2
        %vm9486 = vcmp.gt.s32.totalorder 0, %v9485
        %v9487 = vsel %vm9486, 0, %v9485
        %v9488 = vsub.s32 32, %v9487
        %v9489 = vshll.u32 %v9480, %v9487
        %v9490 = vshrl.u32 %v9472, %v9488
        %v9491 = vor.u32 %v9489, %v9490
        %v9492 = vsub.s32 4294967266, %v9487
        %v9493 = vadd.s32 %v9492, 127
        %v9494 = vshll.u32 %v9493, 23
        %v9495 = vor.u32 4788187, %v9494
        %v9496 = vand.u32 2147483647, %v9495
        %v9498 = vcvt.s32.f32 %v9491
        %v9499 = vmul.f32 %v9498, %v9496
        %v9500 = vxor.u32 %v9499, 2147483648
        %v9501 = vsel %vm9380, %v9500, %v9499
        %v9502 = vsub.s32 4, %v9478
        %v9503 = vsel %vm9380, %v9502, %v9478
        %v9504 = vsel %vm9379, %v532, %v9501
        %v9505 = vsel %vm9379, 0, %v9503
        %v9506 = vmul.f32 %v9504, %v9504
        %v9507 = vmul.f32 %v9506, -0.001358992
        %v9508 = vadd.f32 %v9507, 0.041655596
        %v9509 = vmul.f32 %v9506, %v9508
        %v9510 = vadd.f32 %v9509, -0.4999988
        %v9511 = vmul.f32 %v9506, %v9510
        %v9512 = vadd.f32 1.0, %v9511
        %v9513 = vmul.f32 %v9504, %v9504
        %v9514 = vmul.f32 %v9513, -0.00019511016
        %v9515 = vadd.f32 %v9514, 0.008332121
        %v9516 = vmul.f32 %v9513, %v9515
        %v9517 = vadd.f32 %v9516, -0.16666654
        %v9518 = vmul.f32 %v9513, %v9517
        %v9519 = vadd.f32 %v9518, 1.0
        %v9520 = vmul.f32 %v9519, %v9504
        %vm9521 = vweird.f32 %v532
        %v9522 = vadd.s32 %v9505, 3
        %v9523 = vand.u32 %v9522, 3
        %vm9524 = vcmp.lt.s32.totalorder %v9523, 2
        %vm9525 = vcmp.eq.s32.totalorder %v9523, 0
        %v9526 = vxor.u32 %v9520, 2147483648
        %v9527 = vsel %vm9525, %v9512, %v9526
        %vm9528 = vcmp.eq.s32.totalorder %v9523, 2
        %v9529 = vxor.u32 %v9512, 2147483648
        %v9530 = vsel %vm9528, %v9529, %v9520
        %v9531 = vsel %vm9524, %v9527, %v9530
        %v9532 = vsel %vm9521, nan, %v9531
        %v9533 = vand.u32 2147483647, %v422
        %vm9534 = vcmp.le.f32.partialorder %v9533, 0.7853982
        %vm9535 = vcmp.lt.s32.totalorder %v422, 0
        %v9536 = vand.u32 %v422, 2139095040
        %v9537 = vshrl.u32 %v9536, 23
        %v9538 = vsub.s32 %v9537, 127
        %v9539 = vand.u32 2147483647, %v422
        %v9540 = vand.u32 %v9539, 8388607
        %v9541 = vor.u32 %v9540, 8388608
        %v9542 = vsub.s32 0, %v9541
        %v9543 = vadd.s32 %v9538, 1
        %vm9544 = vcmp.gt.s32.totalorder %v9543, 0
        %v9545 = vsel %vm9544, %v9543, 0
        %v9546 = vshrl.u32 %v9545, 5
        %v9547 = vand.u32 %v9545, 31
        %v9548 = vsub.s32 32, %v9547
        %v9549 = vshrl.u32 683565275, %v9548
        %v9550 = vshll.u32 683565275, %v9547
        %v9551 = vshrl.u32 2475754826, %v9548
        %v9552 = vor.u32 %v9550, %v9551
        %v9553 = vshll.u32 2475754826, %v9547
        %v9554 = vshrl.u32 2131351028, %v9548
        %v9555 = vor.u32 %v9553, %v9554
        %v9556 = vshll.u32 2131351028, %v9547
        %v9557 = vshrl.u32 2102212464, %v9548
        %v9558 = vor.u32 %v9556, %v9557
        %v9559 = vshll.u32 2102212464, %v9547
        %v9560 = vshrl.u32 920167782, %v9548
        %v9561 = vor.u32 %v9559, %v9560
        %v9562 = vshll.u32 920167782, %v9547
        %v9563 = vshrl.u32 1326507024, %v9548
        %v9564 = vor.u32 %v9562, %v9563
        %vm9565 = vcmp.lt.s32.totalorder %v9546, 1
        %vm9566 = vcmp.lt.s32.totalorder %v9546, 2
        %vm9567 = vcmp.lt.s32.totalorder %v9546, 3
        %vm9568 = vcmp.lt.s32.totalorder %v9546, 4
        %v9569 = vsel %vm9565, %v9549, %v9552
        %v9570 = vsel %vm9568, %v9558, 2102212464
        %v9571 = vsel %vm9567, %v9555, %v9570
        %v9572 = vsel %vm9566, %v9569, %v9571
        %v9573 = vsel %vm9565, %v9552, %v9555
        %v9574 = vsel %vm9568, %v9561, 920167782
        %v9575 = vsel %vm9567, %v9558, %v9574
        %v9576 = vsel %vm9566, %v9573, %v9575
        %v9577 = vsel %vm9565, %v9555, %v9558
        %v9578 = vsel %vm9568, %v9564, 1326507024
        %v9579 = vsel %vm9567, %v9561, %v9578
        %v9580 = vsel %vm9566, %v9577, %v9579
        %v9581 = vshll.u32 %v9541, 8
        %v9582 = vand.u32 %v9581, 65535
        %v9583 = vshrl.u32 %v9581, 16
        %v9584 = vand.u32 %v9580, 65535
        %v9585 = vshrl.u32 %v9580, 16
        %v9586 = vmul.u32 %v9582, %v9584
        %v9587 = vmul.u32 %v9582, %v9585
        %v9588 = vmul.u32 %v9583, %v9584
        %v9589 = vmul.u32 %v9583, %v9585
        %v9590 = vshll.u32 %v9587, 16
        %v9591 = vshrl.u32 %v9587, 16
        %v9592 = vshll.u32 %v9588, 16
        %v9593 = vshrl.u32 %v9588, 16
        %vm9594 = vc.u32 %v9586, %v9590
        %v9595 = vsel %vm9594, 1, 0
        %v9596 = vadd.s32 %v9586, %v9590
        %v9597 = vadd.s32 %v9589, %v9595
        %vm9598 = vc.u32 %v9596, %v9592
        %v9599 = vsel %vm9598, 1, 0
        %v9600 = vadd.s32 %v9596, %v9592
        %v9601 = vadd.s32 %v9597, %v9599
        %v9602 = vadd.s32 %v9601, %v9591
        %v9603 = vadd.s32 %v9602, %v9593
        %v9604 = vand.u32 %v9581, 65535
        %v9605 = vshrl.u32 %v9581, 16
        %v9606 = vand.u32 %v9576, 65535
        %v9607 = vshrl.u32 %v9576, 16
        %v9608 = vmul.u32 %v9604, %v9606
        %v9609 = vmul.u32 %v9604, %v9607
        %v9610 = vmul.u32 %v9605, %v9606
        %v9611 = vmul.u32 %v9605, %v9607
        %v9612 = vshll.u32 %v9609, 16
        %v9613 = vshrl.u32 %v9609, 16
        %v9614 = vshll.u32 %v9610, 16
        %v9615 = vshrl.u32 %v9610, 16
        %vm9616 = vc.u32 %v9608, %v9612
        %v9617 = vsel %vm9616, 1, 0
        %v9618 = vadd.s32 %v9608, %v9612
        %v9619 = vadd.s32 %v9611, %v9617
        %vm9620 = vc.u32 %v9618, %v9614
        %v9621 = vsel %vm9620, 1, 0
        %v9622 = vadd.s32 %v9618, %v9614
        %v9623 = vadd.s32 %v9619, %v9621
        %v9624 = vadd.s32 %v9623, %v9613
        %v9625 = vadd.s32 %v9624, %v9615
        %v9626 = vmul.u32 %v9581, %v9572
        %v9627 = vadd.s32 %v9603, %v9622
        %vm9628 = vc.u32 %v9603, %v9622
        %v9629 = vadd.s32 %v9625, 1
        %v9630 = vsel %vm9628, %v9629, %v9625
        %v9631 = vadd.s32 %v9626, %v9630
        %v9632 = vadd.s32 %v9631, 536870912
        %v9633 = vshrl.u32 %v9632, 30
        %v9634 = vshll.u32 %v9633, 30
        %v9635 = vsub.s32 %v9631, %v9634
        %vm9636 = vcmp.lt.s32.totalorder %v9635, 0
        %v9637 = vsub.s32 0, %v9635
        %v9638 = vsel %vm9636, %v9637, %v9635
        %v9639 = vclz %v9638
        %v9640 = vsub.s32 %v9639, 2
        %vm9641 = vcmp.gt.s32.totalorder 0, %v9640
        %v9642 = vsel %vm9641, 0, %v9640
        %v9643 = vsub.s32 32, %v9642
        %v9644 = vshll.u32 %v9635, %v9642
        %v9645 = vshrl.u32 %v9627, %v9643
        %v9646 = vor.u32 %v9644, %v9645
        %v9647 = vsub.s32 4294967266, %v9642
        %v9648 = vadd.s32 %v9647, 127
        %v9649 = vshll.u32 %v9648, 23
        %v9650 = vor.u32 4788187, %v9649
        %v9651 = vand.u32 2147483647, %v9650
        %v9653 = vcvt.s32.f32 %v9646
        %v9654 = vmul.f32 %v9653, %v9651
        %v9655 = vxor.u32 %v9654, 2147483648
        %v9656 = vsel %vm9535, %v9655, %v9654
        %v9657 = vsub.s32 4, %v9633
        %v9658 = vsel %vm9535, %v9657, %v9633
        %v9659 = vsel %vm9534, %v422, %v9656
        %v9660 = vsel %vm9534, 0, %v9658
        %v9661 = vmul.f32 %v9659, %v9659
        %v9662 = vmul.f32 %v9661, -0.001358992
        %v9663 = vadd.f32 %v9662, 0.041655596
        %v9664 = vmul.f32 %v9661, %v9663
        %v9665 = vadd.f32 %v9664, -0.4999988
        %v9666 = vmul.f32 %v9661, %v9665
        %v9667 = vadd.f32 1.0, %v9666
        %v9668 = vmul.f32 %v9659, %v9659
        %v9669 = vmul.f32 %v9668, -0.00019511016
        %v9670 = vadd.f32 %v9669, 0.008332121
        %v9671 = vmul.f32 %v9668, %v9670
        %v9672 = vadd.f32 %v9671, -0.16666654
        %v9673 = vmul.f32 %v9668, %v9672
        %v9674 = vadd.f32 %v9673, 1.0
        %v9675 = vmul.f32 %v9674, %v9659
        %vm9676 = vweird.f32 %v422
        %v9677 = vadd.s32 %v9660, 3
        %v9678 = vand.u32 %v9677, 3
        %vm9679 = vcmp.lt.s32.totalorder %v9678, 2
        %vm9680 = vcmp.eq.s32.totalorder %v9678, 0
        %v9681 = vxor.u32 %v9675, 2147483648
        %v9682 = vsel %vm9680, %v9667, %v9681
        %vm9683 = vcmp.eq.s32.totalorder %v9678, 2
        %v9684 = vxor.u32 %v9667, 2147483648
        %v9685 = vsel %vm9683, %v9684, %v9675
        %v9686 = vsel %vm9679, %v9682, %v9685
        %v9687 = vsel %vm9676, nan, %v9686
        %v9688 = vand.u32 2147483647, %v535
        %vm9689 = vcmp.le.f32.partialorder %v9688, 0.7853982
        %vm9690 = vcmp.lt.s32.totalorder %v535, 0
        %v9691 = vand.u32 %v535, 2139095040
        %v9692 = vshrl.u32 %v9691, 23
        %v9693 = vsub.s32 %v9692, 127
        %v9694 = vand.u32 2147483647, %v535
        %v9695 = vand.u32 %v9694, 8388607
        %v9696 = vor.u32 %v9695, 8388608
        %v9697 = vsub.s32 0, %v9696
        %v9698 = vadd.s32 %v9693, 1
        %vm9699 = vcmp.gt.s32.totalorder %v9698, 0
        %v9700 = vsel %vm9699, %v9698, 0
        %v9701 = vshrl.u32 %v9700, 5
        %v9702 = vand.u32 %v9700, 31
        %v9703 = vsub.s32 32, %v9702
        %v9704 = vshrl.u32 683565275, %v9703
        %v9705 = vshll.u32 683565275, %v9702
        %v9706 = vshrl.u32 2475754826, %v9703
        %v9707 = vor.u32 %v9705, %v9706
        %v9708 = vshll.u32 2475754826, %v9702
        %v9709 = vshrl.u32 2131351028, %v9703
        %v9710 = vor.u32 %v9708, %v9709
        %v9711 = vshll.u32 2131351028, %v9702
        %v9712 = vshrl.u32 2102212464, %v9703
        %v9713 = vor.u32 %v9711, %v9712
        %v9714 = vshll.u32 2102212464, %v9702
        %v9715 = vshrl.u32 920167782, %v9703
        %v9716 = vor.u32 %v9714, %v9715
        %v9717 = vshll.u32 920167782, %v9702
        %v9718 = vshrl.u32 1326507024, %v9703
        %v9719 = vor.u32 %v9717, %v9718
        %vm9720 = vcmp.lt.s32.totalorder %v9701, 1
        %vm9721 = vcmp.lt.s32.totalorder %v9701, 2
        %vm9722 = vcmp.lt.s32.totalorder %v9701, 3
        %vm9723 = vcmp.lt.s32.totalorder %v9701, 4
        %v9724 = vsel %vm9720, %v9704, %v9707
        %v9725 = vsel %vm9723, %v9713, 2102212464
        %v9726 = vsel %vm9722, %v9710, %v9725
        %v9727 = vsel %vm9721, %v9724, %v9726
        %v9728 = vsel %vm9720, %v9707, %v9710
        %v9729 = vsel %vm9723, %v9716, 920167782
        %v9730 = vsel %vm9722, %v9713, %v9729
        %v9731 = vsel %vm9721, %v9728, %v9730
        %v9732 = vsel %vm9720, %v9710, %v9713
        %v9733 = vsel %vm9723, %v9719, 1326507024
        %v9734 = vsel %vm9722, %v9716, %v9733
        %v9735 = vsel %vm9721, %v9732, %v9734
        %v9736 = vshll.u32 %v9696, 8
        %v9737 = vand.u32 %v9736, 65535
        %v9738 = vshrl.u32 %v9736, 16
        %v9739 = vand.u32 %v9735, 65535
        %v9740 = vshrl.u32 %v9735, 16
        %v9741 = vmul.u32 %v9737, %v9739
        %v9742 = vmul.u32 %v9737, %v9740
        %v9743 = vmul.u32 %v9738, %v9739
        %v9744 = vmul.u32 %v9738, %v9740
        %v9745 = vshll.u32 %v9742, 16
        %v9746 = vshrl.u32 %v9742, 16
        %v9747 = vshll.u32 %v9743, 16
        %v9748 = vshrl.u32 %v9743, 16
        %vm9749 = vc.u32 %v9741, %v9745
        %v9750 = vsel %vm9749, 1, 0
        %v9751 = vadd.s32 %v9741, %v9745
        %v9752 = vadd.s32 %v9744, %v9750
        %vm9753 = vc.u32 %v9751, %v9747
        %v9754 = vsel %vm9753, 1, 0
        %v9755 = vadd.s32 %v9751, %v9747
        %v9756 = vadd.s32 %v9752, %v9754
        %v9757 = vadd.s32 %v9756, %v9746
        %v9758 = vadd.s32 %v9757, %v9748
        %v9759 = vand.u32 %v9736, 65535
        %v9760 = vshrl.u32 %v9736, 16
        %v9761 = vand.u32 %v9731, 65535
        %v9762 = vshrl.u32 %v9731, 16
        %v9763 = vmul.u32 %v9759, %v9761
        %v9764 = vmul.u32 %v9759, %v9762
        %v9765 = vmul.u32 %v9760, %v9761
        %v9766 = vmul.u32 %v9760, %v9762
        %v9767 = vshll.u32 %v9764, 16
        %v9768 = vshrl.u32 %v9764, 16
        %v9769 = vshll.u32 %v9765, 16
        %v9770 = vshrl.u32 %v9765, 16
        %vm9771 = vc.u32 %v9763, %v9767
        %v9772 = vsel %vm9771, 1, 0
        %v9773 = vadd.s32 %v9763, %v9767
        %v9774 = vadd.s32 %v9766, %v9772
        %vm9775 = vc.u32 %v9773, %v9769
        %v9776 = vsel %vm9775, 1, 0
        %v9777 = vadd.s32 %v9773, %v9769
        %v9778 = vadd.s32 %v9774, %v9776
        %v9779 = vadd.s32 %v9778, %v9768
        %v9780 = vadd.s32 %v9779, %v9770
        %v9781 = vmul.u32 %v9736, %v9727
        %v9782 = vadd.s32 %v9758, %v9777
        %vm9783 = vc.u32 %v9758, %v9777
        %v9784 = vadd.s32 %v9780, 1
        %v9785 = vsel %vm9783, %v9784, %v9780
        %v9786 = vadd.s32 %v9781, %v9785
        %v9787 = vadd.s32 %v9786, 536870912
        %v9788 = vshrl.u32 %v9787, 30
        %v9789 = vshll.u32 %v9788, 30
        %v9790 = vsub.s32 %v9786, %v9789
        %vm9791 = vcmp.lt.s32.totalorder %v9790, 0
        %v9792 = vsub.s32 0, %v9790
        %v9793 = vsel %vm9791, %v9792, %v9790
        %v9794 = vclz %v9793
        %v9795 = vsub.s32 %v9794, 2
        %vm9796 = vcmp.gt.s32.totalorder 0, %v9795
        %v9797 = vsel %vm9796, 0, %v9795
        %v9798 = vsub.s32 32, %v9797
        %v9799 = vshll.u32 %v9790, %v9797
        %v9800 = vshrl.u32 %v9782, %v9798
        %v9801 = vor.u32 %v9799, %v9800
        %v9802 = vsub.s32 4294967266, %v9797
        %v9803 = vadd.s32 %v9802, 127
        %v9804 = vshll.u32 %v9803, 23
        %v9805 = vor.u32 4788187, %v9804
        %v9806 = vand.u32 2147483647, %v9805
        %v9808 = vcvt.s32.f32 %v9801
        %v9809 = vmul.f32 %v9808, %v9806
        %v9810 = vxor.u32 %v9809, 2147483648
        %v9811 = vsel %vm9690, %v9810, %v9809
        %v9812 = vsub.s32 4, %v9788
        %v9813 = vsel %vm9690, %v9812, %v9788
        %v9814 = vsel %vm9689, %v535, %v9811
        %v9815 = vsel %vm9689, 0, %v9813
        %v9816 = vmul.f32 %v9814, %v9814
        %v9817 = vmul.f32 %v9816, -0.001358992
        %v9818 = vadd.f32 %v9817, 0.041655596
        %v9819 = vmul.f32 %v9816, %v9818
        %v9820 = vadd.f32 %v9819, -0.4999988
        %v9821 = vmul.f32 %v9816, %v9820
        %v9822 = vadd.f32 1.0, %v9821
        %v9823 = vmul.f32 %v9814, %v9814
        %v9824 = vmul.f32 %v9823, -0.00019511016
        %v9825 = vadd.f32 %v9824, 0.008332121
        %v9826 = vmul.f32 %v9823, %v9825
        %v9827 = vadd.f32 %v9826, -0.16666654
        %v9828 = vmul.f32 %v9823, %v9827
        %v9829 = vadd.f32 %v9828, 1.0
        %v9830 = vmul.f32 %v9829, %v9814
        %vm9831 = vweird.f32 %v535
        %v9832 = vadd.s32 %v9815, 3
        %v9833 = vand.u32 %v9832, 3
        %vm9834 = vcmp.lt.s32.totalorder %v9833, 2
        %vm9835 = vcmp.eq.s32.totalorder %v9833, 0
        %v9836 = vxor.u32 %v9830, 2147483648
        %v9837 = vsel %vm9835, %v9822, %v9836
        %vm9838 = vcmp.eq.s32.totalorder %v9833, 2
        %v9839 = vxor.u32 %v9822, 2147483648
        %v9840 = vsel %vm9838, %v9839, %v9830
        %v9841 = vsel %vm9834, %v9837, %v9840
        %v9842 = vsel %vm9831, nan, %v9841
        %v9843 = vand.u32 2147483647, %v425
        %vm9844 = vcmp.le.f32.partialorder %v9843, 0.7853982
        %vm9845 = vcmp.lt.s32.totalorder %v425, 0
        %v9846 = vand.u32 %v425, 2139095040
        %v9847 = vshrl.u32 %v9846, 23
        %v9848 = vsub.s32 %v9847, 127
        %v9849 = vand.u32 2147483647, %v425
        %v9850 = vand.u32 %v9849, 8388607
        %v9851 = vor.u32 %v9850, 8388608
        %v9852 = vsub.s32 0, %v9851
        %v9853 = vadd.s32 %v9848, 1
        %vm9854 = vcmp.gt.s32.totalorder %v9853, 0
        %v9855 = vsel %vm9854, %v9853, 0
        %v9856 = vshrl.u32 %v9855, 5
        %v9857 = vand.u32 %v9855, 31
        %v9858 = vsub.s32 32, %v9857
        %v9859 = vshrl.u32 683565275, %v9858
        %v9860 = vshll.u32 683565275, %v9857
        %v9861 = vshrl.u32 2475754826, %v9858
        %v9862 = vor.u32 %v9860, %v9861
        %v9863 = vshll.u32 2475754826, %v9857
        %v9864 = vshrl.u32 2131351028, %v9858
        %v9865 = vor.u32 %v9863, %v9864
        %v9866 = vshll.u32 2131351028, %v9857
        %v9867 = vshrl.u32 2102212464, %v9858
        %v9868 = vor.u32 %v9866, %v9867
        %v9869 = vshll.u32 2102212464, %v9857
        %v9870 = vshrl.u32 920167782, %v9858
        %v9871 = vor.u32 %v9869, %v9870
        %v9872 = vshll.u32 920167782, %v9857
        %v9873 = vshrl.u32 1326507024, %v9858
        %v9874 = vor.u32 %v9872, %v9873
        %vm9875 = vcmp.lt.s32.totalorder %v9856, 1
        %vm9876 = vcmp.lt.s32.totalorder %v9856, 2
        %vm9877 = vcmp.lt.s32.totalorder %v9856, 3
        %vm9878 = vcmp.lt.s32.totalorder %v9856, 4
        %v9879 = vsel %vm9875, %v9859, %v9862
        %v9880 = vsel %vm9878, %v9868, 2102212464
        %v9881 = vsel %vm9877, %v9865, %v9880
        %v9882 = vsel %vm9876, %v9879, %v9881
        %v9883 = vsel %vm9875, %v9862, %v9865
        %v9884 = vsel %vm9878, %v9871, 920167782
        %v9885 = vsel %vm9877, %v9868, %v9884
        %v9886 = vsel %vm9876, %v9883, %v9885
        %v9887 = vsel %vm9875, %v9865, %v9868
        %v9888 = vsel %vm9878, %v9874, 1326507024
        %v9889 = vsel %vm9877, %v9871, %v9888
        %v9890 = vsel %vm9876, %v9887, %v9889
        %v9891 = vshll.u32 %v9851, 8
        %v9892 = vand.u32 %v9891, 65535
        %v9893 = vshrl.u32 %v9891, 16
        %v9894 = vand.u32 %v9890, 65535
        %v9895 = vshrl.u32 %v9890, 16
        %v9896 = vmul.u32 %v9892, %v9894
        %v9897 = vmul.u32 %v9892, %v9895
        %v9898 = vmul.u32 %v9893, %v9894
        %v9899 = vmul.u32 %v9893, %v9895
        %v9900 = vshll.u32 %v9897, 16
        %v9901 = vshrl.u32 %v9897, 16
        %v9902 = vshll.u32 %v9898, 16
        %v9903 = vshrl.u32 %v9898, 16
        %vm9904 = vc.u32 %v9896, %v9900
        %v9905 = vsel %vm9904, 1, 0
        %v9906 = vadd.s32 %v9896, %v9900
        %v9907 = vadd.s32 %v9899, %v9905
        %vm9908 = vc.u32 %v9906, %v9902
        %v9909 = vsel %vm9908, 1, 0
        %v9910 = vadd.s32 %v9906, %v9902
        %v9911 = vadd.s32 %v9907, %v9909
        %v9912 = vadd.s32 %v9911, %v9901
        %v9913 = vadd.s32 %v9912, %v9903
        %v9914 = vand.u32 %v9891, 65535
        %v9915 = vshrl.u32 %v9891, 16
        %v9916 = vand.u32 %v9886, 65535
        %v9917 = vshrl.u32 %v9886, 16
        %v9918 = vmul.u32 %v9914, %v9916
        %v9919 = vmul.u32 %v9914, %v9917
        %v9920 = vmul.u32 %v9915, %v9916
        %v9921 = vmul.u32 %v9915, %v9917
        %v9922 = vshll.u32 %v9919, 16
        %v9923 = vshrl.u32 %v9919, 16
        %v9924 = vshll.u32 %v9920, 16
        %v9925 = vshrl.u32 %v9920, 16
        %vm9926 = vc.u32 %v9918, %v9922
        %v9927 = vsel %vm9926, 1, 0
        %v9928 = vadd.s32 %v9918, %v9922
        %v9929 = vadd.s32 %v9921, %v9927
        %vm9930 = vc.u32 %v9928, %v9924
        %v9931 = vsel %vm9930, 1, 0
        %v9932 = vadd.s32 %v9928, %v9924
        %v9933 = vadd.s32 %v9929, %v9931
        %v9934 = vadd.s32 %v9933, %v9923
        %v9935 = vadd.s32 %v9934, %v9925
        %v9936 = vmul.u32 %v9891, %v9882
        %v9937 = vadd.s32 %v9913, %v9932
        %vm9938 = vc.u32 %v9913, %v9932
        %v9939 = vadd.s32 %v9935, 1
        %v9940 = vsel %vm9938, %v9939, %v9935
        %v9941 = vadd.s32 %v9936, %v9940
        %v9942 = vadd.s32 %v9941, 536870912
        %v9943 = vshrl.u32 %v9942, 30
        %v9944 = vshll.u32 %v9943, 30
        %v9945 = vsub.s32 %v9941, %v9944
        %vm9946 = vcmp.lt.s32.totalorder %v9945, 0
        %v9947 = vsub.s32 0, %v9945
        %v9948 = vsel %vm9946, %v9947, %v9945
        %v9949 = vclz %v9948
        %v9950 = vsub.s32 %v9949, 2
        %vm9951 = vcmp.gt.s32.totalorder 0, %v9950
        %v9952 = vsel %vm9951, 0, %v9950
        %v9953 = vsub.s32 32, %v9952
        %v9954 = vshll.u32 %v9945, %v9952
        %v9955 = vshrl.u32 %v9937, %v9953
        %v9956 = vor.u32 %v9954, %v9955
        %v9957 = vsub.s32 4294967266, %v9952
        %v9958 = vadd.s32 %v9957, 127
        %v9959 = vshll.u32 %v9958, 23
        %v9960 = vor.u32 4788187, %v9959
        %v9961 = vand.u32 2147483647, %v9960
        %v9963 = vcvt.s32.f32 %v9956
        %v9964 = vmul.f32 %v9963, %v9961
        %v9965 = vxor.u32 %v9964, 2147483648
        %v9966 = vsel %vm9845, %v9965, %v9964
        %v9967 = vsub.s32 4, %v9943
        %v9968 = vsel %vm9845, %v9967, %v9943
        %v9969 = vsel %vm9844, %v425, %v9966
        %v9970 = vsel %vm9844, 0, %v9968
        %v9971 = vmul.f32 %v9969, %v9969
        %v9972 = vmul.f32 %v9971, -0.001358992
        %v9973 = vadd.f32 %v9972, 0.041655596
        %v9974 = vmul.f32 %v9971, %v9973
        %v9975 = vadd.f32 %v9974, -0.4999988
        %v9976 = vmul.f32 %v9971, %v9975
        %v9977 = vadd.f32 1.0, %v9976
        %v9978 = vmul.f32 %v9969, %v9969
        %v9979 = vmul.f32 %v9978, -0.00019511016
        %v9980 = vadd.f32 %v9979, 0.008332121
        %v9981 = vmul.f32 %v9978, %v9980
        %v9982 = vadd.f32 %v9981, -0.16666654
        %v9983 = vmul.f32 %v9978, %v9982
        %v9984 = vadd.f32 %v9983, 1.0
        %v9985 = vmul.f32 %v9984, %v9969
        %vm9986 = vweird.f32 %v425
        %v9987 = vadd.s32 %v9970, 3
        %v9988 = vand.u32 %v9987, 3
        %vm9989 = vcmp.lt.s32.totalorder %v9988, 2
        %vm9990 = vcmp.eq.s32.totalorder %v9988, 0
        %v9991 = vxor.u32 %v9985, 2147483648
        %v9992 = vsel %vm9990, %v9977, %v9991
        %vm9993 = vcmp.eq.s32.totalorder %v9988, 2
        %v9994 = vxor.u32 %v9977, 2147483648
        %v9995 = vsel %vm9993, %v9994, %v9985
        %v9996 = vsel %vm9989, %v9992, %v9995
        %v9997 = vsel %vm9986, nan, %v9996
        %v9998 = vand.u32 2147483647, %v538
        %vm9999 = vcmp.le.f32.partialorder %v9998, 0.7853982
        %vm10000 = vcmp.lt.s32.totalorder %v538, 0
        %v10001 = vand.u32 %v538, 2139095040
        %v10002 = vshrl.u32 %v10001, 23
        %v10003 = vsub.s32 %v10002, 127
        %v10004 = vand.u32 2147483647, %v538
        %v10005 = vand.u32 %v10004, 8388607
        %v10006 = vor.u32 %v10005, 8388608
        %v10007 = vsub.s32 0, %v10006
        %v10008 = vadd.s32 %v10003, 1
        %vm10009 = vcmp.gt.s32.totalorder %v10008, 0
        %v10010 = vsel %vm10009, %v10008, 0
        %v10011 = vshrl.u32 %v10010, 5
        %v10012 = vand.u32 %v10010, 31
        %v10013 = vsub.s32 32, %v10012
        %v10014 = vshrl.u32 683565275, %v10013
        %v10015 = vshll.u32 683565275, %v10012
        %v10016 = vshrl.u32 2475754826, %v10013
        %v10017 = vor.u32 %v10015, %v10016
        %v10018 = vshll.u32 2475754826, %v10012
        %v10019 = vshrl.u32 2131351028, %v10013
        %v10020 = vor.u32 %v10018, %v10019
        %v10021 = vshll.u32 2131351028, %v10012
        %v10022 = vshrl.u32 2102212464, %v10013
        %v10023 = vor.u32 %v10021, %v10022
        %v10024 = vshll.u32 2102212464, %v10012
        %v10025 = vshrl.u32 920167782, %v10013
        %v10026 = vor.u32 %v10024, %v10025
        %v10027 = vshll.u32 920167782, %v10012
        %v10028 = vshrl.u32 1326507024, %v10013
        %v10029 = vor.u32 %v10027, %v10028
        %vm10030 = vcmp.lt.s32.totalorder %v10011, 1
        %vm10031 = vcmp.lt.s32.totalorder %v10011, 2
        %vm10032 = vcmp.lt.s32.totalorder %v10011, 3
        %vm10033 = vcmp.lt.s32.totalorder %v10011, 4
        %v10034 = vsel %vm10030, %v10014, %v10017
        %v10035 = vsel %vm10033, %v10023, 2102212464
        %v10036 = vsel %vm10032, %v10020, %v10035
        %v10037 = vsel %vm10031, %v10034, %v10036
        %v10038 = vsel %vm10030, %v10017, %v10020
        %v10039 = vsel %vm10033, %v10026, 920167782
        %v10040 = vsel %vm10032, %v10023, %v10039
        %v10041 = vsel %vm10031, %v10038, %v10040
        %v10042 = vsel %vm10030, %v10020, %v10023
        %v10043 = vsel %vm10033, %v10029, 1326507024
        %v10044 = vsel %vm10032, %v10026, %v10043
        %v10045 = vsel %vm10031, %v10042, %v10044
        %v10046 = vshll.u32 %v10006, 8
        %v10047 = vand.u32 %v10046, 65535
        %v10048 = vshrl.u32 %v10046, 16
        %v10049 = vand.u32 %v10045, 65535
        %v10050 = vshrl.u32 %v10045, 16
        %v10051 = vmul.u32 %v10047, %v10049
        %v10052 = vmul.u32 %v10047, %v10050
        %v10053 = vmul.u32 %v10048, %v10049
        %v10054 = vmul.u32 %v10048, %v10050
        %v10055 = vshll.u32 %v10052, 16
        %v10056 = vshrl.u32 %v10052, 16
        %v10057 = vshll.u32 %v10053, 16
        %v10058 = vshrl.u32 %v10053, 16
        %vm10059 = vc.u32 %v10051, %v10055
        %v10060 = vsel %vm10059, 1, 0
        %v10061 = vadd.s32 %v10051, %v10055
        %v10062 = vadd.s32 %v10054, %v10060
        %vm10063 = vc.u32 %v10061, %v10057
        %v10064 = vsel %vm10063, 1, 0
        %v10065 = vadd.s32 %v10061, %v10057
        %v10066 = vadd.s32 %v10062, %v10064
        %v10067 = vadd.s32 %v10066, %v10056
        %v10068 = vadd.s32 %v10067, %v10058
        %v10069 = vand.u32 %v10046, 65535
        %v10070 = vshrl.u32 %v10046, 16
        %v10071 = vand.u32 %v10041, 65535
        %v10072 = vshrl.u32 %v10041, 16
        %v10073 = vmul.u32 %v10069, %v10071
        %v10074 = vmul.u32 %v10069, %v10072
        %v10075 = vmul.u32 %v10070, %v10071
        %v10076 = vmul.u32 %v10070, %v10072
        %v10077 = vshll.u32 %v10074, 16
        %v10078 = vshrl.u32 %v10074, 16
        %v10079 = vshll.u32 %v10075, 16
        %v10080 = vshrl.u32 %v10075, 16
        %vm10081 = vc.u32 %v10073, %v10077
        %v10082 = vsel %vm10081, 1, 0
        %v10083 = vadd.s32 %v10073, %v10077
        %v10084 = vadd.s32 %v10076, %v10082
        %vm10085 = vc.u32 %v10083, %v10079
        %v10086 = vsel %vm10085, 1, 0
        %v10087 = vadd.s32 %v10083, %v10079
        %v10088 = vadd.s32 %v10084, %v10086
        %v10089 = vadd.s32 %v10088, %v10078
        %v10090 = vadd.s32 %v10089, %v10080
        %v10091 = vmul.u32 %v10046, %v10037
        %v10092 = vadd.s32 %v10068, %v10087
        %vm10093 = vc.u32 %v10068, %v10087
        %v10094 = vadd.s32 %v10090, 1
        %v10095 = vsel %vm10093, %v10094, %v10090
        %v10096 = vadd.s32 %v10091, %v10095
        %v10097 = vadd.s32 %v10096, 536870912
        %v10098 = vshrl.u32 %v10097, 30
        %v10099 = vshll.u32 %v10098, 30
        %v10100 = vsub.s32 %v10096, %v10099
        %vm10101 = vcmp.lt.s32.totalorder %v10100, 0
        %v10102 = vsub.s32 0, %v10100
        %v10103 = vsel %vm10101, %v10102, %v10100
        %v10104 = vclz %v10103
        %v10105 = vsub.s32 %v10104, 2
        %vm10106 = vcmp.gt.s32.totalorder 0, %v10105
        %v10107 = vsel %vm10106, 0, %v10105
        %v10108 = vsub.s32 32, %v10107
        %v10109 = vshll.u32 %v10100, %v10107
        %v10110 = vshrl.u32 %v10092, %v10108
        %v10111 = vor.u32 %v10109, %v10110
        %v10112 = vsub.s32 4294967266, %v10107
        %v10113 = vadd.s32 %v10112, 127
        %v10114 = vshll.u32 %v10113, 23
        %v10115 = vor.u32 4788187, %v10114
        %v10116 = vand.u32 2147483647, %v10115
        %v10118 = vcvt.s32.f32 %v10111
        %v10119 = vmul.f32 %v10118, %v10116
        %v10120 = vxor.u32 %v10119, 2147483648
        %v10121 = vsel %vm10000, %v10120, %v10119
        %v10122 = vsub.s32 4, %v10098
        %v10123 = vsel %vm10000, %v10122, %v10098
        %v10124 = vsel %vm9999, %v538, %v10121
        %v10125 = vsel %vm9999, 0, %v10123
        %v10126 = vmul.f32 %v10124, %v10124
        %v10127 = vmul.f32 %v10126, -0.001358992
        %v10128 = vadd.f32 %v10127, 0.041655596
        %v10129 = vmul.f32 %v10126, %v10128
        %v10130 = vadd.f32 %v10129, -0.4999988
        %v10131 = vmul.f32 %v10126, %v10130
        %v10132 = vadd.f32 1.0, %v10131
        %v10133 = vmul.f32 %v10124, %v10124
        %v10134 = vmul.f32 %v10133, -0.00019511016
        %v10135 = vadd.f32 %v10134, 0.008332121
        %v10136 = vmul.f32 %v10133, %v10135
        %v10137 = vadd.f32 %v10136, -0.16666654
        %v10138 = vmul.f32 %v10133, %v10137
        %v10139 = vadd.f32 %v10138, 1.0
        %v10140 = vmul.f32 %v10139, %v10124
        %vm10141 = vweird.f32 %v538
        %v10142 = vadd.s32 %v10125, 3
        %v10143 = vand.u32 %v10142, 3
        %vm10144 = vcmp.lt.s32.totalorder %v10143, 2
        %vm10145 = vcmp.eq.s32.totalorder %v10143, 0
        %v10146 = vxor.u32 %v10140, 2147483648
        %v10147 = vsel %vm10145, %v10132, %v10146
        %vm10148 = vcmp.eq.s32.totalorder %v10143, 2
        %v10149 = vxor.u32 %v10132, 2147483648
        %v10150 = vsel %vm10148, %v10149, %v10140
        %v10151 = vsel %vm10144, %v10147, %v10150
        %v10152 = vsel %vm10141, nan, %v10151
        %v10153 = vand.u32 2147483647, %v428
        %vm10154 = vcmp.le.f32.partialorder %v10153, 0.7853982
        %vm10155 = vcmp.lt.s32.totalorder %v428, 0
        %v10156 = vand.u32 %v428, 2139095040
        %v10157 = vshrl.u32 %v10156, 23
        %v10158 = vsub.s32 %v10157, 127
        %v10159 = vand.u32 2147483647, %v428
        %v10160 = vand.u32 %v10159, 8388607
        %v10161 = vor.u32 %v10160, 8388608
        %v10162 = vsub.s32 0, %v10161
        %v10163 = vadd.s32 %v10158, 1
        %vm10164 = vcmp.gt.s32.totalorder %v10163, 0
        %v10165 = vsel %vm10164, %v10163, 0
        %v10166 = vshrl.u32 %v10165, 5
        %v10167 = vand.u32 %v10165, 31
        %v10168 = vsub.s32 32, %v10167
        %v10169 = vshrl.u32 683565275, %v10168
        %v10170 = vshll.u32 683565275, %v10167
        %v10171 = vshrl.u32 2475754826, %v10168
        %v10172 = vor.u32 %v10170, %v10171
        %v10173 = vshll.u32 2475754826, %v10167
        %v10174 = vshrl.u32 2131351028, %v10168
        %v10175 = vor.u32 %v10173, %v10174
        %v10176 = vshll.u32 2131351028, %v10167
        %v10177 = vshrl.u32 2102212464, %v10168
        %v10178 = vor.u32 %v10176, %v10177
        %v10179 = vshll.u32 2102212464, %v10167
        %v10180 = vshrl.u32 920167782, %v10168
        %v10181 = vor.u32 %v10179, %v10180
        %v10182 = vshll.u32 920167782, %v10167
        %v10183 = vshrl.u32 1326507024, %v10168
        %v10184 = vor.u32 %v10182, %v10183
        %vm10185 = vcmp.lt.s32.totalorder %v10166, 1
        %vm10186 = vcmp.lt.s32.totalorder %v10166, 2
        %vm10187 = vcmp.lt.s32.totalorder %v10166, 3
        %vm10188 = vcmp.lt.s32.totalorder %v10166, 4
        %v10189 = vsel %vm10185, %v10169, %v10172
        %v10190 = vsel %vm10188, %v10178, 2102212464
        %v10191 = vsel %vm10187, %v10175, %v10190
        %v10192 = vsel %vm10186, %v10189, %v10191
        %v10193 = vsel %vm10185, %v10172, %v10175
        %v10194 = vsel %vm10188, %v10181, 920167782
        %v10195 = vsel %vm10187, %v10178, %v10194
        %v10196 = vsel %vm10186, %v10193, %v10195
        %v10197 = vsel %vm10185, %v10175, %v10178
        %v10198 = vsel %vm10188, %v10184, 1326507024
        %v10199 = vsel %vm10187, %v10181, %v10198
        %v10200 = vsel %vm10186, %v10197, %v10199
        %v10201 = vshll.u32 %v10161, 8
        %v10202 = vand.u32 %v10201, 65535
        %v10203 = vshrl.u32 %v10201, 16
        %v10204 = vand.u32 %v10200, 65535
        %v10205 = vshrl.u32 %v10200, 16
        %v10206 = vmul.u32 %v10202, %v10204
        %v10207 = vmul.u32 %v10202, %v10205
        %v10208 = vmul.u32 %v10203, %v10204
        %v10209 = vmul.u32 %v10203, %v10205
        %v10210 = vshll.u32 %v10207, 16
        %v10211 = vshrl.u32 %v10207, 16
        %v10212 = vshll.u32 %v10208, 16
        %v10213 = vshrl.u32 %v10208, 16
        %vm10214 = vc.u32 %v10206, %v10210
        %v10215 = vsel %vm10214, 1, 0
        %v10216 = vadd.s32 %v10206, %v10210
        %v10217 = vadd.s32 %v10209, %v10215
        %vm10218 = vc.u32 %v10216, %v10212
        %v10219 = vsel %vm10218, 1, 0
        %v10220 = vadd.s32 %v10216, %v10212
        %v10221 = vadd.s32 %v10217, %v10219
        %v10222 = vadd.s32 %v10221, %v10211
        %v10223 = vadd.s32 %v10222, %v10213
        %v10224 = vand.u32 %v10201, 65535
        %v10225 = vshrl.u32 %v10201, 16
        %v10226 = vand.u32 %v10196, 65535
        %v10227 = vshrl.u32 %v10196, 16
        %v10228 = vmul.u32 %v10224, %v10226
        %v10229 = vmul.u32 %v10224, %v10227
        %v10230 = vmul.u32 %v10225, %v10226
        %v10231 = vmul.u32 %v10225, %v10227
        %v10232 = vshll.u32 %v10229, 16
        %v10233 = vshrl.u32 %v10229, 16
        %v10234 = vshll.u32 %v10230, 16
        %v10235 = vshrl.u32 %v10230, 16
        %vm10236 = vc.u32 %v10228, %v10232
        %v10237 = vsel %vm10236, 1, 0
        %v10238 = vadd.s32 %v10228, %v10232
        %v10239 = vadd.s32 %v10231, %v10237
        %vm10240 = vc.u32 %v10238, %v10234
        %v10241 = vsel %vm10240, 1, 0
        %v10242 = vadd.s32 %v10238, %v10234
        %v10243 = vadd.s32 %v10239, %v10241
        %v10244 = vadd.s32 %v10243, %v10233
        %v10245 = vadd.s32 %v10244, %v10235
        %v10246 = vmul.u32 %v10201, %v10192
        %v10247 = vadd.s32 %v10223, %v10242
        %vm10248 = vc.u32 %v10223, %v10242
        %v10249 = vadd.s32 %v10245, 1
        %v10250 = vsel %vm10248, %v10249, %v10245
        %v10251 = vadd.s32 %v10246, %v10250
        %v10252 = vadd.s32 %v10251, 536870912
        %v10253 = vshrl.u32 %v10252, 30
        %v10254 = vshll.u32 %v10253, 30
        %v10255 = vsub.s32 %v10251, %v10254
        %vm10256 = vcmp.lt.s32.totalorder %v10255, 0
        %v10257 = vsub.s32 0, %v10255
        %v10258 = vsel %vm10256, %v10257, %v10255
        %v10259 = vclz %v10258
        %v10260 = vsub.s32 %v10259, 2
        %vm10261 = vcmp.gt.s32.totalorder 0, %v10260
        %v10262 = vsel %vm10261, 0, %v10260
        %v10263 = vsub.s32 32, %v10262
        %v10264 = vshll.u32 %v10255, %v10262
        %v10265 = vshrl.u32 %v10247, %v10263
        %v10266 = vor.u32 %v10264, %v10265
        %v10267 = vsub.s32 4294967266, %v10262
        %v10268 = vadd.s32 %v10267, 127
        %v10269 = vshll.u32 %v10268, 23
        %v10270 = vor.u32 4788187, %v10269
        %v10271 = vand.u32 2147483647, %v10270
        %v10273 = vcvt.s32.f32 %v10266
        %v10274 = vmul.f32 %v10273, %v10271
        %v10275 = vxor.u32 %v10274, 2147483648
        %v10276 = vsel %vm10155, %v10275, %v10274
        %v10277 = vsub.s32 4, %v10253
        %v10278 = vsel %vm10155, %v10277, %v10253
        %v10279 = vsel %vm10154, %v428, %v10276
        %v10280 = vsel %vm10154, 0, %v10278
        %v10281 = vmul.f32 %v10279, %v10279
        %v10282 = vmul.f32 %v10281, -0.001358992
        %v10283 = vadd.f32 %v10282, 0.041655596
        %v10284 = vmul.f32 %v10281, %v10283
        %v10285 = vadd.f32 %v10284, -0.4999988
        %v10286 = vmul.f32 %v10281, %v10285
        %v10287 = vadd.f32 1.0, %v10286
        %v10288 = vmul.f32 %v10279, %v10279
        %v10289 = vmul.f32 %v10288, -0.00019511016
        %v10290 = vadd.f32 %v10289, 0.008332121
        %v10291 = vmul.f32 %v10288, %v10290
        %v10292 = vadd.f32 %v10291, -0.16666654
        %v10293 = vmul.f32 %v10288, %v10292
        %v10294 = vadd.f32 %v10293, 1.0
        %v10295 = vmul.f32 %v10294, %v10279
        %vm10296 = vweird.f32 %v428
        %v10297 = vadd.s32 %v10280, 3
        %v10298 = vand.u32 %v10297, 3
        %vm10299 = vcmp.lt.s32.totalorder %v10298, 2
        %vm10300 = vcmp.eq.s32.totalorder %v10298, 0
        %v10301 = vxor.u32 %v10295, 2147483648
        %v10302 = vsel %vm10300, %v10287, %v10301
        %vm10303 = vcmp.eq.s32.totalorder %v10298, 2
        %v10304 = vxor.u32 %v10287, 2147483648
        %v10305 = vsel %vm10303, %v10304, %v10295
        %v10306 = vsel %vm10299, %v10302, %v10305
        %v10307 = vsel %vm10296, nan, %v10306
        %v10308 = vand.u32 2147483647, %v541
        %vm10309 = vcmp.le.f32.partialorder %v10308, 0.7853982
        %vm10310 = vcmp.lt.s32.totalorder %v541, 0
        %v10311 = vand.u32 %v541, 2139095040
        %v10312 = vshrl.u32 %v10311, 23
        %v10313 = vsub.s32 %v10312, 127
        %v10314 = vand.u32 2147483647, %v541
        %v10315 = vand.u32 %v10314, 8388607
        %v10316 = vor.u32 %v10315, 8388608
        %v10317 = vsub.s32 0, %v10316
        %v10318 = vadd.s32 %v10313, 1
        %vm10319 = vcmp.gt.s32.totalorder %v10318, 0
        %v10320 = vsel %vm10319, %v10318, 0
        %v10321 = vshrl.u32 %v10320, 5
        %v10322 = vand.u32 %v10320, 31
        %v10323 = vsub.s32 32, %v10322
        %v10324 = vshrl.u32 683565275, %v10323
        %v10325 = vshll.u32 683565275, %v10322
        %v10326 = vshrl.u32 2475754826, %v10323
        %v10327 = vor.u32 %v10325, %v10326
        %v10328 = vshll.u32 2475754826, %v10322
        %v10329 = vshrl.u32 2131351028, %v10323
        %v10330 = vor.u32 %v10328, %v10329
        %v10331 = vshll.u32 2131351028, %v10322
        %v10332 = vshrl.u32 2102212464, %v10323
        %v10333 = vor.u32 %v10331, %v10332
        %v10334 = vshll.u32 2102212464, %v10322
        %v10335 = vshrl.u32 920167782, %v10323
        %v10336 = vor.u32 %v10334, %v10335
        %v10337 = vshll.u32 920167782, %v10322
        %v10338 = vshrl.u32 1326507024, %v10323
        %v10339 = vor.u32 %v10337, %v10338
        %vm10340 = vcmp.lt.s32.totalorder %v10321, 1
        %vm10341 = vcmp.lt.s32.totalorder %v10321, 2
        %vm10342 = vcmp.lt.s32.totalorder %v10321, 3
        %vm10343 = vcmp.lt.s32.totalorder %v10321, 4
        %v10344 = vsel %vm10340, %v10324, %v10327
        %v10345 = vsel %vm10343, %v10333, 2102212464
        %v10346 = vsel %vm10342, %v10330, %v10345
        %v10347 = vsel %vm10341, %v10344, %v10346
        %v10348 = vsel %vm10340, %v10327, %v10330
        %v10349 = vsel %vm10343, %v10336, 920167782
        %v10350 = vsel %vm10342, %v10333, %v10349
        %v10351 = vsel %vm10341, %v10348, %v10350
        %v10352 = vsel %vm10340, %v10330, %v10333
        %v10353 = vsel %vm10343, %v10339, 1326507024
        %v10354 = vsel %vm10342, %v10336, %v10353
        %v10355 = vsel %vm10341, %v10352, %v10354
        %v10356 = vshll.u32 %v10316, 8
        %v10357 = vand.u32 %v10356, 65535
        %v10358 = vshrl.u32 %v10356, 16
        %v10359 = vand.u32 %v10355, 65535
        %v10360 = vshrl.u32 %v10355, 16
        %v10361 = vmul.u32 %v10357, %v10359
        %v10362 = vmul.u32 %v10357, %v10360
        %v10363 = vmul.u32 %v10358, %v10359
        %v10364 = vmul.u32 %v10358, %v10360
        %v10365 = vshll.u32 %v10362, 16
        %v10366 = vshrl.u32 %v10362, 16
        %v10367 = vshll.u32 %v10363, 16
        %v10368 = vshrl.u32 %v10363, 16
        %vm10369 = vc.u32 %v10361, %v10365
        %v10370 = vsel %vm10369, 1, 0
        %v10371 = vadd.s32 %v10361, %v10365
        %v10372 = vadd.s32 %v10364, %v10370
        %vm10373 = vc.u32 %v10371, %v10367
        %v10374 = vsel %vm10373, 1, 0
        %v10375 = vadd.s32 %v10371, %v10367
        %v10376 = vadd.s32 %v10372, %v10374
        %v10377 = vadd.s32 %v10376, %v10366
        %v10378 = vadd.s32 %v10377, %v10368
        %v10379 = vand.u32 %v10356, 65535
        %v10380 = vshrl.u32 %v10356, 16
        %v10381 = vand.u32 %v10351, 65535
        %v10382 = vshrl.u32 %v10351, 16
        %v10383 = vmul.u32 %v10379, %v10381
        %v10384 = vmul.u32 %v10379, %v10382
        %v10385 = vmul.u32 %v10380, %v10381
        %v10386 = vmul.u32 %v10380, %v10382
        %v10387 = vshll.u32 %v10384, 16
        %v10388 = vshrl.u32 %v10384, 16
        %v10389 = vshll.u32 %v10385, 16
        %v10390 = vshrl.u32 %v10385, 16
        %vm10391 = vc.u32 %v10383, %v10387
        %v10392 = vsel %vm10391, 1, 0
        %v10393 = vadd.s32 %v10383, %v10387
        %v10394 = vadd.s32 %v10386, %v10392
        %vm10395 = vc.u32 %v10393, %v10389
        %v10396 = vsel %vm10395, 1, 0
        %v10397 = vadd.s32 %v10393, %v10389
        %v10398 = vadd.s32 %v10394, %v10396
        %v10399 = vadd.s32 %v10398, %v10388
        %v10400 = vadd.s32 %v10399, %v10390
        %v10401 = vmul.u32 %v10356, %v10347
        %v10402 = vadd.s32 %v10378, %v10397
        %vm10403 = vc.u32 %v10378, %v10397
        %v10404 = vadd.s32 %v10400, 1
        %v10405 = vsel %vm10403, %v10404, %v10400
        %v10406 = vadd.s32 %v10401, %v10405
        %v10407 = vadd.s32 %v10406, 536870912
        %v10408 = vshrl.u32 %v10407, 30
        %v10409 = vshll.u32 %v10408, 30
        %v10410 = vsub.s32 %v10406, %v10409
        %vm10411 = vcmp.lt.s32.totalorder %v10410, 0
        %v10412 = vsub.s32 0, %v10410
        %v10413 = vsel %vm10411, %v10412, %v10410
        %v10414 = vclz %v10413
        %v10415 = vsub.s32 %v10414, 2
        %vm10416 = vcmp.gt.s32.totalorder 0, %v10415
        %v10417 = vsel %vm10416, 0, %v10415
        %v10418 = vsub.s32 32, %v10417
        %v10419 = vshll.u32 %v10410, %v10417
        %v10420 = vshrl.u32 %v10402, %v10418
        %v10421 = vor.u32 %v10419, %v10420
        %v10422 = vsub.s32 4294967266, %v10417
        %v10423 = vadd.s32 %v10422, 127
        %v10424 = vshll.u32 %v10423, 23
        %v10425 = vor.u32 4788187, %v10424
        %v10426 = vand.u32 2147483647, %v10425
        %v10428 = vcvt.s32.f32 %v10421
        %v10429 = vmul.f32 %v10428, %v10426
        %v10430 = vxor.u32 %v10429, 2147483648
        %v10431 = vsel %vm10310, %v10430, %v10429
        %v10432 = vsub.s32 4, %v10408
        %v10433 = vsel %vm10310, %v10432, %v10408
        %v10434 = vsel %vm10309, %v541, %v10431
        %v10435 = vsel %vm10309, 0, %v10433
        %v10436 = vmul.f32 %v10434, %v10434
        %v10437 = vmul.f32 %v10436, -0.001358992
        %v10438 = vadd.f32 %v10437, 0.041655596
        %v10439 = vmul.f32 %v10436, %v10438
        %v10440 = vadd.f32 %v10439, -0.4999988
        %v10441 = vmul.f32 %v10436, %v10440
        %v10442 = vadd.f32 1.0, %v10441
        %v10443 = vmul.f32 %v10434, %v10434
        %v10444 = vmul.f32 %v10443, -0.00019511016
        %v10445 = vadd.f32 %v10444, 0.008332121
        %v10446 = vmul.f32 %v10443, %v10445
        %v10447 = vadd.f32 %v10446, -0.16666654
        %v10448 = vmul.f32 %v10443, %v10447
        %v10449 = vadd.f32 %v10448, 1.0
        %v10450 = vmul.f32 %v10449, %v10434
        %vm10451 = vweird.f32 %v541
        %v10452 = vadd.s32 %v10435, 3
        %v10453 = vand.u32 %v10452, 3
        %vm10454 = vcmp.lt.s32.totalorder %v10453, 2
        %vm10455 = vcmp.eq.s32.totalorder %v10453, 0
        %v10456 = vxor.u32 %v10450, 2147483648
        %v10457 = vsel %vm10455, %v10442, %v10456
        %vm10458 = vcmp.eq.s32.totalorder %v10453, 2
        %v10459 = vxor.u32 %v10442, 2147483648
        %v10460 = vsel %vm10458, %v10459, %v10450
        %v10461 = vsel %vm10454, %v10457, %v10460
        %v10462 = vsel %vm10451, nan, %v10461
        %10463 = vst [vmem:[%s164] sm:$0xff] %v697
        %10464 = vst [vmem:[%s164 + $0x8] sm:$0xff] %v852
        %10465 = vst [vmem:[%s164 + $0x10] sm:$0xff] %v1007
        %10466 = vst [vmem:[%s164 + $0x18] sm:$0xff] %v1162
        %10467 = vst [vmem:[%s164 + $0x20] sm:$0xff] %v1317
        %10468 = vst [vmem:[%s164 + $0x28] sm:$0xff] %v1472
        %10469 = vst [vmem:[%s164 + $0x30] sm:$0xff] %v1627
        %10470 = vst [vmem:[%s164 + $0x38] sm:$0xff] %v1782
        %10471 = vst [vmem:[%s164 + $0x40] sm:$0xff] %v1937
        %10472 = vst [vmem:[%s164 + $0x48] sm:$0xff] %v2092
        %10473 = vst [vmem:[%s164 + $0x50] sm:$0xff] %v2247
        %10474 = vst [vmem:[%s164 + $0x58] sm:$0xff] %v2402
        %10475 = vst [vmem:[%s164 + $0x60] sm:$0xff] %v2557
        %10476 = vst [vmem:[%s164 + $0x68] sm:$0xff] %v2712
        %10477 = vst [vmem:[%s164 + $0x70] sm:$0xff] %v2867
        %10478 = vst [vmem:[%s164 + $0x78] sm:$0xff] %v3022
        %10479 = vst [vmem:[%s164 + $0x80] sm:$0xff] %v3177
        %10480 = vst [vmem:[%s164 + $0x88] sm:$0xff] %v3332
        %10481 = vst [vmem:[%s164 + $0x90] sm:$0xff] %v3487
        %10482 = vst [vmem:[%s164 + $0x98] sm:$0xff] %v3642
        %10483 = vst [vmem:[%s164 + $0xa0] sm:$0xff] %v3797
        %10484 = vst [vmem:[%s164 + $0xa8] sm:$0xff] %v3952
        %10485 = vst [vmem:[%s164 + $0xb0] sm:$0xff] %v4107
        %10486 = vst [vmem:[%s164 + $0xb8] sm:$0xff] %v4262
        %10487 = vst [vmem:[%s164 + $0xc0] sm:$0xff] %v4417
        %10488 = vst [vmem:[%s164 + $0xc8] sm:$0xff] %v4572
        %10489 = vst [vmem:[%s164 + $0xd0] sm:$0xff] %v4727
        %10490 = vst [vmem:[%s164 + $0xd8] sm:$0xff] %v4882
        %10491 = vst [vmem:[%s164 + $0xe0] sm:$0xff] %v5037
        %10492 = vst [vmem:[%s164 + $0xe8] sm:$0xff] %v5192
        %10493 = vst [vmem:[%s164 + $0xf0] sm:$0xff] %v5347
        %10494 = vst [vmem:[%s164 + $0xf8] sm:$0xff] %v5502
        %10495 = vst [vmem:[%s164 + $0x100] sm:$0xff] %v5657
        %10496 = vst [vmem:[%s164 + $0x108] sm:$0xff] %v5812
        %10497 = vst [vmem:[%s164 + $0x110] sm:$0xff] %v5967
        %10498 = vst [vmem:[%s164 + $0x118] sm:$0xff] %v6122
        %10499 = vst [vmem:[%s164 + $0x120] sm:$0xff] %v6277
        %10500 = vst [vmem:[%s164 + $0x128] sm:$0xff] %v6432
        %10501 = vst [vmem:[%s164 + $0x130] sm:$0xff] %v6587
        %10502 = vst [vmem:[%s164 + $0x138] sm:$0xff] %v6742
        %10503 = vst [vmem:[%s164 + $0x140] sm:$0xff] %v6897
        %10504 = vst [vmem:[%s164 + $0x148] sm:$0xff] %v7052
        %10505 = vst [vmem:[%s164 + $0x150] sm:$0xff] %v7207
        %10506 = vst [vmem:[%s164 + $0x158] sm:$0xff] %v7362
        %10507 = vst [vmem:[%s164 + $0x160] sm:$0xff] %v7517
        %10508 = vst [vmem:[%s164 + $0x168] sm:$0xff] %v7672
        %10509 = vst [vmem:[%s164 + $0x170] sm:$0xff] %v7827
        %10510 = vst [vmem:[%s164 + $0x178] sm:$0xff] %v7982
        %10511 = vst [vmem:[%s164 + $0x180] sm:$0xff] %v8137
        %10512 = vst [vmem:[%s164 + $0x188] sm:$0xff] %v8292
        %10513 = vst [vmem:[%s164 + $0x190] sm:$0xff] %v8447
        %10514 = vst [vmem:[%s164 + $0x198] sm:$0xff] %v8602
        %10515 = vst [vmem:[%s164 + $0x1a0] sm:$0xff] %v8757
        %10516 = vst [vmem:[%s164 + $0x1a8] sm:$0xff] %v8912
        %10517 = vst [vmem:[%s164 + $0x1b0] sm:$0xff] %v9067
        %10518 = vst [vmem:[%s164 + $0x1b8] sm:$0xff] %v9222
        %10519 = vst [vmem:[%s164 + $0x1c0] sm:$0xff] %v9377
        %10520 = vst [vmem:[%s164 + $0x1c8] sm:$0xff] %v9532
        %10521 = vst [vmem:[%s164 + $0x1d0] sm:$0xff] %v9687
        %10522 = vst [vmem:[%s164 + $0x1d8] sm:$0xff] %v9842
        %10523 = vst [vmem:[%s164 + $0x1e0] sm:$0xff] %v9997
        %10524 = vst [vmem:[%s164 + $0x1e8] sm:$0xff] %v10152
        %10525 = vst [vmem:[%s164 + $0x1f0] sm:$0xff] %v10307
        %10526 = vst [vmem:[%s164 + $0x1f8] sm:$0xff] %v10462
        %s10527 = sand.u32 %s93, 1
        %s10528 = scalar_lea.sflag [#allocation3], %s10527
        %s10529 = sand.u32 %s93, 1
        %s10530 = smul.addr %s10529, 512
        %s10531 = scalar_lea.vmem [#allocation2], %s10530
        // Predicated region
        $region33: #{tpu_custom_call.1} parent=31 // pred_check
          %p10532 = pneg %p103
        $region34: #{tpu_custom_call.1} parent=31 // pred_check_branch
          %10534 = sbr.rel (%p10532) target = $region36
        $region35: #{tpu_custom_call.1} parent=31 // pred_region
          %s10535 = smul.u32 32, %s17
          %10537 = vsyncadd %s10528, 0
          %s10538 = smul.addr %s10535, 2
          %s10539 = smul.addr %s10538, 8
          %s10540 = scalar_lea.hbm %s3, %s10539
          %s10541 = sshll.u32 %s10531, 4
          %s10542 = int_to_ptr.vmem [resolvable:$true] %s10541
          %s10543 = sshll.u32 %s10540, 4
          %s10544 = int_to_ptr.hbm [resolvable:$true] %s10543
          %10549 = dma.vmem_to_hbm [thread:$0]  %s10542, 8192, %s10544, %s10528, 256, 256, 16
        $region36: #{tpu_custom_call.1} parent=31 // pred_fallthru
          _
      $region32: #{tpu_custom_call.1} parent=5 // pred_fallthru
        _
      %p10550 = scmp.le.s32.totalorder 2, %s12
      // Predicated region
      $region37: #{tpu_custom_call.1} parent=5 // pred_check
        %p10551 = pneg %p10550
      $region38: #{tpu_custom_call.1} parent=5 // pred_check_branch
        %10553 = sbr.rel (%p10551) target = $region40
      $region39: #{tpu_custom_call.1} parent=5 // pred_region
        %s10554 = ssub.s32 %s12, 2
        // Predicated region
        $region41: #{tpu_custom_call.1} parent=39 // pred_check
          %p10555 = pneg %p109
        $region42: #{tpu_custom_call.1} parent=39 // pred_check_branch
          %10557 = sbr.rel (%p10555) target = $region44
        $region43: #{tpu_custom_call.1} parent=39 // pred_region
          %s10558 = sand.u32 %s94, 1
          %s10559 = scalar_lea.sflag [#allocation3], %s10558
          %s10560 = sand.u32 %s94, 1
          %s10561 = smul.addr %s10560, 512
          %s10562 = scalar_lea.vmem [#allocation2], %s10561
          %10564 = dma.done %s10559, 8192
        $region44: #{tpu_custom_call.1} parent=39 // pred_fallthru
          _
      $region40: #{tpu_custom_call.1} parent=5 // pred_fallthru
        _
    $region6: #{tpu_custom_call.1} parent=1 // loop_footer
      %s16 = sadd.s32 1, %s12
    $region7: #{tpu_custom_call.1} parent=1 // loop_footer_branch
      %11 = sbr.rel target = $region3
    $region8: #{tpu_custom_call.1} parent=1 // loop_exit
      _
    %10565 = vsyncpa [#allocation3], 1
    %s10566 = scalar_lea.sflag [#allocation3], 1
    %10567 = vsyncpa %s10566, 1

</llo_original>
